<compile_context>
chip_gen: v6e
topology: v6e:2x2x1
jax: 0.10.0
libtpu: 0.0.40
codegen_flags: <defaults>
</compile_context>

<pallas_src>
import jax
import jax.numpy as jnp
from jax.experimental import pallas as pl
from jax.experimental.pallas import tpu as pltpu

# ----------------------------- model hyper-params -----------------------------
HEADS = 4
OUT_CHANNELS = 64
TYPE_DIM = 32
GATE_PAD = 128                           # gate channels padded to one full vreg lane width
EMB_DIM = HEADS * OUT_CHANNELS           # 256; required so h*r*t is well-formed
MLP_DIMS = [2048, 1024, 512, 256, 128]
BN_EPS = 1e-5

TILE_M_DEFAULT = 2048                    # gat_dense row tile (review: 1024-2048)
TILE_B_DEFAULT = 512                     # distmult_mlp batch tile (review: 512)


def _round_up(x, m):
    return ((x + m - 1) // m) * m


def _pad_rows(a, n_pad):
    n = a.shape[0]
    if n_pad == n:
        return a
    return jnp.pad(a, ((0, n_pad - n), (0, 0)))


def _pick_tile(n, tile_max):
    # multiple of 8 sublanes; try to give the 1-D grid >= 2 steps (v7x dual-TC)
    half = _round_up(max(1, (n + 1) // 2), 8)
    return max(8, min(tile_max, half))


def _vmem_limit_bytes():
    # per-generation scoped-VMEM limit: ~96 MiB on 128-MiB parts (v5e/v6e),
    # ~48 MiB on v7x (64 MiB physical); conservative fallback if the query fails.
    try:
        cap = int(pltpu.get_tpu_info().vmem_capacity_bytes)
    except Exception:
        cap = 64 * 1024 * 1024
    return max(32 * 1024 * 1024, min(cap * 3 // 4, 96 * 1024 * 1024))


# ----------------------------- kernel 1: GAT dense part -----------------------------
def gat_dense_kernel(x_ref, tinfo_ref, wbig_ref, bg_ref, wt_ref, out_ref):
    x = x_ref[...]                                                      # [TM, 256] bf16
    # one fused matmul: lanes [0:128) = gate pre-activation, [128:640) = linear|residual_proj
    big = jnp.dot(x, wbig_ref[...], preferred_element_type=jnp.float32)  # [TM, 640] f32
    gate = jax.nn.sigmoid(big[:, :GATE_PAD] + bg_ref[...])             # [TM, 128]
    # type_info arrives un-padded [TM, 32]; zero-extend to 128 lanes in-kernel
    tinfo = tinfo_ref[...]
    zpad = jnp.zeros((tinfo.shape[0], GATE_PAD - TYPE_DIM), dtype=tinfo.dtype)
    gt = (gate * jnp.concatenate([tinfo, zpad], axis=-1)).astype(jnp.bfloat16)  # [TM, 128]
    # accumulate typed-part contraction onto the same f32 accumulator slice
    fused = big[:, GATE_PAD:] + jnp.dot(gt, wt_ref[...],
                                        preferred_element_type=jnp.float32)     # [TM, 512]
    out_ref[...] = fused.astype(jnp.bfloat16)                          # lane-dense proj|res


def gat_dense(x_bf16, type_info, p, tile_m=TILE_M_DEFAULT):
    N = x_bf16.shape[0]
    tm = _pick_tile(N, tile_m)
    n_pad = _round_up(N, tm)
    xp = _pad_rows(x_bf16, n_pad)
    tp = _pad_rows(type_info, n_pad)

    def row_spec(cols):
        return pl.BlockSpec((tm, cols), lambda i: (i, 0))

    def w_spec(a):
        return pl.BlockSpec(a.shape, lambda i: (0, 0))      # resident across all row tiles

    out = pl.pallas_call(
        gat_dense_kernel,
        out_shape=jax.ShapeDtypeStruct((n_pad, 2 * EMB_DIM), jnp.bfloat16),
        grid=(n_pad // tm,),
        in_specs=[row_spec(EMB_DIM), row_spec(TYPE_DIM),
                  w_spec(p["w_big"]), w_spec(p["gate_b"]), w_spec(p["w_t_fused"])],
        out_specs=row_spec(2 * EMB_DIM),
        compiler_params=pltpu.CompilerParams(
            dimension_semantics=("parallel",),
            vmem_limit_bytes=_vmem_limit_bytes()),
    )(xp, tp, p["w_big"], p["gate_b"], p["w_t_fused"])
    return out[:N, :EMB_DIM], out[:N, EMB_DIM:]              # proj, residual (bf16)


# ------------------- GAT message passing (graph part, plain JAX glue) -------------------
# TODO(synk): data-dependent edge gather / segment softmax / scatter-add kept in plain JAX.
def gat_message_passing(x_proj, residual, edge_index, att_src, att_dst):
    N = x_proj.shape[0]
    src, dst = edge_index[0], edge_index[1]
    xp = x_proj.reshape(N, HEADS, OUT_CHANNELS)
    x_i = xp[dst]                                                    # [E, H, O] (target)
    x_j = xp[src]                                                    # [E, H, O] (source)
    alpha = (x_i * att_src[None]).sum(-1) + (x_j * att_dst[None]).sum(-1)   # [E, H] f32
    alpha = jax.nn.leaky_relu(alpha, negative_slope=0.2)
    amax = jax.ops.segment_max(alpha, dst, num_segments=N)
    amax = jnp.where(jnp.isfinite(amax), amax, 0.0)
    a = jnp.exp(alpha - amax[dst])
    denom = jax.ops.segment_sum(a, dst, num_segments=N)
    a = a / (denom[dst] + 1e-16)                                     # PyG softmax (dropout = eval)
    msg = (x_j * a[..., None]).reshape(-1, HEADS * OUT_CHANNELS)     # [E, 256] f32
    aggr = jax.ops.segment_sum(msg, dst, num_segments=N)             # [N, 256]
    out = aggr / jnp.sqrt(1.0 + BN_EPS)                              # BatchNorm1d eval (defaults)
    out = jax.nn.relu(out)                                           # dropout = identity (eval)
    return out + residual.astype(jnp.float32)                        # shapes match -> residual add


# ----------------------------- kernel 2: MLP head on DistMult score -----------------------------
def mlp_head_kernel(score_ref, w1_ref, b1_ref, w2_ref, b2_ref, w3_ref, b3_ref,
                    w4_ref, b4_ref, w5_ref, b5_ref, wout_ref, bout_ref, o_ref):
    score = score_ref[...]                                           # [TB, 1] f32
    # fc1 has input_dim=1: broadcast instead of a degenerate K=1 matmul
    x = jax.nn.relu(score * w1_ref[...] + b1_ref[...])               # [TB, 2048]
    # fc2..fc5: bf16 operands on the MXU, f32 accumulation
    for w_ref, b_ref in ((w2_ref, b2_ref), (w3_ref, b3_ref),
                         (w4_ref, b4_ref), (w5_ref, b5_ref)):
        x = jax.nn.relu(
            jnp.dot(x.astype(jnp.bfloat16), w_ref[...],
                    preferred_element_type=jnp.float32) + b_ref[...])
    # out layer (128 -> 1) as a lane reduction, then sigmoid.
    # TODO(synk): the [TB,1] store is masked (not lane-dense); tiny per tile, kept in-kernel.
    logit = jnp.sum(x * wout_ref[...], axis=1, keepdims=True) + bout_ref[...]
    o_ref[...] = jax.nn.sigmoid(logit)                               # [TB, 1]


def mlp_head(score, p, tile_b=TILE_B_DEFAULT):
    B = score.shape[0]
    tb = _pick_tile(B, tile_b)
    b_pad = _round_up(B, tb)
    s = _pad_rows(score, b_pad)

    def row_spec(cols):
        return pl.BlockSpec((tb, cols), lambda i: (i, 0))

    def w_spec(a):
        return pl.BlockSpec(a.shape, lambda i: (0, 0))      # weights DMA'd once, stay resident

    weights = (p["fc_w"][0], p["fc_b"][0], p["fc_w"][1], p["fc_b"][1],
               p["fc_w"][2], p["fc_b"][2], p["fc_w"][3], p["fc_b"][3],
               p["fc_w"][4], p["fc_b"][4], p["out_w"], p["out_b"])

    out = pl.pallas_call(
        mlp_head_kernel,
        out_shape=jax.ShapeDtypeStruct((b_pad, 1), jnp.float32),
        grid=(b_pad // tb,),
        in_specs=[row_spec(1)] + [w_spec(a) for a in weights],
        out_specs=row_spec(1),
        compiler_params=pltpu.CompilerParams(
            dimension_semantics=("parallel",),
            vmem_limit_bytes=_vmem_limit_bytes()),
    )(s, *weights)
    return out[:B, 0]                                                # .squeeze(-1)


# ----------------------------- full forward -----------------------------
def distmult_forward(params, h_idx, r_idx, t_idx, edge_index, entity_types):
    base = params["entity_emb"]                                      # [NE, 256] bf16
    type_info = params["type_emb"][entity_types]                     # [NE, 32] f32 (no pad)
    proj, residual = gat_dense(base, type_info, params)
    refined = gat_message_passing(proj, residual, edge_index,
                                  params["att_src"], params["att_dst"])   # [NE, 256] f32
    # TODO(synk): fuse these gathers + the score into the MLP kernel via PrefetchScalarGridSpec.
    h_emb = refined[h_idx]
    r_emb = params["rel_emb"][r_idx]
    t_emb = refined[t_idx]
    # DistMult score computed in the wrapper (tiny), so the MXU-bound MLP kernel only streams [B,1]
    score = jnp.sum(h_emb * r_emb * t_emb, axis=1, keepdims=True)    # [B, 1] f32
    return mlp_head(score, params)


# ----------------------------- deterministic parameter init -----------------------------
def xavier_uniform(key, shape, fan_in, fan_out):
    limit = (6.0 / (fan_in + fan_out)) ** 0.5
    return jax.random.uniform(key, shape, jnp.float32, -limit, limit)


def init_params(key, num_entities, num_relations, num_types):
    D, T, HO = EMB_DIM, TYPE_DIM, HEADS * OUT_CHANNELS               # 256, 32, 256
    ks = iter(jax.random.split(key, 32))
    p = {}
    # entity embeddings stored bf16 (kernel consumes bf16 anyway -> halves the x HBM stream)
    p["entity_emb"] = xavier_uniform(next(ks), (num_entities, D), D,
                                     num_entities).astype(jnp.bfloat16)
    p["rel_emb"] = xavier_uniform(next(ks), (num_relations, D), D, num_relations)
    # type embeddings stored un-padded [num_types, 32]
    p["type_emb"] = jax.random.normal(next(ks), (num_types, T), jnp.float32)
    # gate: Linear(D -> T), stored transposed [D, T], lane-padded to 128 cols with zeros
    gw = xavier_uniform(next(ks), (D, T), D, T)
    gw_pad = jnp.pad(gw, ((0, 0), (0, GATE_PAD - T)))                # [256, 128]
    gb = jax.random.uniform(next(ks), (1, T), jnp.float32, -1.0 / D ** 0.5, 1.0 / D ** 0.5)
    p["gate_b"] = jnp.pad(gb, ((0, 0), (0, GATE_PAD - T)))           # [1, 128]
    p["att_src"] = xavier_uniform(next(ks), (HEADS, OUT_CHANNELS), OUT_CHANNELS, HEADS)
    p["att_dst"] = xavier_uniform(next(ks), (HEADS, OUT_CHANNELS), OUT_CHANNELS, HEADS)
    # linear / residual_proj: Linear(D+T -> HO, bias=False), transposed; x-part fused with the
    # gate weight into one [256, 640] matmul RHS, typed-part kept as [128, 512] (rows>=32 zero).
    lin = xavier_uniform(next(ks), (D + T, HO), D + T, HO)
    res = xavier_uniform(next(ks), (D + T, HO), D + T, HO)
    w_x_fused = jnp.concatenate([lin[:D], res[:D]], axis=1)          # [256, 512]
    p["w_big"] = jnp.concatenate([gw_pad, w_x_fused], axis=1).astype(jnp.bfloat16)  # [256, 640]
    wt = jnp.concatenate([lin[D:], res[D:]], axis=1)                 # [32, 512]
    p["w_t_fused"] = jnp.pad(wt, ((0, GATE_PAD - T), (0, 0))).astype(jnp.bfloat16)  # [128, 512]
    # MLP head: 1 -> 2048 -> 1024 -> 512 -> 256 -> 128 -> 1 (fc2..fc5 weights in bf16)
    fc_w, fc_b = [], []
    prev = 1
    for li, dim in enumerate(MLP_DIMS):
        w = xavier_uniform(next(ks), (prev, dim), prev, dim)
        fc_w.append(w if li == 0 else w.astype(jnp.bfloat16))
        fc_b.append(jax.random.uniform(next(ks), (1, dim), jnp.float32,
                                       -1.0 / prev ** 0.5, 1.0 / prev ** 0.5))
        prev = dim
    p["fc_w"], p["fc_b"] = fc_w, fc_b
    p["out_w"] = xavier_uniform(next(ks), (1, MLP_DIMS[-1]), MLP_DIMS[-1], 1)  # row form of [1,128]
    p["out_b"] = jax.random.uniform(next(ks), (1, 1), jnp.float32,
                                    -1.0 / MLP_DIMS[-1] ** 0.5, 1.0 / MLP_DIMS[-1] ** 0.5)
    return p


# ----------------------------- main -----------------------------
if __name__ == "__main__":
    num_entities, num_relations, num_types, batch = 16, 4, 3, 8

    key = jax.random.PRNGKey(0)
    k_par, k_h, k_r, k_t, k_ty = jax.random.split(key, 5)
    params = init_params(k_par, num_entities, num_relations, num_types)

    # synthetic symmetric edge_index (ring graph), mirroring build_edge_index semantics
    heads_e = jnp.arange(num_entities, dtype=jnp.int32)
    tails_e = (heads_e + 1) % num_entities
    src = jnp.concatenate([heads_e, tails_e])
    dst = jnp.concatenate([tails_e, heads_e])
    edge_index = jnp.stack([src, dst])                               # [2, 32]

    entity_types = jax.random.randint(k_ty, (num_entities,), 0, num_types)
    h_idx = jax.random.randint(k_h, (batch,), 0, num_entities)
    r_idx = jax.random.randint(k_r, (batch,), 0, num_relations)
    t_idx = jax.random.randint(k_t, (batch,), 0, num_entities)

    fwd = jax.jit(distmult_forward)
    y = fwd(params, h_idx, r_idx, t_idx, edge_index, entity_types)
    jax.block_until_ready(y)
    assert y.shape == (batch,) and bool(jnp.all(jnp.isfinite(y)))
    print("KERNEL_OK")
</pallas_src>

<mosaic_0001>
module attributes {stable_mosaic.version = 11 : i64} {
  func.func @gat_dense_kernel(%arg0: i32, %arg1: memref<8x256xbf16, #tpu.memory_space<vmem>>, %arg2: memref<8x32xf32, #tpu.memory_space<vmem>>, %arg3: memref<256x640xbf16, #tpu.memory_space<vmem>>, %arg4: memref<1x128xf32, #tpu.memory_space<vmem>>, %arg5: memref<128x512xbf16, #tpu.memory_space<vmem>>, %arg6: memref<8x512xbf16, #tpu.memory_space<vmem>>) attributes {dimension_semantics = [#tpu.dimension_semantics<parallel>], iteration_bounds = array<i64: 2>, scalar_prefetch = 0 : i64, scratch_operands = 0 : i64, tpu.core_type = #tpu.core_type<tc>, window_params = [{transform_indices = @transform_0, window_bounds = array<i64: 8, 256>}, {transform_indices = @transform_1, window_bounds = array<i64: 8, 32>}, {pipeline_mode = #tpu.pipeline_mode<synchronous>, transform_indices = @transform_2, window_bounds = array<i64: 256, 640>}, {pipeline_mode = #tpu.pipeline_mode<synchronous>, transform_indices = @transform_3, window_bounds = array<i64: 1, 128>}, {pipeline_mode = #tpu.pipeline_mode<synchronous>, transform_indices = @transform_4, window_bounds = array<i64: 128, 512>}, {transform_indices = @transform_5, window_bounds = array<i64: 8, 512>}]} {
    %c0 = arith.constant 0 : index
    %c0_0 = arith.constant 0 : index
    %0 = vector.load %arg1[%c0, %c0_0] : memref<8x256xbf16, #tpu.memory_space<vmem>>, vector<8x256xbf16>
    %c0_1 = arith.constant 0 : index
    %c0_2 = arith.constant 0 : index
    %1 = vector.load %arg3[%c0_1, %c0_2] : memref<256x640xbf16, #tpu.memory_space<vmem>>, vector<256x640xbf16>
    %cst = arith.constant dense<0.000000e+00> : vector<8x640xf32>
    %2 = tpu.matmul %0, %1, %cst {dimension_numbers = #tpu.dot_dimension_numbers<[1], [0], [0], [1], [0, 0, 1, 1], [], []>} : vector<8x256xbf16>, vector<256x640xbf16>, vector<8x640xf32> -> vector<8x640xf32>
    %3 = vector.extract_strided_slice %2 {offsets = [0, 0], sizes = [8, 128], strides = [1, 1]} : vector<8x640xf32> to vector<8x128xf32>
    %c0_3 = arith.constant 0 : index
    %c0_4 = arith.constant 0 : index
    %4 = vector.load %arg4[%c0_3, %c0_4] : memref<1x128xf32, #tpu.memory_space<vmem>>, vector<1x128xf32>
    %5 = vector.broadcast %4 : vector<1x128xf32> to vector<8x128xf32>
    %6 = arith.addf %3, %5 : vector<8x128xf32>
    %7 = arith.negf %6 : vector<8x128xf32>
    %8 = math.exp %7 : vector<8x128xf32>
    %cst_5 = arith.constant 1.000000e+00 : f32
    %9 = vector.broadcast %cst_5 : f32 to vector<8x128xf32>
    %10 = arith.addf %9, %8 : vector<8x128xf32>
    %11 = arith.divf %9, %10 : vector<8x128xf32>
    %c0_6 = arith.constant 0 : index
    %c0_7 = arith.constant 0 : index
    %12 = vector.load %arg2[%c0_6, %c0_7] : memref<8x32xf32, #tpu.memory_space<vmem>>, vector<8x32xf32>
    %cst_8 = arith.constant 0.000000e+00 : f32
    %13 = vector.broadcast %cst_8 : f32 to vector<8x96xf32>
    %14 = tpu.concatenate %12, %13 in 1 : vector<8x32xf32>, vector<8x96xf32> -> vector<8x128xf32>
    %15 = arith.mulf %11, %14 : vector<8x128xf32>
    %16 = arith.truncf %15 : vector<8x128xf32> to vector<8x128xbf16>
    %17 = vector.extract_strided_slice %2 {offsets = [0, 128], sizes = [8, 512], strides = [1, 1]} : vector<8x640xf32> to vector<8x512xf32>
    %c0_9 = arith.constant 0 : index
    %c0_10 = arith.constant 0 : index
    %18 = vector.load %arg5[%c0_9, %c0_10] : memref<128x512xbf16, #tpu.memory_space<vmem>>, vector<128x512xbf16>
    %cst_11 = arith.constant dense<0.000000e+00> : vector<8x512xf32>
    %19 = tpu.matmul %16, %18, %cst_11 {dimension_numbers = #tpu.dot_dimension_numbers<[1], [0], [0], [1], [0, 0, 1, 1], [], []>} : vector<8x128xbf16>, vector<128x512xbf16>, vector<8x512xf32> -> vector<8x512xf32>
    %20 = arith.addf %17, %19 : vector<8x512xf32>
    %21 = arith.truncf %20 : vector<8x512xf32> to vector<8x512xbf16>
    %c0_12 = arith.constant 0 : index
    %c0_13 = arith.constant 0 : index
    %22 = vector.load %arg6[%c0_12, %c0_13] : memref<8x512xbf16, #tpu.memory_space<vmem>>, vector<8x512xbf16>
    tpu.vector_store %arg6[%c0_12, %c0_13], %21 {strides = array<i32>} : memref<8x512xbf16, #tpu.memory_space<vmem>>, vector<8x512xbf16>,
    return
  }
  func.func @transform_0(%arg0: i32) -> (i32, i32) {
    %c0_i32 = arith.constant 0 : i32
    %c0_i32_0 = arith.constant 0 : i32
    return %arg0, %c0_i32 : i32, i32
  }
  func.func @transform_1(%arg0: i32) -> (i32, i32) {
    %c0_i32 = arith.constant 0 : i32
    %c0_i32_0 = arith.constant 0 : i32
    return %arg0, %c0_i32 : i32, i32
  }
  func.func @transform_2(%arg0: i32) -> (i32, i32) {
    %c0_i32 = arith.constant 0 : i32
    %c0_i32_0 = arith.constant 0 : i32
    %c0_i32_1 = arith.constant 0 : i32
    return %c0_i32, %c0_i32_0 : i32, i32
  }
  func.func @transform_3(%arg0: i32) -> (i32, i32) {
    %c0_i32 = arith.constant 0 : i32
    %c0_i32_0 = arith.constant 0 : i32
    %c0_i32_1 = arith.constant 0 : i32
    return %c0_i32, %c0_i32_0 : i32, i32
  }
  func.func @transform_4(%arg0: i32) -> (i32, i32) {
    %c0_i32 = arith.constant 0 : i32
    %c0_i32_0 = arith.constant 0 : i32
    %c0_i32_1 = arith.constant 0 : i32
    return %c0_i32, %c0_i32_0 : i32, i32
  }
  func.func @transform_5(%arg0: i32) -> (i32, i32) {
    %c0_i32 = arith.constant 0 : i32
    %c0_i32_0 = arith.constant 0 : i32
    return %arg0, %c0_i32 : i32, i32
  }
}

module attributes {stable_mosaic.version = 11 : i64} {
  func.func @mlp_head_kernel(%arg0: i32, %arg1: memref<8x1xf32, #tpu.memory_space<vmem>>, %arg2: memref<1x2048xf32, #tpu.memory_space<vmem>>, %arg3: memref<1x2048xf32, #tpu.memory_space<vmem>>, %arg4: memref<2048x1024xbf16, #tpu.memory_space<vmem>>, %arg5: memref<1x1024xf32, #tpu.memory_space<vmem>>, %arg6: memref<1024x512xbf16, #tpu.memory_space<vmem>>, %arg7: memref<1x512xf32, #tpu.memory_space<vmem>>, %arg8: memref<512x256xbf16, #tpu.memory_space<vmem>>, %arg9: memref<1x256xf32, #tpu.memory_space<vmem>>, %arg10: memref<256x128xbf16, #tpu.memory_space<vmem>>, %arg11: memref<1x128xf32, #tpu.memory_space<vmem>>, %arg12: memref<1x128xf32, #tpu.memory_space<vmem>>, %arg13: memref<1x1xf32, #tpu.memory_space<vmem>>, %arg14: memref<8x1xf32, #tpu.memory_space<vmem>>) attributes {dimension_semantics = [#tpu.dimension_semantics<parallel>], iteration_bounds = array<i64: 1>, scalar_prefetch = 0 : i64, scratch_operands = 0 : i64, tpu.core_type = #tpu.core_type<tc>, window_params = [{transform_indices = @transform_0, window_bounds = array<i64: 8, 1>}, {pipeline_mode = #tpu.pipeline_mode<synchronous>, transform_indices = @transform_1, window_bounds = array<i64: 1, 2048>}, {pipeline_mode = #tpu.pipeline_mode<synchronous>, transform_indices = @transform_2, window_bounds = array<i64: 1, 2048>}, {pipeline_mode = #tpu.pipeline_mode<synchronous>, transform_indices = @transform_3, window_bounds = array<i64: 2048, 1024>}, {pipeline_mode = #tpu.pipeline_mode<synchronous>, transform_indices = @transform_4, window_bounds = array<i64: 1, 1024>}, {pipeline_mode = #tpu.pipeline_mode<synchronous>, transform_indices = @transform_5, window_bounds = array<i64: 1024, 512>}, {pipeline_mode = #tpu.pipeline_mode<synchronous>, transform_indices = @transform_6, window_bounds = array<i64: 1, 512>}, {pipeline_mode = #tpu.pipeline_mode<synchronous>, transform_indices = @transform_7, window_bounds = array<i64: 512, 256>}, {pipeline_mode = #tpu.pipeline_mode<synchronous>, transform_indices = @transform_8, window_bounds = array<i64: 1, 256>}, {pipeline_mode = #tpu.pipeline_mode<synchronous>, transform_indices = @transform_9, window_bounds = array<i64: 256, 128>}, {pipeline_mode = #tpu.pipeline_mode<synchronous>, transform_indices = @transform_10, window_bounds = array<i64: 1, 128>}, {pipeline_mode = #tpu.pipeline_mode<synchronous>, transform_indices = @transform_11, window_bounds = array<i64: 1, 128>}, {pipeline_mode = #tpu.pipeline_mode<synchronous>, transform_indices = @transform_12, window_bounds = array<i64: 1, 1>}, {transform_indices = @transform_13, window_bounds = array<i64: 8, 1>}]} {
    %c0 = arith.constant 0 : index
    %c0_0 = arith.constant 0 : index
    %0 = vector.load %arg1[%c0, %c0_0] : memref<8x1xf32, #tpu.memory_space<vmem>>, vector<8x1xf32>
    %c0_1 = arith.constant 0 : index
    %c0_2 = arith.constant 0 : index
    %1 = vector.load %arg2[%c0_1, %c0_2] : memref<1x2048xf32, #tpu.memory_space<vmem>>, vector<1x2048xf32>
    %2 = vector.broadcast %0 : vector<8x1xf32> to vector<8x2048xf32>
    %3 = vector.broadcast %1 : vector<1x2048xf32> to vector<8x2048xf32>
    %4 = arith.mulf %2, %3 : vector<8x2048xf32>
    %c0_3 = arith.constant 0 : index
    %c0_4 = arith.constant 0 : index
    %5 = vector.load %arg3[%c0_3, %c0_4] : memref<1x2048xf32, #tpu.memory_space<vmem>>, vector<1x2048xf32>
    %6 = vector.broadcast %5 : vector<1x2048xf32> to vector<8x2048xf32>
    %7 = arith.addf %4, %6 : vector<8x2048xf32>
    %cst = arith.constant 0.000000e+00 : f32
    %8 = vector.broadcast %cst : f32 to vector<8x2048xf32>
    %9 = arith.maximumf %7, %8 : vector<8x2048xf32>
    %10 = arith.truncf %9 : vector<8x2048xf32> to vector<8x2048xbf16>
    %c0_5 = arith.constant 0 : index
    %c0_6 = arith.constant 0 : index
    %11 = vector.load %arg4[%c0_5, %c0_6] : memref<2048x1024xbf16, #tpu.memory_space<vmem>>, vector<2048x1024xbf16>
    %cst_7 = arith.constant dense<0.000000e+00> : vector<8x1024xf32>
    %12 = tpu.matmul %10, %11, %cst_7 {dimension_numbers = #tpu.dot_dimension_numbers<[1], [0], [0], [1], [0, 0, 1, 1], [], []>} : vector<8x2048xbf16>, vector<2048x1024xbf16>, vector<8x1024xf32> -> vector<8x1024xf32>
    %c0_8 = arith.constant 0 : index
    %c0_9 = arith.constant 0 : index
    %13 = vector.load %arg5[%c0_8, %c0_9] : memref<1x1024xf32, #tpu.memory_space<vmem>>, vector<1x1024xf32>
    %14 = vector.broadcast %13 : vector<1x1024xf32> to vector<8x1024xf32>
    %15 = arith.addf %12, %14 : vector<8x1024xf32>
    %cst_10 = arith.constant 0.000000e+00 : f32
    %16 = vector.broadcast %cst_10 : f32 to vector<8x1024xf32>
    %17 = arith.maximumf %15, %16 : vector<8x1024xf32>
    %18 = arith.truncf %17 : vector<8x1024xf32> to vector<8x1024xbf16>
    %c0_11 = arith.constant 0 : index
    %c0_12 = arith.constant 0 : index
    %19 = vector.load %arg6[%c0_11, %c0_12] : memref<1024x512xbf16, #tpu.memory_space<vmem>>, vector<1024x512xbf16>
    %cst_13 = arith.constant dense<0.000000e+00> : vector<8x512xf32>
    %20 = tpu.matmul %18, %19, %cst_13 {dimension_numbers = #tpu.dot_dimension_numbers<[1], [0], [0], [1], [0, 0, 1, 1], [], []>} : vector<8x1024xbf16>, vector<1024x512xbf16>, vector<8x512xf32> -> vector<8x512xf32>
    %c0_14 = arith.constant 0 : index
    %c0_15 = arith.constant 0 : index
    %21 = vector.load %arg7[%c0_14, %c0_15] : memref<1x512xf32, #tpu.memory_space<vmem>>, vector<1x512xf32>
    %22 = vector.broadcast %21 : vector<1x512xf32> to vector<8x512xf32>
    %23 = arith.addf %20, %22 : vector<8x512xf32>
    %cst_16 = arith.constant 0.000000e+00 : f32
    %24 = vector.broadcast %cst_16 : f32 to vector<8x512xf32>
    %25 = arith.maximumf %23, %24 : vector<8x512xf32>
    %26 = arith.truncf %25 : vector<8x512xf32> to vector<8x512xbf16>
    %c0_17 = arith.constant 0 : index
    %c0_18 = arith.constant 0 : index
    %27 = vector.load %arg8[%c0_17, %c0_18] : memref<512x256xbf16, #tpu.memory_space<vmem>>, vector<512x256xbf16>
    %cst_19 = arith.constant dense<0.000000e+00> : vector<8x256xf32>
    %28 = tpu.matmul %26, %27, %cst_19 {dimension_numbers = #tpu.dot_dimension_numbers<[1], [0], [0], [1], [0, 0, 1, 1], [], []>} : vector<8x512xbf16>, vector<512x256xbf16>, vector<8x256xf32> -> vector<8x256xf32>
    %c0_20 = arith.constant 0 : index
    %c0_21 = arith.constant 0 : index
    %29 = vector.load %arg9[%c0_20, %c0_21] : memref<1x256xf32, #tpu.memory_space<vmem>>, vector<1x256xf32>
    %30 = vector.broadcast %29 : vector<1x256xf32> to vector<8x256xf32>
    %31 = arith.addf %28, %30 : vector<8x256xf32>
    %cst_22 = arith.constant 0.000000e+00 : f32
    %32 = vector.broadcast %cst_22 : f32 to vector<8x256xf32>
    %33 = arith.maximumf %31, %32 : vector<8x256xf32>
    %34 = arith.truncf %33 : vector<8x256xf32> to vector<8x256xbf16>
    %c0_23 = arith.constant 0 : index
    %c0_24 = arith.constant 0 : index
    %35 = vector.load %arg10[%c0_23, %c0_24] : memref<256x128xbf16, #tpu.memory_space<vmem>>, vector<256x128xbf16>
    %cst_25 = arith.constant dense<0.000000e+00> : vector<8x128xf32>
    %36 = tpu.matmul %34, %35, %cst_25 {dimension_numbers = #tpu.dot_dimension_numbers<[1], [0], [0], [1], [0, 0, 1, 1], [], []>} : vector<8x256xbf16>, vector<256x128xbf16>, vector<8x128xf32> -> vector<8x128xf32>
    %c0_26 = arith.constant 0 : index
    %c0_27 = arith.constant 0 : index
    %37 = vector.load %arg11[%c0_26, %c0_27] : memref<1x128xf32, #tpu.memory_space<vmem>>, vector<1x128xf32>
    %38 = vector.broadcast %37 : vector<1x128xf32> to vector<8x128xf32>
    %39 = arith.addf %36, %38 : vector<8x128xf32>
    %cst_28 = arith.constant 0.000000e+00 : f32
    %40 = vector.broadcast %cst_28 : f32 to vector<8x128xf32>
    %41 = arith.maximumf %39, %40 : vector<8x128xf32>
    %c0_29 = arith.constant 0 : index
    %c0_30 = arith.constant 0 : index
    %42 = vector.load %arg12[%c0_29, %c0_30] : memref<1x128xf32, #tpu.memory_space<vmem>>, vector<1x128xf32>
    %43 = vector.broadcast %42 : vector<1x128xf32> to vector<8x128xf32>
    %44 = arith.mulf %41, %43 : vector<8x128xf32>
    %cst_31 = arith.constant dense<0.000000e+00> : vector<8xf32>
    %45 = vector.multi_reduction <add>, %44, %cst_31 [1] : vector<8x128xf32> to vector<8xf32>
    %46 = vector.shape_cast %45 : vector<8xf32> to vector<8x1xf32>
    %c0_32 = arith.constant 0 : index
    %c0_33 = arith.constant 0 : index
    %47 = vector.load %arg13[%c0_32, %c0_33] : memref<1x1xf32, #tpu.memory_space<vmem>>, vector<1x1xf32>
    %48 = vector.broadcast %47 : vector<1x1xf32> to vector<8x1xf32>
    %49 = arith.addf %46, %48 : vector<8x1xf32>
    %50 = arith.negf %49 : vector<8x1xf32>
    %51 = math.exp %50 : vector<8x1xf32>
    %cst_34 = arith.constant 1.000000e+00 : f32
    %52 = vector.broadcast %cst_34 : f32 to vector<8x1xf32>
    %53 = arith.addf %52, %51 : vector<8x1xf32>
    %54 = arith.divf %52, %53 : vector<8x1xf32>
    %c0_35 = arith.constant 0 : index
    %c0_36 = arith.constant 0 : index
    %55 = vector.load %arg14[%c0_35, %c0_36] : memref<8x1xf32, #tpu.memory_space<vmem>>, vector<8x1xf32>
    tpu.vector_store %arg14[%c0_35, %c0_36], %54 {strides = array<i32>} : memref<8x1xf32, #tpu.memory_space<vmem>>, vector<8x1xf32>,
    return
  }
  func.func @transform_0(%arg0: i32) -> (i32, i32) {
    %c0_i32 = arith.constant 0 : i32
    %c0_i32_0 = arith.constant 0 : i32
    return %arg0, %c0_i32 : i32, i32
  }
  func.func @transform_1(%arg0: i32) -> (i32, i32) {
    %c0_i32 = arith.constant 0 : i32
    %c0_i32_0 = arith.constant 0 : i32
    %c0_i32_1 = arith.constant 0 : i32
    return %c0_i32, %c0_i32_0 : i32, i32
  }
  func.func @transform_2(%arg0: i32) -> (i32, i32) {
    %c0_i32 = arith.constant 0 : i32
    %c0_i32_0 = arith.constant 0 : i32
    %c0_i32_1 = arith.constant 0 : i32
    return %c0_i32, %c0_i32_0 : i32, i32
  }
  func.func @transform_3(%arg0: i32) -> (i32, i32) {
    %c0_i32 = arith.constant 0 : i32
    %c0_i32_0 = arith.constant 0 : i32
    %c0_i32_1 = arith.constant 0 : i32
    return %c0_i32, %c0_i32_0 : i32, i32
  }
  func.func @transform_4(%arg0: i32) -> (i32, i32) {
    %c0_i32 = arith.constant 0 : i32
    %c0_i32_0 = arith.constant 0 : i32
    %c0_i32_1 = arith.constant 0 : i32
    return %c0_i32, %c0_i32_0 : i32, i32
  }
  func.func @transform_5(%arg0: i32) -> (i32, i32) {
    %c0_i32 = arith.constant 0 : i32
    %c0_i32_0 = arith.constant 0 : i32
    %c0_i32_1 = arith.constant 0 : i32
    return %c0_i32, %c0_i32_0 : i32, i32
  }
  func.func @transform_6(%arg0: i32) -> (i32, i32) {
    %c0_i32 = arith.constant 0 : i32
    %c0_i32_0 = arith.constant 0 : i32
    %c0_i32_1 = arith.constant 0 : i32
    return %c0_i32, %c0_i32_0 : i32, i32
  }
  func.func @transform_7(%arg0: i32) -> (i32, i32) {
    %c0_i32 = arith.constant 0 : i32
    %c0_i32_0 = arith.constant 0 : i32
    %c0_i32_1 = arith.constant 0 : i32
    return %c0_i32, %c0_i32_0 : i32, i32
  }
  func.func @transform_8(%arg0: i32) -> (i32, i32) {
    %c0_i32 = arith.constant 0 : i32
    %c0_i32_0 = arith.constant 0 : i32
    %c0_i32_1 = arith.constant 0 : i32
    return %c0_i32, %c0_i32_0 : i32, i32
  }
  func.func @transform_9(%arg0: i32) -> (i32, i32) {
    %c0_i32 = arith.constant 0 : i32
    %c0_i32_0 = arith.constant 0 : i32
    %c0_i32_1 = arith.constant 0 : i32
    return %c0_i32, %c0_i32_0 : i32, i32
  }
  func.func @transform_10(%arg0: i32) -> (i32, i32) {
    %c0_i32 = arith.constant 0 : i32
    %c0_i32_0 = arith.constant 0 : i32
    %c0_i32_1 = arith.constant 0 : i32
    return %c0_i32, %c0_i32_0 : i32, i32
  }
  func.func @transform_11(%arg0: i32) -> (i32, i32) {
    %c0_i32 = arith.constant 0 : i32
    %c0_i32_0 = arith.constant 0 : i32
    %c0_i32_1 = arith.constant 0 : i32
    return %c0_i32, %c0_i32_0 : i32, i32
  }
  func.func @transform_12(%arg0: i32) -> (i32, i32) {
    %c0_i32 = arith.constant 0 : i32
    %c0_i32_0 = arith.constant 0 : i32
    %c0_i32_1 = arith.constant 0 : i32
    return %c0_i32, %c0_i32_0 : i32, i32
  }
  func.func @transform_13(%arg0: i32) -> (i32, i32) {
    %c0_i32 = arith.constant 0 : i32
    %c0_i32_0 = arith.constant 0 : i32
    return %arg0, %c0_i32 : i32, i32
  }
}

</mosaic_0001>

<llo_original>
// kernel: distmult_forward.2
$region0: #{distmult_forward.2}
  #allocation0 [shape = 'u32[]', space=smem, size = 0x4, offset = 0x4, fixed_abs, tag = 'smem constant byte address 0x4 - core index']
  #allocation1 [shape = 'u32[144,128]{1,0:T(1,128)}', space=vmem, size = 0x12000, scoped, tag = 'internal scratch']
  %s0 = inlined_call_operand.hbm [shape: bf16[16,256], index: 0, kind: input, shape index: {}]
  %s1 = inlined_call_operand.vmem [shape: f32[16,32], index: 1, kind: input, shape index: {}]
  %s2 = inlined_call_operand.hbm [shape: bf16[256,640], index: 2, kind: input, shape index: {}]
  %s3 = inlined_call_operand.hbm [shape: f32[1,128], index: 3, kind: input, shape index: {}]
  %s4 = inlined_call_operand.hbm [shape: bf16[128,512], index: 4, kind: input, shape index: {}]
  %s5 = inlined_call_operand.vmem [shape: bf16[16,512], index: 5, kind: output, shape index: {}]
  %s6 = sld [smem:[#allocation0]]
  $region69: #{distmult_forward.2} parent=0
    _
  %s8 = ssub.s32 1, %s6
  %s9 = scalar_select 0, %s8, %s6
  $region1: #{distmult_forward.2} parent=0
    #allocation2 [shape = 'u8[8192]{0}', space=vmem, size = 0x2000, scoped, tag = 'input window, operand 0']
    #allocation3 [shape = 's32[2]{0}', space=sflag, size = 0x8, scoped, tag = 'scoped memory for distmult_forward.2']
    #allocation4 [shape = 'u8[327680]{0}', space=vmem, size = 0x50000, scoped, tag = 'input window, operand 2, single buffered']
    #allocation5 [shape = 's32[1]{0}', space=sflag, size = 0x4, scoped, tag = 'scoped memory for distmult_forward.2']
    #allocation6 [shape = 'u8[512]{0}', space=vmem, size = 0x400, scoped, tag = 'input window, operand 3, single buffered']
    #allocation7 [shape = 'u8[131072]{0}', space=vmem, size = 0x20000, scoped, tag = 'input window, operand 4, single buffered']
    #allocation8 [shape = 's32[1]{0}', space=sflag, size = 0x4, scoped, tag = 'scoped memory for distmult_forward.2']
    %10 = vsyncpa [#allocation3], 0
    %s11 = scalar_lea.sflag [#allocation3], 1
    %12 = vsyncpa %s11, 0
    %13 = vsyncpa [#allocation5], 0
    %14 = vsyncpa [#allocation8], 0
    loop: start=0, step=1, limit=4
    $region2: #{distmult_forward.2} parent=1 // loop_pre_header
      _
    $region3: #{distmult_forward.2} parent=1 // loop_header
      %s16 = sphi 0, %s20
      %p17 = scmp.ge.s32.totalorder %s16, 4
      %s26 = sphi 0, %s28
      %s29 = sphi 0, %s26
      %s30 = sphi 0, %s29
      %s46 = sphi 0, %s30
      %s52 = sphi 0, %s54
      %s55 = sphi 0, %s52
      %s56 = sphi 0, %s55
      %s72 = sphi 0, %s56
      %s76 = sphi 0, %s76
      %s78 = sphi 0, %s76
      %s79 = sphi 0, %s78
      %s93 = sphi 0, %s79
      %s97 = sphi 0, %s97
      %s99 = sphi 0, %s97
      %s100 = sphi 0, %s99
      %s114 = sphi 0, %s100
      %s118 = sphi 0, %s118
      %s120 = sphi 0, %s118
      %s121 = sphi 0, %s120
      %s135 = sphi 0, %s121
      %s141 = sphi 0, %s143
      %s144 = sphi 0, %s141
      %s145 = sphi 0, %s144
      %s161 = sphi 0, %s145
    $region4: #{distmult_forward.2} parent=1 // loop_header_branch
      %19 = sbr.rel (%p17) target = $region8
    $region5: #{distmult_forward.2} parent=1 // loop_body
      %s21 = ssub.s32 %s16, 1
      %s22 = ssub.s32 %s16, 2
      %s23 = sadd.s32 %s16, 1
      %s24 = ssub.s32 %s16, %s23
      %p25 = scmp.eq.s32.totalorder %s24, 0
      %s27 = sadd.s32 %s26, 1
      %s28 = scalar_select %p25, %s26, %s27
      %p31 = pneg %p25
      %p32 = scmp.eq.s32.totalorder %s16, 1
      %p33 = por %p31, %p32
      %p34 = scmp.ne.s32.totalorder %s26, %s29
      %p35 = scmp.eq.s32.totalorder %s16, 0
      %p36 = por %p34, %p35
      %p37 = scmp.ne.s32.totalorder %s26, %s29
      %p38 = scmp.eq.s32.totalorder %s21, 1
      %p39 = por %p37, %p38
      %p40 = scmp.ne.s32.totalorder %s29, %s30
      %p41 = scmp.eq.s32.totalorder %s21, 0
      %p42 = por %p40, %p41
      %p43 = scmp.ne.s32.totalorder %s29, %s30
      %p44 = scmp.eq.s32.totalorder %s22, 1
      %p45 = por %p43, %p44
      %p47 = scmp.ne.s32.totalorder %s30, %s46
      %p48 = scmp.eq.s32.totalorder %s22, 0
      %p49 = por %p47, %p48
      %s50 = ssub.s32 %s16, %s23
      %p51 = scmp.eq.s32.totalorder %s50, 0
      %s53 = sadd.s32 %s52, 1
      %s54 = scalar_select %p51, %s52, %s53
      %p57 = pneg %p51
      %p58 = scmp.eq.s32.totalorder %s16, 1
      %p59 = por %p57, %p58
      %p60 = scmp.ne.s32.totalorder %s52, %s55
      %p61 = scmp.eq.s32.totalorder %s16, 0
      %p62 = por %p60, %p61
      %p63 = scmp.ne.s32.totalorder %s52, %s55
      %p64 = scmp.eq.s32.totalorder %s21, 1
      %p65 = por %p63, %p64
      %p66 = scmp.ne.s32.totalorder %s55, %s56
      %p67 = scmp.eq.s32.totalorder %s21, 0
      %p68 = por %p66, %p67
      %p69 = scmp.ne.s32.totalorder %s55, %s56
      %p70 = scmp.eq.s32.totalorder %s22, 1
      %p71 = por %p69, %p70
      %p73 = scmp.ne.s32.totalorder %s56, %s72
      %p74 = scmp.eq.s32.totalorder %s22, 0
      %p75 = por %p73, %p74
      %s77 = sadd.s32 %s76, 1
      %p80 = scmp.eq.s32.totalorder %s16, 1
      %p81 = scmp.ne.s32.totalorder %s76, %s78
      %p82 = scmp.eq.s32.totalorder %s16, 0
      %p83 = por %p81, %p82
      %p84 = scmp.ne.s32.totalorder %s76, %s78
      %p85 = scmp.eq.s32.totalorder %s21, 1
      %p86 = por %p84, %p85
      %p87 = scmp.ne.s32.totalorder %s78, %s79
      %p88 = scmp.eq.s32.totalorder %s21, 0
      %p89 = por %p87, %p88
      %p90 = scmp.ne.s32.totalorder %s78, %s79
      %p91 = scmp.eq.s32.totalorder %s22, 1
      %p92 = por %p90, %p91
      %p94 = scmp.ne.s32.totalorder %s79, %s93
      %p95 = scmp.eq.s32.totalorder %s22, 0
      %p96 = por %p94, %p95
      %s98 = sadd.s32 %s97, 1
      %p101 = scmp.eq.s32.totalorder %s16, 1
      %p102 = scmp.ne.s32.totalorder %s97, %s99
      %p103 = scmp.eq.s32.totalorder %s16, 0
      %p104 = por %p102, %p103
      %p105 = scmp.ne.s32.totalorder %s97, %s99
      %p106 = scmp.eq.s32.totalorder %s21, 1
      %p107 = por %p105, %p106
      %p108 = scmp.ne.s32.totalorder %s99, %s100
      %p109 = scmp.eq.s32.totalorder %s21, 0
      %p110 = por %p108, %p109
      %p111 = scmp.ne.s32.totalorder %s99, %s100
      %p112 = scmp.eq.s32.totalorder %s22, 1
      %p113 = por %p111, %p112
      %p115 = scmp.ne.s32.totalorder %s100, %s114
      %p116 = scmp.eq.s32.totalorder %s22, 0
      %p117 = por %p115, %p116
      %s119 = sadd.s32 %s118, 1
      %p122 = scmp.eq.s32.totalorder %s16, 1
      %p123 = scmp.ne.s32.totalorder %s118, %s120
      %p124 = scmp.eq.s32.totalorder %s16, 0
      %p125 = por %p123, %p124
      %p126 = scmp.ne.s32.totalorder %s118, %s120
      %p127 = scmp.eq.s32.totalorder %s21, 1
      %p128 = por %p126, %p127
      %p129 = scmp.ne.s32.totalorder %s120, %s121
      %p130 = scmp.eq.s32.totalorder %s21, 0
      %p131 = por %p129, %p130
      %p132 = scmp.ne.s32.totalorder %s120, %s121
      %p133 = scmp.eq.s32.totalorder %s22, 1
      %p134 = por %p132, %p133
      %p136 = scmp.ne.s32.totalorder %s121, %s135
      %p137 = scmp.eq.s32.totalorder %s22, 0
      %p138 = por %p136, %p137
      %s139 = ssub.s32 %s16, %s23
      %p140 = scmp.eq.s32.totalorder %s139, 0
      %s142 = sadd.s32 %s141, 1
      %s143 = scalar_select %p140, %s141, %s142
      %p146 = pneg %p140
      %p147 = scmp.eq.s32.totalorder %s16, 1
      %p148 = por %p146, %p147
      %p149 = scmp.ne.s32.totalorder %s141, %s144
      %p150 = scmp.eq.s32.totalorder %s16, 0
      %p151 = por %p149, %p150
      %p152 = scmp.ne.s32.totalorder %s141, %s144
      %p153 = scmp.eq.s32.totalorder %s21, 1
      %p154 = por %p152, %p153
      %p155 = scmp.ne.s32.totalorder %s144, %s145
      %p156 = scmp.eq.s32.totalorder %s21, 0
      %p157 = por %p155, %p156
      %p158 = scmp.ne.s32.totalorder %s144, %s145
      %p159 = scmp.eq.s32.totalorder %s22, 1
      %p160 = por %p158, %p159
      %p162 = scmp.ne.s32.totalorder %s145, %s161
      %p163 = scmp.eq.s32.totalorder %s22, 0
      %p164 = por %p162, %p163
      %p165 = scmp.le.s32.totalorder 1, %s16
      %p166 = scmp.lt.s32.totalorder %s16, 3
      %p167 = pnand %p165, %p166
      %p168 = pneg %p167
      // Predicated region
      $region9: #{distmult_forward.2} parent=5 // pred_check
        _
      $region10: #{distmult_forward.2} parent=5 // pred_check_branch
        %170 = sbr.rel (%p167) target = $region12
      $region11: #{distmult_forward.2} parent=5 // pred_region
        %s171 = ssub.s32 %s16, 1
        // Predicated region
        $region13: #{distmult_forward.2} parent=11 // pred_check
          %p172 = pneg %p89
        $region14: #{distmult_forward.2} parent=11 // pred_check_branch
          %174 = sbr.rel (%p172) target = $region16
        $region15: #{distmult_forward.2} parent=11 // pred_region
          %s176 = ssub.s32 10240, 10240
          %177 = vsyncadd [#allocation5], %s176
          %s178 = sshll.u32 [#allocation4], 4
          %s179 = int_to_ptr.vmem [resolvable:$true] %s178
          %184 = dma.hbm_to_vmem [thread:$0]  %s2, 10240, %s179, [#allocation5], 320, 320, 20
        $region16: #{distmult_forward.2} parent=11 // pred_fallthru
          _
        // Predicated region
        $region17: #{distmult_forward.2} parent=11 // pred_check
          %p185 = pneg %p110
        $region18: #{distmult_forward.2} parent=11 // pred_check_branch
          %187 = sbr.rel (%p185) target = $region20
        $region19: #{distmult_forward.2} parent=11 // pred_region
          %s189 = ssub.s32 16, 16
          %190 = vsyncadd [#allocation5], %s189
          %s192 = sshll.u32 [#allocation6], 4
          %s193 = int_to_ptr.vmem [resolvable:$true] %s192
          %195 = dma.hbm_to_vmem [thread:$0]  %s3, 16, %s193, [#allocation5]
        $region20: #{distmult_forward.2} parent=11 // pred_fallthru
          _
        // Predicated region
        $region21: #{distmult_forward.2} parent=11 // pred_check
          %p196 = pneg %p131
        $region22: #{distmult_forward.2} parent=11 // pred_check_branch
          %198 = sbr.rel (%p196) target = $region24
        $region23: #{distmult_forward.2} parent=11 // pred_region
          %s200 = ssub.s32 4096, 4096
          %201 = vsyncadd [#allocation8], %s200
          %s202 = sshll.u32 [#allocation7], 4
          %s203 = int_to_ptr.vmem [resolvable:$true] %s202
          %208 = dma.hbm_to_vmem [thread:$0]  %s4, 4096, %s203, [#allocation8], 256, 256, 16
        $region24: #{distmult_forward.2} parent=11 // pred_fallthru
          _
      $region12: #{distmult_forward.2} parent=5 // pred_fallthru
        _
      %p209 = scmp.lt.s32.totalorder %s16, 2
      // Predicated region
      $region25: #{distmult_forward.2} parent=5 // pred_check
        %p210 = pneg %p209
      $region26: #{distmult_forward.2} parent=5 // pred_check_branch
        %212 = sbr.rel (%p210) target = $region28
      $region27: #{distmult_forward.2} parent=5 // pred_region
        // Predicated region
        $region29: #{distmult_forward.2} parent=27 // pred_check
          %p213 = pneg %p36
        $region30: #{distmult_forward.2} parent=27 // pred_check_branch
          %215 = sbr.rel (%p213) target = $region32
        $region31: #{distmult_forward.2} parent=27 // pred_region
          %s216 = sand.u32 %s26, 1
          %s217 = scalar_lea.sflag [#allocation3], %s216
          %s218 = sand.u32 %s26, 1
          %s219 = smul.addr %s218, 8
          %s220 = scalar_lea.vmem [#allocation2], %s219
          %s222 = ssub.s32 128, 128
          %223 = vsyncadd %s217, %s222
          %s224 = smul.addr %s16, 2
          %s225 = smul.addr %s224, 64
          %s226 = scalar_lea.hbm %s0, %s225
          %s228 = sshll.u32 %s220, 4
          %s229 = int_to_ptr.vmem [resolvable:$true] %s228
          %231 = dma.hbm_to_vmem [thread:$0]  %s226, 128, %s229, %s217
        $region32: #{distmult_forward.2} parent=27 // pred_fallthru
          _
        // Predicated region
        $region33: #{distmult_forward.2} parent=27 // pred_check
          %p232 = pneg %p62
        $region34: #{distmult_forward.2} parent=27 // pred_check_branch
          %234 = sbr.rel (%p232) target = $region36
        $region35: #{distmult_forward.2} parent=27 // pred_region
          %p235 = scmp.lt.s32.totalorder %s16, 1
          %s236 = scalar_select %p235, %s16, 1
          %s237 = smul.addr %s236, 8
          %s238 = scalar_lea.vmem %s1, %s237
        $region36: #{distmult_forward.2} parent=27 // pred_fallthru
          _
      $region28: #{distmult_forward.2} parent=5 // pred_fallthru
        _
      %p239 = scmp.le.s32.totalorder 1, %s16
      %p240 = scmp.lt.s32.totalorder %s16, 3
      %p241 = pnand %p239, %p240
      %p242 = pneg %p241
      // Predicated region
      $region37: #{distmult_forward.2} parent=5 // pred_check
        _
      $region38: #{distmult_forward.2} parent=5 // pred_check_branch
        %244 = sbr.rel (%p241) target = $region40
      $region39: #{distmult_forward.2} parent=5 // pred_region
        %s245 = ssub.s32 %s16, 1
        %s246 = sand.u32 %s29, 1
        %s247 = scalar_lea.sflag [#allocation3], %s246
        %s248 = sand.u32 %s29, 1
        %s249 = smul.addr %s248, 8
        %s250 = scalar_lea.vmem [#allocation2], %s249
        // Predicated region
        $region41: #{distmult_forward.2} parent=39 // pred_check
          %p251 = pneg %p42
        $region42: #{distmult_forward.2} parent=39 // pred_check_branch
          %253 = sbr.rel (%p251) target = $region44
        $region43: #{distmult_forward.2} parent=39 // pred_region
          %254 = dma.done %s247, 128
        $region44: #{distmult_forward.2} parent=39 // pred_fallthru
          _
        // Predicated region
        $region45: #{distmult_forward.2} parent=39 // pred_check
          %p255 = pneg %p89
        $region46: #{distmult_forward.2} parent=39 // pred_check_branch
          %257 = sbr.rel (%p255) target = $region48
        $region47: #{distmult_forward.2} parent=39 // pred_region
          %258 = dma.done [#allocation5], 10240
        $region48: #{distmult_forward.2} parent=39 // pred_fallthru
          _
        // Predicated region
        $region49: #{distmult_forward.2} parent=39 // pred_check
          %p259 = pneg %p110
        $region50: #{distmult_forward.2} parent=39 // pred_check_branch
          %261 = sbr.rel (%p259) target = $region52
        $region51: #{distmult_forward.2} parent=39 // pred_region
          %262 = dma.done [#allocation5], 16
        $region52: #{distmult_forward.2} parent=39 // pred_fallthru
          _
        // Predicated region
        $region53: #{distmult_forward.2} parent=39 // pred_check
          %p263 = pneg %p131
        $region54: #{distmult_forward.2} parent=39 // pred_check_branch
          %265 = sbr.rel (%p263) target = $region56
        $region55: #{distmult_forward.2} parent=39 // pred_region
          %266 = dma.done [#allocation8], 4096
        $region56: #{distmult_forward.2} parent=39 // pred_fallthru
          _
        %s267 = sand.u32 %s29, 1
        %s268 = scalar_lea.sflag [#allocation3], %s267
        %s269 = sand.u32 %s29, 1
        %s270 = smul.addr %s269, 8
        %s271 = scalar_lea.vmem [#allocation2], %s270
        %p272 = pneg %p42
        %p273 = pneg %p39
        %p274 = scmp.lt.s32.totalorder %s21, 1
        %s275 = scalar_select %p274, %s21, 1
        %s276 = smul.addr %s275, 8
        %s277 = scalar_lea.vmem %s1, %s276
        %p278 = pneg %p68
        %p279 = pneg %p65
        %p280 = pneg %p89
        %p281 = pneg %p86
        %p282 = pneg %p110
        %p283 = pneg %p107
        %p284 = pneg %p131
        %p285 = pneg %p128
        %p286 = pneg %p157
        %p287 = pneg %p154
        %p288 = scmp.lt.s32.totalorder %s21, 1
        %s289 = scalar_select %p288, %s21, 1
        %s290 = smul.addr %s289, 4
        %s291 = smul.addr %s290, 4
        %s292 = scalar_lea.vmem %s5, %s291
        %p293 = scmp.lt.s32.totalorder %s21, 1
        %s294 = scalar_select %p293, %s21, 1
        %s295 = smul.addr %s294, 8
        %s296 = scalar_lea.vmem %s1, %s295
        %p297 = scmp.lt.s32.totalorder %s21, 1
        %s298 = scalar_select %p297, %s21, 1
        %s299 = smul.addr %s298, 4
        %s300 = smul.addr %s299, 4
        %s301 = scalar_lea.vmem %s5, %s300
        %v303 = vld [vmem:[%s250] sm:$0xff]
        %v304 = vld [vmem:[#allocation4] sm:$0xff]
        %v305 = vld [vmem:[#allocation4 + $0x8] sm:$0xff]
        %v306 = vld [vmem:[#allocation4 + $0x10] sm:$0xf]
        %v307 = vld [vmem:[#allocation4 + $0x14] sm:$0xff]
        %v308 = vld [vmem:[#allocation4 + $0x1c] sm:$0xff]
        %v309 = vld [vmem:[#allocation4 + $0x24] sm:$0xf]
        %v310 = vld [vmem:[#allocation4 + $0x28] sm:$0xff]
        %v311 = vld [vmem:[#allocation4 + $0x30] sm:$0xff]
        %v312 = vld [vmem:[#allocation4 + $0x38] sm:$0xf]
        %v313 = vld [vmem:[#allocation4 + $0x3c] sm:$0xff]
        %v314 = vld [vmem:[#allocation4 + $0x44] sm:$0xff]
        %v315 = vld [vmem:[#allocation4 + $0x4c] sm:$0xf]
        %v316 = vld [vmem:[#allocation4 + $0x50] sm:$0xff]
        %v317 = vld [vmem:[#allocation4 + $0x58] sm:$0xff]
        %v318 = vld [vmem:[#allocation4 + $0x60] sm:$0xf]
        %v319 = vld [vmem:[#allocation4 + $0x64] sm:$0xff]
        %v320 = vld [vmem:[#allocation4 + $0x6c] sm:$0xff]
        %v321 = vld [vmem:[#allocation4 + $0x74] sm:$0xf]
        %v322 = vld [vmem:[#allocation4 + $0x78] sm:$0xff]
        %v323 = vld [vmem:[#allocation4 + $0x80] sm:$0xff]
        %v324 = vld [vmem:[#allocation4 + $0x88] sm:$0xf]
        %v325 = vld [vmem:[#allocation4 + $0x8c] sm:$0xff]
        %v326 = vld [vmem:[#allocation4 + $0x94] sm:$0xff]
        %v327 = vld [vmem:[#allocation4 + $0x9c] sm:$0xf]
        %v328 = vld [vmem:[#allocation4 + $0xa0] sm:$0xff]
        %v329 = vld [vmem:[#allocation4 + $0xa8] sm:$0xff]
        %v330 = vld [vmem:[#allocation4 + $0xb0] sm:$0xf]
        %v331 = vld [vmem:[#allocation4 + $0xb4] sm:$0xff]
        %v332 = vld [vmem:[#allocation4 + $0xbc] sm:$0xff]
        %v333 = vld [vmem:[#allocation4 + $0xc4] sm:$0xf]
        %v334 = vld [vmem:[#allocation4 + $0xc8] sm:$0xff]
        %v335 = vld [vmem:[#allocation4 + $0xd0] sm:$0xff]
        %v336 = vld [vmem:[#allocation4 + $0xd8] sm:$0xf]
        %v337 = vld [vmem:[#allocation4 + $0xdc] sm:$0xff]
        %v338 = vld [vmem:[#allocation4 + $0xe4] sm:$0xff]
        %v339 = vld [vmem:[#allocation4 + $0xec] sm:$0xf]
        %v340 = vld [vmem:[#allocation4 + $0xf0] sm:$0xff]
        %v341 = vld [vmem:[#allocation4 + $0xf8] sm:$0xff]
        %v342 = vld [vmem:[#allocation4 + $0x100] sm:$0xf]
        %v343 = vld [vmem:[#allocation4 + $0x104] sm:$0xff]
        %v344 = vld [vmem:[#allocation4 + $0x10c] sm:$0xff]
        %v345 = vld [vmem:[#allocation4 + $0x114] sm:$0xf]
        %v346 = vld [vmem:[#allocation4 + $0x118] sm:$0xff]
        %v347 = vld [vmem:[#allocation4 + $0x120] sm:$0xff]
        %v348 = vld [vmem:[#allocation4 + $0x128] sm:$0xf]
        %v349 = vld [vmem:[#allocation4 + $0x12c] sm:$0xff]
        %v350 = vld [vmem:[#allocation4 + $0x134] sm:$0xff]
        %v351 = vld [vmem:[#allocation4 + $0x13c] sm:$0xf]
        %v352 = vld [vmem:[#allocation4 + $0x140] sm:$0xff]
        %v353 = vld [vmem:[#allocation4 + $0x148] sm:$0xff]
        %v354 = vld [vmem:[#allocation4 + $0x150] sm:$0xf]
        %v355 = vld [vmem:[#allocation4 + $0x154] sm:$0xff]
        %v356 = vld [vmem:[#allocation4 + $0x15c] sm:$0xff]
        %v357 = vld [vmem:[#allocation4 + $0x164] sm:$0xf]
        %v358 = vld [vmem:[#allocation4 + $0x168] sm:$0xff]
        %v359 = vld [vmem:[#allocation4 + $0x170] sm:$0xff]
        %v360 = vld [vmem:[#allocation4 + $0x178] sm:$0xf]
        %v361 = vld [vmem:[#allocation4 + $0x17c] sm:$0xff]
        %v362 = vld [vmem:[#allocation4 + $0x184] sm:$0xff]
        %v363 = vld [vmem:[#allocation4 + $0x18c] sm:$0xf]
        %v364 = vld [vmem:[#allocation4 + $0x190] sm:$0xff]
        %v365 = vld [vmem:[#allocation4 + $0x198] sm:$0xff]
        %v366 = vld [vmem:[#allocation4 + $0x1a0] sm:$0xf]
        %v367 = vld [vmem:[#allocation4 + $0x1a4] sm:$0xff]
        %v368 = vld [vmem:[#allocation4 + $0x1ac] sm:$0xff]
        %v369 = vld [vmem:[#allocation4 + $0x1b4] sm:$0xf]
        %v370 = vld [vmem:[#allocation4 + $0x1b8] sm:$0xff]
        %v371 = vld [vmem:[#allocation4 + $0x1c0] sm:$0xff]
        %v372 = vld [vmem:[#allocation4 + $0x1c8] sm:$0xf]
        %v373 = vld [vmem:[#allocation4 + $0x1cc] sm:$0xff]
        %v374 = vld [vmem:[#allocation4 + $0x1d4] sm:$0xff]
        %v375 = vld [vmem:[#allocation4 + $0x1dc] sm:$0xf]
        %v376 = vld [vmem:[#allocation4 + $0x1e0] sm:$0xff]
        %v377 = vld [vmem:[#allocation4 + $0x1e8] sm:$0xff]
        %v378 = vld [vmem:[#allocation4 + $0x1f0] sm:$0xf]
        %v379 = vld [vmem:[#allocation4 + $0x1f4] sm:$0xff]
        %v380 = vld [vmem:[#allocation4 + $0x1fc] sm:$0xff]
        %v381 = vld [vmem:[#allocation4 + $0x204] sm:$0xf]
        %v382 = vld [vmem:[#allocation4 + $0x208] sm:$0xff]
        %v383 = vld [vmem:[#allocation4 + $0x210] sm:$0xff]
        %v384 = vld [vmem:[#allocation4 + $0x218] sm:$0xf]
        %v385 = vld [vmem:[#allocation4 + $0x21c] sm:$0xff]
        %v386 = vld [vmem:[#allocation4 + $0x224] sm:$0xff]
        %v387 = vld [vmem:[#allocation4 + $0x22c] sm:$0xf]
        %v388 = vld [vmem:[#allocation4 + $0x230] sm:$0xff]
        %v389 = vld [vmem:[#allocation4 + $0x238] sm:$0xff]
        %v390 = vld [vmem:[#allocation4 + $0x240] sm:$0xf]
        %v391 = vld [vmem:[#allocation4 + $0x244] sm:$0xff]
        %v392 = vld [vmem:[#allocation4 + $0x24c] sm:$0xff]
        %v393 = vld [vmem:[#allocation4 + $0x254] sm:$0xf]
        %v394 = vld [vmem:[#allocation4 + $0x258] sm:$0xff]
        %v395 = vld [vmem:[#allocation4 + $0x260] sm:$0xff]
        %v396 = vld [vmem:[#allocation4 + $0x268] sm:$0xf]
        %v397 = vld [vmem:[#allocation4 + $0x26c] sm:$0xff]
        %v398 = vld [vmem:[#allocation4 + $0x274] sm:$0xff]
        %v399 = vld [vmem:[#allocation4 + $0x27c] sm:$0xf]
        %v401 = vunpack.c.l.b16 %v303
        %v402 = vunpack.c.h.b16 %v303
        %v403 = vpack.c.b16 %v401, %v401
        %v404 = vpack.c.b16 %v402, %v402
        %v503 = vunpack.c.l.b16 %v304
        %v504 = vunpack.c.h.b16 %v304
        %v505 = vunpack.c.l.b16 %v305
        %v506 = vunpack.c.h.b16 %v305
        %v507 = vunpack.c.l.b16 %v306
        %v508 = vunpack.c.l.b16 %v307
        %v509 = vunpack.c.h.b16 %v307
        %v510 = vunpack.c.l.b16 %v308
        %v511 = vunpack.c.h.b16 %v308
        %v512 = vunpack.c.l.b16 %v309
        %v513 = vunpack.c.l.b16 %v310
        %v514 = vunpack.c.h.b16 %v310
        %v515 = vunpack.c.l.b16 %v311
        %v516 = vunpack.c.h.b16 %v311
        %v517 = vunpack.c.l.b16 %v312
        %v518 = vunpack.c.l.b16 %v313
        %v519 = vunpack.c.h.b16 %v313
        %v520 = vunpack.c.l.b16 %v314
        %v521 = vunpack.c.h.b16 %v314
        %v522 = vunpack.c.l.b16 %v315
        %v523 = vunpack.c.l.b16 %v316
        %v524 = vunpack.c.h.b16 %v316
        %v525 = vunpack.c.l.b16 %v317
        %v526 = vunpack.c.h.b16 %v317
        %v527 = vunpack.c.l.b16 %v318
        %v528 = vunpack.c.l.b16 %v319
        %v529 = vunpack.c.h.b16 %v319
        %v530 = vunpack.c.l.b16 %v320
        %v531 = vunpack.c.h.b16 %v320
        %v532 = vunpack.c.l.b16 %v321
        %v533 = vunpack.c.l.b16 %v322
        %v534 = vunpack.c.h.b16 %v322
        %v535 = vunpack.c.l.b16 %v323
        %v536 = vunpack.c.h.b16 %v323
        %v537 = vunpack.c.l.b16 %v324
        %v538 = vunpack.c.l.b16 %v325
        %v539 = vunpack.c.h.b16 %v325
        %v540 = vunpack.c.l.b16 %v326
        %v541 = vunpack.c.h.b16 %v326
        %v542 = vunpack.c.l.b16 %v327
        %v543 = vunpack.c.l.b16 %v328
        %v544 = vunpack.c.h.b16 %v328
        %v545 = vunpack.c.l.b16 %v329
        %v546 = vunpack.c.h.b16 %v329
        %v547 = vunpack.c.l.b16 %v330
        %v548 = vunpack.c.l.b16 %v331
        %v549 = vunpack.c.h.b16 %v331
        %v550 = vunpack.c.l.b16 %v332
        %v551 = vunpack.c.h.b16 %v332
        %v552 = vunpack.c.l.b16 %v333
        %v553 = vunpack.c.l.b16 %v334
        %v554 = vunpack.c.h.b16 %v334
        %v555 = vunpack.c.l.b16 %v335
        %v556 = vunpack.c.h.b16 %v335
        %v557 = vunpack.c.l.b16 %v336
        %v558 = vunpack.c.l.b16 %v337
        %v559 = vunpack.c.h.b16 %v337
        %v560 = vunpack.c.l.b16 %v338
        %v561 = vunpack.c.h.b16 %v338
        %v562 = vunpack.c.l.b16 %v339
        %v563 = vunpack.c.l.b16 %v340
        %v564 = vunpack.c.h.b16 %v340
        %v565 = vunpack.c.l.b16 %v341
        %v566 = vunpack.c.h.b16 %v341
        %v567 = vunpack.c.l.b16 %v342
        %v568 = vunpack.c.l.b16 %v343
        %v569 = vunpack.c.h.b16 %v343
        %v570 = vunpack.c.l.b16 %v344
        %v571 = vunpack.c.h.b16 %v344
        %v572 = vunpack.c.l.b16 %v345
        %v573 = vunpack.c.l.b16 %v346
        %v574 = vunpack.c.h.b16 %v346
        %v575 = vunpack.c.l.b16 %v347
        %v576 = vunpack.c.h.b16 %v347
        %v577 = vunpack.c.l.b16 %v348
        %v578 = vunpack.c.l.b16 %v349
        %v579 = vunpack.c.h.b16 %v349
        %v580 = vunpack.c.l.b16 %v350
        %v581 = vunpack.c.h.b16 %v350
        %v582 = vunpack.c.l.b16 %v351
        %v583 = vunpack.c.l.b16 %v352
        %v584 = vunpack.c.h.b16 %v352
        %v585 = vunpack.c.l.b16 %v353
        %v586 = vunpack.c.h.b16 %v353
        %v587 = vunpack.c.l.b16 %v354
        %v588 = vunpack.c.l.b16 %v355
        %v589 = vunpack.c.h.b16 %v355
        %v590 = vunpack.c.l.b16 %v356
        %v591 = vunpack.c.h.b16 %v356
        %v592 = vunpack.c.l.b16 %v357
        %v593 = vunpack.c.l.b16 %v358
        %v594 = vunpack.c.h.b16 %v358
        %v595 = vunpack.c.l.b16 %v359
        %v596 = vunpack.c.h.b16 %v359
        %v597 = vunpack.c.l.b16 %v360
        %v598 = vunpack.c.l.b16 %v361
        %v599 = vunpack.c.h.b16 %v361
        %v600 = vunpack.c.l.b16 %v362
        %v601 = vunpack.c.h.b16 %v362
        %v602 = vunpack.c.l.b16 %v363
        %v603 = vunpack.c.l.b16 %v364
        %v604 = vunpack.c.h.b16 %v364
        %v605 = vunpack.c.l.b16 %v365
        %v606 = vunpack.c.h.b16 %v365
        %v607 = vunpack.c.l.b16 %v366
        %v608 = vunpack.c.l.b16 %v367
        %v609 = vunpack.c.h.b16 %v367
        %v610 = vunpack.c.l.b16 %v368
        %v611 = vunpack.c.h.b16 %v368
        %v612 = vunpack.c.l.b16 %v369
        %v613 = vunpack.c.l.b16 %v370
        %v614 = vunpack.c.h.b16 %v370
        %v615 = vunpack.c.l.b16 %v371
        %v616 = vunpack.c.h.b16 %v371
        %v617 = vunpack.c.l.b16 %v372
        %v618 = vunpack.c.l.b16 %v373
        %v619 = vunpack.c.h.b16 %v373
        %v620 = vunpack.c.l.b16 %v374
        %v621 = vunpack.c.h.b16 %v374
        %v622 = vunpack.c.l.b16 %v375
        %v623 = vunpack.c.l.b16 %v376
        %v624 = vunpack.c.h.b16 %v376
        %v625 = vunpack.c.l.b16 %v377
        %v626 = vunpack.c.h.b16 %v377
        %v627 = vunpack.c.l.b16 %v378
        %v628 = vunpack.c.l.b16 %v379
        %v629 = vunpack.c.h.b16 %v379
        %v630 = vunpack.c.l.b16 %v380
        %v631 = vunpack.c.h.b16 %v380
        %v632 = vunpack.c.l.b16 %v381
        %v633 = vunpack.c.l.b16 %v382
        %v634 = vunpack.c.h.b16 %v382
        %v635 = vunpack.c.l.b16 %v383
        %v636 = vunpack.c.h.b16 %v383
        %v637 = vunpack.c.l.b16 %v384
        %v638 = vunpack.c.l.b16 %v385
        %v639 = vunpack.c.h.b16 %v385
        %v640 = vunpack.c.l.b16 %v386
        %v641 = vunpack.c.h.b16 %v386
        %v642 = vunpack.c.l.b16 %v387
        %v643 = vunpack.c.l.b16 %v388
        %v644 = vunpack.c.h.b16 %v388
        %v645 = vunpack.c.l.b16 %v389
        %v646 = vunpack.c.h.b16 %v389
        %v647 = vunpack.c.l.b16 %v390
        %v648 = vunpack.c.l.b16 %v391
        %v649 = vunpack.c.h.b16 %v391
        %v650 = vunpack.c.l.b16 %v392
        %v651 = vunpack.c.h.b16 %v392
        %v652 = vunpack.c.l.b16 %v393
        %v653 = vunpack.c.l.b16 %v394
        %v654 = vunpack.c.h.b16 %v394
        %v655 = vunpack.c.l.b16 %v395
        %v656 = vunpack.c.h.b16 %v395
        %v657 = vunpack.c.l.b16 %v396
        %v658 = vunpack.c.l.b16 %v397
        %v659 = vunpack.c.h.b16 %v397
        %v660 = vunpack.c.l.b16 %v398
        %v661 = vunpack.c.h.b16 %v398
        %v662 = vunpack.c.l.b16 %v399
        %v663 = vpack.c.b16 %v508, %v503
        %v664 = vpack.c.b16 %v509, %v504
        %v665 = vpack.c.b16 %v510, %v505
        %v666 = vpack.c.b16 %v511, %v506
        %v667 = vpack.c.b16 %v512, %v507
        %v668 = vpack.c.b16 %v518, %v513
        %v669 = vpack.c.b16 %v519, %v514
        %v670 = vpack.c.b16 %v520, %v515
        %v671 = vpack.c.b16 %v521, %v516
        %v672 = vpack.c.b16 %v522, %v517
        %v673 = vpack.c.b16 %v528, %v523
        %v674 = vpack.c.b16 %v529, %v524
        %v675 = vpack.c.b16 %v530, %v525
        %v676 = vpack.c.b16 %v531, %v526
        %v677 = vpack.c.b16 %v532, %v527
        %v678 = vpack.c.b16 %v538, %v533
        %v679 = vpack.c.b16 %v539, %v534
        %v680 = vpack.c.b16 %v540, %v535
        %v681 = vpack.c.b16 %v541, %v536
        %v682 = vpack.c.b16 %v542, %v537
        %v683 = vpack.c.b16 %v548, %v543
        %v684 = vpack.c.b16 %v549, %v544
        %v685 = vpack.c.b16 %v550, %v545
        %v686 = vpack.c.b16 %v551, %v546
        %v687 = vpack.c.b16 %v552, %v547
        %v688 = vpack.c.b16 %v558, %v553
        %v689 = vpack.c.b16 %v559, %v554
        %v690 = vpack.c.b16 %v560, %v555
        %v691 = vpack.c.b16 %v561, %v556
        %v692 = vpack.c.b16 %v562, %v557
        %v693 = vpack.c.b16 %v568, %v563
        %v694 = vpack.c.b16 %v569, %v564
        %v695 = vpack.c.b16 %v570, %v565
        %v696 = vpack.c.b16 %v571, %v566
        %v697 = vpack.c.b16 %v572, %v567
        %v698 = vpack.c.b16 %v578, %v573
        %v699 = vpack.c.b16 %v579, %v574
        %v700 = vpack.c.b16 %v580, %v575
        %v701 = vpack.c.b16 %v581, %v576
        %v702 = vpack.c.b16 %v582, %v577
        %v703 = vpack.c.b16 %v588, %v583
        %v704 = vpack.c.b16 %v589, %v584
        %v705 = vpack.c.b16 %v590, %v585
        %v706 = vpack.c.b16 %v591, %v586
        %v707 = vpack.c.b16 %v592, %v587
        %v708 = vpack.c.b16 %v598, %v593
        %v709 = vpack.c.b16 %v599, %v594
        %v710 = vpack.c.b16 %v600, %v595
        %v711 = vpack.c.b16 %v601, %v596
        %v712 = vpack.c.b16 %v602, %v597
        %v713 = vpack.c.b16 %v608, %v603
        %v714 = vpack.c.b16 %v609, %v604
        %v715 = vpack.c.b16 %v610, %v605
        %v716 = vpack.c.b16 %v611, %v606
        %v717 = vpack.c.b16 %v612, %v607
        %v718 = vpack.c.b16 %v618, %v613
        %v719 = vpack.c.b16 %v619, %v614
        %v720 = vpack.c.b16 %v620, %v615
        %v721 = vpack.c.b16 %v621, %v616
        %v722 = vpack.c.b16 %v622, %v617
        %v723 = vpack.c.b16 %v628, %v623
        %v724 = vpack.c.b16 %v629, %v624
        %v725 = vpack.c.b16 %v630, %v625
        %v726 = vpack.c.b16 %v631, %v626
        %v727 = vpack.c.b16 %v632, %v627
        %v728 = vpack.c.b16 %v638, %v633
        %v729 = vpack.c.b16 %v639, %v634
        %v730 = vpack.c.b16 %v640, %v635
        %v731 = vpack.c.b16 %v641, %v636
        %v732 = vpack.c.b16 %v642, %v637
        %v733 = vpack.c.b16 %v648, %v643
        %v734 = vpack.c.b16 %v649, %v644
        %v735 = vpack.c.b16 %v650, %v645
        %v736 = vpack.c.b16 %v651, %v646
        %v737 = vpack.c.b16 %v652, %v647
        %v738 = vpack.c.b16 %v658, %v653
        %v739 = vpack.c.b16 %v659, %v654
        %v740 = vpack.c.b16 %v660, %v655
        %v741 = vpack.c.b16 %v661, %v656
        %v742 = vpack.c.b16 %v662, %v657
        %823 = vmatprep.subr.bf16.mxu0 %v699
        %824 = vmatpush1.bf16.msra.mxu0 %v698
        %825 = vmatprep.subr.bf16.mxu0 %v694
        %826 = vmatpush1.bf16.msra.mxu0 %v693
        %827 = vmatprep.subr.bf16.mxu0 %v689
        %828 = vmatpush1.bf16.msra.mxu0 %v688
        %829 = vmatprep.subr.bf16.mxu0 %v684
        %830 = vmatpush1.bf16.msra.mxu0 %v683
        %831 = vmatprep.subr.bf16.mxu0 %v679
        %832 = vmatpush1.bf16.msra.mxu0 %v678
        %833 = vmatprep.subr.bf16.mxu0 %v674
        %834 = vmatpush1.bf16.msra.mxu0 %v673
        %835 = vmatprep.subr.bf16.mxu0 %v669
        %836 = vmatpush1.bf16.msra.mxu0 %v668
        %837 = vmatprep.subr.bf16.mxu0 %v664
        %838 = vmatpush1.bf16.msra.mxu0 %v663
        %839 = vmatprep.subr.bf16.mxu0 %v739
        %840 = vmatpush2.bf16.msra.mxu0 %v738
        %841 = vmatprep.subr.bf16.mxu0 %v734
        %842 = vmatpush2.bf16.msra.mxu0 %v733
        %843 = vmatprep.subr.bf16.mxu0 %v729
        %844 = vmatpush2.bf16.msra.mxu0 %v728
        %845 = vmatprep.subr.bf16.mxu0 %v724
        %846 = vmatpush2.bf16.msra.mxu0 %v723
        %847 = vmatprep.subr.bf16.mxu0 %v719
        %848 = vmatpush2.bf16.msra.mxu0 %v718
        %849 = vmatprep.subr.bf16.mxu0 %v714
        %850 = vmatpush2.bf16.msra.mxu0 %v713
        %851 = vmatprep.subr.bf16.mxu0 %v709
        %852 = vmatpush2.bf16.msra.mxu0 %v708
        %853 = vmatprep.subr.bf16.mxu0 %v704
        %854 = vmatpush2.bf16.msra.mxu0 %v703
        %855 = vmatprep.mubr.bf16.mxu0 %v404
        %856 = vmatmul.mubr.bf16.gmra.mxu0 %v403
        %v857 = vpop.f32.mrf.mxu0
        %v858 = vadd.f32 0.0, %v857
        %v859 = vpop.f32.mrf.mxu0
        %v860 = vadd.f32 0.0, %v859
        %v861 = vpop.f32.mrf.mxu0
        %v862 = vpop.f32.mrf.mxu0
        %863 = vdwg.mxu0
        %864 = vmatprep.subr.bf16.mxu0 %v701
        %865 = vmatpush1.bf16.msra.mxu0 %v700
        %866 = vmatprep.subr.bf16.mxu0 %v696
        %867 = vmatpush1.bf16.msra.mxu0 %v695
        %868 = vmatprep.subr.bf16.mxu0 %v691
        %869 = vmatpush1.bf16.msra.mxu0 %v690
        %870 = vmatprep.subr.bf16.mxu0 %v686
        %871 = vmatpush1.bf16.msra.mxu0 %v685
        %872 = vmatprep.subr.bf16.mxu0 %v681
        %873 = vmatpush1.bf16.msra.mxu0 %v680
        %874 = vmatprep.subr.bf16.mxu0 %v676
        %875 = vmatpush1.bf16.msra.mxu0 %v675
        %876 = vmatprep.subr.bf16.mxu0 %v671
        %877 = vmatpush1.bf16.msra.mxu0 %v670
        %878 = vmatprep.subr.bf16.mxu0 %v666
        %879 = vmatpush1.bf16.msra.mxu0 %v665
        %880 = vmatprep.subr.bf16.mxu0 %v741
        %881 = vmatpush2.bf16.msra.mxu0 %v740
        %882 = vmatprep.subr.bf16.mxu0 %v736
        %883 = vmatpush2.bf16.msra.mxu0 %v735
        %884 = vmatprep.subr.bf16.mxu0 %v731
        %885 = vmatpush2.bf16.msra.mxu0 %v730
        %886 = vmatprep.subr.bf16.mxu0 %v726
        %887 = vmatpush2.bf16.msra.mxu0 %v725
        %888 = vmatprep.subr.bf16.mxu0 %v721
        %889 = vmatpush2.bf16.msra.mxu0 %v720
        %890 = vmatprep.subr.bf16.mxu0 %v716
        %891 = vmatpush2.bf16.msra.mxu0 %v715
        %892 = vmatprep.subr.bf16.mxu0 %v711
        %893 = vmatpush2.bf16.msra.mxu0 %v710
        %894 = vmatprep.subr.bf16.mxu0 %v706
        %895 = vmatpush2.bf16.msra.mxu0 %v705
        %896 = vmatprep.mubr.bf16.mxu0 %v404
        %897 = vmatmul.mubr.bf16.gmra.mxu0 %v403
        %v898 = vpop.f32.mrf.mxu0
        %v899 = vadd.f32 0.0, %v898
        %v900 = vpop.f32.mrf.mxu0
        %v901 = vadd.f32 0.0, %v900
        %v902 = vpop.f32.mrf.mxu0
        %v903 = vpop.f32.mrf.mxu0
        %904 = vdwg.mxu0
        %905 = vmatprep.subr.bf16.mxu0 0
        %906 = vmatpush1.bf16.msra.mxu0 %v702
        %907 = vmatprep.subr.bf16.mxu0 0
        %908 = vmatpush1.bf16.msra.mxu0 %v697
        %909 = vmatprep.subr.bf16.mxu0 0
        %910 = vmatpush1.bf16.msra.mxu0 %v692
        %911 = vmatprep.subr.bf16.mxu0 0
        %912 = vmatpush1.bf16.msra.mxu0 %v687
        %913 = vmatprep.subr.bf16.mxu0 0
        %914 = vmatpush1.bf16.msra.mxu0 %v682
        %915 = vmatprep.subr.bf16.mxu0 0
        %916 = vmatpush1.bf16.msra.mxu0 %v677
        %917 = vmatprep.subr.bf16.mxu0 0
        %918 = vmatpush1.bf16.msra.mxu0 %v672
        %919 = vmatprep.subr.bf16.mxu0 0
        %920 = vmatpush1.bf16.msra.mxu0 %v667
        %921 = vmatprep.subr.bf16.mxu0 0
        %922 = vmatpush2.bf16.msra.mxu0 %v742
        %923 = vmatprep.subr.bf16.mxu0 0
        %924 = vmatpush2.bf16.msra.mxu0 %v737
        %925 = vmatprep.subr.bf16.mxu0 0
        %926 = vmatpush2.bf16.msra.mxu0 %v732
        %927 = vmatprep.subr.bf16.mxu0 0
        %928 = vmatpush2.bf16.msra.mxu0 %v727
        %929 = vmatprep.subr.bf16.mxu0 0
        %930 = vmatpush2.bf16.msra.mxu0 %v722
        %931 = vmatprep.subr.bf16.mxu0 0
        %932 = vmatpush2.bf16.msra.mxu0 %v717
        %933 = vmatprep.subr.bf16.mxu0 0
        %934 = vmatpush2.bf16.msra.mxu0 %v712
        %935 = vmatprep.subr.bf16.mxu0 0
        %936 = vmatpush2.bf16.msra.mxu0 %v707
        %937 = vmatprep.mubr.bf16.mxu0 %v404
        %938 = vmatmul.mubr.bf16.gmra.mxu0 %v403
        %v939 = vpop.f32.mrf.mxu0
        %v940 = vadd.f32 0.0, %v939
        %v941 = vpop.f32.mrf.mxu0
        %v942 = vpop.f32.mrf.mxu0
        %v943 = vpop.f32.mrf.mxu0
        %944 = vdwg.mxu0
        %v945 = vld [vmem:[#allocation6] sm:$0x1]
        %v947 = vlaneseq
        %v948 = vshrl.u32 %v947, 7
        %v949 = vsub.s32 0, %v948
        %v950 = vrot.slane %v945, %v949
        %v952 = vadd.f32 %v858, %v950
        %v953 = vxor.u32 %v952, 2147483648
        %v954 = vmul.f32 %v953, 1.442695
        %v955 = vpow.pop %v954
        %v956 = vadd.f32 %v955, 1.0
        %v957 = vrcp.pop %v956
        %v958 = vmul.f32 1.0, %v957
        %v959 = vld [vmem:[%s296] sm:$0xff]
        %vm960 = vcmask 261120
        %v961 = vsel %vm960, %v959, 0.0
        %v962 = vmul.f32 %v958, %v961
        %v963 = vpack.c.bf16 %v962, %v962
        %v964 = vld [vmem:[#allocation7] sm:$0xff]
        %v965 = vld [vmem:[#allocation7 + $0x8] sm:$0xff]
        %v966 = vld [vmem:[#allocation7 + $0x10] sm:$0xff]
        %v967 = vld [vmem:[#allocation7 + $0x18] sm:$0xff]
        %v968 = vld [vmem:[#allocation7 + $0x20] sm:$0xff]
        %v969 = vld [vmem:[#allocation7 + $0x28] sm:$0xff]
        %v970 = vld [vmem:[#allocation7 + $0x30] sm:$0xff]
        %v971 = vld [vmem:[#allocation7 + $0x38] sm:$0xff]
        %v972 = vld [vmem:[#allocation7 + $0x40] sm:$0xff]
        %v973 = vld [vmem:[#allocation7 + $0x48] sm:$0xff]
        %v974 = vld [vmem:[#allocation7 + $0x50] sm:$0xff]
        %v975 = vld [vmem:[#allocation7 + $0x58] sm:$0xff]
        %v976 = vld [vmem:[#allocation7 + $0x60] sm:$0xff]
        %v977 = vld [vmem:[#allocation7 + $0x68] sm:$0xff]
        %v978 = vld [vmem:[#allocation7 + $0x70] sm:$0xff]
        %v979 = vld [vmem:[#allocation7 + $0x78] sm:$0xff]
        %v980 = vld [vmem:[#allocation7 + $0x80] sm:$0xff]
        %v981 = vld [vmem:[#allocation7 + $0x88] sm:$0xff]
        %v982 = vld [vmem:[#allocation7 + $0x90] sm:$0xff]
        %v983 = vld [vmem:[#allocation7 + $0x98] sm:$0xff]
        %v984 = vld [vmem:[#allocation7 + $0xa0] sm:$0xff]
        %v985 = vld [vmem:[#allocation7 + $0xa8] sm:$0xff]
        %v986 = vld [vmem:[#allocation7 + $0xb0] sm:$0xff]
        %v987 = vld [vmem:[#allocation7 + $0xb8] sm:$0xff]
        %v988 = vld [vmem:[#allocation7 + $0xc0] sm:$0xff]
        %v989 = vld [vmem:[#allocation7 + $0xc8] sm:$0xff]
        %v990 = vld [vmem:[#allocation7 + $0xd0] sm:$0xff]
        %v991 = vld [vmem:[#allocation7 + $0xd8] sm:$0xff]
        %v992 = vld [vmem:[#allocation7 + $0xe0] sm:$0xff]
        %v993 = vld [vmem:[#allocation7 + $0xe8] sm:$0xff]
        %v994 = vld [vmem:[#allocation7 + $0xf0] sm:$0xff]
        %v995 = vld [vmem:[#allocation7 + $0xf8] sm:$0xff]
        %v1028 = vunpack.c.l.b16 %v964
        %v1029 = vunpack.c.h.b16 %v964
        %v1030 = vunpack.c.l.b16 %v965
        %v1031 = vunpack.c.h.b16 %v965
        %v1032 = vunpack.c.l.b16 %v966
        %v1033 = vunpack.c.h.b16 %v966
        %v1034 = vunpack.c.l.b16 %v967
        %v1035 = vunpack.c.h.b16 %v967
        %v1036 = vunpack.c.l.b16 %v968
        %v1037 = vunpack.c.h.b16 %v968
        %v1038 = vunpack.c.l.b16 %v969
        %v1039 = vunpack.c.h.b16 %v969
        %v1040 = vunpack.c.l.b16 %v970
        %v1041 = vunpack.c.h.b16 %v970
        %v1042 = vunpack.c.l.b16 %v971
        %v1043 = vunpack.c.h.b16 %v971
        %v1044 = vunpack.c.l.b16 %v972
        %v1045 = vunpack.c.h.b16 %v972
        %v1046 = vunpack.c.l.b16 %v973
        %v1047 = vunpack.c.h.b16 %v973
        %v1048 = vunpack.c.l.b16 %v974
        %v1049 = vunpack.c.h.b16 %v974
        %v1050 = vunpack.c.l.b16 %v975
        %v1051 = vunpack.c.h.b16 %v975
        %v1052 = vunpack.c.l.b16 %v976
        %v1053 = vunpack.c.h.b16 %v976
        %v1054 = vunpack.c.l.b16 %v977
        %v1055 = vunpack.c.h.b16 %v977
        %v1056 = vunpack.c.l.b16 %v978
        %v1057 = vunpack.c.h.b16 %v978
        %v1058 = vunpack.c.l.b16 %v979
        %v1059 = vunpack.c.h.b16 %v979
        %v1060 = vunpack.c.l.b16 %v980
        %v1061 = vunpack.c.h.b16 %v980
        %v1062 = vunpack.c.l.b16 %v981
        %v1063 = vunpack.c.h.b16 %v981
        %v1064 = vunpack.c.l.b16 %v982
        %v1065 = vunpack.c.h.b16 %v982
        %v1066 = vunpack.c.l.b16 %v983
        %v1067 = vunpack.c.h.b16 %v983
        %v1068 = vunpack.c.l.b16 %v984
        %v1069 = vunpack.c.h.b16 %v984
        %v1070 = vunpack.c.l.b16 %v985
        %v1071 = vunpack.c.h.b16 %v985
        %v1072 = vunpack.c.l.b16 %v986
        %v1073 = vunpack.c.h.b16 %v986
        %v1074 = vunpack.c.l.b16 %v987
        %v1075 = vunpack.c.h.b16 %v987
        %v1076 = vunpack.c.l.b16 %v988
        %v1077 = vunpack.c.h.b16 %v988
        %v1078 = vunpack.c.l.b16 %v989
        %v1079 = vunpack.c.h.b16 %v989
        %v1080 = vunpack.c.l.b16 %v990
        %v1081 = vunpack.c.h.b16 %v990
        %v1082 = vunpack.c.l.b16 %v991
        %v1083 = vunpack.c.h.b16 %v991
        %v1084 = vunpack.c.l.b16 %v992
        %v1085 = vunpack.c.h.b16 %v992
        %v1086 = vunpack.c.l.b16 %v993
        %v1087 = vunpack.c.h.b16 %v993
        %v1088 = vunpack.c.l.b16 %v994
        %v1089 = vunpack.c.h.b16 %v994
        %v1090 = vunpack.c.l.b16 %v995
        %v1091 = vunpack.c.h.b16 %v995
        %v1092 = vpack.c.b16 %v1032, %v1028
        %v1093 = vpack.c.b16 %v1033, %v1029
        %v1094 = vpack.c.b16 %v1034, %v1030
        %v1095 = vpack.c.b16 %v1035, %v1031
        %v1096 = vpack.c.b16 %v1040, %v1036
        %v1097 = vpack.c.b16 %v1041, %v1037
        %v1098 = vpack.c.b16 %v1042, %v1038
        %v1099 = vpack.c.b16 %v1043, %v1039
        %v1100 = vpack.c.b16 %v1048, %v1044
        %v1101 = vpack.c.b16 %v1049, %v1045
        %v1102 = vpack.c.b16 %v1050, %v1046
        %v1103 = vpack.c.b16 %v1051, %v1047
        %v1104 = vpack.c.b16 %v1056, %v1052
        %v1105 = vpack.c.b16 %v1057, %v1053
        %v1106 = vpack.c.b16 %v1058, %v1054
        %v1107 = vpack.c.b16 %v1059, %v1055
        %v1108 = vpack.c.b16 %v1064, %v1060
        %v1109 = vpack.c.b16 %v1065, %v1061
        %v1110 = vpack.c.b16 %v1066, %v1062
        %v1111 = vpack.c.b16 %v1067, %v1063
        %v1112 = vpack.c.b16 %v1072, %v1068
        %v1113 = vpack.c.b16 %v1073, %v1069
        %v1114 = vpack.c.b16 %v1074, %v1070
        %v1115 = vpack.c.b16 %v1075, %v1071
        %v1116 = vpack.c.b16 %v1080, %v1076
        %v1117 = vpack.c.b16 %v1081, %v1077
        %v1118 = vpack.c.b16 %v1082, %v1078
        %v1119 = vpack.c.b16 %v1083, %v1079
        %v1120 = vpack.c.b16 %v1088, %v1084
        %v1121 = vpack.c.b16 %v1089, %v1085
        %v1122 = vpack.c.b16 %v1090, %v1086
        %v1123 = vpack.c.b16 %v1091, %v1087
        %1156 = vmatprep.subr.bf16.mxu0 %v1121
        %1157 = vmatpush1.bf16.msra.mxu0 %v1120
        %1158 = vmatprep.subr.bf16.mxu0 %v1117
        %1159 = vmatpush1.bf16.msra.mxu0 %v1116
        %1160 = vmatprep.subr.bf16.mxu0 %v1113
        %1161 = vmatpush1.bf16.msra.mxu0 %v1112
        %1162 = vmatprep.subr.bf16.mxu0 %v1109
        %1163 = vmatpush1.bf16.msra.mxu0 %v1108
        %1164 = vmatprep.subr.bf16.mxu0 %v1105
        %1165 = vmatpush1.bf16.msra.mxu0 %v1104
        %1166 = vmatprep.subr.bf16.mxu0 %v1101
        %1167 = vmatpush1.bf16.msra.mxu0 %v1100
        %1168 = vmatprep.subr.bf16.mxu0 %v1097
        %1169 = vmatpush1.bf16.msra.mxu0 %v1096
        %1170 = vmatprep.subr.bf16.mxu0 %v1093
        %1171 = vmatpush1.bf16.msra.mxu0 %v1092
        %1172 = vmatprep.subr.bf16.mxu0 0
        %1173 = vmatpush2.bf16.msra.mxu0 0
        %1174 = vmatprep.subr.bf16.mxu0 0
        %1175 = vmatpush2.bf16.msra.mxu0 0
        %1176 = vmatprep.subr.bf16.mxu0 0
        %1177 = vmatpush2.bf16.msra.mxu0 0
        %1178 = vmatprep.subr.bf16.mxu0 0
        %1179 = vmatpush2.bf16.msra.mxu0 0
        %1180 = vmatprep.subr.bf16.mxu0 0
        %1181 = vmatpush2.bf16.msra.mxu0 0
        %1182 = vmatprep.subr.bf16.mxu0 0
        %1183 = vmatpush2.bf16.msra.mxu0 0
        %1184 = vmatprep.subr.bf16.mxu0 0
        %1185 = vmatpush2.bf16.msra.mxu0 0
        %1186 = vmatprep.subr.bf16.mxu0 0
        %1187 = vmatpush2.bf16.msra.mxu0 0
        %1188 = vmatprep.mubr.bf16.mxu0 0
        %1189 = vmatmul.mubr.bf16.gmra.mxu0 %v963
        %v1190 = vpop.f32.mrf.mxu0
        %v1191 = vadd.f32 0.0, %v1190
        %v1192 = vpop.f32.mrf.mxu0
        %v1193 = vadd.f32 0.0, %v1192
        %v1194 = vpop.f32.mrf.mxu0
        %v1195 = vpop.f32.mrf.mxu0
        %1196 = vdwg.mxu0
        %1197 = vmatprep.subr.bf16.mxu0 %v1123
        %1198 = vmatpush1.bf16.msra.mxu0 %v1122
        %1199 = vmatprep.subr.bf16.mxu0 %v1119
        %1200 = vmatpush1.bf16.msra.mxu0 %v1118
        %1201 = vmatprep.subr.bf16.mxu0 %v1115
        %1202 = vmatpush1.bf16.msra.mxu0 %v1114
        %1203 = vmatprep.subr.bf16.mxu0 %v1111
        %1204 = vmatpush1.bf16.msra.mxu0 %v1110
        %1205 = vmatprep.subr.bf16.mxu0 %v1107
        %1206 = vmatpush1.bf16.msra.mxu0 %v1106
        %1207 = vmatprep.subr.bf16.mxu0 %v1103
        %1208 = vmatpush1.bf16.msra.mxu0 %v1102
        %1209 = vmatprep.subr.bf16.mxu0 %v1099
        %1210 = vmatpush1.bf16.msra.mxu0 %v1098
        %1211 = vmatprep.subr.bf16.mxu0 %v1095
        %1212 = vmatpush1.bf16.msra.mxu0 %v1094
        %1213 = vmatprep.subr.bf16.mxu0 0
        %1214 = vmatpush2.bf16.msra.mxu0 0
        %1215 = vmatprep.subr.bf16.mxu0 0
        %1216 = vmatpush2.bf16.msra.mxu0 0
        %1217 = vmatprep.subr.bf16.mxu0 0
        %1218 = vmatpush2.bf16.msra.mxu0 0
        %1219 = vmatprep.subr.bf16.mxu0 0
        %1220 = vmatpush2.bf16.msra.mxu0 0
        %1221 = vmatprep.subr.bf16.mxu0 0
        %1222 = vmatpush2.bf16.msra.mxu0 0
        %1223 = vmatprep.subr.bf16.mxu0 0
        %1224 = vmatpush2.bf16.msra.mxu0 0
        %1225 = vmatprep.subr.bf16.mxu0 0
        %1226 = vmatpush2.bf16.msra.mxu0 0
        %1227 = vmatprep.subr.bf16.mxu0 0
        %1228 = vmatpush2.bf16.msra.mxu0 0
        %1229 = vmatprep.mubr.bf16.mxu0 0
        %1230 = vmatmul.mubr.bf16.gmra.mxu0 %v963
        %v1231 = vpop.f32.mrf.mxu0
        %v1232 = vadd.f32 0.0, %v1231
        %v1233 = vpop.f32.mrf.mxu0
        %v1234 = vadd.f32 0.0, %v1233
        %v1235 = vpop.f32.mrf.mxu0
        %v1236 = vpop.f32.mrf.mxu0
        %1237 = vdwg.mxu0
        %v1238 = vadd.f32 %v860, %v1191
        %v1239 = vadd.f32 %v899, %v1193
        %v1240 = vadd.f32 %v901, %v1232
        %v1241 = vadd.f32 %v940, %v1234
        %v1242 = vpack.c.bf16 %v1238, %v1238
        %v1243 = vpack.c.bf16 %v1239, %v1239
        %v1244 = vpack.c.bf16 %v1240, %v1240
        %v1245 = vpack.c.bf16 %v1241, %v1241
        %v1250 = vunpack.c.l.b16 %v1242
        %v1251 = vunpack.c.l.b16 %v1243
        %v1252 = vunpack.c.l.b16 %v1244
        %v1253 = vunpack.c.l.b16 %v1245
        %v1254 = vpack.c.b16 %v1251, %v1250
        %v1255 = vpack.c.b16 %v1253, %v1252
        %1258 = vst [vmem:[%s301] sm:$0xff] %v1254
        %1259 = vst [vmem:[%s301 + $0x8] sm:$0xff] %v1255
        %p1260 = scmp.lt.s32.totalorder %s21, 1
        %s1261 = scalar_select %p1260, %s21, 1
        %s1262 = smul.addr %s1261, 4
        %s1263 = smul.addr %s1262, 4
        %s1264 = scalar_lea.vmem %s5, %s1263
        // Predicated region
        $region57: #{distmult_forward.2} parent=39 // pred_check
          %p1265 = pneg %p154
        $region58: #{distmult_forward.2} parent=39 // pred_check_branch
          %1267 = sbr.rel (%p1265) target = $region60
        $region59: #{distmult_forward.2} parent=39 // pred_region
          _
        $region60: #{distmult_forward.2} parent=39 // pred_fallthru
          _
      $region40: #{distmult_forward.2} parent=5 // pred_fallthru
        _
      %p1268 = scmp.le.s32.totalorder 2, %s16
      // Predicated region
      $region61: #{distmult_forward.2} parent=5 // pred_check
        %p1269 = pneg %p1268
      $region62: #{distmult_forward.2} parent=5 // pred_check_branch
        %1271 = sbr.rel (%p1269) target = $region64
      $region63: #{distmult_forward.2} parent=5 // pred_region
        %s1272 = ssub.s32 %s16, 2
        // Predicated region
        $region65: #{distmult_forward.2} parent=63 // pred_check
          %p1273 = pneg %p160
        $region66: #{distmult_forward.2} parent=63 // pred_check_branch
          %1275 = sbr.rel (%p1273) target = $region68
        $region67: #{distmult_forward.2} parent=63 // pred_region
          %p1276 = scmp.lt.s32.totalorder %s22, 1
          %s1277 = scalar_select %p1276, %s22, 1
          %s1278 = smul.addr %s1277, 4
          %s1279 = smul.addr %s1278, 4
          %s1280 = scalar_lea.vmem %s5, %s1279
        $region68: #{distmult_forward.2} parent=63 // pred_fallthru
          _
      $region64: #{distmult_forward.2} parent=5 // pred_fallthru
        _
    $region6: #{distmult_forward.2} parent=1 // loop_footer
      %s20 = sadd.s32 1, %s16
    $region7: #{distmult_forward.2} parent=1 // loop_footer_branch
      %15 = sbr.rel target = $region3
    $region8: #{distmult_forward.2} parent=1 // loop_exit
      _
    %1281 = vsyncpa [#allocation3], 1
    %s1282 = scalar_lea.sflag [#allocation3], 1
    %1283 = vsyncpa %s1282, 1
    %1284 = vsyncpa [#allocation5], 1
    %1285 = vsyncpa [#allocation8], 1

// kernel: distmult_forward.3
$region0: #{distmult_forward.3}
  #allocation0 [shape = 'u32[]', space=smem, size = 0x4, offset = 0x4, fixed_abs, tag = 'smem constant byte address 0x4 - core index']
  #allocation1 [shape = 'u32[144,128]{1,0:T(1,128)}', space=vmem, size = 0x12000, scoped, tag = 'internal scratch']
  #allocation2 [shape = 'f32[1,1]{1,0:T(1,128)S(1)}', space=vmem, size = 0x200, scoped, tag = 'scoped memory for distmult_forward.3']
  %s0 = inlined_call_operand.vmem [shape: f32[8,1], index: 0, kind: input, shape index: {}]
  %s1 = inlined_call_operand.hbm [shape: f32[1,2048], index: 1, kind: input, shape index: {}]
  %s2 = inlined_call_operand.hbm [shape: f32[1,2048], index: 2, kind: input, shape index: {}]
  %s3 = inlined_call_operand.hbm [shape: bf16[2048,1024], index: 3, kind: input, shape index: {}]
  %s4 = inlined_call_operand.hbm [shape: f32[1,1024], index: 4, kind: input, shape index: {}]
  %s5 = inlined_call_operand.hbm [shape: bf16[1024,512], index: 5, kind: input, shape index: {}]
  %s6 = inlined_call_operand.hbm [shape: f32[1,512], index: 6, kind: input, shape index: {}]
  %s7 = inlined_call_operand.hbm [shape: bf16[512,256], index: 7, kind: input, shape index: {}]
  %s8 = inlined_call_operand.hbm [shape: f32[1,256], index: 8, kind: input, shape index: {}]
  %s9 = inlined_call_operand.hbm [shape: bf16[256,128], index: 9, kind: input, shape index: {}]
  %s10 = inlined_call_operand.hbm [shape: f32[1,128], index: 10, kind: input, shape index: {}]
  %s11 = inlined_call_operand.hbm [shape: f32[1,128], index: 11, kind: input, shape index: {}]
  %s12 = inlined_call_operand.<no memory space> [shape: f32[1,1], index: 12, kind: input, shape index: {}]
  %s13 = inlined_call_operand.vmem [shape: f32[8,1], index: 13, kind: output, shape index: {}]
  %s14 = sld [smem:[#allocation0]]
  $region106: #{distmult_forward.3} parent=0
    _
  %s16 = ssub.s32 1, %s14
  %s17 = scalar_select 0, %s16, %s14
  %v18 = vstv %s12
  %19 = vst [vmem:[#allocation2] sm:$0x1] %v18
  $region1: #{distmult_forward.3} parent=0
    #allocation3 [shape = 'u8[8192]{0}', space=vmem, size = 0x2000, scoped, tag = 'input window, operand 1, single buffered']
    #allocation4 [shape = 's32[1]{0}', space=sflag, size = 0x4, scoped, tag = 'scoped memory for distmult_forward.3']
    #allocation5 [shape = 'u8[8192]{0}', space=vmem, size = 0x2000, scoped, tag = 'input window, operand 2, single buffered']
    #allocation6 [shape = 's32[1]{0}', space=sflag, size = 0x4, scoped, tag = 'scoped memory for distmult_forward.3']
    #allocation7 [shape = 'u8[4194304]{0}', space=vmem, size = 0x400000, scoped, tag = 'input window, operand 3, single buffered']
    #allocation8 [shape = 'u8[4096]{0}', space=vmem, size = 0x1000, scoped, tag = 'input window, operand 4, single buffered']
    #allocation9 [shape = 's32[1]{0}', space=sflag, size = 0x4, scoped, tag = 'scoped memory for distmult_forward.3']
    #allocation10 [shape = 'u8[1048576]{0}', space=vmem, size = 0x100000, scoped, tag = 'input window, operand 5, single buffered']
    #allocation11 [shape = 'u8[2048]{0}', space=vmem, size = 0x800, scoped, tag = 'input window, operand 6, single buffered']
    #allocation12 [shape = 's32[1]{0}', space=sflag, size = 0x4, scoped, tag = 'scoped memory for distmult_forward.3']
    #allocation13 [shape = 'u8[262144]{0}', space=vmem, size = 0x40000, scoped, tag = 'input window, operand 7, single buffered']
    #allocation14 [shape = 'u8[1024]{0}', space=vmem, size = 0x400, scoped, tag = 'input window, operand 8, single buffered']
    #allocation15 [shape = 's32[1]{0}', space=sflag, size = 0x4, scoped, tag = 'scoped memory for distmult_forward.3']
    #allocation16 [shape = 'u8[65536]{0}', space=vmem, size = 0x10000, scoped, tag = 'input window, operand 9, single buffered']
    #allocation17 [shape = 'u8[512]{0}', space=vmem, size = 0x400, scoped, tag = 'input window, operand 10, single buffered']
    #allocation18 [shape = 's32[1]{0}', space=sflag, size = 0x4, scoped, tag = 'scoped memory for distmult_forward.3']
    #allocation19 [shape = 'u8[512]{0}', space=vmem, size = 0x400, scoped, tag = 'input window, operand 11, single buffered']
    %20 = vsyncpa [#allocation4], 0
    %21 = vsyncpa [#allocation6], 0
    %22 = vsyncpa [#allocation9], 0
    %23 = vsyncpa [#allocation12], 0
    %24 = vsyncpa [#allocation15], 0
    %25 = vsyncpa [#allocation18], 0
    // Predicated region
    $region2: #{distmult_forward.3} parent=1 // pred_check
      _
    $region3: #{distmult_forward.3} parent=1 // pred_check_branch
      %27 = sbr.rel (0) target = $region5
    $region4: #{distmult_forward.3} parent=1 // pred_region
      _
    $region5: #{distmult_forward.3} parent=1 // pred_fallthru
      _
    // Predicated region
    $region6: #{distmult_forward.3} parent=1 // pred_check
      _
    $region7: #{distmult_forward.3} parent=1 // pred_check_branch
      %29 = sbr.rel (0) target = $region9
    $region8: #{distmult_forward.3} parent=1 // pred_region
      %s31 = ssub.s32 256, 256
      %32 = vsyncadd [#allocation4], %s31
      %s34 = sshll.u32 [#allocation3], 4
      %s35 = int_to_ptr.vmem [resolvable:$true] %s34
      %37 = dma.hbm_to_vmem [thread:$0]  %s1, 256, %s35, [#allocation4]
    $region9: #{distmult_forward.3} parent=1 // pred_fallthru
      _
    // Predicated region
    $region10: #{distmult_forward.3} parent=1 // pred_check
      _
    $region11: #{distmult_forward.3} parent=1 // pred_check_branch
      %39 = sbr.rel (0) target = $region13
    $region12: #{distmult_forward.3} parent=1 // pred_region
      %s41 = ssub.s32 256, 256
      %42 = vsyncadd [#allocation6], %s41
      %s44 = sshll.u32 [#allocation5], 4
      %s45 = int_to_ptr.vmem [resolvable:$true] %s44
      %47 = dma.hbm_to_vmem [thread:$0]  %s2, 256, %s45, [#allocation6]
    $region13: #{distmult_forward.3} parent=1 // pred_fallthru
      _
    // Predicated region
    $region14: #{distmult_forward.3} parent=1 // pred_check
      _
    $region15: #{distmult_forward.3} parent=1 // pred_check_branch
      %49 = sbr.rel (0) target = $region17
    $region16: #{distmult_forward.3} parent=1 // pred_region
      %s51 = ssub.s32 131072, 131072
      %52 = vsyncadd [#allocation6], %s51
      %s53 = sshll.u32 [#allocation7], 4
      %s54 = int_to_ptr.vmem [resolvable:$true] %s53
      %59 = dma.hbm_to_vmem [thread:$0]  %s3, 131072, %s54, [#allocation6], 512, 512, 32
    $region17: #{distmult_forward.3} parent=1 // pred_fallthru
      _
    // Predicated region
    $region18: #{distmult_forward.3} parent=1 // pred_check
      _
    $region19: #{distmult_forward.3} parent=1 // pred_check_branch
      %61 = sbr.rel (0) target = $region21
    $region20: #{distmult_forward.3} parent=1 // pred_region
      %s63 = ssub.s32 128, 128
      %64 = vsyncadd [#allocation9], %s63
      %s66 = sshll.u32 [#allocation8], 4
      %s67 = int_to_ptr.vmem [resolvable:$true] %s66
      %69 = dma.hbm_to_vmem [thread:$0]  %s4, 128, %s67, [#allocation9]
    $region21: #{distmult_forward.3} parent=1 // pred_fallthru
      _
    // Predicated region
    $region22: #{distmult_forward.3} parent=1 // pred_check
      _
    $region23: #{distmult_forward.3} parent=1 // pred_check_branch
      %71 = sbr.rel (0) target = $region25
    $region24: #{distmult_forward.3} parent=1 // pred_region
      %s73 = ssub.s32 32768, 32768
      %74 = vsyncadd [#allocation9], %s73
      %s75 = sshll.u32 [#allocation10], 4
      %s76 = int_to_ptr.vmem [resolvable:$true] %s75
      %81 = dma.hbm_to_vmem [thread:$0]  %s5, 32768, %s76, [#allocation9], 256, 256, 16
    $region25: #{distmult_forward.3} parent=1 // pred_fallthru
      _
    // Predicated region
    $region26: #{distmult_forward.3} parent=1 // pred_check
      _
    $region27: #{distmult_forward.3} parent=1 // pred_check_branch
      %83 = sbr.rel (0) target = $region29
    $region28: #{distmult_forward.3} parent=1 // pred_region
      %s85 = ssub.s32 64, 64
      %86 = vsyncadd [#allocation12], %s85
      %s88 = sshll.u32 [#allocation11], 4
      %s89 = int_to_ptr.vmem [resolvable:$true] %s88
      %91 = dma.hbm_to_vmem [thread:$0]  %s6, 64, %s89, [#allocation12]
    $region29: #{distmult_forward.3} parent=1 // pred_fallthru
      _
    // Predicated region
    $region30: #{distmult_forward.3} parent=1 // pred_check
      _
    $region31: #{distmult_forward.3} parent=1 // pred_check_branch
      %93 = sbr.rel (0) target = $region33
    $region32: #{distmult_forward.3} parent=1 // pred_region
      %s95 = ssub.s32 8192, 8192
      %96 = vsyncadd [#allocation12], %s95
      %s97 = sshll.u32 [#allocation13], 4
      %s98 = int_to_ptr.vmem [resolvable:$true] %s97
      %103 = dma.hbm_to_vmem [thread:$0]  %s7, 8192, %s98, [#allocation12], 128, 128, 8
    $region33: #{distmult_forward.3} parent=1 // pred_fallthru
      _
    // Predicated region
    $region34: #{distmult_forward.3} parent=1 // pred_check
      _
    $region35: #{distmult_forward.3} parent=1 // pred_check_branch
      %105 = sbr.rel (0) target = $region37
    $region36: #{distmult_forward.3} parent=1 // pred_region
      %s107 = ssub.s32 32, 32
      %108 = vsyncadd [#allocation15], %s107
      %s110 = sshll.u32 [#allocation14], 4
      %s111 = int_to_ptr.vmem [resolvable:$true] %s110
      %113 = dma.hbm_to_vmem [thread:$0]  %s8, 32, %s111, [#allocation15]
    $region37: #{distmult_forward.3} parent=1 // pred_fallthru
      _
    // Predicated region
    $region38: #{distmult_forward.3} parent=1 // pred_check
      _
    $region39: #{distmult_forward.3} parent=1 // pred_check_branch
      %115 = sbr.rel (0) target = $region41
    $region40: #{distmult_forward.3} parent=1 // pred_region
      %s117 = ssub.s32 2048, 2048
      %118 = vsyncadd [#allocation15], %s117
      %s119 = sshll.u32 [#allocation16], 4
      %s120 = int_to_ptr.vmem [resolvable:$true] %s119
      %125 = dma.hbm_to_vmem [thread:$0]  %s9, 2048, %s120, [#allocation15], 64, 64, 4
    $region41: #{distmult_forward.3} parent=1 // pred_fallthru
      _
    // Predicated region
    $region42: #{distmult_forward.3} parent=1 // pred_check
      _
    $region43: #{distmult_forward.3} parent=1 // pred_check_branch
      %127 = sbr.rel (0) target = $region45
    $region44: #{distmult_forward.3} parent=1 // pred_region
      %s129 = ssub.s32 16, 16
      %130 = vsyncadd [#allocation18], %s129
      %s132 = sshll.u32 [#allocation17], 4
      %s133 = int_to_ptr.vmem [resolvable:$true] %s132
      %135 = dma.hbm_to_vmem [thread:$0]  %s10, 16, %s133, [#allocation18]
    $region45: #{distmult_forward.3} parent=1 // pred_fallthru
      _
    // Predicated region
    $region46: #{distmult_forward.3} parent=1 // pred_check
      _
    $region47: #{distmult_forward.3} parent=1 // pred_check_branch
      %137 = sbr.rel (0) target = $region49
    $region48: #{distmult_forward.3} parent=1 // pred_region
      %s139 = ssub.s32 16, 16
      %140 = vsyncadd [#allocation18], %s139
      %s142 = sshll.u32 [#allocation19], 4
      %s143 = int_to_ptr.vmem [resolvable:$true] %s142
      %145 = dma.hbm_to_vmem [thread:$0]  %s11, 16, %s143, [#allocation18]
    $region49: #{distmult_forward.3} parent=1 // pred_fallthru
      _
    // Predicated region
    $region50: #{distmult_forward.3} parent=1 // pred_check
      _
    $region51: #{distmult_forward.3} parent=1 // pred_check_branch
      %147 = sbr.rel (0) target = $region53
    $region52: #{distmult_forward.3} parent=1 // pred_region
      _
    $region53: #{distmult_forward.3} parent=1 // pred_fallthru
      _
    // Predicated region
    $region54: #{distmult_forward.3} parent=1 // pred_check
      _
    $region55: #{distmult_forward.3} parent=1 // pred_check_branch
      %149 = sbr.rel (0) target = $region57
    $region56: #{distmult_forward.3} parent=1 // pred_region
      %150 = dma.done [#allocation4], 256
    $region57: #{distmult_forward.3} parent=1 // pred_fallthru
      _
    // Predicated region
    $region58: #{distmult_forward.3} parent=1 // pred_check
      _
    $region59: #{distmult_forward.3} parent=1 // pred_check_branch
      %152 = sbr.rel (0) target = $region61
    $region60: #{distmult_forward.3} parent=1 // pred_region
      %153 = dma.done [#allocation6], 256
    $region61: #{distmult_forward.3} parent=1 // pred_fallthru
      _
    // Predicated region
    $region62: #{distmult_forward.3} parent=1 // pred_check
      _
    $region63: #{distmult_forward.3} parent=1 // pred_check_branch
      %155 = sbr.rel (0) target = $region65
    $region64: #{distmult_forward.3} parent=1 // pred_region
      %156 = dma.done [#allocation6], 131072
    $region65: #{distmult_forward.3} parent=1 // pred_fallthru
      _
    // Predicated region
    $region66: #{distmult_forward.3} parent=1 // pred_check
      _
    $region67: #{distmult_forward.3} parent=1 // pred_check_branch
      %158 = sbr.rel (0) target = $region69
    $region68: #{distmult_forward.3} parent=1 // pred_region
      %159 = dma.done [#allocation9], 128
    $region69: #{distmult_forward.3} parent=1 // pred_fallthru
      _
    // Predicated region
    $region70: #{distmult_forward.3} parent=1 // pred_check
      _
    $region71: #{distmult_forward.3} parent=1 // pred_check_branch
      %161 = sbr.rel (0) target = $region73
    $region72: #{distmult_forward.3} parent=1 // pred_region
      %162 = dma.done [#allocation9], 32768
    $region73: #{distmult_forward.3} parent=1 // pred_fallthru
      _
    // Predicated region
    $region74: #{distmult_forward.3} parent=1 // pred_check
      _
    $region75: #{distmult_forward.3} parent=1 // pred_check_branch
      %164 = sbr.rel (0) target = $region77
    $region76: #{distmult_forward.3} parent=1 // pred_region
      %165 = dma.done [#allocation12], 64
    $region77: #{distmult_forward.3} parent=1 // pred_fallthru
      _
    // Predicated region
    $region78: #{distmult_forward.3} parent=1 // pred_check
      _
    $region79: #{distmult_forward.3} parent=1 // pred_check_branch
      %167 = sbr.rel (0) target = $region81
    $region80: #{distmult_forward.3} parent=1 // pred_region
      %168 = dma.done [#allocation12], 8192
    $region81: #{distmult_forward.3} parent=1 // pred_fallthru
      _
    // Predicated region
    $region82: #{distmult_forward.3} parent=1 // pred_check
      _
    $region83: #{distmult_forward.3} parent=1 // pred_check_branch
      %170 = sbr.rel (0) target = $region85
    $region84: #{distmult_forward.3} parent=1 // pred_region
      %171 = dma.done [#allocation15], 32
    $region85: #{distmult_forward.3} parent=1 // pred_fallthru
      _
    // Predicated region
    $region86: #{distmult_forward.3} parent=1 // pred_check
      _
    $region87: #{distmult_forward.3} parent=1 // pred_check_branch
      %173 = sbr.rel (0) target = $region89
    $region88: #{distmult_forward.3} parent=1 // pred_region
      %174 = dma.done [#allocation15], 2048
    $region89: #{distmult_forward.3} parent=1 // pred_fallthru
      _
    // Predicated region
    $region90: #{distmult_forward.3} parent=1 // pred_check
      _
    $region91: #{distmult_forward.3} parent=1 // pred_check_branch
      %176 = sbr.rel (0) target = $region93
    $region92: #{distmult_forward.3} parent=1 // pred_region
      %177 = dma.done [#allocation18], 16
    $region93: #{distmult_forward.3} parent=1 // pred_fallthru
      _
    // Predicated region
    $region94: #{distmult_forward.3} parent=1 // pred_check
      _
    $region95: #{distmult_forward.3} parent=1 // pred_check_branch
      %179 = sbr.rel (0) target = $region97
    $region96: #{distmult_forward.3} parent=1 // pred_region
      %180 = dma.done [#allocation18], 16
    $region97: #{distmult_forward.3} parent=1 // pred_fallthru
      _
    %v182 = vld [vmem:[%s0] sm:$0xff]
    %v183 = vld [vmem:[#allocation3] sm:$0xff]
    %v184 = vld [vmem:[#allocation3 + $0x8] sm:$0xff]
    %186 = vset.pattern.permute.xlu0 0
    %187 = vperm.xlu0 %186, %v182
    %v188 = vpop.permute.xlu0 %187
    %v192 = vlaneseq
    %v193 = vshrl.u32 %v192, 7
    %v194 = vsub.s32 0, %v193
    %v195 = vrot.slane %v183, %v194
    %v196 = vlaneseq
    %v197 = vshrl.u32 %v196, 7
    %v198 = vsub.s32 1, %v197
    %v199 = vrot.slane %v183, %v198
    %v200 = vlaneseq
    %v201 = vshrl.u32 %v200, 7
    %v202 = vsub.s32 2, %v201
    %v203 = vrot.slane %v183, %v202
    %v204 = vlaneseq
    %v205 = vshrl.u32 %v204, 7
    %v206 = vsub.s32 3, %v205
    %v207 = vrot.slane %v183, %v206
    %v208 = vlaneseq
    %v209 = vshrl.u32 %v208, 7
    %v210 = vsub.s32 4, %v209
    %v211 = vrot.slane %v183, %v210
    %v212 = vlaneseq
    %v213 = vshrl.u32 %v212, 7
    %v214 = vsub.s32 5, %v213
    %v215 = vrot.slane %v183, %v214
    %v216 = vlaneseq
    %v217 = vshrl.u32 %v216, 7
    %v218 = vsub.s32 6, %v217
    %v219 = vrot.slane %v183, %v218
    %v220 = vlaneseq
    %v221 = vshrl.u32 %v220, 7
    %v222 = vsub.s32 7, %v221
    %v223 = vrot.slane %v183, %v222
    %v224 = vlaneseq
    %v225 = vshrl.u32 %v224, 7
    %v226 = vsub.s32 0, %v225
    %v227 = vrot.slane %v184, %v226
    %v228 = vlaneseq
    %v229 = vshrl.u32 %v228, 7
    %v230 = vsub.s32 1, %v229
    %v231 = vrot.slane %v184, %v230
    %v232 = vlaneseq
    %v233 = vshrl.u32 %v232, 7
    %v234 = vsub.s32 2, %v233
    %v235 = vrot.slane %v184, %v234
    %v236 = vlaneseq
    %v237 = vshrl.u32 %v236, 7
    %v238 = vsub.s32 3, %v237
    %v239 = vrot.slane %v184, %v238
    %v240 = vlaneseq
    %v241 = vshrl.u32 %v240, 7
    %v242 = vsub.s32 4, %v241
    %v243 = vrot.slane %v184, %v242
    %v244 = vlaneseq
    %v245 = vshrl.u32 %v244, 7
    %v246 = vsub.s32 5, %v245
    %v247 = vrot.slane %v184, %v246
    %v248 = vlaneseq
    %v249 = vshrl.u32 %v248, 7
    %v250 = vsub.s32 6, %v249
    %v251 = vrot.slane %v184, %v250
    %v252 = vlaneseq
    %v253 = vshrl.u32 %v252, 7
    %v254 = vsub.s32 7, %v253
    %v255 = vrot.slane %v184, %v254
    %v272 = vmul.f32 %v188, %v195
    %v273 = vmul.f32 %v188, %v199
    %v274 = vmul.f32 %v188, %v203
    %v275 = vmul.f32 %v188, %v207
    %v276 = vmul.f32 %v188, %v211
    %v277 = vmul.f32 %v188, %v215
    %v278 = vmul.f32 %v188, %v219
    %v279 = vmul.f32 %v188, %v223
    %v280 = vmul.f32 %v188, %v227
    %v281 = vmul.f32 %v188, %v231
    %v282 = vmul.f32 %v188, %v235
    %v283 = vmul.f32 %v188, %v239
    %v284 = vmul.f32 %v188, %v243
    %v285 = vmul.f32 %v188, %v247
    %v286 = vmul.f32 %v188, %v251
    %v287 = vmul.f32 %v188, %v255
    %v288 = vld [vmem:[#allocation5] sm:$0xff]
    %v289 = vld [vmem:[#allocation5 + $0x8] sm:$0xff]
    %v292 = vlaneseq
    %v293 = vshrl.u32 %v292, 7
    %v294 = vsub.s32 0, %v293
    %v295 = vrot.slane %v288, %v294
    %v296 = vlaneseq
    %v297 = vshrl.u32 %v296, 7
    %v298 = vsub.s32 1, %v297
    %v299 = vrot.slane %v288, %v298
    %v300 = vlaneseq
    %v301 = vshrl.u32 %v300, 7
    %v302 = vsub.s32 2, %v301
    %v303 = vrot.slane %v288, %v302
    %v304 = vlaneseq
    %v305 = vshrl.u32 %v304, 7
    %v306 = vsub.s32 3, %v305
    %v307 = vrot.slane %v288, %v306
    %v308 = vlaneseq
    %v309 = vshrl.u32 %v308, 7
    %v310 = vsub.s32 4, %v309
    %v311 = vrot.slane %v288, %v310
    %v312 = vlaneseq
    %v313 = vshrl.u32 %v312, 7
    %v314 = vsub.s32 5, %v313
    %v315 = vrot.slane %v288, %v314
    %v316 = vlaneseq
    %v317 = vshrl.u32 %v316, 7
    %v318 = vsub.s32 6, %v317
    %v319 = vrot.slane %v288, %v318
    %v320 = vlaneseq
    %v321 = vshrl.u32 %v320, 7
    %v322 = vsub.s32 7, %v321
    %v323 = vrot.slane %v288, %v322
    %v324 = vlaneseq
    %v325 = vshrl.u32 %v324, 7
    %v326 = vsub.s32 0, %v325
    %v327 = vrot.slane %v289, %v326
    %v328 = vlaneseq
    %v329 = vshrl.u32 %v328, 7
    %v330 = vsub.s32 1, %v329
    %v331 = vrot.slane %v289, %v330
    %v332 = vlaneseq
    %v333 = vshrl.u32 %v332, 7
    %v334 = vsub.s32 2, %v333
    %v335 = vrot.slane %v289, %v334
    %v336 = vlaneseq
    %v337 = vshrl.u32 %v336, 7
    %v338 = vsub.s32 3, %v337
    %v339 = vrot.slane %v289, %v338
    %v340 = vlaneseq
    %v341 = vshrl.u32 %v340, 7
    %v342 = vsub.s32 4, %v341
    %v343 = vrot.slane %v289, %v342
    %v344 = vlaneseq
    %v345 = vshrl.u32 %v344, 7
    %v346 = vsub.s32 5, %v345
    %v347 = vrot.slane %v289, %v346
    %v348 = vlaneseq
    %v349 = vshrl.u32 %v348, 7
    %v350 = vsub.s32 6, %v349
    %v351 = vrot.slane %v289, %v350
    %v352 = vlaneseq
    %v353 = vshrl.u32 %v352, 7
    %v354 = vsub.s32 7, %v353
    %v355 = vrot.slane %v289, %v354
    %v372 = vadd.f32 %v272, %v295
    %v373 = vadd.f32 %v273, %v299
    %v374 = vadd.f32 %v274, %v303
    %v375 = vadd.f32 %v275, %v307
    %v376 = vadd.f32 %v276, %v311
    %v377 = vadd.f32 %v277, %v315
    %v378 = vadd.f32 %v278, %v319
    %v379 = vadd.f32 %v279, %v323
    %v380 = vadd.f32 %v280, %v327
    %v381 = vadd.f32 %v281, %v331
    %v382 = vadd.f32 %v282, %v335
    %v383 = vadd.f32 %v283, %v339
    %v384 = vadd.f32 %v284, %v343
    %v385 = vadd.f32 %v285, %v347
    %v386 = vadd.f32 %v286, %v351
    %v387 = vadd.f32 %v287, %v355
    %v388 = vmax.f32 %v372, 0.0
    %v389 = vmax.f32 %v373, 0.0
    %v390 = vmax.f32 %v374, 0.0
    %v391 = vmax.f32 %v375, 0.0
    %v392 = vmax.f32 %v376, 0.0
    %v393 = vmax.f32 %v377, 0.0
    %v394 = vmax.f32 %v378, 0.0
    %v395 = vmax.f32 %v379, 0.0
    %v396 = vmax.f32 %v380, 0.0
    %v397 = vmax.f32 %v381, 0.0
    %v398 = vmax.f32 %v382, 0.0
    %v399 = vmax.f32 %v383, 0.0
    %v400 = vmax.f32 %v384, 0.0
    %v401 = vmax.f32 %v385, 0.0
    %v402 = vmax.f32 %v386, 0.0
    %v403 = vmax.f32 %v387, 0.0
    %v404 = vpack.c.bf16 %v388, %v388
    %v405 = vpack.c.bf16 %v389, %v389
    %v406 = vpack.c.bf16 %v390, %v390
    %v407 = vpack.c.bf16 %v391, %v391
    %v408 = vpack.c.bf16 %v392, %v392
    %v409 = vpack.c.bf16 %v393, %v393
    %v410 = vpack.c.bf16 %v394, %v394
    %v411 = vpack.c.bf16 %v395, %v395
    %v412 = vpack.c.bf16 %v396, %v396
    %v413 = vpack.c.bf16 %v397, %v397
    %v414 = vpack.c.bf16 %v398, %v398
    %v415 = vpack.c.bf16 %v399, %v399
    %v416 = vpack.c.bf16 %v400, %v400
    %v417 = vpack.c.bf16 %v401, %v401
    %v418 = vpack.c.bf16 %v402, %v402
    %v419 = vpack.c.bf16 %v403, %v403
    %v420 = vld [vmem:[#allocation7] sm:$0xff]
    %v421 = vld [vmem:[#allocation7 + $0x8] sm:$0xff]
    %v422 = vld [vmem:[#allocation7 + $0x10] sm:$0xff]
    %v423 = vld [vmem:[#allocation7 + $0x18] sm:$0xff]
    %v424 = vld [vmem:[#allocation7 + $0x20] sm:$0xff]
    %v425 = vld [vmem:[#allocation7 + $0x28] sm:$0xff]
    %v426 = vld [vmem:[#allocation7 + $0x30] sm:$0xff]
    %v427 = vld [vmem:[#allocation7 + $0x38] sm:$0xff]
    %v428 = vld [vmem:[#allocation7 + $0x40] sm:$0xff]
    %v429 = vld [vmem:[#allocation7 + $0x48] sm:$0xff]
    %v430 = vld [vmem:[#allocation7 + $0x50] sm:$0xff]
    %v431 = vld [vmem:[#allocation7 + $0x58] sm:$0xff]
    %v432 = vld [vmem:[#allocation7 + $0x60] sm:$0xff]
    %v433 = vld [vmem:[#allocation7 + $0x68] sm:$0xff]
    %v434 = vld [vmem:[#allocation7 + $0x70] sm:$0xff]
    %v435 = vld [vmem:[#allocation7 + $0x78] sm:$0xff]
    %v436 = vld [vmem:[#allocation7 + $0x80] sm:$0xff]
    %v437 = vld [vmem:[#allocation7 + $0x88] sm:$0xff]
    %v438 = vld [vmem:[#allocation7 + $0x90] sm:$0xff]
    %v439 = vld [vmem:[#allocation7 + $0x98] sm:$0xff]
    %v440 = vld [vmem:[#allocation7 + $0xa0] sm:$0xff]
    %v441 = vld [vmem:[#allocation7 + $0xa8] sm:$0xff]
    %v442 = vld [vmem:[#allocation7 + $0xb0] sm:$0xff]
    %v443 = vld [vmem:[#allocation7 + $0xb8] sm:$0xff]
    %v444 = vld [vmem:[#allocation7 + $0xc0] sm:$0xff]
    %v445 = vld [vmem:[#allocation7 + $0xc8] sm:$0xff]
    %v446 = vld [vmem:[#allocation7 + $0xd0] sm:$0xff]
    %v447 = vld [vmem:[#allocation7 + $0xd8] sm:$0xff]
    %v448 = vld [vmem:[#allocation7 + $0xe0] sm:$0xff]
    %v449 = vld [vmem:[#allocation7 + $0xe8] sm:$0xff]
    %v450 = vld [vmem:[#allocation7 + $0xf0] sm:$0xff]
    %v451 = vld [vmem:[#allocation7 + $0xf8] sm:$0xff]
    %v452 = vld [vmem:[#allocation7 + $0x100] sm:$0xff]
    %v453 = vld [vmem:[#allocation7 + $0x108] sm:$0xff]
    %v454 = vld [vmem:[#allocation7 + $0x110] sm:$0xff]
    %v455 = vld [vmem:[#allocation7 + $0x118] sm:$0xff]
    %v456 = vld [vmem:[#allocation7 + $0x120] sm:$0xff]
    %v457 = vld [vmem:[#allocation7 + $0x128] sm:$0xff]
    %v458 = vld [vmem:[#allocation7 + $0x130] sm:$0xff]
    %v459 = vld [vmem:[#allocation7 + $0x138] sm:$0xff]
    %v460 = vld [vmem:[#allocation7 + $0x140] sm:$0xff]
    %v461 = vld [vmem:[#allocation7 + $0x148] sm:$0xff]
    %v462 = vld [vmem:[#allocation7 + $0x150] sm:$0xff]
    %v463 = vld [vmem:[#allocation7 + $0x158] sm:$0xff]
    %v464 = vld [vmem:[#allocation7 + $0x160] sm:$0xff]
    %v465 = vld [vmem:[#allocation7 + $0x168] sm:$0xff]
    %v466 = vld [vmem:[#allocation7 + $0x170] sm:$0xff]
    %v467 = vld [vmem:[#allocation7 + $0x178] sm:$0xff]
    %v468 = vld [vmem:[#allocation7 + $0x180] sm:$0xff]
    %v469 = vld [vmem:[#allocation7 + $0x188] sm:$0xff]
    %v470 = vld [vmem:[#allocation7 + $0x190] sm:$0xff]
    %v471 = vld [vmem:[#allocation7 + $0x198] sm:$0xff]
    %v472 = vld [vmem:[#allocation7 + $0x1a0] sm:$0xff]
    %v473 = vld [vmem:[#allocation7 + $0x1a8] sm:$0xff]
    %v474 = vld [vmem:[#allocation7 + $0x1b0] sm:$0xff]
    %v475 = vld [vmem:[#allocation7 + $0x1b8] sm:$0xff]
    %v476 = vld [vmem:[#allocation7 + $0x1c0] sm:$0xff]
    %v477 = vld [vmem:[#allocation7 + $0x1c8] sm:$0xff]
    %v478 = vld [vmem:[#allocation7 + $0x1d0] sm:$0xff]
    %v479 = vld [vmem:[#allocation7 + $0x1d8] sm:$0xff]
    %v480 = vld [vmem:[#allocation7 + $0x1e0] sm:$0xff]
    %v481 = vld [vmem:[#allocation7 + $0x1e8] sm:$0xff]
    %v482 = vld [vmem:[#allocation7 + $0x1f0] sm:$0xff]
    %v483 = vld [vmem:[#allocation7 + $0x1f8] sm:$0xff]
    %v484 = vld [vmem:[#allocation7 + $0x200] sm:$0xff]
    %v485 = vld [vmem:[#allocation7 + $0x208] sm:$0xff]
    %v486 = vld [vmem:[#allocation7 + $0x210] sm:$0xff]
    %v487 = vld [vmem:[#allocation7 + $0x218] sm:$0xff]
    %v488 = vld [vmem:[#allocation7 + $0x220] sm:$0xff]
    %v489 = vld [vmem:[#allocation7 + $0x228] sm:$0xff]
    %v490 = vld [vmem:[#allocation7 + $0x230] sm:$0xff]
    %v491 = vld [vmem:[#allocation7 + $0x238] sm:$0xff]
    %v492 = vld [vmem:[#allocation7 + $0x240] sm:$0xff]
    %v493 = vld [vmem:[#allocation7 + $0x248] sm:$0xff]
    %v494 = vld [vmem:[#allocation7 + $0x250] sm:$0xff]
    %v495 = vld [vmem:[#allocation7 + $0x258] sm:$0xff]
    %v496 = vld [vmem:[#allocation7 + $0x260] sm:$0xff]
    %v497 = vld [vmem:[#allocation7 + $0x268] sm:$0xff]
    %v498 = vld [vmem:[#allocation7 + $0x270] sm:$0xff]
    %v499 = vld [vmem:[#allocation7 + $0x278] sm:$0xff]
    %v500 = vld [vmem:[#allocation7 + $0x280] sm:$0xff]
    %v501 = vld [vmem:[#allocation7 + $0x288] sm:$0xff]
    %v502 = vld [vmem:[#allocation7 + $0x290] sm:$0xff]
    %v503 = vld [vmem:[#allocation7 + $0x298] sm:$0xff]
    %v504 = vld [vmem:[#allocation7 + $0x2a0] sm:$0xff]
    %v505 = vld [vmem:[#allocation7 + $0x2a8] sm:$0xff]
    %v506 = vld [vmem:[#allocation7 + $0x2b0] sm:$0xff]
    %v507 = vld [vmem:[#allocation7 + $0x2b8] sm:$0xff]
    %v508 = vld [vmem:[#allocation7 + $0x2c0] sm:$0xff]
    %v509 = vld [vmem:[#allocation7 + $0x2c8] sm:$0xff]
    %v510 = vld [vmem:[#allocation7 + $0x2d0] sm:$0xff]
    %v511 = vld [vmem:[#allocation7 + $0x2d8] sm:$0xff]
    %v512 = vld [vmem:[#allocation7 + $0x2e0] sm:$0xff]
    %v513 = vld [vmem:[#allocation7 + $0x2e8] sm:$0xff]
    %v514 = vld [vmem:[#allocation7 + $0x2f0] sm:$0xff]
    %v515 = vld [vmem:[#allocation7 + $0x2f8] sm:$0xff]
    %v516 = vld [vmem:[#allocation7 + $0x300] sm:$0xff]
    %v517 = vld [vmem:[#allocation7 + $0x308] sm:$0xff]
    %v518 = vld [vmem:[#allocation7 + $0x310] sm:$0xff]
    %v519 = vld [vmem:[#allocation7 + $0x318] sm:$0xff]
    %v520 = vld [vmem:[#allocation7 + $0x320] sm:$0xff]
    %v521 = vld [vmem:[#allocation7 + $0x328] sm:$0xff]
    %v522 = vld [vmem:[#allocation7 + $0x330] sm:$0xff]
    %v523 = vld [vmem:[#allocation7 + $0x338] sm:$0xff]
    %v524 = vld [vmem:[#allocation7 + $0x340] sm:$0xff]
    %v525 = vld [vmem:[#allocation7 + $0x348] sm:$0xff]
    %v526 = vld [vmem:[#allocation7 + $0x350] sm:$0xff]
    %v527 = vld [vmem:[#allocation7 + $0x358] sm:$0xff]
    %v528 = vld [vmem:[#allocation7 + $0x360] sm:$0xff]
    %v529 = vld [vmem:[#allocation7 + $0x368] sm:$0xff]
    %v530 = vld [vmem:[#allocation7 + $0x370] sm:$0xff]
    %v531 = vld [vmem:[#allocation7 + $0x378] sm:$0xff]
    %v532 = vld [vmem:[#allocation7 + $0x380] sm:$0xff]
    %v533 = vld [vmem:[#allocation7 + $0x388] sm:$0xff]
    %v534 = vld [vmem:[#allocation7 + $0x390] sm:$0xff]
    %v535 = vld [vmem:[#allocation7 + $0x398] sm:$0xff]
    %v536 = vld [vmem:[#allocation7 + $0x3a0] sm:$0xff]
    %v537 = vld [vmem:[#allocation7 + $0x3a8] sm:$0xff]
    %v538 = vld [vmem:[#allocation7 + $0x3b0] sm:$0xff]
    %v539 = vld [vmem:[#allocation7 + $0x3b8] sm:$0xff]
    %v540 = vld [vmem:[#allocation7 + $0x3c0] sm:$0xff]
    %v541 = vld [vmem:[#allocation7 + $0x3c8] sm:$0xff]
    %v542 = vld [vmem:[#allocation7 + $0x3d0] sm:$0xff]
    %v543 = vld [vmem:[#allocation7 + $0x3d8] sm:$0xff]
    %v544 = vld [vmem:[#allocation7 + $0x3e0] sm:$0xff]
    %v545 = vld [vmem:[#allocation7 + $0x3e8] sm:$0xff]
    %v546 = vld [vmem:[#allocation7 + $0x3f0] sm:$0xff]
    %v547 = vld [vmem:[#allocation7 + $0x3f8] sm:$0xff]
    %v548 = vld [vmem:[#allocation7 + $0x400] sm:$0xff]
    %v549 = vld [vmem:[#allocation7 + $0x408] sm:$0xff]
    %v550 = vld [vmem:[#allocation7 + $0x410] sm:$0xff]
    %v551 = vld [vmem:[#allocation7 + $0x418] sm:$0xff]
    %v552 = vld [vmem:[#allocation7 + $0x420] sm:$0xff]
    %v553 = vld [vmem:[#allocation7 + $0x428] sm:$0xff]
    %v554 = vld [vmem:[#allocation7 + $0x430] sm:$0xff]
    %v555 = vld [vmem:[#allocation7 + $0x438] sm:$0xff]
    %v556 = vld [vmem:[#allocation7 + $0x440] sm:$0xff]
    %v557 = vld [vmem:[#allocation7 + $0x448] sm:$0xff]
    %v558 = vld [vmem:[#allocation7 + $0x450] sm:$0xff]
    %v559 = vld [vmem:[#allocation7 + $0x458] sm:$0xff]
    %v560 = vld [vmem:[#allocation7 + $0x460] sm:$0xff]
    %v561 = vld [vmem:[#allocation7 + $0x468] sm:$0xff]
    %v562 = vld [vmem:[#allocation7 + $0x470] sm:$0xff]
    %v563 = vld [vmem:[#allocation7 + $0x478] sm:$0xff]
    %v564 = vld [vmem:[#allocation7 + $0x480] sm:$0xff]
    %v565 = vld [vmem:[#allocation7 + $0x488] sm:$0xff]
    %v566 = vld [vmem:[#allocation7 + $0x490] sm:$0xff]
    %v567 = vld [vmem:[#allocation7 + $0x498] sm:$0xff]
    %v568 = vld [vmem:[#allocation7 + $0x4a0] sm:$0xff]
    %v569 = vld [vmem:[#allocation7 + $0x4a8] sm:$0xff]
    %v570 = vld [vmem:[#allocation7 + $0x4b0] sm:$0xff]
    %v571 = vld [vmem:[#allocation7 + $0x4b8] sm:$0xff]
    %v572 = vld [vmem:[#allocation7 + $0x4c0] sm:$0xff]
    %v573 = vld [vmem:[#allocation7 + $0x4c8] sm:$0xff]
    %v574 = vld [vmem:[#allocation7 + $0x4d0] sm:$0xff]
    %v575 = vld [vmem:[#allocation7 + $0x4d8] sm:$0xff]
    %v576 = vld [vmem:[#allocation7 + $0x4e0] sm:$0xff]
    %v577 = vld [vmem:[#allocation7 + $0x4e8] sm:$0xff]
    %v578 = vld [vmem:[#allocation7 + $0x4f0] sm:$0xff]
    %v579 = vld [vmem:[#allocation7 + $0x4f8] sm:$0xff]
    %v580 = vld [vmem:[#allocation7 + $0x500] sm:$0xff]
    %v581 = vld [vmem:[#allocation7 + $0x508] sm:$0xff]
    %v582 = vld [vmem:[#allocation7 + $0x510] sm:$0xff]
    %v583 = vld [vmem:[#allocation7 + $0x518] sm:$0xff]
    %v584 = vld [vmem:[#allocation7 + $0x520] sm:$0xff]
    %v585 = vld [vmem:[#allocation7 + $0x528] sm:$0xff]
    %v586 = vld [vmem:[#allocation7 + $0x530] sm:$0xff]
    %v587 = vld [vmem:[#allocation7 + $0x538] sm:$0xff]
    %v588 = vld [vmem:[#allocation7 + $0x540] sm:$0xff]
    %v589 = vld [vmem:[#allocation7 + $0x548] sm:$0xff]
    %v590 = vld [vmem:[#allocation7 + $0x550] sm:$0xff]
    %v591 = vld [vmem:[#allocation7 + $0x558] sm:$0xff]
    %v592 = vld [vmem:[#allocation7 + $0x560] sm:$0xff]
    %v593 = vld [vmem:[#allocation7 + $0x568] sm:$0xff]
    %v594 = vld [vmem:[#allocation7 + $0x570] sm:$0xff]
    %v595 = vld [vmem:[#allocation7 + $0x578] sm:$0xff]
    %v596 = vld [vmem:[#allocation7 + $0x580] sm:$0xff]
    %v597 = vld [vmem:[#allocation7 + $0x588] sm:$0xff]
    %v598 = vld [vmem:[#allocation7 + $0x590] sm:$0xff]
    %v599 = vld [vmem:[#allocation7 + $0x598] sm:$0xff]
    %v600 = vld [vmem:[#allocation7 + $0x5a0] sm:$0xff]
    %v601 = vld [vmem:[#allocation7 + $0x5a8] sm:$0xff]
    %v602 = vld [vmem:[#allocation7 + $0x5b0] sm:$0xff]
    %v603 = vld [vmem:[#allocation7 + $0x5b8] sm:$0xff]
    %v604 = vld [vmem:[#allocation7 + $0x5c0] sm:$0xff]
    %v605 = vld [vmem:[#allocation7 + $0x5c8] sm:$0xff]
    %v606 = vld [vmem:[#allocation7 + $0x5d0] sm:$0xff]
    %v607 = vld [vmem:[#allocation7 + $0x5d8] sm:$0xff]
    %v608 = vld [vmem:[#allocation7 + $0x5e0] sm:$0xff]
    %v609 = vld [vmem:[#allocation7 + $0x5e8] sm:$0xff]
    %v610 = vld [vmem:[#allocation7 + $0x5f0] sm:$0xff]
    %v611 = vld [vmem:[#allocation7 + $0x5f8] sm:$0xff]
    %v612 = vld [vmem:[#allocation7 + $0x600] sm:$0xff]
    %v613 = vld [vmem:[#allocation7 + $0x608] sm:$0xff]
    %v614 = vld [vmem:[#allocation7 + $0x610] sm:$0xff]
    %v615 = vld [vmem:[#allocation7 + $0x618] sm:$0xff]
    %v616 = vld [vmem:[#allocation7 + $0x620] sm:$0xff]
    %v617 = vld [vmem:[#allocation7 + $0x628] sm:$0xff]
    %v618 = vld [vmem:[#allocation7 + $0x630] sm:$0xff]
    %v619 = vld [vmem:[#allocation7 + $0x638] sm:$0xff]
    %v620 = vld [vmem:[#allocation7 + $0x640] sm:$0xff]
    %v621 = vld [vmem:[#allocation7 + $0x648] sm:$0xff]
    %v622 = vld [vmem:[#allocation7 + $0x650] sm:$0xff]
    %v623 = vld [vmem:[#allocation7 + $0x658] sm:$0xff]
    %v624 = vld [vmem:[#allocation7 + $0x660] sm:$0xff]
    %v625 = vld [vmem:[#allocation7 + $0x668] sm:$0xff]
    %v626 = vld [vmem:[#allocation7 + $0x670] sm:$0xff]
    %v627 = vld [vmem:[#allocation7 + $0x678] sm:$0xff]
    %v628 = vld [vmem:[#allocation7 + $0x680] sm:$0xff]
    %v629 = vld [vmem:[#allocation7 + $0x688] sm:$0xff]
    %v630 = vld [vmem:[#allocation7 + $0x690] sm:$0xff]
    %v631 = vld [vmem:[#allocation7 + $0x698] sm:$0xff]
    %v632 = vld [vmem:[#allocation7 + $0x6a0] sm:$0xff]
    %v633 = vld [vmem:[#allocation7 + $0x6a8] sm:$0xff]
    %v634 = vld [vmem:[#allocation7 + $0x6b0] sm:$0xff]
    %v635 = vld [vmem:[#allocation7 + $0x6b8] sm:$0xff]
    %v636 = vld [vmem:[#allocation7 + $0x6c0] sm:$0xff]
    %v637 = vld [vmem:[#allocation7 + $0x6c8] sm:$0xff]
    %v638 = vld [vmem:[#allocation7 + $0x6d0] sm:$0xff]
    %v639 = vld [vmem:[#allocation7 + $0x6d8] sm:$0xff]
    %v640 = vld [vmem:[#allocation7 + $0x6e0] sm:$0xff]
    %v641 = vld [vmem:[#allocation7 + $0x6e8] sm:$0xff]
    %v642 = vld [vmem:[#allocation7 + $0x6f0] sm:$0xff]
    %v643 = vld [vmem:[#allocation7 + $0x6f8] sm:$0xff]
    %v644 = vld [vmem:[#allocation7 + $0x700] sm:$0xff]
    %v645 = vld [vmem:[#allocation7 + $0x708] sm:$0xff]
    %v646 = vld [vmem:[#allocation7 + $0x710] sm:$0xff]
    %v647 = vld [vmem:[#allocation7 + $0x718] sm:$0xff]
    %v648 = vld [vmem:[#allocation7 + $0x720] sm:$0xff]
    %v649 = vld [vmem:[#allocation7 + $0x728] sm:$0xff]
    %v650 = vld [vmem:[#allocation7 + $0x730] sm:$0xff]
    %v651 = vld [vmem:[#allocation7 + $0x738] sm:$0xff]
    %v652 = vld [vmem:[#allocation7 + $0x740] sm:$0xff]
    %v653 = vld [vmem:[#allocation7 + $0x748] sm:$0xff]
    %v654 = vld [vmem:[#allocation7 + $0x750] sm:$0xff]
    %v655 = vld [vmem:[#allocation7 + $0x758] sm:$0xff]
    %v656 = vld [vmem:[#allocation7 + $0x760] sm:$0xff]
    %v657 = vld [vmem:[#allocation7 + $0x768] sm:$0xff]
    %v658 = vld [vmem:[#allocation7 + $0x770] sm:$0xff]
    %v659 = vld [vmem:[#allocation7 + $0x778] sm:$0xff]
    %v660 = vld [vmem:[#allocation7 + $0x780] sm:$0xff]
    %v661 = vld [vmem:[#allocation7 + $0x788] sm:$0xff]
    %v662 = vld [vmem:[#allocation7 + $0x790] sm:$0xff]
    %v663 = vld [vmem:[#allocation7 + $0x798] sm:$0xff]
    %v664 = vld [vmem:[#allocation7 + $0x7a0] sm:$0xff]
    %v665 = vld [vmem:[#allocation7 + $0x7a8] sm:$0xff]
    %v666 = vld [vmem:[#allocation7 + $0x7b0] sm:$0xff]
    %v667 = vld [vmem:[#allocation7 + $0x7b8] sm:$0xff]
    %v668 = vld [vmem:[#allocation7 + $0x7c0] sm:$0xff]
    %v669 = vld [vmem:[#allocation7 + $0x7c8] sm:$0xff]
    %v670 = vld [vmem:[#allocation7 + $0x7d0] sm:$0xff]
    %v671 = vld [vmem:[#allocation7 + $0x7d8] sm:$0xff]
    %v672 = vld [vmem:[#allocation7 + $0x7e0] sm:$0xff]
    %v673 = vld [vmem:[#allocation7 + $0x7e8] sm:$0xff]
    %v674 = vld [vmem:[#allocation7 + $0x7f0] sm:$0xff]
    %v675 = vld [vmem:[#allocation7 + $0x7f8] sm:$0xff]
    %v676 = vld [vmem:[#allocation7 + $0x800] sm:$0xff]
    %v677 = vld [vmem:[#allocation7 + $0x808] sm:$0xff]
    %v678 = vld [vmem:[#allocation7 + $0x810] sm:$0xff]
    %v679 = vld [vmem:[#allocation7 + $0x818] sm:$0xff]
    %v680 = vld [vmem:[#allocation7 + $0x820] sm:$0xff]
    %v681 = vld [vmem:[#allocation7 + $0x828] sm:$0xff]
    %v682 = vld [vmem:[#allocation7 + $0x830] sm:$0xff]
    %v683 = vld [vmem:[#allocation7 + $0x838] sm:$0xff]
    %v684 = vld [vmem:[#allocation7 + $0x840] sm:$0xff]
    %v685 = vld [vmem:[#allocation7 + $0x848] sm:$0xff]
    %v686 = vld [vmem:[#allocation7 + $0x850] sm:$0xff]
    %v687 = vld [vmem:[#allocation7 + $0x858] sm:$0xff]
    %v688 = vld [vmem:[#allocation7 + $0x860] sm:$0xff]
    %v689 = vld [vmem:[#allocation7 + $0x868] sm:$0xff]
    %v690 = vld [vmem:[#allocation7 + $0x870] sm:$0xff]
    %v691 = vld [vmem:[#allocation7 + $0x878] sm:$0xff]
    %v692 = vld [vmem:[#allocation7 + $0x880] sm:$0xff]
    %v693 = vld [vmem:[#allocation7 + $0x888] sm:$0xff]
    %v694 = vld [vmem:[#allocation7 + $0x890] sm:$0xff]
    %v695 = vld [vmem:[#allocation7 + $0x898] sm:$0xff]
    %v696 = vld [vmem:[#allocation7 + $0x8a0] sm:$0xff]
    %v697 = vld [vmem:[#allocation7 + $0x8a8] sm:$0xff]
    %v698 = vld [vmem:[#allocation7 + $0x8b0] sm:$0xff]
    %v699 = vld [vmem:[#allocation7 + $0x8b8] sm:$0xff]
    %v700 = vld [vmem:[#allocation7 + $0x8c0] sm:$0xff]
    %v701 = vld [vmem:[#allocation7 + $0x8c8] sm:$0xff]
    %v702 = vld [vmem:[#allocation7 + $0x8d0] sm:$0xff]
    %v703 = vld [vmem:[#allocation7 + $0x8d8] sm:$0xff]
    %v704 = vld [vmem:[#allocation7 + $0x8e0] sm:$0xff]
    %v705 = vld [vmem:[#allocation7 + $0x8e8] sm:$0xff]
    %v706 = vld [vmem:[#allocation7 + $0x8f0] sm:$0xff]
    %v707 = vld [vmem:[#allocation7 + $0x8f8] sm:$0xff]
    %v708 = vld [vmem:[#allocation7 + $0x900] sm:$0xff]
    %v709 = vld [vmem:[#allocation7 + $0x908] sm:$0xff]
    %v710 = vld [vmem:[#allocation7 + $0x910] sm:$0xff]
    %v711 = vld [vmem:[#allocation7 + $0x918] sm:$0xff]
    %v712 = vld [vmem:[#allocation7 + $0x920] sm:$0xff]
    %v713 = vld [vmem:[#allocation7 + $0x928] sm:$0xff]
    %v714 = vld [vmem:[#allocation7 + $0x930] sm:$0xff]
    %v715 = vld [vmem:[#allocation7 + $0x938] sm:$0xff]
    %v716 = vld [vmem:[#allocation7 + $0x940] sm:$0xff]
    %v717 = vld [vmem:[#allocation7 + $0x948] sm:$0xff]
    %v718 = vld [vmem:[#allocation7 + $0x950] sm:$0xff]
    %v719 = vld [vmem:[#allocation7 + $0x958] sm:$0xff]
    %v720 = vld [vmem:[#allocation7 + $0x960] sm:$0xff]
    %v721 = vld [vmem:[#allocation7 + $0x968] sm:$0xff]
    %v722 = vld [vmem:[#allocation7 + $0x970] sm:$0xff]
    %v723 = vld [vmem:[#allocation7 + $0x978] sm:$0xff]
    %v724 = vld [vmem:[#allocation7 + $0x980] sm:$0xff]
    %v725 = vld [vmem:[#allocation7 + $0x988] sm:$0xff]
    %v726 = vld [vmem:[#allocation7 + $0x990] sm:$0xff]
    %v727 = vld [vmem:[#allocation7 + $0x998] sm:$0xff]
    %v728 = vld [vmem:[#allocation7 + $0x9a0] sm:$0xff]
    %v729 = vld [vmem:[#allocation7 + $0x9a8] sm:$0xff]
    %v730 = vld [vmem:[#allocation7 + $0x9b0] sm:$0xff]
    %v731 = vld [vmem:[#allocation7 + $0x9b8] sm:$0xff]
    %v732 = vld [vmem:[#allocation7 + $0x9c0] sm:$0xff]
    %v733 = vld [vmem:[#allocation7 + $0x9c8] sm:$0xff]
    %v734 = vld [vmem:[#allocation7 + $0x9d0] sm:$0xff]
    %v735 = vld [vmem:[#allocation7 + $0x9d8] sm:$0xff]
    %v736 = vld [vmem:[#allocation7 + $0x9e0] sm:$0xff]
    %v737 = vld [vmem:[#allocation7 + $0x9e8] sm:$0xff]
    %v738 = vld [vmem:[#allocation7 + $0x9f0] sm:$0xff]
    %v739 = vld [vmem:[#allocation7 + $0x9f8] sm:$0xff]
    %v740 = vld [vmem:[#allocation7 + $0xa00] sm:$0xff]
    %v741 = vld [vmem:[#allocation7 + $0xa08] sm:$0xff]
    %v742 = vld [vmem:[#allocation7 + $0xa10] sm:$0xff]
    %v743 = vld [vmem:[#allocation7 + $0xa18] sm:$0xff]
    %v744 = vld [vmem:[#allocation7 + $0xa20] sm:$0xff]
    %v745 = vld [vmem:[#allocation7 + $0xa28] sm:$0xff]
    %v746 = vld [vmem:[#allocation7 + $0xa30] sm:$0xff]
    %v747 = vld [vmem:[#allocation7 + $0xa38] sm:$0xff]
    %v748 = vld [vmem:[#allocation7 + $0xa40] sm:$0xff]
    %v749 = vld [vmem:[#allocation7 + $0xa48] sm:$0xff]
    %v750 = vld [vmem:[#allocation7 + $0xa50] sm:$0xff]
    %v751 = vld [vmem:[#allocation7 + $0xa58] sm:$0xff]
    %v752 = vld [vmem:[#allocation7 + $0xa60] sm:$0xff]
    %v753 = vld [vmem:[#allocation7 + $0xa68] sm:$0xff]
    %v754 = vld [vmem:[#allocation7 + $0xa70] sm:$0xff]
    %v755 = vld [vmem:[#allocation7 + $0xa78] sm:$0xff]
    %v756 = vld [vmem:[#allocation7 + $0xa80] sm:$0xff]
    %v757 = vld [vmem:[#allocation7 + $0xa88] sm:$0xff]
    %v758 = vld [vmem:[#allocation7 + $0xa90] sm:$0xff]
    %v759 = vld [vmem:[#allocation7 + $0xa98] sm:$0xff]
    %v760 = vld [vmem:[#allocation7 + $0xaa0] sm:$0xff]
    %v761 = vld [vmem:[#allocation7 + $0xaa8] sm:$0xff]
    %v762 = vld [vmem:[#allocation7 + $0xab0] sm:$0xff]
    %v763 = vld [vmem:[#allocation7 + $0xab8] sm:$0xff]
    %v764 = vld [vmem:[#allocation7 + $0xac0] sm:$0xff]
    %v765 = vld [vmem:[#allocation7 + $0xac8] sm:$0xff]
    %v766 = vld [vmem:[#allocation7 + $0xad0] sm:$0xff]
    %v767 = vld [vmem:[#allocation7 + $0xad8] sm:$0xff]
    %v768 = vld [vmem:[#allocation7 + $0xae0] sm:$0xff]
    %v769 = vld [vmem:[#allocation7 + $0xae8] sm:$0xff]
    %v770 = vld [vmem:[#allocation7 + $0xaf0] sm:$0xff]
    %v771 = vld [vmem:[#allocation7 + $0xaf8] sm:$0xff]
    %v772 = vld [vmem:[#allocation7 + $0xb00] sm:$0xff]
    %v773 = vld [vmem:[#allocation7 + $0xb08] sm:$0xff]
    %v774 = vld [vmem:[#allocation7 + $0xb10] sm:$0xff]
    %v775 = vld [vmem:[#allocation7 + $0xb18] sm:$0xff]
    %v776 = vld [vmem:[#allocation7 + $0xb20] sm:$0xff]
    %v777 = vld [vmem:[#allocation7 + $0xb28] sm:$0xff]
    %v778 = vld [vmem:[#allocation7 + $0xb30] sm:$0xff]
    %v779 = vld [vmem:[#allocation7 + $0xb38] sm:$0xff]
    %v780 = vld [vmem:[#allocation7 + $0xb40] sm:$0xff]
    %v781 = vld [vmem:[#allocation7 + $0xb48] sm:$0xff]
    %v782 = vld [vmem:[#allocation7 + $0xb50] sm:$0xff]
    %v783 = vld [vmem:[#allocation7 + $0xb58] sm:$0xff]
    %v784 = vld [vmem:[#allocation7 + $0xb60] sm:$0xff]
    %v785 = vld [vmem:[#allocation7 + $0xb68] sm:$0xff]
    %v786 = vld [vmem:[#allocation7 + $0xb70] sm:$0xff]
    %v787 = vld [vmem:[#allocation7 + $0xb78] sm:$0xff]
    %v788 = vld [vmem:[#allocation7 + $0xb80] sm:$0xff]
    %v789 = vld [vmem:[#allocation7 + $0xb88] sm:$0xff]
    %v790 = vld [vmem:[#allocation7 + $0xb90] sm:$0xff]
    %v791 = vld [vmem:[#allocation7 + $0xb98] sm:$0xff]
    %v792 = vld [vmem:[#allocation7 + $0xba0] sm:$0xff]
    %v793 = vld [vmem:[#allocation7 + $0xba8] sm:$0xff]
    %v794 = vld [vmem:[#allocation7 + $0xbb0] sm:$0xff]
    %v795 = vld [vmem:[#allocation7 + $0xbb8] sm:$0xff]
    %v796 = vld [vmem:[#allocation7 + $0xbc0] sm:$0xff]
    %v797 = vld [vmem:[#allocation7 + $0xbc8] sm:$0xff]
    %v798 = vld [vmem:[#allocation7 + $0xbd0] sm:$0xff]
    %v799 = vld [vmem:[#allocation7 + $0xbd8] sm:$0xff]
    %v800 = vld [vmem:[#allocation7 + $0xbe0] sm:$0xff]
    %v801 = vld [vmem:[#allocation7 + $0xbe8] sm:$0xff]
    %v802 = vld [vmem:[#allocation7 + $0xbf0] sm:$0xff]
    %v803 = vld [vmem:[#allocation7 + $0xbf8] sm:$0xff]
    %v804 = vld [vmem:[#allocation7 + $0xc00] sm:$0xff]
    %v805 = vld [vmem:[#allocation7 + $0xc08] sm:$0xff]
    %v806 = vld [vmem:[#allocation7 + $0xc10] sm:$0xff]
    %v807 = vld [vmem:[#allocation7 + $0xc18] sm:$0xff]
    %v808 = vld [vmem:[#allocation7 + $0xc20] sm:$0xff]
    %v809 = vld [vmem:[#allocation7 + $0xc28] sm:$0xff]
    %v810 = vld [vmem:[#allocation7 + $0xc30] sm:$0xff]
    %v811 = vld [vmem:[#allocation7 + $0xc38] sm:$0xff]
    %v812 = vld [vmem:[#allocation7 + $0xc40] sm:$0xff]
    %v813 = vld [vmem:[#allocation7 + $0xc48] sm:$0xff]
    %v814 = vld [vmem:[#allocation7 + $0xc50] sm:$0xff]
    %v815 = vld [vmem:[#allocation7 + $0xc58] sm:$0xff]
    %v816 = vld [vmem:[#allocation7 + $0xc60] sm:$0xff]
    %v817 = vld [vmem:[#allocation7 + $0xc68] sm:$0xff]
    %v818 = vld [vmem:[#allocation7 + $0xc70] sm:$0xff]
    %v819 = vld [vmem:[#allocation7 + $0xc78] sm:$0xff]
    %v820 = vld [vmem:[#allocation7 + $0xc80] sm:$0xff]
    %v821 = vld [vmem:[#allocation7 + $0xc88] sm:$0xff]
    %v822 = vld [vmem:[#allocation7 + $0xc90] sm:$0xff]
    %v823 = vld [vmem:[#allocation7 + $0xc98] sm:$0xff]
    %v824 = vld [vmem:[#allocation7 + $0xca0] sm:$0xff]
    %v825 = vld [vmem:[#allocation7 + $0xca8] sm:$0xff]
    %v826 = vld [vmem:[#allocation7 + $0xcb0] sm:$0xff]
    %v827 = vld [vmem:[#allocation7 + $0xcb8] sm:$0xff]
    %v828 = vld [vmem:[#allocation7 + $0xcc0] sm:$0xff]
    %v829 = vld [vmem:[#allocation7 + $0xcc8] sm:$0xff]
    %v830 = vld [vmem:[#allocation7 + $0xcd0] sm:$0xff]
    %v831 = vld [vmem:[#allocation7 + $0xcd8] sm:$0xff]
    %v832 = vld [vmem:[#allocation7 + $0xce0] sm:$0xff]
    %v833 = vld [vmem:[#allocation7 + $0xce8] sm:$0xff]
    %v834 = vld [vmem:[#allocation7 + $0xcf0] sm:$0xff]
    %v835 = vld [vmem:[#allocation7 + $0xcf8] sm:$0xff]
    %v836 = vld [vmem:[#allocation7 + $0xd00] sm:$0xff]
    %v837 = vld [vmem:[#allocation7 + $0xd08] sm:$0xff]
    %v838 = vld [vmem:[#allocation7 + $0xd10] sm:$0xff]
    %v839 = vld [vmem:[#allocation7 + $0xd18] sm:$0xff]
    %v840 = vld [vmem:[#allocation7 + $0xd20] sm:$0xff]
    %v841 = vld [vmem:[#allocation7 + $0xd28] sm:$0xff]
    %v842 = vld [vmem:[#allocation7 + $0xd30] sm:$0xff]
    %v843 = vld [vmem:[#allocation7 + $0xd38] sm:$0xff]
    %v844 = vld [vmem:[#allocation7 + $0xd40] sm:$0xff]
    %v845 = vld [vmem:[#allocation7 + $0xd48] sm:$0xff]
    %v846 = vld [vmem:[#allocation7 + $0xd50] sm:$0xff]
    %v847 = vld [vmem:[#allocation7 + $0xd58] sm:$0xff]
    %v848 = vld [vmem:[#allocation7 + $0xd60] sm:$0xff]
    %v849 = vld [vmem:[#allocation7 + $0xd68] sm:$0xff]
    %v850 = vld [vmem:[#allocation7 + $0xd70] sm:$0xff]
    %v851 = vld [vmem:[#allocation7 + $0xd78] sm:$0xff]
    %v852 = vld [vmem:[#allocation7 + $0xd80] sm:$0xff]
    %v853 = vld [vmem:[#allocation7 + $0xd88] sm:$0xff]
    %v854 = vld [vmem:[#allocation7 + $0xd90] sm:$0xff]
    %v855 = vld [vmem:[#allocation7 + $0xd98] sm:$0xff]
    %v856 = vld [vmem:[#allocation7 + $0xda0] sm:$0xff]
    %v857 = vld [vmem:[#allocation7 + $0xda8] sm:$0xff]
    %v858 = vld [vmem:[#allocation7 + $0xdb0] sm:$0xff]
    %v859 = vld [vmem:[#allocation7 + $0xdb8] sm:$0xff]
    %v860 = vld [vmem:[#allocation7 + $0xdc0] sm:$0xff]
    %v861 = vld [vmem:[#allocation7 + $0xdc8] sm:$0xff]
    %v862 = vld [vmem:[#allocation7 + $0xdd0] sm:$0xff]
    %v863 = vld [vmem:[#allocation7 + $0xdd8] sm:$0xff]
    %v864 = vld [vmem:[#allocation7 + $0xde0] sm:$0xff]
    %v865 = vld [vmem:[#allocation7 + $0xde8] sm:$0xff]
    %v866 = vld [vmem:[#allocation7 + $0xdf0] sm:$0xff]
    %v867 = vld [vmem:[#allocation7 + $0xdf8] sm:$0xff]
    %v868 = vld [vmem:[#allocation7 + $0xe00] sm:$0xff]
    %v869 = vld [vmem:[#allocation7 + $0xe08] sm:$0xff]
    %v870 = vld [vmem:[#allocation7 + $0xe10] sm:$0xff]
    %v871 = vld [vmem:[#allocation7 + $0xe18] sm:$0xff]
    %v872 = vld [vmem:[#allocation7 + $0xe20] sm:$0xff]
    %v873 = vld [vmem:[#allocation7 + $0xe28] sm:$0xff]
    %v874 = vld [vmem:[#allocation7 + $0xe30] sm:$0xff]
    %v875 = vld [vmem:[#allocation7 + $0xe38] sm:$0xff]
    %v876 = vld [vmem:[#allocation7 + $0xe40] sm:$0xff]
    %v877 = vld [vmem:[#allocation7 + $0xe48] sm:$0xff]
    %v878 = vld [vmem:[#allocation7 + $0xe50] sm:$0xff]
    %v879 = vld [vmem:[#allocation7 + $0xe58] sm:$0xff]
    %v880 = vld [vmem:[#allocation7 + $0xe60] sm:$0xff]
    %v881 = vld [vmem:[#allocation7 + $0xe68] sm:$0xff]
    %v882 = vld [vmem:[#allocation7 + $0xe70] sm:$0xff]
    %v883 = vld [vmem:[#allocation7 + $0xe78] sm:$0xff]
    %v884 = vld [vmem:[#allocation7 + $0xe80] sm:$0xff]
    %v885 = vld [vmem:[#allocation7 + $0xe88] sm:$0xff]
    %v886 = vld [vmem:[#allocation7 + $0xe90] sm:$0xff]
    %v887 = vld [vmem:[#allocation7 + $0xe98] sm:$0xff]
    %v888 = vld [vmem:[#allocation7 + $0xea0] sm:$0xff]
    %v889 = vld [vmem:[#allocation7 + $0xea8] sm:$0xff]
    %v890 = vld [vmem:[#allocation7 + $0xeb0] sm:$0xff]
    %v891 = vld [vmem:[#allocation7 + $0xeb8] sm:$0xff]
    %v892 = vld [vmem:[#allocation7 + $0xec0] sm:$0xff]
    %v893 = vld [vmem:[#allocation7 + $0xec8] sm:$0xff]
    %v894 = vld [vmem:[#allocation7 + $0xed0] sm:$0xff]
    %v895 = vld [vmem:[#allocation7 + $0xed8] sm:$0xff]
    %v896 = vld [vmem:[#allocation7 + $0xee0] sm:$0xff]
    %v897 = vld [vmem:[#allocation7 + $0xee8] sm:$0xff]
    %v898 = vld [vmem:[#allocation7 + $0xef0] sm:$0xff]
    %v899 = vld [vmem:[#allocation7 + $0xef8] sm:$0xff]
    %v900 = vld [vmem:[#allocation7 + $0xf00] sm:$0xff]
    %v901 = vld [vmem:[#allocation7 + $0xf08] sm:$0xff]
    %v902 = vld [vmem:[#allocation7 + $0xf10] sm:$0xff]
    %v903 = vld [vmem:[#allocation7 + $0xf18] sm:$0xff]
    %v904 = vld [vmem:[#allocation7 + $0xf20] sm:$0xff]
    %v905 = vld [vmem:[#allocation7 + $0xf28] sm:$0xff]
    %v906 = vld [vmem:[#allocation7 + $0xf30] sm:$0xff]
    %v907 = vld [vmem:[#allocation7 + $0xf38] sm:$0xff]
    %v908 = vld [vmem:[#allocation7 + $0xf40] sm:$0xff]
    %v909 = vld [vmem:[#allocation7 + $0xf48] sm:$0xff]
    %v910 = vld [vmem:[#allocation7 + $0xf50] sm:$0xff]
    %v911 = vld [vmem:[#allocation7 + $0xf58] sm:$0xff]
    %v912 = vld [vmem:[#allocation7 + $0xf60] sm:$0xff]
    %v913 = vld [vmem:[#allocation7 + $0xf68] sm:$0xff]
    %v914 = vld [vmem:[#allocation7 + $0xf70] sm:$0xff]
    %v915 = vld [vmem:[#allocation7 + $0xf78] sm:$0xff]
    %v916 = vld [vmem:[#allocation7 + $0xf80] sm:$0xff]
    %v917 = vld [vmem:[#allocation7 + $0xf88] sm:$0xff]
    %v918 = vld [vmem:[#allocation7 + $0xf90] sm:$0xff]
    %v919 = vld [vmem:[#allocation7 + $0xf98] sm:$0xff]
    %v920 = vld [vmem:[#allocation7 + $0xfa0] sm:$0xff]
    %v921 = vld [vmem:[#allocation7 + $0xfa8] sm:$0xff]
    %v922 = vld [vmem:[#allocation7 + $0xfb0] sm:$0xff]
    %v923 = vld [vmem:[#allocation7 + $0xfb8] sm:$0xff]
    %v924 = vld [vmem:[#allocation7 + $0xfc0] sm:$0xff]
    %v925 = vld [vmem:[#allocation7 + $0xfc8] sm:$0xff]
    %v926 = vld [vmem:[#allocation7 + $0xfd0] sm:$0xff]
    %v927 = vld [vmem:[#allocation7 + $0xfd8] sm:$0xff]
    %v928 = vld [vmem:[#allocation7 + $0xfe0] sm:$0xff]
    %v929 = vld [vmem:[#allocation7 + $0xfe8] sm:$0xff]
    %v930 = vld [vmem:[#allocation7 + $0xff0] sm:$0xff]
    %v931 = vld [vmem:[#allocation7 + $0xff8] sm:$0xff]
    %v932 = vld [vmem:[#allocation7 + $0x1000] sm:$0xff]
    %v933 = vld [vmem:[#allocation7 + $0x1008] sm:$0xff]
    %v934 = vld [vmem:[#allocation7 + $0x1010] sm:$0xff]
    %v935 = vld [vmem:[#allocation7 + $0x1018] sm:$0xff]
    %v936 = vld [vmem:[#allocation7 + $0x1020] sm:$0xff]
    %v937 = vld [vmem:[#allocation7 + $0x1028] sm:$0xff]
    %v938 = vld [vmem:[#allocation7 + $0x1030] sm:$0xff]
    %v939 = vld [vmem:[#allocation7 + $0x1038] sm:$0xff]
    %v940 = vld [vmem:[#allocation7 + $0x1040] sm:$0xff]
    %v941 = vld [vmem:[#allocation7 + $0x1048] sm:$0xff]
    %v942 = vld [vmem:[#allocation7 + $0x1050] sm:$0xff]
    %v943 = vld [vmem:[#allocation7 + $0x1058] sm:$0xff]
    %v944 = vld [vmem:[#allocation7 + $0x1060] sm:$0xff]
    %v945 = vld [vmem:[#allocation7 + $0x1068] sm:$0xff]
    %v946 = vld [vmem:[#allocation7 + $0x1070] sm:$0xff]
    %v947 = vld [vmem:[#allocation7 + $0x1078] sm:$0xff]
    %v948 = vld [vmem:[#allocation7 + $0x1080] sm:$0xff]
    %v949 = vld [vmem:[#allocation7 + $0x1088] sm:$0xff]
    %v950 = vld [vmem:[#allocation7 + $0x1090] sm:$0xff]
    %v951 = vld [vmem:[#allocation7 + $0x1098] sm:$0xff]
    %v952 = vld [vmem:[#allocation7 + $0x10a0] sm:$0xff]
    %v953 = vld [vmem:[#allocation7 + $0x10a8] sm:$0xff]
    %v954 = vld [vmem:[#allocation7 + $0x10b0] sm:$0xff]
    %v955 = vld [vmem:[#allocation7 + $0x10b8] sm:$0xff]
    %v956 = vld [vmem:[#allocation7 + $0x10c0] sm:$0xff]
    %v957 = vld [vmem:[#allocation7 + $0x10c8] sm:$0xff]
    %v958 = vld [vmem:[#allocation7 + $0x10d0] sm:$0xff]
    %v959 = vld [vmem:[#allocation7 + $0x10d8] sm:$0xff]
    %v960 = vld [vmem:[#allocation7 + $0x10e0] sm:$0xff]
    %v961 = vld [vmem:[#allocation7 + $0x10e8] sm:$0xff]
    %v962 = vld [vmem:[#allocation7 + $0x10f0] sm:$0xff]
    %v963 = vld [vmem:[#allocation7 + $0x10f8] sm:$0xff]
    %v964 = vld [vmem:[#allocation7 + $0x1100] sm:$0xff]
    %v965 = vld [vmem:[#allocation7 + $0x1108] sm:$0xff]
    %v966 = vld [vmem:[#allocation7 + $0x1110] sm:$0xff]
    %v967 = vld [vmem:[#allocation7 + $0x1118] sm:$0xff]
    %v968 = vld [vmem:[#allocation7 + $0x1120] sm:$0xff]
    %v969 = vld [vmem:[#allocation7 + $0x1128] sm:$0xff]
    %v970 = vld [vmem:[#allocation7 + $0x1130] sm:$0xff]
    %v971 = vld [vmem:[#allocation7 + $0x1138] sm:$0xff]
    %v972 = vld [vmem:[#allocation7 + $0x1140] sm:$0xff]
    %v973 = vld [vmem:[#allocation7 + $0x1148] sm:$0xff]
    %v974 = vld [vmem:[#allocation7 + $0x1150] sm:$0xff]
    %v975 = vld [vmem:[#allocation7 + $0x1158] sm:$0xff]
    %v976 = vld [vmem:[#allocation7 + $0x1160] sm:$0xff]
    %v977 = vld [vmem:[#allocation7 + $0x1168] sm:$0xff]
    %v978 = vld [vmem:[#allocation7 + $0x1170] sm:$0xff]
    %v979 = vld [vmem:[#allocation7 + $0x1178] sm:$0xff]
    %v980 = vld [vmem:[#allocation7 + $0x1180] sm:$0xff]
    %v981 = vld [vmem:[#allocation7 + $0x1188] sm:$0xff]
    %v982 = vld [vmem:[#allocation7 + $0x1190] sm:$0xff]
    %v983 = vld [vmem:[#allocation7 + $0x1198] sm:$0xff]
    %v984 = vld [vmem:[#allocation7 + $0x11a0] sm:$0xff]
    %v985 = vld [vmem:[#allocation7 + $0x11a8] sm:$0xff]
    %v986 = vld [vmem:[#allocation7 + $0x11b0] sm:$0xff]
    %v987 = vld [vmem:[#allocation7 + $0x11b8] sm:$0xff]
    %v988 = vld [vmem:[#allocation7 + $0x11c0] sm:$0xff]
    %v989 = vld [vmem:[#allocation7 + $0x11c8] sm:$0xff]
    %v990 = vld [vmem:[#allocation7 + $0x11d0] sm:$0xff]
    %v991 = vld [vmem:[#allocation7 + $0x11d8] sm:$0xff]
    %v992 = vld [vmem:[#allocation7 + $0x11e0] sm:$0xff]
    %v993 = vld [vmem:[#allocation7 + $0x11e8] sm:$0xff]
    %v994 = vld [vmem:[#allocation7 + $0x11f0] sm:$0xff]
    %v995 = vld [vmem:[#allocation7 + $0x11f8] sm:$0xff]
    %v996 = vld [vmem:[#allocation7 + $0x1200] sm:$0xff]
    %v997 = vld [vmem:[#allocation7 + $0x1208] sm:$0xff]
    %v998 = vld [vmem:[#allocation7 + $0x1210] sm:$0xff]
    %v999 = vld [vmem:[#allocation7 + $0x1218] sm:$0xff]
    %v1000 = vld [vmem:[#allocation7 + $0x1220] sm:$0xff]
    %v1001 = vld [vmem:[#allocation7 + $0x1228] sm:$0xff]
    %v1002 = vld [vmem:[#allocation7 + $0x1230] sm:$0xff]
    %v1003 = vld [vmem:[#allocation7 + $0x1238] sm:$0xff]
    %v1004 = vld [vmem:[#allocation7 + $0x1240] sm:$0xff]
    %v1005 = vld [vmem:[#allocation7 + $0x1248] sm:$0xff]
    %v1006 = vld [vmem:[#allocation7 + $0x1250] sm:$0xff]
    %v1007 = vld [vmem:[#allocation7 + $0x1258] sm:$0xff]
    %v1008 = vld [vmem:[#allocation7 + $0x1260] sm:$0xff]
    %v1009 = vld [vmem:[#allocation7 + $0x1268] sm:$0xff]
    %v1010 = vld [vmem:[#allocation7 + $0x1270] sm:$0xff]
    %v1011 = vld [vmem:[#allocation7 + $0x1278] sm:$0xff]
    %v1012 = vld [vmem:[#allocation7 + $0x1280] sm:$0xff]
    %v1013 = vld [vmem:[#allocation7 + $0x1288] sm:$0xff]
    %v1014 = vld [vmem:[#allocation7 + $0x1290] sm:$0xff]
    %v1015 = vld [vmem:[#allocation7 + $0x1298] sm:$0xff]
    %v1016 = vld [vmem:[#allocation7 + $0x12a0] sm:$0xff]
    %v1017 = vld [vmem:[#allocation7 + $0x12a8] sm:$0xff]
    %v1018 = vld [vmem:[#allocation7 + $0x12b0] sm:$0xff]
    %v1019 = vld [vmem:[#allocation7 + $0x12b8] sm:$0xff]
    %v1020 = vld [vmem:[#allocation7 + $0x12c0] sm:$0xff]
    %v1021 = vld [vmem:[#allocation7 + $0x12c8] sm:$0xff]
    %v1022 = vld [vmem:[#allocation7 + $0x12d0] sm:$0xff]
    %v1023 = vld [vmem:[#allocation7 + $0x12d8] sm:$0xff]
    %v1024 = vld [vmem:[#allocation7 + $0x12e0] sm:$0xff]
    %v1025 = vld [vmem:[#allocation7 + $0x12e8] sm:$0xff]
    %v1026 = vld [vmem:[#allocation7 + $0x12f0] sm:$0xff]
    %v1027 = vld [vmem:[#allocation7 + $0x12f8] sm:$0xff]
    %v1028 = vld [vmem:[#allocation7 + $0x1300] sm:$0xff]
    %v1029 = vld [vmem:[#allocation7 + $0x1308] sm:$0xff]
    %v1030 = vld [vmem:[#allocation7 + $0x1310] sm:$0xff]
    %v1031 = vld [vmem:[#allocation7 + $0x1318] sm:$0xff]
    %v1032 = vld [vmem:[#allocation7 + $0x1320] sm:$0xff]
    %v1033 = vld [vmem:[#allocation7 + $0x1328] sm:$0xff]
    %v1034 = vld [vmem:[#allocation7 + $0x1330] sm:$0xff]
    %v1035 = vld [vmem:[#allocation7 + $0x1338] sm:$0xff]
    %v1036 = vld [vmem:[#allocation7 + $0x1340] sm:$0xff]
    %v1037 = vld [vmem:[#allocation7 + $0x1348] sm:$0xff]
    %v1038 = vld [vmem:[#allocation7 + $0x1350] sm:$0xff]
    %v1039 = vld [vmem:[#allocation7 + $0x1358] sm:$0xff]
    %v1040 = vld [vmem:[#allocation7 + $0x1360] sm:$0xff]
    %v1041 = vld [vmem:[#allocation7 + $0x1368] sm:$0xff]
    %v1042 = vld [vmem:[#allocation7 + $0x1370] sm:$0xff]
    %v1043 = vld [vmem:[#allocation7 + $0x1378] sm:$0xff]
    %v1044 = vld [vmem:[#allocation7 + $0x1380] sm:$0xff]
    %v1045 = vld [vmem:[#allocation7 + $0x1388] sm:$0xff]
    %v1046 = vld [vmem:[#allocation7 + $0x1390] sm:$0xff]
    %v1047 = vld [vmem:[#allocation7 + $0x1398] sm:$0xff]
    %v1048 = vld [vmem:[#allocation7 + $0x13a0] sm:$0xff]
    %v1049 = vld [vmem:[#allocation7 + $0x13a8] sm:$0xff]
    %v1050 = vld [vmem:[#allocation7 + $0x13b0] sm:$0xff]
    %v1051 = vld [vmem:[#allocation7 + $0x13b8] sm:$0xff]
    %v1052 = vld [vmem:[#allocation7 + $0x13c0] sm:$0xff]
    %v1053 = vld [vmem:[#allocation7 + $0x13c8] sm:$0xff]
    %v1054 = vld [vmem:[#allocation7 + $0x13d0] sm:$0xff]
    %v1055 = vld [vmem:[#allocation7 + $0x13d8] sm:$0xff]
    %v1056 = vld [vmem:[#allocation7 + $0x13e0] sm:$0xff]
    %v1057 = vld [vmem:[#allocation7 + $0x13e8] sm:$0xff]
    %v1058 = vld [vmem:[#allocation7 + $0x13f0] sm:$0xff]
    %v1059 = vld [vmem:[#allocation7 + $0x13f8] sm:$0xff]
    %v1060 = vld [vmem:[#allocation7 + $0x1400] sm:$0xff]
    %v1061 = vld [vmem:[#allocation7 + $0x1408] sm:$0xff]
    %v1062 = vld [vmem:[#allocation7 + $0x1410] sm:$0xff]
    %v1063 = vld [vmem:[#allocation7 + $0x1418] sm:$0xff]
    %v1064 = vld [vmem:[#allocation7 + $0x1420] sm:$0xff]
    %v1065 = vld [vmem:[#allocation7 + $0x1428] sm:$0xff]
    %v1066 = vld [vmem:[#allocation7 + $0x1430] sm:$0xff]
    %v1067 = vld [vmem:[#allocation7 + $0x1438] sm:$0xff]
    %v1068 = vld [vmem:[#allocation7 + $0x1440] sm:$0xff]
    %v1069 = vld [vmem:[#allocation7 + $0x1448] sm:$0xff]
    %v1070 = vld [vmem:[#allocation7 + $0x1450] sm:$0xff]
    %v1071 = vld [vmem:[#allocation7 + $0x1458] sm:$0xff]
    %v1072 = vld [vmem:[#allocation7 + $0x1460] sm:$0xff]
    %v1073 = vld [vmem:[#allocation7 + $0x1468] sm:$0xff]
    %v1074 = vld [vmem:[#allocation7 + $0x1470] sm:$0xff]
    %v1075 = vld [vmem:[#allocation7 + $0x1478] sm:$0xff]
    %v1076 = vld [vmem:[#allocation7 + $0x1480] sm:$0xff]
    %v1077 = vld [vmem:[#allocation7 + $0x1488] sm:$0xff]
    %v1078 = vld [vmem:[#allocation7 + $0x1490] sm:$0xff]
    %v1079 = vld [vmem:[#allocation7 + $0x1498] sm:$0xff]
    %v1080 = vld [vmem:[#allocation7 + $0x14a0] sm:$0xff]
    %v1081 = vld [vmem:[#allocation7 + $0x14a8] sm:$0xff]
    %v1082 = vld [vmem:[#allocation7 + $0x14b0] sm:$0xff]
    %v1083 = vld [vmem:[#allocation7 + $0x14b8] sm:$0xff]
    %v1084 = vld [vmem:[#allocation7 + $0x14c0] sm:$0xff]
    %v1085 = vld [vmem:[#allocation7 + $0x14c8] sm:$0xff]
    %v1086 = vld [vmem:[#allocation7 + $0x14d0] sm:$0xff]
    %v1087 = vld [vmem:[#allocation7 + $0x14d8] sm:$0xff]
    %v1088 = vld [vmem:[#allocation7 + $0x14e0] sm:$0xff]
    %v1089 = vld [vmem:[#allocation7 + $0x14e8] sm:$0xff]
    %v1090 = vld [vmem:[#allocation7 + $0x14f0] sm:$0xff]
    %v1091 = vld [vmem:[#allocation7 + $0x14f8] sm:$0xff]
    %v1092 = vld [vmem:[#allocation7 + $0x1500] sm:$0xff]
    %v1093 = vld [vmem:[#allocation7 + $0x1508] sm:$0xff]
    %v1094 = vld [vmem:[#allocation7 + $0x1510] sm:$0xff]
    %v1095 = vld [vmem:[#allocation7 + $0x1518] sm:$0xff]
    %v1096 = vld [vmem:[#allocation7 + $0x1520] sm:$0xff]
    %v1097 = vld [vmem:[#allocation7 + $0x1528] sm:$0xff]
    %v1098 = vld [vmem:[#allocation7 + $0x1530] sm:$0xff]
    %v1099 = vld [vmem:[#allocation7 + $0x1538] sm:$0xff]
    %v1100 = vld [vmem:[#allocation7 + $0x1540] sm:$0xff]
    %v1101 = vld [vmem:[#allocation7 + $0x1548] sm:$0xff]
    %v1102 = vld [vmem:[#allocation7 + $0x1550] sm:$0xff]
    %v1103 = vld [vmem:[#allocation7 + $0x1558] sm:$0xff]
    %v1104 = vld [vmem:[#allocation7 + $0x1560] sm:$0xff]
    %v1105 = vld [vmem:[#allocation7 + $0x1568] sm:$0xff]
    %v1106 = vld [vmem:[#allocation7 + $0x1570] sm:$0xff]
    %v1107 = vld [vmem:[#allocation7 + $0x1578] sm:$0xff]
    %v1108 = vld [vmem:[#allocation7 + $0x1580] sm:$0xff]
    %v1109 = vld [vmem:[#allocation7 + $0x1588] sm:$0xff]
    %v1110 = vld [vmem:[#allocation7 + $0x1590] sm:$0xff]
    %v1111 = vld [vmem:[#allocation7 + $0x1598] sm:$0xff]
    %v1112 = vld [vmem:[#allocation7 + $0x15a0] sm:$0xff]
    %v1113 = vld [vmem:[#allocation7 + $0x15a8] sm:$0xff]
    %v1114 = vld [vmem:[#allocation7 + $0x15b0] sm:$0xff]
    %v1115 = vld [vmem:[#allocation7 + $0x15b8] sm:$0xff]
    %v1116 = vld [vmem:[#allocation7 + $0x15c0] sm:$0xff]
    %v1117 = vld [vmem:[#allocation7 + $0x15c8] sm:$0xff]
    %v1118 = vld [vmem:[#allocation7 + $0x15d0] sm:$0xff]
    %v1119 = vld [vmem:[#allocation7 + $0x15d8] sm:$0xff]
    %v1120 = vld [vmem:[#allocation7 + $0x15e0] sm:$0xff]
    %v1121 = vld [vmem:[#allocation7 + $0x15e8] sm:$0xff]
    %v1122 = vld [vmem:[#allocation7 + $0x15f0] sm:$0xff]
    %v1123 = vld [vmem:[#allocation7 + $0x15f8] sm:$0xff]
    %v1124 = vld [vmem:[#allocation7 + $0x1600] sm:$0xff]
    %v1125 = vld [vmem:[#allocation7 + $0x1608] sm:$0xff]
    %v1126 = vld [vmem:[#allocation7 + $0x1610] sm:$0xff]
    %v1127 = vld [vmem:[#allocation7 + $0x1618] sm:$0xff]
    %v1128 = vld [vmem:[#allocation7 + $0x1620] sm:$0xff]
    %v1129 = vld [vmem:[#allocation7 + $0x1628] sm:$0xff]
    %v1130 = vld [vmem:[#allocation7 + $0x1630] sm:$0xff]
    %v1131 = vld [vmem:[#allocation7 + $0x1638] sm:$0xff]
    %v1132 = vld [vmem:[#allocation7 + $0x1640] sm:$0xff]
    %v1133 = vld [vmem:[#allocation7 + $0x1648] sm:$0xff]
    %v1134 = vld [vmem:[#allocation7 + $0x1650] sm:$0xff]
    %v1135 = vld [vmem:[#allocation7 + $0x1658] sm:$0xff]
    %v1136 = vld [vmem:[#allocation7 + $0x1660] sm:$0xff]
    %v1137 = vld [vmem:[#allocation7 + $0x1668] sm:$0xff]
    %v1138 = vld [vmem:[#allocation7 + $0x1670] sm:$0xff]
    %v1139 = vld [vmem:[#allocation7 + $0x1678] sm:$0xff]
    %v1140 = vld [vmem:[#allocation7 + $0x1680] sm:$0xff]
    %v1141 = vld [vmem:[#allocation7 + $0x1688] sm:$0xff]
    %v1142 = vld [vmem:[#allocation7 + $0x1690] sm:$0xff]
    %v1143 = vld [vmem:[#allocation7 + $0x1698] sm:$0xff]
    %v1144 = vld [vmem:[#allocation7 + $0x16a0] sm:$0xff]
    %v1145 = vld [vmem:[#allocation7 + $0x16a8] sm:$0xff]
    %v1146 = vld [vmem:[#allocation7 + $0x16b0] sm:$0xff]
    %v1147 = vld [vmem:[#allocation7 + $0x16b8] sm:$0xff]
    %v1148 = vld [vmem:[#allocation7 + $0x16c0] sm:$0xff]
    %v1149 = vld [vmem:[#allocation7 + $0x16c8] sm:$0xff]
    %v1150 = vld [vmem:[#allocation7 + $0x16d0] sm:$0xff]
    %v1151 = vld [vmem:[#allocation7 + $0x16d8] sm:$0xff]
    %v1152 = vld [vmem:[#allocation7 + $0x16e0] sm:$0xff]
    %v1153 = vld [vmem:[#allocation7 + $0x16e8] sm:$0xff]
    %v1154 = vld [vmem:[#allocation7 + $0x16f0] sm:$0xff]
    %v1155 = vld [vmem:[#allocation7 + $0x16f8] sm:$0xff]
    %v1156 = vld [vmem:[#allocation7 + $0x1700] sm:$0xff]
    %v1157 = vld [vmem:[#allocation7 + $0x1708] sm:$0xff]
    %v1158 = vld [vmem:[#allocation7 + $0x1710] sm:$0xff]
    %v1159 = vld [vmem:[#allocation7 + $0x1718] sm:$0xff]
    %v1160 = vld [vmem:[#allocation7 + $0x1720] sm:$0xff]
    %v1161 = vld [vmem:[#allocation7 + $0x1728] sm:$0xff]
    %v1162 = vld [vmem:[#allocation7 + $0x1730] sm:$0xff]
    %v1163 = vld [vmem:[#allocation7 + $0x1738] sm:$0xff]
    %v1164 = vld [vmem:[#allocation7 + $0x1740] sm:$0xff]
    %v1165 = vld [vmem:[#allocation7 + $0x1748] sm:$0xff]
    %v1166 = vld [vmem:[#allocation7 + $0x1750] sm:$0xff]
    %v1167 = vld [vmem:[#allocation7 + $0x1758] sm:$0xff]
    %v1168 = vld [vmem:[#allocation7 + $0x1760] sm:$0xff]
    %v1169 = vld [vmem:[#allocation7 + $0x1768] sm:$0xff]
    %v1170 = vld [vmem:[#allocation7 + $0x1770] sm:$0xff]
    %v1171 = vld [vmem:[#allocation7 + $0x1778] sm:$0xff]
    %v1172 = vld [vmem:[#allocation7 + $0x1780] sm:$0xff]
    %v1173 = vld [vmem:[#allocation7 + $0x1788] sm:$0xff]
    %v1174 = vld [vmem:[#allocation7 + $0x1790] sm:$0xff]
    %v1175 = vld [vmem:[#allocation7 + $0x1798] sm:$0xff]
    %v1176 = vld [vmem:[#allocation7 + $0x17a0] sm:$0xff]
    %v1177 = vld [vmem:[#allocation7 + $0x17a8] sm:$0xff]
    %v1178 = vld [vmem:[#allocation7 + $0x17b0] sm:$0xff]
    %v1179 = vld [vmem:[#allocation7 + $0x17b8] sm:$0xff]
    %v1180 = vld [vmem:[#allocation7 + $0x17c0] sm:$0xff]
    %v1181 = vld [vmem:[#allocation7 + $0x17c8] sm:$0xff]
    %v1182 = vld [vmem:[#allocation7 + $0x17d0] sm:$0xff]
    %v1183 = vld [vmem:[#allocation7 + $0x17d8] sm:$0xff]
    %v1184 = vld [vmem:[#allocation7 + $0x17e0] sm:$0xff]
    %v1185 = vld [vmem:[#allocation7 + $0x17e8] sm:$0xff]
    %v1186 = vld [vmem:[#allocation7 + $0x17f0] sm:$0xff]
    %v1187 = vld [vmem:[#allocation7 + $0x17f8] sm:$0xff]
    %v1188 = vld [vmem:[#allocation7 + $0x1800] sm:$0xff]
    %v1189 = vld [vmem:[#allocation7 + $0x1808] sm:$0xff]
    %v1190 = vld [vmem:[#allocation7 + $0x1810] sm:$0xff]
    %v1191 = vld [vmem:[#allocation7 + $0x1818] sm:$0xff]
    %v1192 = vld [vmem:[#allocation7 + $0x1820] sm:$0xff]
    %v1193 = vld [vmem:[#allocation7 + $0x1828] sm:$0xff]
    %v1194 = vld [vmem:[#allocation7 + $0x1830] sm:$0xff]
    %v1195 = vld [vmem:[#allocation7 + $0x1838] sm:$0xff]
    %v1196 = vld [vmem:[#allocation7 + $0x1840] sm:$0xff]
    %v1197 = vld [vmem:[#allocation7 + $0x1848] sm:$0xff]
    %v1198 = vld [vmem:[#allocation7 + $0x1850] sm:$0xff]
    %v1199 = vld [vmem:[#allocation7 + $0x1858] sm:$0xff]
    %v1200 = vld [vmem:[#allocation7 + $0x1860] sm:$0xff]
    %v1201 = vld [vmem:[#allocation7 + $0x1868] sm:$0xff]
    %v1202 = vld [vmem:[#allocation7 + $0x1870] sm:$0xff]
    %v1203 = vld [vmem:[#allocation7 + $0x1878] sm:$0xff]
    %v1204 = vld [vmem:[#allocation7 + $0x1880] sm:$0xff]
    %v1205 = vld [vmem:[#allocation7 + $0x1888] sm:$0xff]
    %v1206 = vld [vmem:[#allocation7 + $0x1890] sm:$0xff]
    %v1207 = vld [vmem:[#allocation7 + $0x1898] sm:$0xff]
    %v1208 = vld [vmem:[#allocation7 + $0x18a0] sm:$0xff]
    %v1209 = vld [vmem:[#allocation7 + $0x18a8] sm:$0xff]
    %v1210 = vld [vmem:[#allocation7 + $0x18b0] sm:$0xff]
    %v1211 = vld [vmem:[#allocation7 + $0x18b8] sm:$0xff]
    %v1212 = vld [vmem:[#allocation7 + $0x18c0] sm:$0xff]
    %v1213 = vld [vmem:[#allocation7 + $0x18c8] sm:$0xff]
    %v1214 = vld [vmem:[#allocation7 + $0x18d0] sm:$0xff]
    %v1215 = vld [vmem:[#allocation7 + $0x18d8] sm:$0xff]
    %v1216 = vld [vmem:[#allocation7 + $0x18e0] sm:$0xff]
    %v1217 = vld [vmem:[#allocation7 + $0x18e8] sm:$0xff]
    %v1218 = vld [vmem:[#allocation7 + $0x18f0] sm:$0xff]
    %v1219 = vld [vmem:[#allocation7 + $0x18f8] sm:$0xff]
    %v1220 = vld [vmem:[#allocation7 + $0x1900] sm:$0xff]
    %v1221 = vld [vmem:[#allocation7 + $0x1908] sm:$0xff]
    %v1222 = vld [vmem:[#allocation7 + $0x1910] sm:$0xff]
    %v1223 = vld [vmem:[#allocation7 + $0x1918] sm:$0xff]
    %v1224 = vld [vmem:[#allocation7 + $0x1920] sm:$0xff]
    %v1225 = vld [vmem:[#allocation7 + $0x1928] sm:$0xff]
    %v1226 = vld [vmem:[#allocation7 + $0x1930] sm:$0xff]
    %v1227 = vld [vmem:[#allocation7 + $0x1938] sm:$0xff]
    %v1228 = vld [vmem:[#allocation7 + $0x1940] sm:$0xff]
    %v1229 = vld [vmem:[#allocation7 + $0x1948] sm:$0xff]
    %v1230 = vld [vmem:[#allocation7 + $0x1950] sm:$0xff]
    %v1231 = vld [vmem:[#allocation7 + $0x1958] sm:$0xff]
    %v1232 = vld [vmem:[#allocation7 + $0x1960] sm:$0xff]
    %v1233 = vld [vmem:[#allocation7 + $0x1968] sm:$0xff]
    %v1234 = vld [vmem:[#allocation7 + $0x1970] sm:$0xff]
    %v1235 = vld [vmem:[#allocation7 + $0x1978] sm:$0xff]
    %v1236 = vld [vmem:[#allocation7 + $0x1980] sm:$0xff]
    %v1237 = vld [vmem:[#allocation7 + $0x1988] sm:$0xff]
    %v1238 = vld [vmem:[#allocation7 + $0x1990] sm:$0xff]
    %v1239 = vld [vmem:[#allocation7 + $0x1998] sm:$0xff]
    %v1240 = vld [vmem:[#allocation7 + $0x19a0] sm:$0xff]
    %v1241 = vld [vmem:[#allocation7 + $0x19a8] sm:$0xff]
    %v1242 = vld [vmem:[#allocation7 + $0x19b0] sm:$0xff]
    %v1243 = vld [vmem:[#allocation7 + $0x19b8] sm:$0xff]
    %v1244 = vld [vmem:[#allocation7 + $0x19c0] sm:$0xff]
    %v1245 = vld [vmem:[#allocation7 + $0x19c8] sm:$0xff]
    %v1246 = vld [vmem:[#allocation7 + $0x19d0] sm:$0xff]
    %v1247 = vld [vmem:[#allocation7 + $0x19d8] sm:$0xff]
    %v1248 = vld [vmem:[#allocation7 + $0x19e0] sm:$0xff]
    %v1249 = vld [vmem:[#allocation7 + $0x19e8] sm:$0xff]
    %v1250 = vld [vmem:[#allocation7 + $0x19f0] sm:$0xff]
    %v1251 = vld [vmem:[#allocation7 + $0x19f8] sm:$0xff]
    %v1252 = vld [vmem:[#allocation7 + $0x1a00] sm:$0xff]
    %v1253 = vld [vmem:[#allocation7 + $0x1a08] sm:$0xff]
    %v1254 = vld [vmem:[#allocation7 + $0x1a10] sm:$0xff]
    %v1255 = vld [vmem:[#allocation7 + $0x1a18] sm:$0xff]
    %v1256 = vld [vmem:[#allocation7 + $0x1a20] sm:$0xff]
    %v1257 = vld [vmem:[#allocation7 + $0x1a28] sm:$0xff]
    %v1258 = vld [vmem:[#allocation7 + $0x1a30] sm:$0xff]
    %v1259 = vld [vmem:[#allocation7 + $0x1a38] sm:$0xff]
    %v1260 = vld [vmem:[#allocation7 + $0x1a40] sm:$0xff]
    %v1261 = vld [vmem:[#allocation7 + $0x1a48] sm:$0xff]
    %v1262 = vld [vmem:[#allocation7 + $0x1a50] sm:$0xff]
    %v1263 = vld [vmem:[#allocation7 + $0x1a58] sm:$0xff]
    %v1264 = vld [vmem:[#allocation7 + $0x1a60] sm:$0xff]
    %v1265 = vld [vmem:[#allocation7 + $0x1a68] sm:$0xff]
    %v1266 = vld [vmem:[#allocation7 + $0x1a70] sm:$0xff]
    %v1267 = vld [vmem:[#allocation7 + $0x1a78] sm:$0xff]
    %v1268 = vld [vmem:[#allocation7 + $0x1a80] sm:$0xff]
    %v1269 = vld [vmem:[#allocation7 + $0x1a88] sm:$0xff]
    %v1270 = vld [vmem:[#allocation7 + $0x1a90] sm:$0xff]
    %v1271 = vld [vmem:[#allocation7 + $0x1a98] sm:$0xff]
    %v1272 = vld [vmem:[#allocation7 + $0x1aa0] sm:$0xff]
    %v1273 = vld [vmem:[#allocation7 + $0x1aa8] sm:$0xff]
    %v1274 = vld [vmem:[#allocation7 + $0x1ab0] sm:$0xff]
    %v1275 = vld [vmem:[#allocation7 + $0x1ab8] sm:$0xff]
    %v1276 = vld [vmem:[#allocation7 + $0x1ac0] sm:$0xff]
    %v1277 = vld [vmem:[#allocation7 + $0x1ac8] sm:$0xff]
    %v1278 = vld [vmem:[#allocation7 + $0x1ad0] sm:$0xff]
    %v1279 = vld [vmem:[#allocation7 + $0x1ad8] sm:$0xff]
    %v1280 = vld [vmem:[#allocation7 + $0x1ae0] sm:$0xff]
    %v1281 = vld [vmem:[#allocation7 + $0x1ae8] sm:$0xff]
    %v1282 = vld [vmem:[#allocation7 + $0x1af0] sm:$0xff]
    %v1283 = vld [vmem:[#allocation7 + $0x1af8] sm:$0xff]
    %v1284 = vld [vmem:[#allocation7 + $0x1b00] sm:$0xff]
    %v1285 = vld [vmem:[#allocation7 + $0x1b08] sm:$0xff]
    %v1286 = vld [vmem:[#allocation7 + $0x1b10] sm:$0xff]
    %v1287 = vld [vmem:[#allocation7 + $0x1b18] sm:$0xff]
    %v1288 = vld [vmem:[#allocation7 + $0x1b20] sm:$0xff]
    %v1289 = vld [vmem:[#allocation7 + $0x1b28] sm:$0xff]
    %v1290 = vld [vmem:[#allocation7 + $0x1b30] sm:$0xff]
    %v1291 = vld [vmem:[#allocation7 + $0x1b38] sm:$0xff]
    %v1292 = vld [vmem:[#allocation7 + $0x1b40] sm:$0xff]
    %v1293 = vld [vmem:[#allocation7 + $0x1b48] sm:$0xff]
    %v1294 = vld [vmem:[#allocation7 + $0x1b50] sm:$0xff]
    %v1295 = vld [vmem:[#allocation7 + $0x1b58] sm:$0xff]
    %v1296 = vld [vmem:[#allocation7 + $0x1b60] sm:$0xff]
    %v1297 = vld [vmem:[#allocation7 + $0x1b68] sm:$0xff]
    %v1298 = vld [vmem:[#allocation7 + $0x1b70] sm:$0xff]
    %v1299 = vld [vmem:[#allocation7 + $0x1b78] sm:$0xff]
    %v1300 = vld [vmem:[#allocation7 + $0x1b80] sm:$0xff]
    %v1301 = vld [vmem:[#allocation7 + $0x1b88] sm:$0xff]
    %v1302 = vld [vmem:[#allocation7 + $0x1b90] sm:$0xff]
    %v1303 = vld [vmem:[#allocation7 + $0x1b98] sm:$0xff]
    %v1304 = vld [vmem:[#allocation7 + $0x1ba0] sm:$0xff]
    %v1305 = vld [vmem:[#allocation7 + $0x1ba8] sm:$0xff]
    %v1306 = vld [vmem:[#allocation7 + $0x1bb0] sm:$0xff]
    %v1307 = vld [vmem:[#allocation7 + $0x1bb8] sm:$0xff]
    %v1308 = vld [vmem:[#allocation7 + $0x1bc0] sm:$0xff]
    %v1309 = vld [vmem:[#allocation7 + $0x1bc8] sm:$0xff]
    %v1310 = vld [vmem:[#allocation7 + $0x1bd0] sm:$0xff]
    %v1311 = vld [vmem:[#allocation7 + $0x1bd8] sm:$0xff]
    %v1312 = vld [vmem:[#allocation7 + $0x1be0] sm:$0xff]
    %v1313 = vld [vmem:[#allocation7 + $0x1be8] sm:$0xff]
    %v1314 = vld [vmem:[#allocation7 + $0x1bf0] sm:$0xff]
    %v1315 = vld [vmem:[#allocation7 + $0x1bf8] sm:$0xff]
    %v1316 = vld [vmem:[#allocation7 + $0x1c00] sm:$0xff]
    %v1317 = vld [vmem:[#allocation7 + $0x1c08] sm:$0xff]
    %v1318 = vld [vmem:[#allocation7 + $0x1c10] sm:$0xff]
    %v1319 = vld [vmem:[#allocation7 + $0x1c18] sm:$0xff]
    %v1320 = vld [vmem:[#allocation7 + $0x1c20] sm:$0xff]
    %v1321 = vld [vmem:[#allocation7 + $0x1c28] sm:$0xff]
    %v1322 = vld [vmem:[#allocation7 + $0x1c30] sm:$0xff]
    %v1323 = vld [vmem:[#allocation7 + $0x1c38] sm:$0xff]
    %v1324 = vld [vmem:[#allocation7 + $0x1c40] sm:$0xff]
    %v1325 = vld [vmem:[#allocation7 + $0x1c48] sm:$0xff]
    %v1326 = vld [vmem:[#allocation7 + $0x1c50] sm:$0xff]
    %v1327 = vld [vmem:[#allocation7 + $0x1c58] sm:$0xff]
    %v1328 = vld [vmem:[#allocation7 + $0x1c60] sm:$0xff]
    %v1329 = vld [vmem:[#allocation7 + $0x1c68] sm:$0xff]
    %v1330 = vld [vmem:[#allocation7 + $0x1c70] sm:$0xff]
    %v1331 = vld [vmem:[#allocation7 + $0x1c78] sm:$0xff]
    %v1332 = vld [vmem:[#allocation7 + $0x1c80] sm:$0xff]
    %v1333 = vld [vmem:[#allocation7 + $0x1c88] sm:$0xff]
    %v1334 = vld [vmem:[#allocation7 + $0x1c90] sm:$0xff]
    %v1335 = vld [vmem:[#allocation7 + $0x1c98] sm:$0xff]
    %v1336 = vld [vmem:[#allocation7 + $0x1ca0] sm:$0xff]
    %v1337 = vld [vmem:[#allocation7 + $0x1ca8] sm:$0xff]
    %v1338 = vld [vmem:[#allocation7 + $0x1cb0] sm:$0xff]
    %v1339 = vld [vmem:[#allocation7 + $0x1cb8] sm:$0xff]
    %v1340 = vld [vmem:[#allocation7 + $0x1cc0] sm:$0xff]
    %v1341 = vld [vmem:[#allocation7 + $0x1cc8] sm:$0xff]
    %v1342 = vld [vmem:[#allocation7 + $0x1cd0] sm:$0xff]
    %v1343 = vld [vmem:[#allocation7 + $0x1cd8] sm:$0xff]
    %v1344 = vld [vmem:[#allocation7 + $0x1ce0] sm:$0xff]
    %v1345 = vld [vmem:[#allocation7 + $0x1ce8] sm:$0xff]
    %v1346 = vld [vmem:[#allocation7 + $0x1cf0] sm:$0xff]
    %v1347 = vld [vmem:[#allocation7 + $0x1cf8] sm:$0xff]
    %v1348 = vld [vmem:[#allocation7 + $0x1d00] sm:$0xff]
    %v1349 = vld [vmem:[#allocation7 + $0x1d08] sm:$0xff]
    %v1350 = vld [vmem:[#allocation7 + $0x1d10] sm:$0xff]
    %v1351 = vld [vmem:[#allocation7 + $0x1d18] sm:$0xff]
    %v1352 = vld [vmem:[#allocation7 + $0x1d20] sm:$0xff]
    %v1353 = vld [vmem:[#allocation7 + $0x1d28] sm:$0xff]
    %v1354 = vld [vmem:[#allocation7 + $0x1d30] sm:$0xff]
    %v1355 = vld [vmem:[#allocation7 + $0x1d38] sm:$0xff]
    %v1356 = vld [vmem:[#allocation7 + $0x1d40] sm:$0xff]
    %v1357 = vld [vmem:[#allocation7 + $0x1d48] sm:$0xff]
    %v1358 = vld [vmem:[#allocation7 + $0x1d50] sm:$0xff]
    %v1359 = vld [vmem:[#allocation7 + $0x1d58] sm:$0xff]
    %v1360 = vld [vmem:[#allocation7 + $0x1d60] sm:$0xff]
    %v1361 = vld [vmem:[#allocation7 + $0x1d68] sm:$0xff]
    %v1362 = vld [vmem:[#allocation7 + $0x1d70] sm:$0xff]
    %v1363 = vld [vmem:[#allocation7 + $0x1d78] sm:$0xff]
    %v1364 = vld [vmem:[#allocation7 + $0x1d80] sm:$0xff]
    %v1365 = vld [vmem:[#allocation7 + $0x1d88] sm:$0xff]
    %v1366 = vld [vmem:[#allocation7 + $0x1d90] sm:$0xff]
    %v1367 = vld [vmem:[#allocation7 + $0x1d98] sm:$0xff]
    %v1368 = vld [vmem:[#allocation7 + $0x1da0] sm:$0xff]
    %v1369 = vld [vmem:[#allocation7 + $0x1da8] sm:$0xff]
    %v1370 = vld [vmem:[#allocation7 + $0x1db0] sm:$0xff]
    %v1371 = vld [vmem:[#allocation7 + $0x1db8] sm:$0xff]
    %v1372 = vld [vmem:[#allocation7 + $0x1dc0] sm:$0xff]
    %v1373 = vld [vmem:[#allocation7 + $0x1dc8] sm:$0xff]
    %v1374 = vld [vmem:[#allocation7 + $0x1dd0] sm:$0xff]
    %v1375 = vld [vmem:[#allocation7 + $0x1dd8] sm:$0xff]
    %v1376 = vld [vmem:[#allocation7 + $0x1de0] sm:$0xff]
    %v1377 = vld [vmem:[#allocation7 + $0x1de8] sm:$0xff]
    %v1378 = vld [vmem:[#allocation7 + $0x1df0] sm:$0xff]
    %v1379 = vld [vmem:[#allocation7 + $0x1df8] sm:$0xff]
    %v1380 = vld [vmem:[#allocation7 + $0x1e00] sm:$0xff]
    %v1381 = vld [vmem:[#allocation7 + $0x1e08] sm:$0xff]
    %v1382 = vld [vmem:[#allocation7 + $0x1e10] sm:$0xff]
    %v1383 = vld [vmem:[#allocation7 + $0x1e18] sm:$0xff]
    %v1384 = vld [vmem:[#allocation7 + $0x1e20] sm:$0xff]
    %v1385 = vld [vmem:[#allocation7 + $0x1e28] sm:$0xff]
    %v1386 = vld [vmem:[#allocation7 + $0x1e30] sm:$0xff]
    %v1387 = vld [vmem:[#allocation7 + $0x1e38] sm:$0xff]
    %v1388 = vld [vmem:[#allocation7 + $0x1e40] sm:$0xff]
    %v1389 = vld [vmem:[#allocation7 + $0x1e48] sm:$0xff]
    %v1390 = vld [vmem:[#allocation7 + $0x1e50] sm:$0xff]
    %v1391 = vld [vmem:[#allocation7 + $0x1e58] sm:$0xff]
    %v1392 = vld [vmem:[#allocation7 + $0x1e60] sm:$0xff]
    %v1393 = vld [vmem:[#allocation7 + $0x1e68] sm:$0xff]
    %v1394 = vld [vmem:[#allocation7 + $0x1e70] sm:$0xff]
    %v1395 = vld [vmem:[#allocation7 + $0x1e78] sm:$0xff]
    %v1396 = vld [vmem:[#allocation7 + $0x1e80] sm:$0xff]
    %v1397 = vld [vmem:[#allocation7 + $0x1e88] sm:$0xff]
    %v1398 = vld [vmem:[#allocation7 + $0x1e90] sm:$0xff]
    %v1399 = vld [vmem:[#allocation7 + $0x1e98] sm:$0xff]
    %v1400 = vld [vmem:[#allocation7 + $0x1ea0] sm:$0xff]
    %v1401 = vld [vmem:[#allocation7 + $0x1ea8] sm:$0xff]
    %v1402 = vld [vmem:[#allocation7 + $0x1eb0] sm:$0xff]
    %v1403 = vld [vmem:[#allocation7 + $0x1eb8] sm:$0xff]
    %v1404 = vld [vmem:[#allocation7 + $0x1ec0] sm:$0xff]
    %v1405 = vld [vmem:[#allocation7 + $0x1ec8] sm:$0xff]
    %v1406 = vld [vmem:[#allocation7 + $0x1ed0] sm:$0xff]
    %v1407 = vld [vmem:[#allocation7 + $0x1ed8] sm:$0xff]
    %v1408 = vld [vmem:[#allocation7 + $0x1ee0] sm:$0xff]
    %v1409 = vld [vmem:[#allocation7 + $0x1ee8] sm:$0xff]
    %v1410 = vld [vmem:[#allocation7 + $0x1ef0] sm:$0xff]
    %v1411 = vld [vmem:[#allocation7 + $0x1ef8] sm:$0xff]
    %v1412 = vld [vmem:[#allocation7 + $0x1f00] sm:$0xff]
    %v1413 = vld [vmem:[#allocation7 + $0x1f08] sm:$0xff]
    %v1414 = vld [vmem:[#allocation7 + $0x1f10] sm:$0xff]
    %v1415 = vld [vmem:[#allocation7 + $0x1f18] sm:$0xff]
    %v1416 = vld [vmem:[#allocation7 + $0x1f20] sm:$0xff]
    %v1417 = vld [vmem:[#allocation7 + $0x1f28] sm:$0xff]
    %v1418 = vld [vmem:[#allocation7 + $0x1f30] sm:$0xff]
    %v1419 = vld [vmem:[#allocation7 + $0x1f38] sm:$0xff]
    %v1420 = vld [vmem:[#allocation7 + $0x1f40] sm:$0xff]
    %v1421 = vld [vmem:[#allocation7 + $0x1f48] sm:$0xff]
    %v1422 = vld [vmem:[#allocation7 + $0x1f50] sm:$0xff]
    %v1423 = vld [vmem:[#allocation7 + $0x1f58] sm:$0xff]
    %v1424 = vld [vmem:[#allocation7 + $0x1f60] sm:$0xff]
    %v1425 = vld [vmem:[#allocation7 + $0x1f68] sm:$0xff]
    %v1426 = vld [vmem:[#allocation7 + $0x1f70] sm:$0xff]
    %v1427 = vld [vmem:[#allocation7 + $0x1f78] sm:$0xff]
    %v1428 = vld [vmem:[#allocation7 + $0x1f80] sm:$0xff]
    %v1429 = vld [vmem:[#allocation7 + $0x1f88] sm:$0xff]
    %v1430 = vld [vmem:[#allocation7 + $0x1f90] sm:$0xff]
    %v1431 = vld [vmem:[#allocation7 + $0x1f98] sm:$0xff]
    %v1432 = vld [vmem:[#allocation7 + $0x1fa0] sm:$0xff]
    %v1433 = vld [vmem:[#allocation7 + $0x1fa8] sm:$0xff]
    %v1434 = vld [vmem:[#allocation7 + $0x1fb0] sm:$0xff]
    %v1435 = vld [vmem:[#allocation7 + $0x1fb8] sm:$0xff]
    %v1436 = vld [vmem:[#allocation7 + $0x1fc0] sm:$0xff]
    %v1437 = vld [vmem:[#allocation7 + $0x1fc8] sm:$0xff]
    %v1438 = vld [vmem:[#allocation7 + $0x1fd0] sm:$0xff]
    %v1439 = vld [vmem:[#allocation7 + $0x1fd8] sm:$0xff]
    %v1440 = vld [vmem:[#allocation7 + $0x1fe0] sm:$0xff]
    %v1441 = vld [vmem:[#allocation7 + $0x1fe8] sm:$0xff]
    %v1442 = vld [vmem:[#allocation7 + $0x1ff0] sm:$0xff]
    %v1443 = vld [vmem:[#allocation7 + $0x1ff8] sm:$0xff]
    %v1444 = vld [vmem:[#allocation8] sm:$0xff]
    %v1446 = vlaneseq
    %v1447 = vshrl.u32 %v1446, 7
    %v1448 = vsub.s32 0, %v1447
    %v1449 = vrot.slane %v1444, %v1448
    %v1450 = vlaneseq
    %v1451 = vshrl.u32 %v1450, 7
    %v1452 = vsub.s32 1, %v1451
    %v1453 = vrot.slane %v1444, %v1452
    %v1454 = vlaneseq
    %v1455 = vshrl.u32 %v1454, 7
    %v1456 = vsub.s32 2, %v1455
    %v1457 = vrot.slane %v1444, %v1456
    %v1458 = vlaneseq
    %v1459 = vshrl.u32 %v1458, 7
    %v1460 = vsub.s32 3, %v1459
    %v1461 = vrot.slane %v1444, %v1460
    %v1462 = vlaneseq
    %v1463 = vshrl.u32 %v1462, 7
    %v1464 = vsub.s32 4, %v1463
    %v1465 = vrot.slane %v1444, %v1464
    %v1466 = vlaneseq
    %v1467 = vshrl.u32 %v1466, 7
    %v1468 = vsub.s32 5, %v1467
    %v1469 = vrot.slane %v1444, %v1468
    %v1470 = vlaneseq
    %v1471 = vshrl.u32 %v1470, 7
    %v1472 = vsub.s32 6, %v1471
    %v1473 = vrot.slane %v1444, %v1472
    %v1474 = vlaneseq
    %v1475 = vshrl.u32 %v1474, 7
    %v1476 = vsub.s32 7, %v1475
    %v1477 = vrot.slane %v1444, %v1476
    %v2510 = vunpack.c.l.b16 %v420
    %v2511 = vunpack.c.h.b16 %v420
    %v2512 = vunpack.c.l.b16 %v421
    %v2513 = vunpack.c.h.b16 %v421
    %v2514 = vunpack.c.l.b16 %v422
    %v2515 = vunpack.c.h.b16 %v422
    %v2516 = vunpack.c.l.b16 %v423
    %v2517 = vunpack.c.h.b16 %v423
    %v2518 = vunpack.c.l.b16 %v424
    %v2519 = vunpack.c.h.b16 %v424
    %v2520 = vunpack.c.l.b16 %v425
    %v2521 = vunpack.c.h.b16 %v425
    %v2522 = vunpack.c.l.b16 %v426
    %v2523 = vunpack.c.h.b16 %v426
    %v2524 = vunpack.c.l.b16 %v427
    %v2525 = vunpack.c.h.b16 %v427
    %v2526 = vunpack.c.l.b16 %v428
    %v2527 = vunpack.c.h.b16 %v428
    %v2528 = vunpack.c.l.b16 %v429
    %v2529 = vunpack.c.h.b16 %v429
    %v2530 = vunpack.c.l.b16 %v430
    %v2531 = vunpack.c.h.b16 %v430
    %v2532 = vunpack.c.l.b16 %v431
    %v2533 = vunpack.c.h.b16 %v431
    %v2534 = vunpack.c.l.b16 %v432
    %v2535 = vunpack.c.h.b16 %v432
    %v2536 = vunpack.c.l.b16 %v433
    %v2537 = vunpack.c.h.b16 %v433
    %v2538 = vunpack.c.l.b16 %v434
    %v2539 = vunpack.c.h.b16 %v434
    %v2540 = vunpack.c.l.b16 %v435
    %v2541 = vunpack.c.h.b16 %v435
    %v2542 = vunpack.c.l.b16 %v436
    %v2543 = vunpack.c.h.b16 %v436
    %v2544 = vunpack.c.l.b16 %v437
    %v2545 = vunpack.c.h.b16 %v437
    %v2546 = vunpack.c.l.b16 %v438
    %v2547 = vunpack.c.h.b16 %v438
    %v2548 = vunpack.c.l.b16 %v439
    %v2549 = vunpack.c.h.b16 %v439
    %v2550 = vunpack.c.l.b16 %v440
    %v2551 = vunpack.c.h.b16 %v440
    %v2552 = vunpack.c.l.b16 %v441
    %v2553 = vunpack.c.h.b16 %v441
    %v2554 = vunpack.c.l.b16 %v442
    %v2555 = vunpack.c.h.b16 %v442
    %v2556 = vunpack.c.l.b16 %v443
    %v2557 = vunpack.c.h.b16 %v443
    %v2558 = vunpack.c.l.b16 %v444
    %v2559 = vunpack.c.h.b16 %v444
    %v2560 = vunpack.c.l.b16 %v445
    %v2561 = vunpack.c.h.b16 %v445
    %v2562 = vunpack.c.l.b16 %v446
    %v2563 = vunpack.c.h.b16 %v446
    %v2564 = vunpack.c.l.b16 %v447
    %v2565 = vunpack.c.h.b16 %v447
    %v2566 = vunpack.c.l.b16 %v448
    %v2567 = vunpack.c.h.b16 %v448
    %v2568 = vunpack.c.l.b16 %v449
    %v2569 = vunpack.c.h.b16 %v449
    %v2570 = vunpack.c.l.b16 %v450
    %v2571 = vunpack.c.h.b16 %v450
    %v2572 = vunpack.c.l.b16 %v451
    %v2573 = vunpack.c.h.b16 %v451
    %v2574 = vunpack.c.l.b16 %v452
    %v2575 = vunpack.c.h.b16 %v452
    %v2576 = vunpack.c.l.b16 %v453
    %v2577 = vunpack.c.h.b16 %v453
    %v2578 = vunpack.c.l.b16 %v454
    %v2579 = vunpack.c.h.b16 %v454
    %v2580 = vunpack.c.l.b16 %v455
    %v2581 = vunpack.c.h.b16 %v455
    %v2582 = vunpack.c.l.b16 %v456
    %v2583 = vunpack.c.h.b16 %v456
    %v2584 = vunpack.c.l.b16 %v457
    %v2585 = vunpack.c.h.b16 %v457
    %v2586 = vunpack.c.l.b16 %v458
    %v2587 = vunpack.c.h.b16 %v458
    %v2588 = vunpack.c.l.b16 %v459
    %v2589 = vunpack.c.h.b16 %v459
    %v2590 = vunpack.c.l.b16 %v460
    %v2591 = vunpack.c.h.b16 %v460
    %v2592 = vunpack.c.l.b16 %v461
    %v2593 = vunpack.c.h.b16 %v461
    %v2594 = vunpack.c.l.b16 %v462
    %v2595 = vunpack.c.h.b16 %v462
    %v2596 = vunpack.c.l.b16 %v463
    %v2597 = vunpack.c.h.b16 %v463
    %v2598 = vunpack.c.l.b16 %v464
    %v2599 = vunpack.c.h.b16 %v464
    %v2600 = vunpack.c.l.b16 %v465
    %v2601 = vunpack.c.h.b16 %v465
    %v2602 = vunpack.c.l.b16 %v466
    %v2603 = vunpack.c.h.b16 %v466
    %v2604 = vunpack.c.l.b16 %v467
    %v2605 = vunpack.c.h.b16 %v467
    %v2606 = vunpack.c.l.b16 %v468
    %v2607 = vunpack.c.h.b16 %v468
    %v2608 = vunpack.c.l.b16 %v469
    %v2609 = vunpack.c.h.b16 %v469
    %v2610 = vunpack.c.l.b16 %v470
    %v2611 = vunpack.c.h.b16 %v470
    %v2612 = vunpack.c.l.b16 %v471
    %v2613 = vunpack.c.h.b16 %v471
    %v2614 = vunpack.c.l.b16 %v472
    %v2615 = vunpack.c.h.b16 %v472
    %v2616 = vunpack.c.l.b16 %v473
    %v2617 = vunpack.c.h.b16 %v473
    %v2618 = vunpack.c.l.b16 %v474
    %v2619 = vunpack.c.h.b16 %v474
    %v2620 = vunpack.c.l.b16 %v475
    %v2621 = vunpack.c.h.b16 %v475
    %v2622 = vunpack.c.l.b16 %v476
    %v2623 = vunpack.c.h.b16 %v476
    %v2624 = vunpack.c.l.b16 %v477
    %v2625 = vunpack.c.h.b16 %v477
    %v2626 = vunpack.c.l.b16 %v478
    %v2627 = vunpack.c.h.b16 %v478
    %v2628 = vunpack.c.l.b16 %v479
    %v2629 = vunpack.c.h.b16 %v479
    %v2630 = vunpack.c.l.b16 %v480
    %v2631 = vunpack.c.h.b16 %v480
    %v2632 = vunpack.c.l.b16 %v481
    %v2633 = vunpack.c.h.b16 %v481
    %v2634 = vunpack.c.l.b16 %v482
    %v2635 = vunpack.c.h.b16 %v482
    %v2636 = vunpack.c.l.b16 %v483
    %v2637 = vunpack.c.h.b16 %v483
    %v2638 = vunpack.c.l.b16 %v484
    %v2639 = vunpack.c.h.b16 %v484
    %v2640 = vunpack.c.l.b16 %v485
    %v2641 = vunpack.c.h.b16 %v485
    %v2642 = vunpack.c.l.b16 %v486
    %v2643 = vunpack.c.h.b16 %v486
    %v2644 = vunpack.c.l.b16 %v487
    %v2645 = vunpack.c.h.b16 %v487
    %v2646 = vunpack.c.l.b16 %v488
    %v2647 = vunpack.c.h.b16 %v488
    %v2648 = vunpack.c.l.b16 %v489
    %v2649 = vunpack.c.h.b16 %v489
    %v2650 = vunpack.c.l.b16 %v490
    %v2651 = vunpack.c.h.b16 %v490
    %v2652 = vunpack.c.l.b16 %v491
    %v2653 = vunpack.c.h.b16 %v491
    %v2654 = vunpack.c.l.b16 %v492
    %v2655 = vunpack.c.h.b16 %v492
    %v2656 = vunpack.c.l.b16 %v493
    %v2657 = vunpack.c.h.b16 %v493
    %v2658 = vunpack.c.l.b16 %v494
    %v2659 = vunpack.c.h.b16 %v494
    %v2660 = vunpack.c.l.b16 %v495
    %v2661 = vunpack.c.h.b16 %v495
    %v2662 = vunpack.c.l.b16 %v496
    %v2663 = vunpack.c.h.b16 %v496
    %v2664 = vunpack.c.l.b16 %v497
    %v2665 = vunpack.c.h.b16 %v497
    %v2666 = vunpack.c.l.b16 %v498
    %v2667 = vunpack.c.h.b16 %v498
    %v2668 = vunpack.c.l.b16 %v499
    %v2669 = vunpack.c.h.b16 %v499
    %v2670 = vunpack.c.l.b16 %v500
    %v2671 = vunpack.c.h.b16 %v500
    %v2672 = vunpack.c.l.b16 %v501
    %v2673 = vunpack.c.h.b16 %v501
    %v2674 = vunpack.c.l.b16 %v502
    %v2675 = vunpack.c.h.b16 %v502
    %v2676 = vunpack.c.l.b16 %v503
    %v2677 = vunpack.c.h.b16 %v503
    %v2678 = vunpack.c.l.b16 %v504
    %v2679 = vunpack.c.h.b16 %v504
    %v2680 = vunpack.c.l.b16 %v505
    %v2681 = vunpack.c.h.b16 %v505
    %v2682 = vunpack.c.l.b16 %v506
    %v2683 = vunpack.c.h.b16 %v506
    %v2684 = vunpack.c.l.b16 %v507
    %v2685 = vunpack.c.h.b16 %v507
    %v2686 = vunpack.c.l.b16 %v508
    %v2687 = vunpack.c.h.b16 %v508
    %v2688 = vunpack.c.l.b16 %v509
    %v2689 = vunpack.c.h.b16 %v509
    %v2690 = vunpack.c.l.b16 %v510
    %v2691 = vunpack.c.h.b16 %v510
    %v2692 = vunpack.c.l.b16 %v511
    %v2693 = vunpack.c.h.b16 %v511
    %v2694 = vunpack.c.l.b16 %v512
    %v2695 = vunpack.c.h.b16 %v512
    %v2696 = vunpack.c.l.b16 %v513
    %v2697 = vunpack.c.h.b16 %v513
    %v2698 = vunpack.c.l.b16 %v514
    %v2699 = vunpack.c.h.b16 %v514
    %v2700 = vunpack.c.l.b16 %v515
    %v2701 = vunpack.c.h.b16 %v515
    %v2702 = vunpack.c.l.b16 %v516
    %v2703 = vunpack.c.h.b16 %v516
    %v2704 = vunpack.c.l.b16 %v517
    %v2705 = vunpack.c.h.b16 %v517
    %v2706 = vunpack.c.l.b16 %v518
    %v2707 = vunpack.c.h.b16 %v518
    %v2708 = vunpack.c.l.b16 %v519
    %v2709 = vunpack.c.h.b16 %v519
    %v2710 = vunpack.c.l.b16 %v520
    %v2711 = vunpack.c.h.b16 %v520
    %v2712 = vunpack.c.l.b16 %v521
    %v2713 = vunpack.c.h.b16 %v521
    %v2714 = vunpack.c.l.b16 %v522
    %v2715 = vunpack.c.h.b16 %v522
    %v2716 = vunpack.c.l.b16 %v523
    %v2717 = vunpack.c.h.b16 %v523
    %v2718 = vunpack.c.l.b16 %v524
    %v2719 = vunpack.c.h.b16 %v524
    %v2720 = vunpack.c.l.b16 %v525
    %v2721 = vunpack.c.h.b16 %v525
    %v2722 = vunpack.c.l.b16 %v526
    %v2723 = vunpack.c.h.b16 %v526
    %v2724 = vunpack.c.l.b16 %v527
    %v2725 = vunpack.c.h.b16 %v527
    %v2726 = vunpack.c.l.b16 %v528
    %v2727 = vunpack.c.h.b16 %v528
    %v2728 = vunpack.c.l.b16 %v529
    %v2729 = vunpack.c.h.b16 %v529
    %v2730 = vunpack.c.l.b16 %v530
    %v2731 = vunpack.c.h.b16 %v530
    %v2732 = vunpack.c.l.b16 %v531
    %v2733 = vunpack.c.h.b16 %v531
    %v2734 = vunpack.c.l.b16 %v532
    %v2735 = vunpack.c.h.b16 %v532
    %v2736 = vunpack.c.l.b16 %v533
    %v2737 = vunpack.c.h.b16 %v533
    %v2738 = vunpack.c.l.b16 %v534
    %v2739 = vunpack.c.h.b16 %v534
    %v2740 = vunpack.c.l.b16 %v535
    %v2741 = vunpack.c.h.b16 %v535
    %v2742 = vunpack.c.l.b16 %v536
    %v2743 = vunpack.c.h.b16 %v536
    %v2744 = vunpack.c.l.b16 %v537
    %v2745 = vunpack.c.h.b16 %v537
    %v2746 = vunpack.c.l.b16 %v538
    %v2747 = vunpack.c.h.b16 %v538
    %v2748 = vunpack.c.l.b16 %v539
    %v2749 = vunpack.c.h.b16 %v539
    %v2750 = vunpack.c.l.b16 %v540
    %v2751 = vunpack.c.h.b16 %v540
    %v2752 = vunpack.c.l.b16 %v541
    %v2753 = vunpack.c.h.b16 %v541
    %v2754 = vunpack.c.l.b16 %v542
    %v2755 = vunpack.c.h.b16 %v542
    %v2756 = vunpack.c.l.b16 %v543
    %v2757 = vunpack.c.h.b16 %v543
    %v2758 = vunpack.c.l.b16 %v544
    %v2759 = vunpack.c.h.b16 %v544
    %v2760 = vunpack.c.l.b16 %v545
    %v2761 = vunpack.c.h.b16 %v545
    %v2762 = vunpack.c.l.b16 %v546
    %v2763 = vunpack.c.h.b16 %v546
    %v2764 = vunpack.c.l.b16 %v547
    %v2765 = vunpack.c.h.b16 %v547
    %v2766 = vunpack.c.l.b16 %v548
    %v2767 = vunpack.c.h.b16 %v548
    %v2768 = vunpack.c.l.b16 %v549
    %v2769 = vunpack.c.h.b16 %v549
    %v2770 = vunpack.c.l.b16 %v550
    %v2771 = vunpack.c.h.b16 %v550
    %v2772 = vunpack.c.l.b16 %v551
    %v2773 = vunpack.c.h.b16 %v551
    %v2774 = vunpack.c.l.b16 %v552
    %v2775 = vunpack.c.h.b16 %v552
    %v2776 = vunpack.c.l.b16 %v553
    %v2777 = vunpack.c.h.b16 %v553
    %v2778 = vunpack.c.l.b16 %v554
    %v2779 = vunpack.c.h.b16 %v554
    %v2780 = vunpack.c.l.b16 %v555
    %v2781 = vunpack.c.h.b16 %v555
    %v2782 = vunpack.c.l.b16 %v556
    %v2783 = vunpack.c.h.b16 %v556
    %v2784 = vunpack.c.l.b16 %v557
    %v2785 = vunpack.c.h.b16 %v557
    %v2786 = vunpack.c.l.b16 %v558
    %v2787 = vunpack.c.h.b16 %v558
    %v2788 = vunpack.c.l.b16 %v559
    %v2789 = vunpack.c.h.b16 %v559
    %v2790 = vunpack.c.l.b16 %v560
    %v2791 = vunpack.c.h.b16 %v560
    %v2792 = vunpack.c.l.b16 %v561
    %v2793 = vunpack.c.h.b16 %v561
    %v2794 = vunpack.c.l.b16 %v562
    %v2795 = vunpack.c.h.b16 %v562
    %v2796 = vunpack.c.l.b16 %v563
    %v2797 = vunpack.c.h.b16 %v563
    %v2798 = vunpack.c.l.b16 %v564
    %v2799 = vunpack.c.h.b16 %v564
    %v2800 = vunpack.c.l.b16 %v565
    %v2801 = vunpack.c.h.b16 %v565
    %v2802 = vunpack.c.l.b16 %v566
    %v2803 = vunpack.c.h.b16 %v566
    %v2804 = vunpack.c.l.b16 %v567
    %v2805 = vunpack.c.h.b16 %v567
    %v2806 = vunpack.c.l.b16 %v568
    %v2807 = vunpack.c.h.b16 %v568
    %v2808 = vunpack.c.l.b16 %v569
    %v2809 = vunpack.c.h.b16 %v569
    %v2810 = vunpack.c.l.b16 %v570
    %v2811 = vunpack.c.h.b16 %v570
    %v2812 = vunpack.c.l.b16 %v571
    %v2813 = vunpack.c.h.b16 %v571
    %v2814 = vunpack.c.l.b16 %v572
    %v2815 = vunpack.c.h.b16 %v572
    %v2816 = vunpack.c.l.b16 %v573
    %v2817 = vunpack.c.h.b16 %v573
    %v2818 = vunpack.c.l.b16 %v574
    %v2819 = vunpack.c.h.b16 %v574
    %v2820 = vunpack.c.l.b16 %v575
    %v2821 = vunpack.c.h.b16 %v575
    %v2822 = vunpack.c.l.b16 %v576
    %v2823 = vunpack.c.h.b16 %v576
    %v2824 = vunpack.c.l.b16 %v577
    %v2825 = vunpack.c.h.b16 %v577
    %v2826 = vunpack.c.l.b16 %v578
    %v2827 = vunpack.c.h.b16 %v578
    %v2828 = vunpack.c.l.b16 %v579
    %v2829 = vunpack.c.h.b16 %v579
    %v2830 = vunpack.c.l.b16 %v580
    %v2831 = vunpack.c.h.b16 %v580
    %v2832 = vunpack.c.l.b16 %v581
    %v2833 = vunpack.c.h.b16 %v581
    %v2834 = vunpack.c.l.b16 %v582
    %v2835 = vunpack.c.h.b16 %v582
    %v2836 = vunpack.c.l.b16 %v583
    %v2837 = vunpack.c.h.b16 %v583
    %v2838 = vunpack.c.l.b16 %v584
    %v2839 = vunpack.c.h.b16 %v584
    %v2840 = vunpack.c.l.b16 %v585
    %v2841 = vunpack.c.h.b16 %v585
    %v2842 = vunpack.c.l.b16 %v586
    %v2843 = vunpack.c.h.b16 %v586
    %v2844 = vunpack.c.l.b16 %v587
    %v2845 = vunpack.c.h.b16 %v587
    %v2846 = vunpack.c.l.b16 %v588
    %v2847 = vunpack.c.h.b16 %v588
    %v2848 = vunpack.c.l.b16 %v589
    %v2849 = vunpack.c.h.b16 %v589
    %v2850 = vunpack.c.l.b16 %v590
    %v2851 = vunpack.c.h.b16 %v590
    %v2852 = vunpack.c.l.b16 %v591
    %v2853 = vunpack.c.h.b16 %v591
    %v2854 = vunpack.c.l.b16 %v592
    %v2855 = vunpack.c.h.b16 %v592
    %v2856 = vunpack.c.l.b16 %v593
    %v2857 = vunpack.c.h.b16 %v593
    %v2858 = vunpack.c.l.b16 %v594
    %v2859 = vunpack.c.h.b16 %v594
    %v2860 = vunpack.c.l.b16 %v595
    %v2861 = vunpack.c.h.b16 %v595
    %v2862 = vunpack.c.l.b16 %v596
    %v2863 = vunpack.c.h.b16 %v596
    %v2864 = vunpack.c.l.b16 %v597
    %v2865 = vunpack.c.h.b16 %v597
    %v2866 = vunpack.c.l.b16 %v598
    %v2867 = vunpack.c.h.b16 %v598
    %v2868 = vunpack.c.l.b16 %v599
    %v2869 = vunpack.c.h.b16 %v599
    %v2870 = vunpack.c.l.b16 %v600
    %v2871 = vunpack.c.h.b16 %v600
    %v2872 = vunpack.c.l.b16 %v601
    %v2873 = vunpack.c.h.b16 %v601
    %v2874 = vunpack.c.l.b16 %v602
    %v2875 = vunpack.c.h.b16 %v602
    %v2876 = vunpack.c.l.b16 %v603
    %v2877 = vunpack.c.h.b16 %v603
    %v2878 = vunpack.c.l.b16 %v604
    %v2879 = vunpack.c.h.b16 %v604
    %v2880 = vunpack.c.l.b16 %v605
    %v2881 = vunpack.c.h.b16 %v605
    %v2882 = vunpack.c.l.b16 %v606
    %v2883 = vunpack.c.h.b16 %v606
    %v2884 = vunpack.c.l.b16 %v607
    %v2885 = vunpack.c.h.b16 %v607
    %v2886 = vunpack.c.l.b16 %v608
    %v2887 = vunpack.c.h.b16 %v608
    %v2888 = vunpack.c.l.b16 %v609
    %v2889 = vunpack.c.h.b16 %v609
    %v2890 = vunpack.c.l.b16 %v610
    %v2891 = vunpack.c.h.b16 %v610
    %v2892 = vunpack.c.l.b16 %v611
    %v2893 = vunpack.c.h.b16 %v611
    %v2894 = vunpack.c.l.b16 %v612
    %v2895 = vunpack.c.h.b16 %v612
    %v2896 = vunpack.c.l.b16 %v613
    %v2897 = vunpack.c.h.b16 %v613
    %v2898 = vunpack.c.l.b16 %v614
    %v2899 = vunpack.c.h.b16 %v614
    %v2900 = vunpack.c.l.b16 %v615
    %v2901 = vunpack.c.h.b16 %v615
    %v2902 = vunpack.c.l.b16 %v616
    %v2903 = vunpack.c.h.b16 %v616
    %v2904 = vunpack.c.l.b16 %v617
    %v2905 = vunpack.c.h.b16 %v617
    %v2906 = vunpack.c.l.b16 %v618
    %v2907 = vunpack.c.h.b16 %v618
    %v2908 = vunpack.c.l.b16 %v619
    %v2909 = vunpack.c.h.b16 %v619
    %v2910 = vunpack.c.l.b16 %v620
    %v2911 = vunpack.c.h.b16 %v620
    %v2912 = vunpack.c.l.b16 %v621
    %v2913 = vunpack.c.h.b16 %v621
    %v2914 = vunpack.c.l.b16 %v622
    %v2915 = vunpack.c.h.b16 %v622
    %v2916 = vunpack.c.l.b16 %v623
    %v2917 = vunpack.c.h.b16 %v623
    %v2918 = vunpack.c.l.b16 %v624
    %v2919 = vunpack.c.h.b16 %v624
    %v2920 = vunpack.c.l.b16 %v625
    %v2921 = vunpack.c.h.b16 %v625
    %v2922 = vunpack.c.l.b16 %v626
    %v2923 = vunpack.c.h.b16 %v626
    %v2924 = vunpack.c.l.b16 %v627
    %v2925 = vunpack.c.h.b16 %v627
    %v2926 = vunpack.c.l.b16 %v628
    %v2927 = vunpack.c.h.b16 %v628
    %v2928 = vunpack.c.l.b16 %v629
    %v2929 = vunpack.c.h.b16 %v629
    %v2930 = vunpack.c.l.b16 %v630
    %v2931 = vunpack.c.h.b16 %v630
    %v2932 = vunpack.c.l.b16 %v631
    %v2933 = vunpack.c.h.b16 %v631
    %v2934 = vunpack.c.l.b16 %v632
    %v2935 = vunpack.c.h.b16 %v632
    %v2936 = vunpack.c.l.b16 %v633
    %v2937 = vunpack.c.h.b16 %v633
    %v2938 = vunpack.c.l.b16 %v634
    %v2939 = vunpack.c.h.b16 %v634
    %v2940 = vunpack.c.l.b16 %v635
    %v2941 = vunpack.c.h.b16 %v635
    %v2942 = vunpack.c.l.b16 %v636
    %v2943 = vunpack.c.h.b16 %v636
    %v2944 = vunpack.c.l.b16 %v637
    %v2945 = vunpack.c.h.b16 %v637
    %v2946 = vunpack.c.l.b16 %v638
    %v2947 = vunpack.c.h.b16 %v638
    %v2948 = vunpack.c.l.b16 %v639
    %v2949 = vunpack.c.h.b16 %v639
    %v2950 = vunpack.c.l.b16 %v640
    %v2951 = vunpack.c.h.b16 %v640
    %v2952 = vunpack.c.l.b16 %v641
    %v2953 = vunpack.c.h.b16 %v641
    %v2954 = vunpack.c.l.b16 %v642
    %v2955 = vunpack.c.h.b16 %v642
    %v2956 = vunpack.c.l.b16 %v643
    %v2957 = vunpack.c.h.b16 %v643
    %v2958 = vunpack.c.l.b16 %v644
    %v2959 = vunpack.c.h.b16 %v644
    %v2960 = vunpack.c.l.b16 %v645
    %v2961 = vunpack.c.h.b16 %v645
    %v2962 = vunpack.c.l.b16 %v646
    %v2963 = vunpack.c.h.b16 %v646
    %v2964 = vunpack.c.l.b16 %v647
    %v2965 = vunpack.c.h.b16 %v647
    %v2966 = vunpack.c.l.b16 %v648
    %v2967 = vunpack.c.h.b16 %v648
    %v2968 = vunpack.c.l.b16 %v649
    %v2969 = vunpack.c.h.b16 %v649
    %v2970 = vunpack.c.l.b16 %v650
    %v2971 = vunpack.c.h.b16 %v650
    %v2972 = vunpack.c.l.b16 %v651
    %v2973 = vunpack.c.h.b16 %v651
    %v2974 = vunpack.c.l.b16 %v652
    %v2975 = vunpack.c.h.b16 %v652
    %v2976 = vunpack.c.l.b16 %v653
    %v2977 = vunpack.c.h.b16 %v653
    %v2978 = vunpack.c.l.b16 %v654
    %v2979 = vunpack.c.h.b16 %v654
    %v2980 = vunpack.c.l.b16 %v655
    %v2981 = vunpack.c.h.b16 %v655
    %v2982 = vunpack.c.l.b16 %v656
    %v2983 = vunpack.c.h.b16 %v656
    %v2984 = vunpack.c.l.b16 %v657
    %v2985 = vunpack.c.h.b16 %v657
    %v2986 = vunpack.c.l.b16 %v658
    %v2987 = vunpack.c.h.b16 %v658
    %v2988 = vunpack.c.l.b16 %v659
    %v2989 = vunpack.c.h.b16 %v659
    %v2990 = vunpack.c.l.b16 %v660
    %v2991 = vunpack.c.h.b16 %v660
    %v2992 = vunpack.c.l.b16 %v661
    %v2993 = vunpack.c.h.b16 %v661
    %v2994 = vunpack.c.l.b16 %v662
    %v2995 = vunpack.c.h.b16 %v662
    %v2996 = vunpack.c.l.b16 %v663
    %v2997 = vunpack.c.h.b16 %v663
    %v2998 = vunpack.c.l.b16 %v664
    %v2999 = vunpack.c.h.b16 %v664
    %v3000 = vunpack.c.l.b16 %v665
    %v3001 = vunpack.c.h.b16 %v665
    %v3002 = vunpack.c.l.b16 %v666
    %v3003 = vunpack.c.h.b16 %v666
    %v3004 = vunpack.c.l.b16 %v667
    %v3005 = vunpack.c.h.b16 %v667
    %v3006 = vunpack.c.l.b16 %v668
    %v3007 = vunpack.c.h.b16 %v668
    %v3008 = vunpack.c.l.b16 %v669
    %v3009 = vunpack.c.h.b16 %v669
    %v3010 = vunpack.c.l.b16 %v670
    %v3011 = vunpack.c.h.b16 %v670
    %v3012 = vunpack.c.l.b16 %v671
    %v3013 = vunpack.c.h.b16 %v671
    %v3014 = vunpack.c.l.b16 %v672
    %v3015 = vunpack.c.h.b16 %v672
    %v3016 = vunpack.c.l.b16 %v673
    %v3017 = vunpack.c.h.b16 %v673
    %v3018 = vunpack.c.l.b16 %v674
    %v3019 = vunpack.c.h.b16 %v674
    %v3020 = vunpack.c.l.b16 %v675
    %v3021 = vunpack.c.h.b16 %v675
    %v3022 = vunpack.c.l.b16 %v676
    %v3023 = vunpack.c.h.b16 %v676
    %v3024 = vunpack.c.l.b16 %v677
    %v3025 = vunpack.c.h.b16 %v677
    %v3026 = vunpack.c.l.b16 %v678
    %v3027 = vunpack.c.h.b16 %v678
    %v3028 = vunpack.c.l.b16 %v679
    %v3029 = vunpack.c.h.b16 %v679
    %v3030 = vunpack.c.l.b16 %v680
    %v3031 = vunpack.c.h.b16 %v680
    %v3032 = vunpack.c.l.b16 %v681
    %v3033 = vunpack.c.h.b16 %v681
    %v3034 = vunpack.c.l.b16 %v682
    %v3035 = vunpack.c.h.b16 %v682
    %v3036 = vunpack.c.l.b16 %v683
    %v3037 = vunpack.c.h.b16 %v683
    %v3038 = vunpack.c.l.b16 %v684
    %v3039 = vunpack.c.h.b16 %v684
    %v3040 = vunpack.c.l.b16 %v685
    %v3041 = vunpack.c.h.b16 %v685
    %v3042 = vunpack.c.l.b16 %v686
    %v3043 = vunpack.c.h.b16 %v686
    %v3044 = vunpack.c.l.b16 %v687
    %v3045 = vunpack.c.h.b16 %v687
    %v3046 = vunpack.c.l.b16 %v688
    %v3047 = vunpack.c.h.b16 %v688
    %v3048 = vunpack.c.l.b16 %v689
    %v3049 = vunpack.c.h.b16 %v689
    %v3050 = vunpack.c.l.b16 %v690
    %v3051 = vunpack.c.h.b16 %v690
    %v3052 = vunpack.c.l.b16 %v691
    %v3053 = vunpack.c.h.b16 %v691
    %v3054 = vunpack.c.l.b16 %v692
    %v3055 = vunpack.c.h.b16 %v692
    %v3056 = vunpack.c.l.b16 %v693
    %v3057 = vunpack.c.h.b16 %v693
    %v3058 = vunpack.c.l.b16 %v694
    %v3059 = vunpack.c.h.b16 %v694
    %v3060 = vunpack.c.l.b16 %v695
    %v3061 = vunpack.c.h.b16 %v695
    %v3062 = vunpack.c.l.b16 %v696
    %v3063 = vunpack.c.h.b16 %v696
    %v3064 = vunpack.c.l.b16 %v697
    %v3065 = vunpack.c.h.b16 %v697
    %v3066 = vunpack.c.l.b16 %v698
    %v3067 = vunpack.c.h.b16 %v698
    %v3068 = vunpack.c.l.b16 %v699
    %v3069 = vunpack.c.h.b16 %v699
    %v3070 = vunpack.c.l.b16 %v700
    %v3071 = vunpack.c.h.b16 %v700
    %v3072 = vunpack.c.l.b16 %v701
    %v3073 = vunpack.c.h.b16 %v701
    %v3074 = vunpack.c.l.b16 %v702
    %v3075 = vunpack.c.h.b16 %v702
    %v3076 = vunpack.c.l.b16 %v703
    %v3077 = vunpack.c.h.b16 %v703
    %v3078 = vunpack.c.l.b16 %v704
    %v3079 = vunpack.c.h.b16 %v704
    %v3080 = vunpack.c.l.b16 %v705
    %v3081 = vunpack.c.h.b16 %v705
    %v3082 = vunpack.c.l.b16 %v706
    %v3083 = vunpack.c.h.b16 %v706
    %v3084 = vunpack.c.l.b16 %v707
    %v3085 = vunpack.c.h.b16 %v707
    %v3086 = vunpack.c.l.b16 %v708
    %v3087 = vunpack.c.h.b16 %v708
    %v3088 = vunpack.c.l.b16 %v709
    %v3089 = vunpack.c.h.b16 %v709
    %v3090 = vunpack.c.l.b16 %v710
    %v3091 = vunpack.c.h.b16 %v710
    %v3092 = vunpack.c.l.b16 %v711
    %v3093 = vunpack.c.h.b16 %v711
    %v3094 = vunpack.c.l.b16 %v712
    %v3095 = vunpack.c.h.b16 %v712
    %v3096 = vunpack.c.l.b16 %v713
    %v3097 = vunpack.c.h.b16 %v713
    %v3098 = vunpack.c.l.b16 %v714
    %v3099 = vunpack.c.h.b16 %v714
    %v3100 = vunpack.c.l.b16 %v715
    %v3101 = vunpack.c.h.b16 %v715
    %v3102 = vunpack.c.l.b16 %v716
    %v3103 = vunpack.c.h.b16 %v716
    %v3104 = vunpack.c.l.b16 %v717
    %v3105 = vunpack.c.h.b16 %v717
    %v3106 = vunpack.c.l.b16 %v718
    %v3107 = vunpack.c.h.b16 %v718
    %v3108 = vunpack.c.l.b16 %v719
    %v3109 = vunpack.c.h.b16 %v719
    %v3110 = vunpack.c.l.b16 %v720
    %v3111 = vunpack.c.h.b16 %v720
    %v3112 = vunpack.c.l.b16 %v721
    %v3113 = vunpack.c.h.b16 %v721
    %v3114 = vunpack.c.l.b16 %v722
    %v3115 = vunpack.c.h.b16 %v722
    %v3116 = vunpack.c.l.b16 %v723
    %v3117 = vunpack.c.h.b16 %v723
    %v3118 = vunpack.c.l.b16 %v724
    %v3119 = vunpack.c.h.b16 %v724
    %v3120 = vunpack.c.l.b16 %v725
    %v3121 = vunpack.c.h.b16 %v725
    %v3122 = vunpack.c.l.b16 %v726
    %v3123 = vunpack.c.h.b16 %v726
    %v3124 = vunpack.c.l.b16 %v727
    %v3125 = vunpack.c.h.b16 %v727
    %v3126 = vunpack.c.l.b16 %v728
    %v3127 = vunpack.c.h.b16 %v728
    %v3128 = vunpack.c.l.b16 %v729
    %v3129 = vunpack.c.h.b16 %v729
    %v3130 = vunpack.c.l.b16 %v730
    %v3131 = vunpack.c.h.b16 %v730
    %v3132 = vunpack.c.l.b16 %v731
    %v3133 = vunpack.c.h.b16 %v731
    %v3134 = vunpack.c.l.b16 %v732
    %v3135 = vunpack.c.h.b16 %v732
    %v3136 = vunpack.c.l.b16 %v733
    %v3137 = vunpack.c.h.b16 %v733
    %v3138 = vunpack.c.l.b16 %v734
    %v3139 = vunpack.c.h.b16 %v734
    %v3140 = vunpack.c.l.b16 %v735
    %v3141 = vunpack.c.h.b16 %v735
    %v3142 = vunpack.c.l.b16 %v736
    %v3143 = vunpack.c.h.b16 %v736
    %v3144 = vunpack.c.l.b16 %v737
    %v3145 = vunpack.c.h.b16 %v737
    %v3146 = vunpack.c.l.b16 %v738
    %v3147 = vunpack.c.h.b16 %v738
    %v3148 = vunpack.c.l.b16 %v739
    %v3149 = vunpack.c.h.b16 %v739
    %v3150 = vunpack.c.l.b16 %v740
    %v3151 = vunpack.c.h.b16 %v740
    %v3152 = vunpack.c.l.b16 %v741
    %v3153 = vunpack.c.h.b16 %v741
    %v3154 = vunpack.c.l.b16 %v742
    %v3155 = vunpack.c.h.b16 %v742
    %v3156 = vunpack.c.l.b16 %v743
    %v3157 = vunpack.c.h.b16 %v743
    %v3158 = vunpack.c.l.b16 %v744
    %v3159 = vunpack.c.h.b16 %v744
    %v3160 = vunpack.c.l.b16 %v745
    %v3161 = vunpack.c.h.b16 %v745
    %v3162 = vunpack.c.l.b16 %v746
    %v3163 = vunpack.c.h.b16 %v746
    %v3164 = vunpack.c.l.b16 %v747
    %v3165 = vunpack.c.h.b16 %v747
    %v3166 = vunpack.c.l.b16 %v748
    %v3167 = vunpack.c.h.b16 %v748
    %v3168 = vunpack.c.l.b16 %v749
    %v3169 = vunpack.c.h.b16 %v749
    %v3170 = vunpack.c.l.b16 %v750
    %v3171 = vunpack.c.h.b16 %v750
    %v3172 = vunpack.c.l.b16 %v751
    %v3173 = vunpack.c.h.b16 %v751
    %v3174 = vunpack.c.l.b16 %v752
    %v3175 = vunpack.c.h.b16 %v752
    %v3176 = vunpack.c.l.b16 %v753
    %v3177 = vunpack.c.h.b16 %v753
    %v3178 = vunpack.c.l.b16 %v754
    %v3179 = vunpack.c.h.b16 %v754
    %v3180 = vunpack.c.l.b16 %v755
    %v3181 = vunpack.c.h.b16 %v755
    %v3182 = vunpack.c.l.b16 %v756
    %v3183 = vunpack.c.h.b16 %v756
    %v3184 = vunpack.c.l.b16 %v757
    %v3185 = vunpack.c.h.b16 %v757
    %v3186 = vunpack.c.l.b16 %v758
    %v3187 = vunpack.c.h.b16 %v758
    %v3188 = vunpack.c.l.b16 %v759
    %v3189 = vunpack.c.h.b16 %v759
    %v3190 = vunpack.c.l.b16 %v760
    %v3191 = vunpack.c.h.b16 %v760
    %v3192 = vunpack.c.l.b16 %v761
    %v3193 = vunpack.c.h.b16 %v761
    %v3194 = vunpack.c.l.b16 %v762
    %v3195 = vunpack.c.h.b16 %v762
    %v3196 = vunpack.c.l.b16 %v763
    %v3197 = vunpack.c.h.b16 %v763
    %v3198 = vunpack.c.l.b16 %v764
    %v3199 = vunpack.c.h.b16 %v764
    %v3200 = vunpack.c.l.b16 %v765
    %v3201 = vunpack.c.h.b16 %v765
    %v3202 = vunpack.c.l.b16 %v766
    %v3203 = vunpack.c.h.b16 %v766
    %v3204 = vunpack.c.l.b16 %v767
    %v3205 = vunpack.c.h.b16 %v767
    %v3206 = vunpack.c.l.b16 %v768
    %v3207 = vunpack.c.h.b16 %v768
    %v3208 = vunpack.c.l.b16 %v769
    %v3209 = vunpack.c.h.b16 %v769
    %v3210 = vunpack.c.l.b16 %v770
    %v3211 = vunpack.c.h.b16 %v770
    %v3212 = vunpack.c.l.b16 %v771
    %v3213 = vunpack.c.h.b16 %v771
    %v3214 = vunpack.c.l.b16 %v772
    %v3215 = vunpack.c.h.b16 %v772
    %v3216 = vunpack.c.l.b16 %v773
    %v3217 = vunpack.c.h.b16 %v773
    %v3218 = vunpack.c.l.b16 %v774
    %v3219 = vunpack.c.h.b16 %v774
    %v3220 = vunpack.c.l.b16 %v775
    %v3221 = vunpack.c.h.b16 %v775
    %v3222 = vunpack.c.l.b16 %v776
    %v3223 = vunpack.c.h.b16 %v776
    %v3224 = vunpack.c.l.b16 %v777
    %v3225 = vunpack.c.h.b16 %v777
    %v3226 = vunpack.c.l.b16 %v778
    %v3227 = vunpack.c.h.b16 %v778
    %v3228 = vunpack.c.l.b16 %v779
    %v3229 = vunpack.c.h.b16 %v779
    %v3230 = vunpack.c.l.b16 %v780
    %v3231 = vunpack.c.h.b16 %v780
    %v3232 = vunpack.c.l.b16 %v781
    %v3233 = vunpack.c.h.b16 %v781
    %v3234 = vunpack.c.l.b16 %v782
    %v3235 = vunpack.c.h.b16 %v782
    %v3236 = vunpack.c.l.b16 %v783
    %v3237 = vunpack.c.h.b16 %v783
    %v3238 = vunpack.c.l.b16 %v784
    %v3239 = vunpack.c.h.b16 %v784
    %v3240 = vunpack.c.l.b16 %v785
    %v3241 = vunpack.c.h.b16 %v785
    %v3242 = vunpack.c.l.b16 %v786
    %v3243 = vunpack.c.h.b16 %v786
    %v3244 = vunpack.c.l.b16 %v787
    %v3245 = vunpack.c.h.b16 %v787
    %v3246 = vunpack.c.l.b16 %v788
    %v3247 = vunpack.c.h.b16 %v788
    %v3248 = vunpack.c.l.b16 %v789
    %v3249 = vunpack.c.h.b16 %v789
    %v3250 = vunpack.c.l.b16 %v790
    %v3251 = vunpack.c.h.b16 %v790
    %v3252 = vunpack.c.l.b16 %v791
    %v3253 = vunpack.c.h.b16 %v791
    %v3254 = vunpack.c.l.b16 %v792
    %v3255 = vunpack.c.h.b16 %v792
    %v3256 = vunpack.c.l.b16 %v793
    %v3257 = vunpack.c.h.b16 %v793
    %v3258 = vunpack.c.l.b16 %v794
    %v3259 = vunpack.c.h.b16 %v794
    %v3260 = vunpack.c.l.b16 %v795
    %v3261 = vunpack.c.h.b16 %v795
    %v3262 = vunpack.c.l.b16 %v796
    %v3263 = vunpack.c.h.b16 %v796
    %v3264 = vunpack.c.l.b16 %v797
    %v3265 = vunpack.c.h.b16 %v797
    %v3266 = vunpack.c.l.b16 %v798
    %v3267 = vunpack.c.h.b16 %v798
    %v3268 = vunpack.c.l.b16 %v799
    %v3269 = vunpack.c.h.b16 %v799
    %v3270 = vunpack.c.l.b16 %v800
    %v3271 = vunpack.c.h.b16 %v800
    %v3272 = vunpack.c.l.b16 %v801
    %v3273 = vunpack.c.h.b16 %v801
    %v3274 = vunpack.c.l.b16 %v802
    %v3275 = vunpack.c.h.b16 %v802
    %v3276 = vunpack.c.l.b16 %v803
    %v3277 = vunpack.c.h.b16 %v803
    %v3278 = vunpack.c.l.b16 %v804
    %v3279 = vunpack.c.h.b16 %v804
    %v3280 = vunpack.c.l.b16 %v805
    %v3281 = vunpack.c.h.b16 %v805
    %v3282 = vunpack.c.l.b16 %v806
    %v3283 = vunpack.c.h.b16 %v806
    %v3284 = vunpack.c.l.b16 %v807
    %v3285 = vunpack.c.h.b16 %v807
    %v3286 = vunpack.c.l.b16 %v808
    %v3287 = vunpack.c.h.b16 %v808
    %v3288 = vunpack.c.l.b16 %v809
    %v3289 = vunpack.c.h.b16 %v809
    %v3290 = vunpack.c.l.b16 %v810
    %v3291 = vunpack.c.h.b16 %v810
    %v3292 = vunpack.c.l.b16 %v811
    %v3293 = vunpack.c.h.b16 %v811
    %v3294 = vunpack.c.l.b16 %v812
    %v3295 = vunpack.c.h.b16 %v812
    %v3296 = vunpack.c.l.b16 %v813
    %v3297 = vunpack.c.h.b16 %v813
    %v3298 = vunpack.c.l.b16 %v814
    %v3299 = vunpack.c.h.b16 %v814
    %v3300 = vunpack.c.l.b16 %v815
    %v3301 = vunpack.c.h.b16 %v815
    %v3302 = vunpack.c.l.b16 %v816
    %v3303 = vunpack.c.h.b16 %v816
    %v3304 = vunpack.c.l.b16 %v817
    %v3305 = vunpack.c.h.b16 %v817
    %v3306 = vunpack.c.l.b16 %v818
    %v3307 = vunpack.c.h.b16 %v818
    %v3308 = vunpack.c.l.b16 %v819
    %v3309 = vunpack.c.h.b16 %v819
    %v3310 = vunpack.c.l.b16 %v820
    %v3311 = vunpack.c.h.b16 %v820
    %v3312 = vunpack.c.l.b16 %v821
    %v3313 = vunpack.c.h.b16 %v821
    %v3314 = vunpack.c.l.b16 %v822
    %v3315 = vunpack.c.h.b16 %v822
    %v3316 = vunpack.c.l.b16 %v823
    %v3317 = vunpack.c.h.b16 %v823
    %v3318 = vunpack.c.l.b16 %v824
    %v3319 = vunpack.c.h.b16 %v824
    %v3320 = vunpack.c.l.b16 %v825
    %v3321 = vunpack.c.h.b16 %v825
    %v3322 = vunpack.c.l.b16 %v826
    %v3323 = vunpack.c.h.b16 %v826
    %v3324 = vunpack.c.l.b16 %v827
    %v3325 = vunpack.c.h.b16 %v827
    %v3326 = vunpack.c.l.b16 %v828
    %v3327 = vunpack.c.h.b16 %v828
    %v3328 = vunpack.c.l.b16 %v829
    %v3329 = vunpack.c.h.b16 %v829
    %v3330 = vunpack.c.l.b16 %v830
    %v3331 = vunpack.c.h.b16 %v830
    %v3332 = vunpack.c.l.b16 %v831
    %v3333 = vunpack.c.h.b16 %v831
    %v3334 = vunpack.c.l.b16 %v832
    %v3335 = vunpack.c.h.b16 %v832
    %v3336 = vunpack.c.l.b16 %v833
    %v3337 = vunpack.c.h.b16 %v833
    %v3338 = vunpack.c.l.b16 %v834
    %v3339 = vunpack.c.h.b16 %v834
    %v3340 = vunpack.c.l.b16 %v835
    %v3341 = vunpack.c.h.b16 %v835
    %v3342 = vunpack.c.l.b16 %v836
    %v3343 = vunpack.c.h.b16 %v836
    %v3344 = vunpack.c.l.b16 %v837
    %v3345 = vunpack.c.h.b16 %v837
    %v3346 = vunpack.c.l.b16 %v838
    %v3347 = vunpack.c.h.b16 %v838
    %v3348 = vunpack.c.l.b16 %v839
    %v3349 = vunpack.c.h.b16 %v839
    %v3350 = vunpack.c.l.b16 %v840
    %v3351 = vunpack.c.h.b16 %v840
    %v3352 = vunpack.c.l.b16 %v841
    %v3353 = vunpack.c.h.b16 %v841
    %v3354 = vunpack.c.l.b16 %v842
    %v3355 = vunpack.c.h.b16 %v842
    %v3356 = vunpack.c.l.b16 %v843
    %v3357 = vunpack.c.h.b16 %v843
    %v3358 = vunpack.c.l.b16 %v844
    %v3359 = vunpack.c.h.b16 %v844
    %v3360 = vunpack.c.l.b16 %v845
    %v3361 = vunpack.c.h.b16 %v845
    %v3362 = vunpack.c.l.b16 %v846
    %v3363 = vunpack.c.h.b16 %v846
    %v3364 = vunpack.c.l.b16 %v847
    %v3365 = vunpack.c.h.b16 %v847
    %v3366 = vunpack.c.l.b16 %v848
    %v3367 = vunpack.c.h.b16 %v848
    %v3368 = vunpack.c.l.b16 %v849
    %v3369 = vunpack.c.h.b16 %v849
    %v3370 = vunpack.c.l.b16 %v850
    %v3371 = vunpack.c.h.b16 %v850
    %v3372 = vunpack.c.l.b16 %v851
    %v3373 = vunpack.c.h.b16 %v851
    %v3374 = vunpack.c.l.b16 %v852
    %v3375 = vunpack.c.h.b16 %v852
    %v3376 = vunpack.c.l.b16 %v853
    %v3377 = vunpack.c.h.b16 %v853
    %v3378 = vunpack.c.l.b16 %v854
    %v3379 = vunpack.c.h.b16 %v854
    %v3380 = vunpack.c.l.b16 %v855
    %v3381 = vunpack.c.h.b16 %v855
    %v3382 = vunpack.c.l.b16 %v856
    %v3383 = vunpack.c.h.b16 %v856
    %v3384 = vunpack.c.l.b16 %v857
    %v3385 = vunpack.c.h.b16 %v857
    %v3386 = vunpack.c.l.b16 %v858
    %v3387 = vunpack.c.h.b16 %v858
    %v3388 = vunpack.c.l.b16 %v859
    %v3389 = vunpack.c.h.b16 %v859
    %v3390 = vunpack.c.l.b16 %v860
    %v3391 = vunpack.c.h.b16 %v860
    %v3392 = vunpack.c.l.b16 %v861
    %v3393 = vunpack.c.h.b16 %v861
    %v3394 = vunpack.c.l.b16 %v862
    %v3395 = vunpack.c.h.b16 %v862
    %v3396 = vunpack.c.l.b16 %v863
    %v3397 = vunpack.c.h.b16 %v863
    %v3398 = vunpack.c.l.b16 %v864
    %v3399 = vunpack.c.h.b16 %v864
    %v3400 = vunpack.c.l.b16 %v865
    %v3401 = vunpack.c.h.b16 %v865
    %v3402 = vunpack.c.l.b16 %v866
    %v3403 = vunpack.c.h.b16 %v866
    %v3404 = vunpack.c.l.b16 %v867
    %v3405 = vunpack.c.h.b16 %v867
    %v3406 = vunpack.c.l.b16 %v868
    %v3407 = vunpack.c.h.b16 %v868
    %v3408 = vunpack.c.l.b16 %v869
    %v3409 = vunpack.c.h.b16 %v869
    %v3410 = vunpack.c.l.b16 %v870
    %v3411 = vunpack.c.h.b16 %v870
    %v3412 = vunpack.c.l.b16 %v871
    %v3413 = vunpack.c.h.b16 %v871
    %v3414 = vunpack.c.l.b16 %v872
    %v3415 = vunpack.c.h.b16 %v872
    %v3416 = vunpack.c.l.b16 %v873
    %v3417 = vunpack.c.h.b16 %v873
    %v3418 = vunpack.c.l.b16 %v874
    %v3419 = vunpack.c.h.b16 %v874
    %v3420 = vunpack.c.l.b16 %v875
    %v3421 = vunpack.c.h.b16 %v875
    %v3422 = vunpack.c.l.b16 %v876
    %v3423 = vunpack.c.h.b16 %v876
    %v3424 = vunpack.c.l.b16 %v877
    %v3425 = vunpack.c.h.b16 %v877
    %v3426 = vunpack.c.l.b16 %v878
    %v3427 = vunpack.c.h.b16 %v878
    %v3428 = vunpack.c.l.b16 %v879
    %v3429 = vunpack.c.h.b16 %v879
    %v3430 = vunpack.c.l.b16 %v880
    %v3431 = vunpack.c.h.b16 %v880
    %v3432 = vunpack.c.l.b16 %v881
    %v3433 = vunpack.c.h.b16 %v881
    %v3434 = vunpack.c.l.b16 %v882
    %v3435 = vunpack.c.h.b16 %v882
    %v3436 = vunpack.c.l.b16 %v883
    %v3437 = vunpack.c.h.b16 %v883
    %v3438 = vunpack.c.l.b16 %v884
    %v3439 = vunpack.c.h.b16 %v884
    %v3440 = vunpack.c.l.b16 %v885
    %v3441 = vunpack.c.h.b16 %v885
    %v3442 = vunpack.c.l.b16 %v886
    %v3443 = vunpack.c.h.b16 %v886
    %v3444 = vunpack.c.l.b16 %v887
    %v3445 = vunpack.c.h.b16 %v887
    %v3446 = vunpack.c.l.b16 %v888
    %v3447 = vunpack.c.h.b16 %v888
    %v3448 = vunpack.c.l.b16 %v889
    %v3449 = vunpack.c.h.b16 %v889
    %v3450 = vunpack.c.l.b16 %v890
    %v3451 = vunpack.c.h.b16 %v890
    %v3452 = vunpack.c.l.b16 %v891
    %v3453 = vunpack.c.h.b16 %v891
    %v3454 = vunpack.c.l.b16 %v892
    %v3455 = vunpack.c.h.b16 %v892
    %v3456 = vunpack.c.l.b16 %v893
    %v3457 = vunpack.c.h.b16 %v893
    %v3458 = vunpack.c.l.b16 %v894
    %v3459 = vunpack.c.h.b16 %v894
    %v3460 = vunpack.c.l.b16 %v895
    %v3461 = vunpack.c.h.b16 %v895
    %v3462 = vunpack.c.l.b16 %v896
    %v3463 = vunpack.c.h.b16 %v896
    %v3464 = vunpack.c.l.b16 %v897
    %v3465 = vunpack.c.h.b16 %v897
    %v3466 = vunpack.c.l.b16 %v898
    %v3467 = vunpack.c.h.b16 %v898
    %v3468 = vunpack.c.l.b16 %v899
    %v3469 = vunpack.c.h.b16 %v899
    %v3470 = vunpack.c.l.b16 %v900
    %v3471 = vunpack.c.h.b16 %v900
    %v3472 = vunpack.c.l.b16 %v901
    %v3473 = vunpack.c.h.b16 %v901
    %v3474 = vunpack.c.l.b16 %v902
    %v3475 = vunpack.c.h.b16 %v902
    %v3476 = vunpack.c.l.b16 %v903
    %v3477 = vunpack.c.h.b16 %v903
    %v3478 = vunpack.c.l.b16 %v904
    %v3479 = vunpack.c.h.b16 %v904
    %v3480 = vunpack.c.l.b16 %v905
    %v3481 = vunpack.c.h.b16 %v905
    %v3482 = vunpack.c.l.b16 %v906
    %v3483 = vunpack.c.h.b16 %v906
    %v3484 = vunpack.c.l.b16 %v907
    %v3485 = vunpack.c.h.b16 %v907
    %v3486 = vunpack.c.l.b16 %v908
    %v3487 = vunpack.c.h.b16 %v908
    %v3488 = vunpack.c.l.b16 %v909
    %v3489 = vunpack.c.h.b16 %v909
    %v3490 = vunpack.c.l.b16 %v910
    %v3491 = vunpack.c.h.b16 %v910
    %v3492 = vunpack.c.l.b16 %v911
    %v3493 = vunpack.c.h.b16 %v911
    %v3494 = vunpack.c.l.b16 %v912
    %v3495 = vunpack.c.h.b16 %v912
    %v3496 = vunpack.c.l.b16 %v913
    %v3497 = vunpack.c.h.b16 %v913
    %v3498 = vunpack.c.l.b16 %v914
    %v3499 = vunpack.c.h.b16 %v914
    %v3500 = vunpack.c.l.b16 %v915
    %v3501 = vunpack.c.h.b16 %v915
    %v3502 = vunpack.c.l.b16 %v916
    %v3503 = vunpack.c.h.b16 %v916
    %v3504 = vunpack.c.l.b16 %v917
    %v3505 = vunpack.c.h.b16 %v917
    %v3506 = vunpack.c.l.b16 %v918
    %v3507 = vunpack.c.h.b16 %v918
    %v3508 = vunpack.c.l.b16 %v919
    %v3509 = vunpack.c.h.b16 %v919
    %v3510 = vunpack.c.l.b16 %v920
    %v3511 = vunpack.c.h.b16 %v920
    %v3512 = vunpack.c.l.b16 %v921
    %v3513 = vunpack.c.h.b16 %v921
    %v3514 = vunpack.c.l.b16 %v922
    %v3515 = vunpack.c.h.b16 %v922
    %v3516 = vunpack.c.l.b16 %v923
    %v3517 = vunpack.c.h.b16 %v923
    %v3518 = vunpack.c.l.b16 %v924
    %v3519 = vunpack.c.h.b16 %v924
    %v3520 = vunpack.c.l.b16 %v925
    %v3521 = vunpack.c.h.b16 %v925
    %v3522 = vunpack.c.l.b16 %v926
    %v3523 = vunpack.c.h.b16 %v926
    %v3524 = vunpack.c.l.b16 %v927
    %v3525 = vunpack.c.h.b16 %v927
    %v3526 = vunpack.c.l.b16 %v928
    %v3527 = vunpack.c.h.b16 %v928
    %v3528 = vunpack.c.l.b16 %v929
    %v3529 = vunpack.c.h.b16 %v929
    %v3530 = vunpack.c.l.b16 %v930
    %v3531 = vunpack.c.h.b16 %v930
    %v3532 = vunpack.c.l.b16 %v931
    %v3533 = vunpack.c.h.b16 %v931
    %v3534 = vunpack.c.l.b16 %v932
    %v3535 = vunpack.c.h.b16 %v932
    %v3536 = vunpack.c.l.b16 %v933
    %v3537 = vunpack.c.h.b16 %v933
    %v3538 = vunpack.c.l.b16 %v934
    %v3539 = vunpack.c.h.b16 %v934
    %v3540 = vunpack.c.l.b16 %v935
    %v3541 = vunpack.c.h.b16 %v935
    %v3542 = vunpack.c.l.b16 %v936
    %v3543 = vunpack.c.h.b16 %v936
    %v3544 = vunpack.c.l.b16 %v937
    %v3545 = vunpack.c.h.b16 %v937
    %v3546 = vunpack.c.l.b16 %v938
    %v3547 = vunpack.c.h.b16 %v938
    %v3548 = vunpack.c.l.b16 %v939
    %v3549 = vunpack.c.h.b16 %v939
    %v3550 = vunpack.c.l.b16 %v940
    %v3551 = vunpack.c.h.b16 %v940
    %v3552 = vunpack.c.l.b16 %v941
    %v3553 = vunpack.c.h.b16 %v941
    %v3554 = vunpack.c.l.b16 %v942
    %v3555 = vunpack.c.h.b16 %v942
    %v3556 = vunpack.c.l.b16 %v943
    %v3557 = vunpack.c.h.b16 %v943
    %v3558 = vunpack.c.l.b16 %v944
    %v3559 = vunpack.c.h.b16 %v944
    %v3560 = vunpack.c.l.b16 %v945
    %v3561 = vunpack.c.h.b16 %v945
    %v3562 = vunpack.c.l.b16 %v946
    %v3563 = vunpack.c.h.b16 %v946
    %v3564 = vunpack.c.l.b16 %v947
    %v3565 = vunpack.c.h.b16 %v947
    %v3566 = vunpack.c.l.b16 %v948
    %v3567 = vunpack.c.h.b16 %v948
    %v3568 = vunpack.c.l.b16 %v949
    %v3569 = vunpack.c.h.b16 %v949
    %v3570 = vunpack.c.l.b16 %v950
    %v3571 = vunpack.c.h.b16 %v950
    %v3572 = vunpack.c.l.b16 %v951
    %v3573 = vunpack.c.h.b16 %v951
    %v3574 = vunpack.c.l.b16 %v952
    %v3575 = vunpack.c.h.b16 %v952
    %v3576 = vunpack.c.l.b16 %v953
    %v3577 = vunpack.c.h.b16 %v953
    %v3578 = vunpack.c.l.b16 %v954
    %v3579 = vunpack.c.h.b16 %v954
    %v3580 = vunpack.c.l.b16 %v955
    %v3581 = vunpack.c.h.b16 %v955
    %v3582 = vunpack.c.l.b16 %v956
    %v3583 = vunpack.c.h.b16 %v956
    %v3584 = vunpack.c.l.b16 %v957
    %v3585 = vunpack.c.h.b16 %v957
    %v3586 = vunpack.c.l.b16 %v958
    %v3587 = vunpack.c.h.b16 %v958
    %v3588 = vunpack.c.l.b16 %v959
    %v3589 = vunpack.c.h.b16 %v959
    %v3590 = vunpack.c.l.b16 %v960
    %v3591 = vunpack.c.h.b16 %v960
    %v3592 = vunpack.c.l.b16 %v961
    %v3593 = vunpack.c.h.b16 %v961
    %v3594 = vunpack.c.l.b16 %v962
    %v3595 = vunpack.c.h.b16 %v962
    %v3596 = vunpack.c.l.b16 %v963
    %v3597 = vunpack.c.h.b16 %v963
    %v3598 = vunpack.c.l.b16 %v964
    %v3599 = vunpack.c.h.b16 %v964
    %v3600 = vunpack.c.l.b16 %v965
    %v3601 = vunpack.c.h.b16 %v965
    %v3602 = vunpack.c.l.b16 %v966
    %v3603 = vunpack.c.h.b16 %v966
    %v3604 = vunpack.c.l.b16 %v967
    %v3605 = vunpack.c.h.b16 %v967
    %v3606 = vunpack.c.l.b16 %v968
    %v3607 = vunpack.c.h.b16 %v968
    %v3608 = vunpack.c.l.b16 %v969
    %v3609 = vunpack.c.h.b16 %v969
    %v3610 = vunpack.c.l.b16 %v970
    %v3611 = vunpack.c.h.b16 %v970
    %v3612 = vunpack.c.l.b16 %v971
    %v3613 = vunpack.c.h.b16 %v971
    %v3614 = vunpack.c.l.b16 %v972
    %v3615 = vunpack.c.h.b16 %v972
    %v3616 = vunpack.c.l.b16 %v973
    %v3617 = vunpack.c.h.b16 %v973
    %v3618 = vunpack.c.l.b16 %v974
    %v3619 = vunpack.c.h.b16 %v974
    %v3620 = vunpack.c.l.b16 %v975
    %v3621 = vunpack.c.h.b16 %v975
    %v3622 = vunpack.c.l.b16 %v976
    %v3623 = vunpack.c.h.b16 %v976
    %v3624 = vunpack.c.l.b16 %v977
    %v3625 = vunpack.c.h.b16 %v977
    %v3626 = vunpack.c.l.b16 %v978
    %v3627 = vunpack.c.h.b16 %v978
    %v3628 = vunpack.c.l.b16 %v979
    %v3629 = vunpack.c.h.b16 %v979
    %v3630 = vunpack.c.l.b16 %v980
    %v3631 = vunpack.c.h.b16 %v980
    %v3632 = vunpack.c.l.b16 %v981
    %v3633 = vunpack.c.h.b16 %v981
    %v3634 = vunpack.c.l.b16 %v982
    %v3635 = vunpack.c.h.b16 %v982
    %v3636 = vunpack.c.l.b16 %v983
    %v3637 = vunpack.c.h.b16 %v983
    %v3638 = vunpack.c.l.b16 %v984
    %v3639 = vunpack.c.h.b16 %v984
    %v3640 = vunpack.c.l.b16 %v985
    %v3641 = vunpack.c.h.b16 %v985
    %v3642 = vunpack.c.l.b16 %v986
    %v3643 = vunpack.c.h.b16 %v986
    %v3644 = vunpack.c.l.b16 %v987
    %v3645 = vunpack.c.h.b16 %v987
    %v3646 = vunpack.c.l.b16 %v988
    %v3647 = vunpack.c.h.b16 %v988
    %v3648 = vunpack.c.l.b16 %v989
    %v3649 = vunpack.c.h.b16 %v989
    %v3650 = vunpack.c.l.b16 %v990
    %v3651 = vunpack.c.h.b16 %v990
    %v3652 = vunpack.c.l.b16 %v991
    %v3653 = vunpack.c.h.b16 %v991
    %v3654 = vunpack.c.l.b16 %v992
    %v3655 = vunpack.c.h.b16 %v992
    %v3656 = vunpack.c.l.b16 %v993
    %v3657 = vunpack.c.h.b16 %v993
    %v3658 = vunpack.c.l.b16 %v994
    %v3659 = vunpack.c.h.b16 %v994
    %v3660 = vunpack.c.l.b16 %v995
    %v3661 = vunpack.c.h.b16 %v995
    %v3662 = vunpack.c.l.b16 %v996
    %v3663 = vunpack.c.h.b16 %v996
    %v3664 = vunpack.c.l.b16 %v997
    %v3665 = vunpack.c.h.b16 %v997
    %v3666 = vunpack.c.l.b16 %v998
    %v3667 = vunpack.c.h.b16 %v998
    %v3668 = vunpack.c.l.b16 %v999
    %v3669 = vunpack.c.h.b16 %v999
    %v3670 = vunpack.c.l.b16 %v1000
    %v3671 = vunpack.c.h.b16 %v1000
    %v3672 = vunpack.c.l.b16 %v1001
    %v3673 = vunpack.c.h.b16 %v1001
    %v3674 = vunpack.c.l.b16 %v1002
    %v3675 = vunpack.c.h.b16 %v1002
    %v3676 = vunpack.c.l.b16 %v1003
    %v3677 = vunpack.c.h.b16 %v1003
    %v3678 = vunpack.c.l.b16 %v1004
    %v3679 = vunpack.c.h.b16 %v1004
    %v3680 = vunpack.c.l.b16 %v1005
    %v3681 = vunpack.c.h.b16 %v1005
    %v3682 = vunpack.c.l.b16 %v1006
    %v3683 = vunpack.c.h.b16 %v1006
    %v3684 = vunpack.c.l.b16 %v1007
    %v3685 = vunpack.c.h.b16 %v1007
    %v3686 = vunpack.c.l.b16 %v1008
    %v3687 = vunpack.c.h.b16 %v1008
    %v3688 = vunpack.c.l.b16 %v1009
    %v3689 = vunpack.c.h.b16 %v1009
    %v3690 = vunpack.c.l.b16 %v1010
    %v3691 = vunpack.c.h.b16 %v1010
    %v3692 = vunpack.c.l.b16 %v1011
    %v3693 = vunpack.c.h.b16 %v1011
    %v3694 = vunpack.c.l.b16 %v1012
    %v3695 = vunpack.c.h.b16 %v1012
    %v3696 = vunpack.c.l.b16 %v1013
    %v3697 = vunpack.c.h.b16 %v1013
    %v3698 = vunpack.c.l.b16 %v1014
    %v3699 = vunpack.c.h.b16 %v1014
    %v3700 = vunpack.c.l.b16 %v1015
    %v3701 = vunpack.c.h.b16 %v1015
    %v3702 = vunpack.c.l.b16 %v1016
    %v3703 = vunpack.c.h.b16 %v1016
    %v3704 = vunpack.c.l.b16 %v1017
    %v3705 = vunpack.c.h.b16 %v1017
    %v3706 = vunpack.c.l.b16 %v1018
    %v3707 = vunpack.c.h.b16 %v1018
    %v3708 = vunpack.c.l.b16 %v1019
    %v3709 = vunpack.c.h.b16 %v1019
    %v3710 = vunpack.c.l.b16 %v1020
    %v3711 = vunpack.c.h.b16 %v1020
    %v3712 = vunpack.c.l.b16 %v1021
    %v3713 = vunpack.c.h.b16 %v1021
    %v3714 = vunpack.c.l.b16 %v1022
    %v3715 = vunpack.c.h.b16 %v1022
    %v3716 = vunpack.c.l.b16 %v1023
    %v3717 = vunpack.c.h.b16 %v1023
    %v3718 = vunpack.c.l.b16 %v1024
    %v3719 = vunpack.c.h.b16 %v1024
    %v3720 = vunpack.c.l.b16 %v1025
    %v3721 = vunpack.c.h.b16 %v1025
    %v3722 = vunpack.c.l.b16 %v1026
    %v3723 = vunpack.c.h.b16 %v1026
    %v3724 = vunpack.c.l.b16 %v1027
    %v3725 = vunpack.c.h.b16 %v1027
    %v3726 = vunpack.c.l.b16 %v1028
    %v3727 = vunpack.c.h.b16 %v1028
    %v3728 = vunpack.c.l.b16 %v1029
    %v3729 = vunpack.c.h.b16 %v1029
    %v3730 = vunpack.c.l.b16 %v1030
    %v3731 = vunpack.c.h.b16 %v1030
    %v3732 = vunpack.c.l.b16 %v1031
    %v3733 = vunpack.c.h.b16 %v1031
    %v3734 = vunpack.c.l.b16 %v1032
    %v3735 = vunpack.c.h.b16 %v1032
    %v3736 = vunpack.c.l.b16 %v1033
    %v3737 = vunpack.c.h.b16 %v1033
    %v3738 = vunpack.c.l.b16 %v1034
    %v3739 = vunpack.c.h.b16 %v1034
    %v3740 = vunpack.c.l.b16 %v1035
    %v3741 = vunpack.c.h.b16 %v1035
    %v3742 = vunpack.c.l.b16 %v1036
    %v3743 = vunpack.c.h.b16 %v1036
    %v3744 = vunpack.c.l.b16 %v1037
    %v3745 = vunpack.c.h.b16 %v1037
    %v3746 = vunpack.c.l.b16 %v1038
    %v3747 = vunpack.c.h.b16 %v1038
    %v3748 = vunpack.c.l.b16 %v1039
    %v3749 = vunpack.c.h.b16 %v1039
    %v3750 = vunpack.c.l.b16 %v1040
    %v3751 = vunpack.c.h.b16 %v1040
    %v3752 = vunpack.c.l.b16 %v1041
    %v3753 = vunpack.c.h.b16 %v1041
    %v3754 = vunpack.c.l.b16 %v1042
    %v3755 = vunpack.c.h.b16 %v1042
    %v3756 = vunpack.c.l.b16 %v1043
    %v3757 = vunpack.c.h.b16 %v1043
    %v3758 = vunpack.c.l.b16 %v1044
    %v3759 = vunpack.c.h.b16 %v1044
    %v3760 = vunpack.c.l.b16 %v1045
    %v3761 = vunpack.c.h.b16 %v1045
    %v3762 = vunpack.c.l.b16 %v1046
    %v3763 = vunpack.c.h.b16 %v1046
    %v3764 = vunpack.c.l.b16 %v1047
    %v3765 = vunpack.c.h.b16 %v1047
    %v3766 = vunpack.c.l.b16 %v1048
    %v3767 = vunpack.c.h.b16 %v1048
    %v3768 = vunpack.c.l.b16 %v1049
    %v3769 = vunpack.c.h.b16 %v1049
    %v3770 = vunpack.c.l.b16 %v1050
    %v3771 = vunpack.c.h.b16 %v1050
    %v3772 = vunpack.c.l.b16 %v1051
    %v3773 = vunpack.c.h.b16 %v1051
    %v3774 = vunpack.c.l.b16 %v1052
    %v3775 = vunpack.c.h.b16 %v1052
    %v3776 = vunpack.c.l.b16 %v1053
    %v3777 = vunpack.c.h.b16 %v1053
    %v3778 = vunpack.c.l.b16 %v1054
    %v3779 = vunpack.c.h.b16 %v1054
    %v3780 = vunpack.c.l.b16 %v1055
    %v3781 = vunpack.c.h.b16 %v1055
    %v3782 = vunpack.c.l.b16 %v1056
    %v3783 = vunpack.c.h.b16 %v1056
    %v3784 = vunpack.c.l.b16 %v1057
    %v3785 = vunpack.c.h.b16 %v1057
    %v3786 = vunpack.c.l.b16 %v1058
    %v3787 = vunpack.c.h.b16 %v1058
    %v3788 = vunpack.c.l.b16 %v1059
    %v3789 = vunpack.c.h.b16 %v1059
    %v3790 = vunpack.c.l.b16 %v1060
    %v3791 = vunpack.c.h.b16 %v1060
    %v3792 = vunpack.c.l.b16 %v1061
    %v3793 = vunpack.c.h.b16 %v1061
    %v3794 = vunpack.c.l.b16 %v1062
    %v3795 = vunpack.c.h.b16 %v1062
    %v3796 = vunpack.c.l.b16 %v1063
    %v3797 = vunpack.c.h.b16 %v1063
    %v3798 = vunpack.c.l.b16 %v1064
    %v3799 = vunpack.c.h.b16 %v1064
    %v3800 = vunpack.c.l.b16 %v1065
    %v3801 = vunpack.c.h.b16 %v1065
    %v3802 = vunpack.c.l.b16 %v1066
    %v3803 = vunpack.c.h.b16 %v1066
    %v3804 = vunpack.c.l.b16 %v1067
    %v3805 = vunpack.c.h.b16 %v1067
    %v3806 = vunpack.c.l.b16 %v1068
    %v3807 = vunpack.c.h.b16 %v1068
    %v3808 = vunpack.c.l.b16 %v1069
    %v3809 = vunpack.c.h.b16 %v1069
    %v3810 = vunpack.c.l.b16 %v1070
    %v3811 = vunpack.c.h.b16 %v1070
    %v3812 = vunpack.c.l.b16 %v1071
    %v3813 = vunpack.c.h.b16 %v1071
    %v3814 = vunpack.c.l.b16 %v1072
    %v3815 = vunpack.c.h.b16 %v1072
    %v3816 = vunpack.c.l.b16 %v1073
    %v3817 = vunpack.c.h.b16 %v1073
    %v3818 = vunpack.c.l.b16 %v1074
    %v3819 = vunpack.c.h.b16 %v1074
    %v3820 = vunpack.c.l.b16 %v1075
    %v3821 = vunpack.c.h.b16 %v1075
    %v3822 = vunpack.c.l.b16 %v1076
    %v3823 = vunpack.c.h.b16 %v1076
    %v3824 = vunpack.c.l.b16 %v1077
    %v3825 = vunpack.c.h.b16 %v1077
    %v3826 = vunpack.c.l.b16 %v1078
    %v3827 = vunpack.c.h.b16 %v1078
    %v3828 = vunpack.c.l.b16 %v1079
    %v3829 = vunpack.c.h.b16 %v1079
    %v3830 = vunpack.c.l.b16 %v1080
    %v3831 = vunpack.c.h.b16 %v1080
    %v3832 = vunpack.c.l.b16 %v1081
    %v3833 = vunpack.c.h.b16 %v1081
    %v3834 = vunpack.c.l.b16 %v1082
    %v3835 = vunpack.c.h.b16 %v1082
    %v3836 = vunpack.c.l.b16 %v1083
    %v3837 = vunpack.c.h.b16 %v1083
    %v3838 = vunpack.c.l.b16 %v1084
    %v3839 = vunpack.c.h.b16 %v1084
    %v3840 = vunpack.c.l.b16 %v1085
    %v3841 = vunpack.c.h.b16 %v1085
    %v3842 = vunpack.c.l.b16 %v1086
    %v3843 = vunpack.c.h.b16 %v1086
    %v3844 = vunpack.c.l.b16 %v1087
    %v3845 = vunpack.c.h.b16 %v1087
    %v3846 = vunpack.c.l.b16 %v1088
    %v3847 = vunpack.c.h.b16 %v1088
    %v3848 = vunpack.c.l.b16 %v1089
    %v3849 = vunpack.c.h.b16 %v1089
    %v3850 = vunpack.c.l.b16 %v1090
    %v3851 = vunpack.c.h.b16 %v1090
    %v3852 = vunpack.c.l.b16 %v1091
    %v3853 = vunpack.c.h.b16 %v1091
    %v3854 = vunpack.c.l.b16 %v1092
    %v3855 = vunpack.c.h.b16 %v1092
    %v3856 = vunpack.c.l.b16 %v1093
    %v3857 = vunpack.c.h.b16 %v1093
    %v3858 = vunpack.c.l.b16 %v1094
    %v3859 = vunpack.c.h.b16 %v1094
    %v3860 = vunpack.c.l.b16 %v1095
    %v3861 = vunpack.c.h.b16 %v1095
    %v3862 = vunpack.c.l.b16 %v1096
    %v3863 = vunpack.c.h.b16 %v1096
    %v3864 = vunpack.c.l.b16 %v1097
    %v3865 = vunpack.c.h.b16 %v1097
    %v3866 = vunpack.c.l.b16 %v1098
    %v3867 = vunpack.c.h.b16 %v1098
    %v3868 = vunpack.c.l.b16 %v1099
    %v3869 = vunpack.c.h.b16 %v1099
    %v3870 = vunpack.c.l.b16 %v1100
    %v3871 = vunpack.c.h.b16 %v1100
    %v3872 = vunpack.c.l.b16 %v1101
    %v3873 = vunpack.c.h.b16 %v1101
    %v3874 = vunpack.c.l.b16 %v1102
    %v3875 = vunpack.c.h.b16 %v1102
    %v3876 = vunpack.c.l.b16 %v1103
    %v3877 = vunpack.c.h.b16 %v1103
    %v3878 = vunpack.c.l.b16 %v1104
    %v3879 = vunpack.c.h.b16 %v1104
    %v3880 = vunpack.c.l.b16 %v1105
    %v3881 = vunpack.c.h.b16 %v1105
    %v3882 = vunpack.c.l.b16 %v1106
    %v3883 = vunpack.c.h.b16 %v1106
    %v3884 = vunpack.c.l.b16 %v1107
    %v3885 = vunpack.c.h.b16 %v1107
    %v3886 = vunpack.c.l.b16 %v1108
    %v3887 = vunpack.c.h.b16 %v1108
    %v3888 = vunpack.c.l.b16 %v1109
    %v3889 = vunpack.c.h.b16 %v1109
    %v3890 = vunpack.c.l.b16 %v1110
    %v3891 = vunpack.c.h.b16 %v1110
    %v3892 = vunpack.c.l.b16 %v1111
    %v3893 = vunpack.c.h.b16 %v1111
    %v3894 = vunpack.c.l.b16 %v1112
    %v3895 = vunpack.c.h.b16 %v1112
    %v3896 = vunpack.c.l.b16 %v1113
    %v3897 = vunpack.c.h.b16 %v1113
    %v3898 = vunpack.c.l.b16 %v1114
    %v3899 = vunpack.c.h.b16 %v1114
    %v3900 = vunpack.c.l.b16 %v1115
    %v3901 = vunpack.c.h.b16 %v1115
    %v3902 = vunpack.c.l.b16 %v1116
    %v3903 = vunpack.c.h.b16 %v1116
    %v3904 = vunpack.c.l.b16 %v1117
    %v3905 = vunpack.c.h.b16 %v1117
    %v3906 = vunpack.c.l.b16 %v1118
    %v3907 = vunpack.c.h.b16 %v1118
    %v3908 = vunpack.c.l.b16 %v1119
    %v3909 = vunpack.c.h.b16 %v1119
    %v3910 = vunpack.c.l.b16 %v1120
    %v3911 = vunpack.c.h.b16 %v1120
    %v3912 = vunpack.c.l.b16 %v1121
    %v3913 = vunpack.c.h.b16 %v1121
    %v3914 = vunpack.c.l.b16 %v1122
    %v3915 = vunpack.c.h.b16 %v1122
    %v3916 = vunpack.c.l.b16 %v1123
    %v3917 = vunpack.c.h.b16 %v1123
    %v3918 = vunpack.c.l.b16 %v1124
    %v3919 = vunpack.c.h.b16 %v1124
    %v3920 = vunpack.c.l.b16 %v1125
    %v3921 = vunpack.c.h.b16 %v1125
    %v3922 = vunpack.c.l.b16 %v1126
    %v3923 = vunpack.c.h.b16 %v1126
    %v3924 = vunpack.c.l.b16 %v1127
    %v3925 = vunpack.c.h.b16 %v1127
    %v3926 = vunpack.c.l.b16 %v1128
    %v3927 = vunpack.c.h.b16 %v1128
    %v3928 = vunpack.c.l.b16 %v1129
    %v3929 = vunpack.c.h.b16 %v1129
    %v3930 = vunpack.c.l.b16 %v1130
    %v3931 = vunpack.c.h.b16 %v1130
    %v3932 = vunpack.c.l.b16 %v1131
    %v3933 = vunpack.c.h.b16 %v1131
    %v3934 = vunpack.c.l.b16 %v1132
    %v3935 = vunpack.c.h.b16 %v1132
    %v3936 = vunpack.c.l.b16 %v1133
    %v3937 = vunpack.c.h.b16 %v1133
    %v3938 = vunpack.c.l.b16 %v1134
    %v3939 = vunpack.c.h.b16 %v1134
    %v3940 = vunpack.c.l.b16 %v1135
    %v3941 = vunpack.c.h.b16 %v1135
    %v3942 = vunpack.c.l.b16 %v1136
    %v3943 = vunpack.c.h.b16 %v1136
    %v3944 = vunpack.c.l.b16 %v1137
    %v3945 = vunpack.c.h.b16 %v1137
    %v3946 = vunpack.c.l.b16 %v1138
    %v3947 = vunpack.c.h.b16 %v1138
    %v3948 = vunpack.c.l.b16 %v1139
    %v3949 = vunpack.c.h.b16 %v1139
    %v3950 = vunpack.c.l.b16 %v1140
    %v3951 = vunpack.c.h.b16 %v1140
    %v3952 = vunpack.c.l.b16 %v1141
    %v3953 = vunpack.c.h.b16 %v1141
    %v3954 = vunpack.c.l.b16 %v1142
    %v3955 = vunpack.c.h.b16 %v1142
    %v3956 = vunpack.c.l.b16 %v1143
    %v3957 = vunpack.c.h.b16 %v1143
    %v3958 = vunpack.c.l.b16 %v1144
    %v3959 = vunpack.c.h.b16 %v1144
    %v3960 = vunpack.c.l.b16 %v1145
    %v3961 = vunpack.c.h.b16 %v1145
    %v3962 = vunpack.c.l.b16 %v1146
    %v3963 = vunpack.c.h.b16 %v1146
    %v3964 = vunpack.c.l.b16 %v1147
    %v3965 = vunpack.c.h.b16 %v1147
    %v3966 = vunpack.c.l.b16 %v1148
    %v3967 = vunpack.c.h.b16 %v1148
    %v3968 = vunpack.c.l.b16 %v1149
    %v3969 = vunpack.c.h.b16 %v1149
    %v3970 = vunpack.c.l.b16 %v1150
    %v3971 = vunpack.c.h.b16 %v1150
    %v3972 = vunpack.c.l.b16 %v1151
    %v3973 = vunpack.c.h.b16 %v1151
    %v3974 = vunpack.c.l.b16 %v1152
    %v3975 = vunpack.c.h.b16 %v1152
    %v3976 = vunpack.c.l.b16 %v1153
    %v3977 = vunpack.c.h.b16 %v1153
    %v3978 = vunpack.c.l.b16 %v1154
    %v3979 = vunpack.c.h.b16 %v1154
    %v3980 = vunpack.c.l.b16 %v1155
    %v3981 = vunpack.c.h.b16 %v1155
    %v3982 = vunpack.c.l.b16 %v1156
    %v3983 = vunpack.c.h.b16 %v1156
    %v3984 = vunpack.c.l.b16 %v1157
    %v3985 = vunpack.c.h.b16 %v1157
    %v3986 = vunpack.c.l.b16 %v1158
    %v3987 = vunpack.c.h.b16 %v1158
    %v3988 = vunpack.c.l.b16 %v1159
    %v3989 = vunpack.c.h.b16 %v1159
    %v3990 = vunpack.c.l.b16 %v1160
    %v3991 = vunpack.c.h.b16 %v1160
    %v3992 = vunpack.c.l.b16 %v1161
    %v3993 = vunpack.c.h.b16 %v1161
    %v3994 = vunpack.c.l.b16 %v1162
    %v3995 = vunpack.c.h.b16 %v1162
    %v3996 = vunpack.c.l.b16 %v1163
    %v3997 = vunpack.c.h.b16 %v1163
    %v3998 = vunpack.c.l.b16 %v1164
    %v3999 = vunpack.c.h.b16 %v1164
    %v4000 = vunpack.c.l.b16 %v1165
    %v4001 = vunpack.c.h.b16 %v1165
    %v4002 = vunpack.c.l.b16 %v1166
    %v4003 = vunpack.c.h.b16 %v1166
    %v4004 = vunpack.c.l.b16 %v1167
    %v4005 = vunpack.c.h.b16 %v1167
    %v4006 = vunpack.c.l.b16 %v1168
    %v4007 = vunpack.c.h.b16 %v1168
    %v4008 = vunpack.c.l.b16 %v1169
    %v4009 = vunpack.c.h.b16 %v1169
    %v4010 = vunpack.c.l.b16 %v1170
    %v4011 = vunpack.c.h.b16 %v1170
    %v4012 = vunpack.c.l.b16 %v1171
    %v4013 = vunpack.c.h.b16 %v1171
    %v4014 = vunpack.c.l.b16 %v1172
    %v4015 = vunpack.c.h.b16 %v1172
    %v4016 = vunpack.c.l.b16 %v1173
    %v4017 = vunpack.c.h.b16 %v1173
    %v4018 = vunpack.c.l.b16 %v1174
    %v4019 = vunpack.c.h.b16 %v1174
    %v4020 = vunpack.c.l.b16 %v1175
    %v4021 = vunpack.c.h.b16 %v1175
    %v4022 = vunpack.c.l.b16 %v1176
    %v4023 = vunpack.c.h.b16 %v1176
    %v4024 = vunpack.c.l.b16 %v1177
    %v4025 = vunpack.c.h.b16 %v1177
    %v4026 = vunpack.c.l.b16 %v1178
    %v4027 = vunpack.c.h.b16 %v1178
    %v4028 = vunpack.c.l.b16 %v1179
    %v4029 = vunpack.c.h.b16 %v1179
    %v4030 = vunpack.c.l.b16 %v1180
    %v4031 = vunpack.c.h.b16 %v1180
    %v4032 = vunpack.c.l.b16 %v1181
    %v4033 = vunpack.c.h.b16 %v1181
    %v4034 = vunpack.c.l.b16 %v1182
    %v4035 = vunpack.c.h.b16 %v1182
    %v4036 = vunpack.c.l.b16 %v1183
    %v4037 = vunpack.c.h.b16 %v1183
    %v4038 = vunpack.c.l.b16 %v1184
    %v4039 = vunpack.c.h.b16 %v1184
    %v4040 = vunpack.c.l.b16 %v1185
    %v4041 = vunpack.c.h.b16 %v1185
    %v4042 = vunpack.c.l.b16 %v1186
    %v4043 = vunpack.c.h.b16 %v1186
    %v4044 = vunpack.c.l.b16 %v1187
    %v4045 = vunpack.c.h.b16 %v1187
    %v4046 = vunpack.c.l.b16 %v1188
    %v4047 = vunpack.c.h.b16 %v1188
    %v4048 = vunpack.c.l.b16 %v1189
    %v4049 = vunpack.c.h.b16 %v1189
    %v4050 = vunpack.c.l.b16 %v1190
    %v4051 = vunpack.c.h.b16 %v1190
    %v4052 = vunpack.c.l.b16 %v1191
    %v4053 = vunpack.c.h.b16 %v1191
    %v4054 = vunpack.c.l.b16 %v1192
    %v4055 = vunpack.c.h.b16 %v1192
    %v4056 = vunpack.c.l.b16 %v1193
    %v4057 = vunpack.c.h.b16 %v1193
    %v4058 = vunpack.c.l.b16 %v1194
    %v4059 = vunpack.c.h.b16 %v1194
    %v4060 = vunpack.c.l.b16 %v1195
    %v4061 = vunpack.c.h.b16 %v1195
    %v4062 = vunpack.c.l.b16 %v1196
    %v4063 = vunpack.c.h.b16 %v1196
    %v4064 = vunpack.c.l.b16 %v1197
    %v4065 = vunpack.c.h.b16 %v1197
    %v4066 = vunpack.c.l.b16 %v1198
    %v4067 = vunpack.c.h.b16 %v1198
    %v4068 = vunpack.c.l.b16 %v1199
    %v4069 = vunpack.c.h.b16 %v1199
    %v4070 = vunpack.c.l.b16 %v1200
    %v4071 = vunpack.c.h.b16 %v1200
    %v4072 = vunpack.c.l.b16 %v1201
    %v4073 = vunpack.c.h.b16 %v1201
    %v4074 = vunpack.c.l.b16 %v1202
    %v4075 = vunpack.c.h.b16 %v1202
    %v4076 = vunpack.c.l.b16 %v1203
    %v4077 = vunpack.c.h.b16 %v1203
    %v4078 = vunpack.c.l.b16 %v1204
    %v4079 = vunpack.c.h.b16 %v1204
    %v4080 = vunpack.c.l.b16 %v1205
    %v4081 = vunpack.c.h.b16 %v1205
    %v4082 = vunpack.c.l.b16 %v1206
    %v4083 = vunpack.c.h.b16 %v1206
    %v4084 = vunpack.c.l.b16 %v1207
    %v4085 = vunpack.c.h.b16 %v1207
    %v4086 = vunpack.c.l.b16 %v1208
    %v4087 = vunpack.c.h.b16 %v1208
    %v4088 = vunpack.c.l.b16 %v1209
    %v4089 = vunpack.c.h.b16 %v1209
    %v4090 = vunpack.c.l.b16 %v1210
    %v4091 = vunpack.c.h.b16 %v1210
    %v4092 = vunpack.c.l.b16 %v1211
    %v4093 = vunpack.c.h.b16 %v1211
    %v4094 = vunpack.c.l.b16 %v1212
    %v4095 = vunpack.c.h.b16 %v1212
    %v4096 = vunpack.c.l.b16 %v1213
    %v4097 = vunpack.c.h.b16 %v1213
    %v4098 = vunpack.c.l.b16 %v1214
    %v4099 = vunpack.c.h.b16 %v1214
    %v4100 = vunpack.c.l.b16 %v1215
    %v4101 = vunpack.c.h.b16 %v1215
    %v4102 = vunpack.c.l.b16 %v1216
    %v4103 = vunpack.c.h.b16 %v1216
    %v4104 = vunpack.c.l.b16 %v1217
    %v4105 = vunpack.c.h.b16 %v1217
    %v4106 = vunpack.c.l.b16 %v1218
    %v4107 = vunpack.c.h.b16 %v1218
    %v4108 = vunpack.c.l.b16 %v1219
    %v4109 = vunpack.c.h.b16 %v1219
    %v4110 = vunpack.c.l.b16 %v1220
    %v4111 = vunpack.c.h.b16 %v1220
    %v4112 = vunpack.c.l.b16 %v1221
    %v4113 = vunpack.c.h.b16 %v1221
    %v4114 = vunpack.c.l.b16 %v1222
    %v4115 = vunpack.c.h.b16 %v1222
    %v4116 = vunpack.c.l.b16 %v1223
    %v4117 = vunpack.c.h.b16 %v1223
    %v4118 = vunpack.c.l.b16 %v1224
    %v4119 = vunpack.c.h.b16 %v1224
    %v4120 = vunpack.c.l.b16 %v1225
    %v4121 = vunpack.c.h.b16 %v1225
    %v4122 = vunpack.c.l.b16 %v1226
    %v4123 = vunpack.c.h.b16 %v1226
    %v4124 = vunpack.c.l.b16 %v1227
    %v4125 = vunpack.c.h.b16 %v1227
    %v4126 = vunpack.c.l.b16 %v1228
    %v4127 = vunpack.c.h.b16 %v1228
    %v4128 = vunpack.c.l.b16 %v1229
    %v4129 = vunpack.c.h.b16 %v1229
    %v4130 = vunpack.c.l.b16 %v1230
    %v4131 = vunpack.c.h.b16 %v1230
    %v4132 = vunpack.c.l.b16 %v1231
    %v4133 = vunpack.c.h.b16 %v1231
    %v4134 = vunpack.c.l.b16 %v1232
    %v4135 = vunpack.c.h.b16 %v1232
    %v4136 = vunpack.c.l.b16 %v1233
    %v4137 = vunpack.c.h.b16 %v1233
    %v4138 = vunpack.c.l.b16 %v1234
    %v4139 = vunpack.c.h.b16 %v1234
    %v4140 = vunpack.c.l.b16 %v1235
    %v4141 = vunpack.c.h.b16 %v1235
    %v4142 = vunpack.c.l.b16 %v1236
    %v4143 = vunpack.c.h.b16 %v1236
    %v4144 = vunpack.c.l.b16 %v1237
    %v4145 = vunpack.c.h.b16 %v1237
    %v4146 = vunpack.c.l.b16 %v1238
    %v4147 = vunpack.c.h.b16 %v1238
    %v4148 = vunpack.c.l.b16 %v1239
    %v4149 = vunpack.c.h.b16 %v1239
    %v4150 = vunpack.c.l.b16 %v1240
    %v4151 = vunpack.c.h.b16 %v1240
    %v4152 = vunpack.c.l.b16 %v1241
    %v4153 = vunpack.c.h.b16 %v1241
    %v4154 = vunpack.c.l.b16 %v1242
    %v4155 = vunpack.c.h.b16 %v1242
    %v4156 = vunpack.c.l.b16 %v1243
    %v4157 = vunpack.c.h.b16 %v1243
    %v4158 = vunpack.c.l.b16 %v1244
    %v4159 = vunpack.c.h.b16 %v1244
    %v4160 = vunpack.c.l.b16 %v1245
    %v4161 = vunpack.c.h.b16 %v1245
    %v4162 = vunpack.c.l.b16 %v1246
    %v4163 = vunpack.c.h.b16 %v1246
    %v4164 = vunpack.c.l.b16 %v1247
    %v4165 = vunpack.c.h.b16 %v1247
    %v4166 = vunpack.c.l.b16 %v1248
    %v4167 = vunpack.c.h.b16 %v1248
    %v4168 = vunpack.c.l.b16 %v1249
    %v4169 = vunpack.c.h.b16 %v1249
    %v4170 = vunpack.c.l.b16 %v1250
    %v4171 = vunpack.c.h.b16 %v1250
    %v4172 = vunpack.c.l.b16 %v1251
    %v4173 = vunpack.c.h.b16 %v1251
    %v4174 = vunpack.c.l.b16 %v1252
    %v4175 = vunpack.c.h.b16 %v1252
    %v4176 = vunpack.c.l.b16 %v1253
    %v4177 = vunpack.c.h.b16 %v1253
    %v4178 = vunpack.c.l.b16 %v1254
    %v4179 = vunpack.c.h.b16 %v1254
    %v4180 = vunpack.c.l.b16 %v1255
    %v4181 = vunpack.c.h.b16 %v1255
    %v4182 = vunpack.c.l.b16 %v1256
    %v4183 = vunpack.c.h.b16 %v1256
    %v4184 = vunpack.c.l.b16 %v1257
    %v4185 = vunpack.c.h.b16 %v1257
    %v4186 = vunpack.c.l.b16 %v1258
    %v4187 = vunpack.c.h.b16 %v1258
    %v4188 = vunpack.c.l.b16 %v1259
    %v4189 = vunpack.c.h.b16 %v1259
    %v4190 = vunpack.c.l.b16 %v1260
    %v4191 = vunpack.c.h.b16 %v1260
    %v4192 = vunpack.c.l.b16 %v1261
    %v4193 = vunpack.c.h.b16 %v1261
    %v4194 = vunpack.c.l.b16 %v1262
    %v4195 = vunpack.c.h.b16 %v1262
    %v4196 = vunpack.c.l.b16 %v1263
    %v4197 = vunpack.c.h.b16 %v1263
    %v4198 = vunpack.c.l.b16 %v1264
    %v4199 = vunpack.c.h.b16 %v1264
    %v4200 = vunpack.c.l.b16 %v1265
    %v4201 = vunpack.c.h.b16 %v1265
    %v4202 = vunpack.c.l.b16 %v1266
    %v4203 = vunpack.c.h.b16 %v1266
    %v4204 = vunpack.c.l.b16 %v1267
    %v4205 = vunpack.c.h.b16 %v1267
    %v4206 = vunpack.c.l.b16 %v1268
    %v4207 = vunpack.c.h.b16 %v1268
    %v4208 = vunpack.c.l.b16 %v1269
    %v4209 = vunpack.c.h.b16 %v1269
    %v4210 = vunpack.c.l.b16 %v1270
    %v4211 = vunpack.c.h.b16 %v1270
    %v4212 = vunpack.c.l.b16 %v1271
    %v4213 = vunpack.c.h.b16 %v1271
    %v4214 = vunpack.c.l.b16 %v1272
    %v4215 = vunpack.c.h.b16 %v1272
    %v4216 = vunpack.c.l.b16 %v1273
    %v4217 = vunpack.c.h.b16 %v1273
    %v4218 = vunpack.c.l.b16 %v1274
    %v4219 = vunpack.c.h.b16 %v1274
    %v4220 = vunpack.c.l.b16 %v1275
    %v4221 = vunpack.c.h.b16 %v1275
    %v4222 = vunpack.c.l.b16 %v1276
    %v4223 = vunpack.c.h.b16 %v1276
    %v4224 = vunpack.c.l.b16 %v1277
    %v4225 = vunpack.c.h.b16 %v1277
    %v4226 = vunpack.c.l.b16 %v1278
    %v4227 = vunpack.c.h.b16 %v1278
    %v4228 = vunpack.c.l.b16 %v1279
    %v4229 = vunpack.c.h.b16 %v1279
    %v4230 = vunpack.c.l.b16 %v1280
    %v4231 = vunpack.c.h.b16 %v1280
    %v4232 = vunpack.c.l.b16 %v1281
    %v4233 = vunpack.c.h.b16 %v1281
    %v4234 = vunpack.c.l.b16 %v1282
    %v4235 = vunpack.c.h.b16 %v1282
    %v4236 = vunpack.c.l.b16 %v1283
    %v4237 = vunpack.c.h.b16 %v1283
    %v4238 = vunpack.c.l.b16 %v1284
    %v4239 = vunpack.c.h.b16 %v1284
    %v4240 = vunpack.c.l.b16 %v1285
    %v4241 = vunpack.c.h.b16 %v1285
    %v4242 = vunpack.c.l.b16 %v1286
    %v4243 = vunpack.c.h.b16 %v1286
    %v4244 = vunpack.c.l.b16 %v1287
    %v4245 = vunpack.c.h.b16 %v1287
    %v4246 = vunpack.c.l.b16 %v1288
    %v4247 = vunpack.c.h.b16 %v1288
    %v4248 = vunpack.c.l.b16 %v1289
    %v4249 = vunpack.c.h.b16 %v1289
    %v4250 = vunpack.c.l.b16 %v1290
    %v4251 = vunpack.c.h.b16 %v1290
    %v4252 = vunpack.c.l.b16 %v1291
    %v4253 = vunpack.c.h.b16 %v1291
    %v4254 = vunpack.c.l.b16 %v1292
    %v4255 = vunpack.c.h.b16 %v1292
    %v4256 = vunpack.c.l.b16 %v1293
    %v4257 = vunpack.c.h.b16 %v1293
    %v4258 = vunpack.c.l.b16 %v1294
    %v4259 = vunpack.c.h.b16 %v1294
    %v4260 = vunpack.c.l.b16 %v1295
    %v4261 = vunpack.c.h.b16 %v1295
    %v4262 = vunpack.c.l.b16 %v1296
    %v4263 = vunpack.c.h.b16 %v1296
    %v4264 = vunpack.c.l.b16 %v1297
    %v4265 = vunpack.c.h.b16 %v1297
    %v4266 = vunpack.c.l.b16 %v1298
    %v4267 = vunpack.c.h.b16 %v1298
    %v4268 = vunpack.c.l.b16 %v1299
    %v4269 = vunpack.c.h.b16 %v1299
    %v4270 = vunpack.c.l.b16 %v1300
    %v4271 = vunpack.c.h.b16 %v1300
    %v4272 = vunpack.c.l.b16 %v1301
    %v4273 = vunpack.c.h.b16 %v1301
    %v4274 = vunpack.c.l.b16 %v1302
    %v4275 = vunpack.c.h.b16 %v1302
    %v4276 = vunpack.c.l.b16 %v1303
    %v4277 = vunpack.c.h.b16 %v1303
    %v4278 = vunpack.c.l.b16 %v1304
    %v4279 = vunpack.c.h.b16 %v1304
    %v4280 = vunpack.c.l.b16 %v1305
    %v4281 = vunpack.c.h.b16 %v1305
    %v4282 = vunpack.c.l.b16 %v1306
    %v4283 = vunpack.c.h.b16 %v1306
    %v4284 = vunpack.c.l.b16 %v1307
    %v4285 = vunpack.c.h.b16 %v1307
    %v4286 = vunpack.c.l.b16 %v1308
    %v4287 = vunpack.c.h.b16 %v1308
    %v4288 = vunpack.c.l.b16 %v1309
    %v4289 = vunpack.c.h.b16 %v1309
    %v4290 = vunpack.c.l.b16 %v1310
    %v4291 = vunpack.c.h.b16 %v1310
    %v4292 = vunpack.c.l.b16 %v1311
    %v4293 = vunpack.c.h.b16 %v1311
    %v4294 = vunpack.c.l.b16 %v1312
    %v4295 = vunpack.c.h.b16 %v1312
    %v4296 = vunpack.c.l.b16 %v1313
    %v4297 = vunpack.c.h.b16 %v1313
    %v4298 = vunpack.c.l.b16 %v1314
    %v4299 = vunpack.c.h.b16 %v1314
    %v4300 = vunpack.c.l.b16 %v1315
    %v4301 = vunpack.c.h.b16 %v1315
    %v4302 = vunpack.c.l.b16 %v1316
    %v4303 = vunpack.c.h.b16 %v1316
    %v4304 = vunpack.c.l.b16 %v1317
    %v4305 = vunpack.c.h.b16 %v1317
    %v4306 = vunpack.c.l.b16 %v1318
    %v4307 = vunpack.c.h.b16 %v1318
    %v4308 = vunpack.c.l.b16 %v1319
    %v4309 = vunpack.c.h.b16 %v1319
    %v4310 = vunpack.c.l.b16 %v1320
    %v4311 = vunpack.c.h.b16 %v1320
    %v4312 = vunpack.c.l.b16 %v1321
    %v4313 = vunpack.c.h.b16 %v1321
    %v4314 = vunpack.c.l.b16 %v1322
    %v4315 = vunpack.c.h.b16 %v1322
    %v4316 = vunpack.c.l.b16 %v1323
    %v4317 = vunpack.c.h.b16 %v1323
    %v4318 = vunpack.c.l.b16 %v1324
    %v4319 = vunpack.c.h.b16 %v1324
    %v4320 = vunpack.c.l.b16 %v1325
    %v4321 = vunpack.c.h.b16 %v1325
    %v4322 = vunpack.c.l.b16 %v1326
    %v4323 = vunpack.c.h.b16 %v1326
    %v4324 = vunpack.c.l.b16 %v1327
    %v4325 = vunpack.c.h.b16 %v1327
    %v4326 = vunpack.c.l.b16 %v1328
    %v4327 = vunpack.c.h.b16 %v1328
    %v4328 = vunpack.c.l.b16 %v1329
    %v4329 = vunpack.c.h.b16 %v1329
    %v4330 = vunpack.c.l.b16 %v1330
    %v4331 = vunpack.c.h.b16 %v1330
    %v4332 = vunpack.c.l.b16 %v1331
    %v4333 = vunpack.c.h.b16 %v1331
    %v4334 = vunpack.c.l.b16 %v1332
    %v4335 = vunpack.c.h.b16 %v1332
    %v4336 = vunpack.c.l.b16 %v1333
    %v4337 = vunpack.c.h.b16 %v1333
    %v4338 = vunpack.c.l.b16 %v1334
    %v4339 = vunpack.c.h.b16 %v1334
    %v4340 = vunpack.c.l.b16 %v1335
    %v4341 = vunpack.c.h.b16 %v1335
    %v4342 = vunpack.c.l.b16 %v1336
    %v4343 = vunpack.c.h.b16 %v1336
    %v4344 = vunpack.c.l.b16 %v1337
    %v4345 = vunpack.c.h.b16 %v1337
    %v4346 = vunpack.c.l.b16 %v1338
    %v4347 = vunpack.c.h.b16 %v1338
    %v4348 = vunpack.c.l.b16 %v1339
    %v4349 = vunpack.c.h.b16 %v1339
    %v4350 = vunpack.c.l.b16 %v1340
    %v4351 = vunpack.c.h.b16 %v1340
    %v4352 = vunpack.c.l.b16 %v1341
    %v4353 = vunpack.c.h.b16 %v1341
    %v4354 = vunpack.c.l.b16 %v1342
    %v4355 = vunpack.c.h.b16 %v1342
    %v4356 = vunpack.c.l.b16 %v1343
    %v4357 = vunpack.c.h.b16 %v1343
    %v4358 = vunpack.c.l.b16 %v1344
    %v4359 = vunpack.c.h.b16 %v1344
    %v4360 = vunpack.c.l.b16 %v1345
    %v4361 = vunpack.c.h.b16 %v1345
    %v4362 = vunpack.c.l.b16 %v1346
    %v4363 = vunpack.c.h.b16 %v1346
    %v4364 = vunpack.c.l.b16 %v1347
    %v4365 = vunpack.c.h.b16 %v1347
    %v4366 = vunpack.c.l.b16 %v1348
    %v4367 = vunpack.c.h.b16 %v1348
    %v4368 = vunpack.c.l.b16 %v1349
    %v4369 = vunpack.c.h.b16 %v1349
    %v4370 = vunpack.c.l.b16 %v1350
    %v4371 = vunpack.c.h.b16 %v1350
    %v4372 = vunpack.c.l.b16 %v1351
    %v4373 = vunpack.c.h.b16 %v1351
    %v4374 = vunpack.c.l.b16 %v1352
    %v4375 = vunpack.c.h.b16 %v1352
    %v4376 = vunpack.c.l.b16 %v1353
    %v4377 = vunpack.c.h.b16 %v1353
    %v4378 = vunpack.c.l.b16 %v1354
    %v4379 = vunpack.c.h.b16 %v1354
    %v4380 = vunpack.c.l.b16 %v1355
    %v4381 = vunpack.c.h.b16 %v1355
    %v4382 = vunpack.c.l.b16 %v1356
    %v4383 = vunpack.c.h.b16 %v1356
    %v4384 = vunpack.c.l.b16 %v1357
    %v4385 = vunpack.c.h.b16 %v1357
    %v4386 = vunpack.c.l.b16 %v1358
    %v4387 = vunpack.c.h.b16 %v1358
    %v4388 = vunpack.c.l.b16 %v1359
    %v4389 = vunpack.c.h.b16 %v1359
    %v4390 = vunpack.c.l.b16 %v1360
    %v4391 = vunpack.c.h.b16 %v1360
    %v4392 = vunpack.c.l.b16 %v1361
    %v4393 = vunpack.c.h.b16 %v1361
    %v4394 = vunpack.c.l.b16 %v1362
    %v4395 = vunpack.c.h.b16 %v1362
    %v4396 = vunpack.c.l.b16 %v1363
    %v4397 = vunpack.c.h.b16 %v1363
    %v4398 = vunpack.c.l.b16 %v1364
    %v4399 = vunpack.c.h.b16 %v1364
    %v4400 = vunpack.c.l.b16 %v1365
    %v4401 = vunpack.c.h.b16 %v1365
    %v4402 = vunpack.c.l.b16 %v1366
    %v4403 = vunpack.c.h.b16 %v1366
    %v4404 = vunpack.c.l.b16 %v1367
    %v4405 = vunpack.c.h.b16 %v1367
    %v4406 = vunpack.c.l.b16 %v1368
    %v4407 = vunpack.c.h.b16 %v1368
    %v4408 = vunpack.c.l.b16 %v1369
    %v4409 = vunpack.c.h.b16 %v1369
    %v4410 = vunpack.c.l.b16 %v1370
    %v4411 = vunpack.c.h.b16 %v1370
    %v4412 = vunpack.c.l.b16 %v1371
    %v4413 = vunpack.c.h.b16 %v1371
    %v4414 = vunpack.c.l.b16 %v1372
    %v4415 = vunpack.c.h.b16 %v1372
    %v4416 = vunpack.c.l.b16 %v1373
    %v4417 = vunpack.c.h.b16 %v1373
    %v4418 = vunpack.c.l.b16 %v1374
    %v4419 = vunpack.c.h.b16 %v1374
    %v4420 = vunpack.c.l.b16 %v1375
    %v4421 = vunpack.c.h.b16 %v1375
    %v4422 = vunpack.c.l.b16 %v1376
    %v4423 = vunpack.c.h.b16 %v1376
    %v4424 = vunpack.c.l.b16 %v1377
    %v4425 = vunpack.c.h.b16 %v1377
    %v4426 = vunpack.c.l.b16 %v1378
    %v4427 = vunpack.c.h.b16 %v1378
    %v4428 = vunpack.c.l.b16 %v1379
    %v4429 = vunpack.c.h.b16 %v1379
    %v4430 = vunpack.c.l.b16 %v1380
    %v4431 = vunpack.c.h.b16 %v1380
    %v4432 = vunpack.c.l.b16 %v1381
    %v4433 = vunpack.c.h.b16 %v1381
    %v4434 = vunpack.c.l.b16 %v1382
    %v4435 = vunpack.c.h.b16 %v1382
    %v4436 = vunpack.c.l.b16 %v1383
    %v4437 = vunpack.c.h.b16 %v1383
    %v4438 = vunpack.c.l.b16 %v1384
    %v4439 = vunpack.c.h.b16 %v1384
    %v4440 = vunpack.c.l.b16 %v1385
    %v4441 = vunpack.c.h.b16 %v1385
    %v4442 = vunpack.c.l.b16 %v1386
    %v4443 = vunpack.c.h.b16 %v1386
    %v4444 = vunpack.c.l.b16 %v1387
    %v4445 = vunpack.c.h.b16 %v1387
    %v4446 = vunpack.c.l.b16 %v1388
    %v4447 = vunpack.c.h.b16 %v1388
    %v4448 = vunpack.c.l.b16 %v1389
    %v4449 = vunpack.c.h.b16 %v1389
    %v4450 = vunpack.c.l.b16 %v1390
    %v4451 = vunpack.c.h.b16 %v1390
    %v4452 = vunpack.c.l.b16 %v1391
    %v4453 = vunpack.c.h.b16 %v1391
    %v4454 = vunpack.c.l.b16 %v1392
    %v4455 = vunpack.c.h.b16 %v1392
    %v4456 = vunpack.c.l.b16 %v1393
    %v4457 = vunpack.c.h.b16 %v1393
    %v4458 = vunpack.c.l.b16 %v1394
    %v4459 = vunpack.c.h.b16 %v1394
    %v4460 = vunpack.c.l.b16 %v1395
    %v4461 = vunpack.c.h.b16 %v1395
    %v4462 = vunpack.c.l.b16 %v1396
    %v4463 = vunpack.c.h.b16 %v1396
    %v4464 = vunpack.c.l.b16 %v1397
    %v4465 = vunpack.c.h.b16 %v1397
    %v4466 = vunpack.c.l.b16 %v1398
    %v4467 = vunpack.c.h.b16 %v1398
    %v4468 = vunpack.c.l.b16 %v1399
    %v4469 = vunpack.c.h.b16 %v1399
    %v4470 = vunpack.c.l.b16 %v1400
    %v4471 = vunpack.c.h.b16 %v1400
    %v4472 = vunpack.c.l.b16 %v1401
    %v4473 = vunpack.c.h.b16 %v1401
    %v4474 = vunpack.c.l.b16 %v1402
    %v4475 = vunpack.c.h.b16 %v1402
    %v4476 = vunpack.c.l.b16 %v1403
    %v4477 = vunpack.c.h.b16 %v1403
    %v4478 = vunpack.c.l.b16 %v1404
    %v4479 = vunpack.c.h.b16 %v1404
    %v4480 = vunpack.c.l.b16 %v1405
    %v4481 = vunpack.c.h.b16 %v1405
    %v4482 = vunpack.c.l.b16 %v1406
    %v4483 = vunpack.c.h.b16 %v1406
    %v4484 = vunpack.c.l.b16 %v1407
    %v4485 = vunpack.c.h.b16 %v1407
    %v4486 = vunpack.c.l.b16 %v1408
    %v4487 = vunpack.c.h.b16 %v1408
    %v4488 = vunpack.c.l.b16 %v1409
    %v4489 = vunpack.c.h.b16 %v1409
    %v4490 = vunpack.c.l.b16 %v1410
    %v4491 = vunpack.c.h.b16 %v1410
    %v4492 = vunpack.c.l.b16 %v1411
    %v4493 = vunpack.c.h.b16 %v1411
    %v4494 = vunpack.c.l.b16 %v1412
    %v4495 = vunpack.c.h.b16 %v1412
    %v4496 = vunpack.c.l.b16 %v1413
    %v4497 = vunpack.c.h.b16 %v1413
    %v4498 = vunpack.c.l.b16 %v1414
    %v4499 = vunpack.c.h.b16 %v1414
    %v4500 = vunpack.c.l.b16 %v1415
    %v4501 = vunpack.c.h.b16 %v1415
    %v4502 = vunpack.c.l.b16 %v1416
    %v4503 = vunpack.c.h.b16 %v1416
    %v4504 = vunpack.c.l.b16 %v1417
    %v4505 = vunpack.c.h.b16 %v1417
    %v4506 = vunpack.c.l.b16 %v1418
    %v4507 = vunpack.c.h.b16 %v1418
    %v4508 = vunpack.c.l.b16 %v1419
    %v4509 = vunpack.c.h.b16 %v1419
    %v4510 = vunpack.c.l.b16 %v1420
    %v4511 = vunpack.c.h.b16 %v1420
    %v4512 = vunpack.c.l.b16 %v1421
    %v4513 = vunpack.c.h.b16 %v1421
    %v4514 = vunpack.c.l.b16 %v1422
    %v4515 = vunpack.c.h.b16 %v1422
    %v4516 = vunpack.c.l.b16 %v1423
    %v4517 = vunpack.c.h.b16 %v1423
    %v4518 = vunpack.c.l.b16 %v1424
    %v4519 = vunpack.c.h.b16 %v1424
    %v4520 = vunpack.c.l.b16 %v1425
    %v4521 = vunpack.c.h.b16 %v1425
    %v4522 = vunpack.c.l.b16 %v1426
    %v4523 = vunpack.c.h.b16 %v1426
    %v4524 = vunpack.c.l.b16 %v1427
    %v4525 = vunpack.c.h.b16 %v1427
    %v4526 = vunpack.c.l.b16 %v1428
    %v4527 = vunpack.c.h.b16 %v1428
    %v4528 = vunpack.c.l.b16 %v1429
    %v4529 = vunpack.c.h.b16 %v1429
    %v4530 = vunpack.c.l.b16 %v1430
    %v4531 = vunpack.c.h.b16 %v1430
    %v4532 = vunpack.c.l.b16 %v1431
    %v4533 = vunpack.c.h.b16 %v1431
    %v4534 = vunpack.c.l.b16 %v1432
    %v4535 = vunpack.c.h.b16 %v1432
    %v4536 = vunpack.c.l.b16 %v1433
    %v4537 = vunpack.c.h.b16 %v1433
    %v4538 = vunpack.c.l.b16 %v1434
    %v4539 = vunpack.c.h.b16 %v1434
    %v4540 = vunpack.c.l.b16 %v1435
    %v4541 = vunpack.c.h.b16 %v1435
    %v4542 = vunpack.c.l.b16 %v1436
    %v4543 = vunpack.c.h.b16 %v1436
    %v4544 = vunpack.c.l.b16 %v1437
    %v4545 = vunpack.c.h.b16 %v1437
    %v4546 = vunpack.c.l.b16 %v1438
    %v4547 = vunpack.c.h.b16 %v1438
    %v4548 = vunpack.c.l.b16 %v1439
    %v4549 = vunpack.c.h.b16 %v1439
    %v4550 = vunpack.c.l.b16 %v1440
    %v4551 = vunpack.c.h.b16 %v1440
    %v4552 = vunpack.c.l.b16 %v1441
    %v4553 = vunpack.c.h.b16 %v1441
    %v4554 = vunpack.c.l.b16 %v1442
    %v4555 = vunpack.c.h.b16 %v1442
    %v4556 = vunpack.c.l.b16 %v1443
    %v4557 = vunpack.c.h.b16 %v1443
    %v4558 = vpack.c.b16 %v2518, %v2510
    %v4559 = vpack.c.b16 %v2519, %v2511
    %v4560 = vpack.c.b16 %v2520, %v2512
    %v4561 = vpack.c.b16 %v2521, %v2513
    %v4562 = vpack.c.b16 %v2522, %v2514
    %v4563 = vpack.c.b16 %v2523, %v2515
    %v4564 = vpack.c.b16 %v2524, %v2516
    %v4565 = vpack.c.b16 %v2525, %v2517
    %v4566 = vpack.c.b16 %v2534, %v2526
    %v4567 = vpack.c.b16 %v2535, %v2527
    %v4568 = vpack.c.b16 %v2536, %v2528
    %v4569 = vpack.c.b16 %v2537, %v2529
    %v4570 = vpack.c.b16 %v2538, %v2530
    %v4571 = vpack.c.b16 %v2539, %v2531
    %v4572 = vpack.c.b16 %v2540, %v2532
    %v4573 = vpack.c.b16 %v2541, %v2533
    %v4574 = vpack.c.b16 %v2550, %v2542
    %v4575 = vpack.c.b16 %v2551, %v2543
    %v4576 = vpack.c.b16 %v2552, %v2544
    %v4577 = vpack.c.b16 %v2553, %v2545
    %v4578 = vpack.c.b16 %v2554, %v2546
    %v4579 = vpack.c.b16 %v2555, %v2547
    %v4580 = vpack.c.b16 %v2556, %v2548
    %v4581 = vpack.c.b16 %v2557, %v2549
    %v4582 = vpack.c.b16 %v2566, %v2558
    %v4583 = vpack.c.b16 %v2567, %v2559
    %v4584 = vpack.c.b16 %v2568, %v2560
    %v4585 = vpack.c.b16 %v2569, %v2561
    %v4586 = vpack.c.b16 %v2570, %v2562
    %v4587 = vpack.c.b16 %v2571, %v2563
    %v4588 = vpack.c.b16 %v2572, %v2564
    %v4589 = vpack.c.b16 %v2573, %v2565
    %v4590 = vpack.c.b16 %v2582, %v2574
    %v4591 = vpack.c.b16 %v2583, %v2575
    %v4592 = vpack.c.b16 %v2584, %v2576
    %v4593 = vpack.c.b16 %v2585, %v2577
    %v4594 = vpack.c.b16 %v2586, %v2578
    %v4595 = vpack.c.b16 %v2587, %v2579
    %v4596 = vpack.c.b16 %v2588, %v2580
    %v4597 = vpack.c.b16 %v2589, %v2581
    %v4598 = vpack.c.b16 %v2598, %v2590
    %v4599 = vpack.c.b16 %v2599, %v2591
    %v4600 = vpack.c.b16 %v2600, %v2592
    %v4601 = vpack.c.b16 %v2601, %v2593
    %v4602 = vpack.c.b16 %v2602, %v2594
    %v4603 = vpack.c.b16 %v2603, %v2595
    %v4604 = vpack.c.b16 %v2604, %v2596
    %v4605 = vpack.c.b16 %v2605, %v2597
    %v4606 = vpack.c.b16 %v2614, %v2606
    %v4607 = vpack.c.b16 %v2615, %v2607
    %v4608 = vpack.c.b16 %v2616, %v2608
    %v4609 = vpack.c.b16 %v2617, %v2609
    %v4610 = vpack.c.b16 %v2618, %v2610
    %v4611 = vpack.c.b16 %v2619, %v2611
    %v4612 = vpack.c.b16 %v2620, %v2612
    %v4613 = vpack.c.b16 %v2621, %v2613
    %v4614 = vpack.c.b16 %v2630, %v2622
    %v4615 = vpack.c.b16 %v2631, %v2623
    %v4616 = vpack.c.b16 %v2632, %v2624
    %v4617 = vpack.c.b16 %v2633, %v2625
    %v4618 = vpack.c.b16 %v2634, %v2626
    %v4619 = vpack.c.b16 %v2635, %v2627
    %v4620 = vpack.c.b16 %v2636, %v2628
    %v4621 = vpack.c.b16 %v2637, %v2629
    %v4622 = vpack.c.b16 %v2646, %v2638
    %v4623 = vpack.c.b16 %v2647, %v2639
    %v4624 = vpack.c.b16 %v2648, %v2640
    %v4625 = vpack.c.b16 %v2649, %v2641
    %v4626 = vpack.c.b16 %v2650, %v2642
    %v4627 = vpack.c.b16 %v2651, %v2643
    %v4628 = vpack.c.b16 %v2652, %v2644
    %v4629 = vpack.c.b16 %v2653, %v2645
    %v4630 = vpack.c.b16 %v2662, %v2654
    %v4631 = vpack.c.b16 %v2663, %v2655
    %v4632 = vpack.c.b16 %v2664, %v2656
    %v4633 = vpack.c.b16 %v2665, %v2657
    %v4634 = vpack.c.b16 %v2666, %v2658
    %v4635 = vpack.c.b16 %v2667, %v2659
    %v4636 = vpack.c.b16 %v2668, %v2660
    %v4637 = vpack.c.b16 %v2669, %v2661
    %v4638 = vpack.c.b16 %v2678, %v2670
    %v4639 = vpack.c.b16 %v2679, %v2671
    %v4640 = vpack.c.b16 %v2680, %v2672
    %v4641 = vpack.c.b16 %v2681, %v2673
    %v4642 = vpack.c.b16 %v2682, %v2674
    %v4643 = vpack.c.b16 %v2683, %v2675
    %v4644 = vpack.c.b16 %v2684, %v2676
    %v4645 = vpack.c.b16 %v2685, %v2677
    %v4646 = vpack.c.b16 %v2694, %v2686
    %v4647 = vpack.c.b16 %v2695, %v2687
    %v4648 = vpack.c.b16 %v2696, %v2688
    %v4649 = vpack.c.b16 %v2697, %v2689
    %v4650 = vpack.c.b16 %v2698, %v2690
    %v4651 = vpack.c.b16 %v2699, %v2691
    %v4652 = vpack.c.b16 %v2700, %v2692
    %v4653 = vpack.c.b16 %v2701, %v2693
    %v4654 = vpack.c.b16 %v2710, %v2702
    %v4655 = vpack.c.b16 %v2711, %v2703
    %v4656 = vpack.c.b16 %v2712, %v2704
    %v4657 = vpack.c.b16 %v2713, %v2705
    %v4658 = vpack.c.b16 %v2714, %v2706
    %v4659 = vpack.c.b16 %v2715, %v2707
    %v4660 = vpack.c.b16 %v2716, %v2708
    %v4661 = vpack.c.b16 %v2717, %v2709
    %v4662 = vpack.c.b16 %v2726, %v2718
    %v4663 = vpack.c.b16 %v2727, %v2719
    %v4664 = vpack.c.b16 %v2728, %v2720
    %v4665 = vpack.c.b16 %v2729, %v2721
    %v4666 = vpack.c.b16 %v2730, %v2722
    %v4667 = vpack.c.b16 %v2731, %v2723
    %v4668 = vpack.c.b16 %v2732, %v2724
    %v4669 = vpack.c.b16 %v2733, %v2725
    %v4670 = vpack.c.b16 %v2742, %v2734
    %v4671 = vpack.c.b16 %v2743, %v2735
    %v4672 = vpack.c.b16 %v2744, %v2736
    %v4673 = vpack.c.b16 %v2745, %v2737
    %v4674 = vpack.c.b16 %v2746, %v2738
    %v4675 = vpack.c.b16 %v2747, %v2739
    %v4676 = vpack.c.b16 %v2748, %v2740
    %v4677 = vpack.c.b16 %v2749, %v2741
    %v4678 = vpack.c.b16 %v2758, %v2750
    %v4679 = vpack.c.b16 %v2759, %v2751
    %v4680 = vpack.c.b16 %v2760, %v2752
    %v4681 = vpack.c.b16 %v2761, %v2753
    %v4682 = vpack.c.b16 %v2762, %v2754
    %v4683 = vpack.c.b16 %v2763, %v2755
    %v4684 = vpack.c.b16 %v2764, %v2756
    %v4685 = vpack.c.b16 %v2765, %v2757
    %v4686 = vpack.c.b16 %v2774, %v2766
    %v4687 = vpack.c.b16 %v2775, %v2767
    %v4688 = vpack.c.b16 %v2776, %v2768
    %v4689 = vpack.c.b16 %v2777, %v2769
    %v4690 = vpack.c.b16 %v2778, %v2770
    %v4691 = vpack.c.b16 %v2779, %v2771
    %v4692 = vpack.c.b16 %v2780, %v2772
    %v4693 = vpack.c.b16 %v2781, %v2773
    %v4694 = vpack.c.b16 %v2790, %v2782
    %v4695 = vpack.c.b16 %v2791, %v2783
    %v4696 = vpack.c.b16 %v2792, %v2784
    %v4697 = vpack.c.b16 %v2793, %v2785
    %v4698 = vpack.c.b16 %v2794, %v2786
    %v4699 = vpack.c.b16 %v2795, %v2787
    %v4700 = vpack.c.b16 %v2796, %v2788
    %v4701 = vpack.c.b16 %v2797, %v2789
    %v4702 = vpack.c.b16 %v2806, %v2798
    %v4703 = vpack.c.b16 %v2807, %v2799
    %v4704 = vpack.c.b16 %v2808, %v2800
    %v4705 = vpack.c.b16 %v2809, %v2801
    %v4706 = vpack.c.b16 %v2810, %v2802
    %v4707 = vpack.c.b16 %v2811, %v2803
    %v4708 = vpack.c.b16 %v2812, %v2804
    %v4709 = vpack.c.b16 %v2813, %v2805
    %v4710 = vpack.c.b16 %v2822, %v2814
    %v4711 = vpack.c.b16 %v2823, %v2815
    %v4712 = vpack.c.b16 %v2824, %v2816
    %v4713 = vpack.c.b16 %v2825, %v2817
    %v4714 = vpack.c.b16 %v2826, %v2818
    %v4715 = vpack.c.b16 %v2827, %v2819
    %v4716 = vpack.c.b16 %v2828, %v2820
    %v4717 = vpack.c.b16 %v2829, %v2821
    %v4718 = vpack.c.b16 %v2838, %v2830
    %v4719 = vpack.c.b16 %v2839, %v2831
    %v4720 = vpack.c.b16 %v2840, %v2832
    %v4721 = vpack.c.b16 %v2841, %v2833
    %v4722 = vpack.c.b16 %v2842, %v2834
    %v4723 = vpack.c.b16 %v2843, %v2835
    %v4724 = vpack.c.b16 %v2844, %v2836
    %v4725 = vpack.c.b16 %v2845, %v2837
    %v4726 = vpack.c.b16 %v2854, %v2846
    %v4727 = vpack.c.b16 %v2855, %v2847
    %v4728 = vpack.c.b16 %v2856, %v2848
    %v4729 = vpack.c.b16 %v2857, %v2849
    %v4730 = vpack.c.b16 %v2858, %v2850
    %v4731 = vpack.c.b16 %v2859, %v2851
    %v4732 = vpack.c.b16 %v2860, %v2852
    %v4733 = vpack.c.b16 %v2861, %v2853
    %v4734 = vpack.c.b16 %v2870, %v2862
    %v4735 = vpack.c.b16 %v2871, %v2863
    %v4736 = vpack.c.b16 %v2872, %v2864
    %v4737 = vpack.c.b16 %v2873, %v2865
    %v4738 = vpack.c.b16 %v2874, %v2866
    %v4739 = vpack.c.b16 %v2875, %v2867
    %v4740 = vpack.c.b16 %v2876, %v2868
    %v4741 = vpack.c.b16 %v2877, %v2869
    %v4742 = vpack.c.b16 %v2886, %v2878
    %v4743 = vpack.c.b16 %v2887, %v2879
    %v4744 = vpack.c.b16 %v2888, %v2880
    %v4745 = vpack.c.b16 %v2889, %v2881
    %v4746 = vpack.c.b16 %v2890, %v2882
    %v4747 = vpack.c.b16 %v2891, %v2883
    %v4748 = vpack.c.b16 %v2892, %v2884
    %v4749 = vpack.c.b16 %v2893, %v2885
    %v4750 = vpack.c.b16 %v2902, %v2894
    %v4751 = vpack.c.b16 %v2903, %v2895
    %v4752 = vpack.c.b16 %v2904, %v2896
    %v4753 = vpack.c.b16 %v2905, %v2897
    %v4754 = vpack.c.b16 %v2906, %v2898
    %v4755 = vpack.c.b16 %v2907, %v2899
    %v4756 = vpack.c.b16 %v2908, %v2900
    %v4757 = vpack.c.b16 %v2909, %v2901
    %v4758 = vpack.c.b16 %v2918, %v2910
    %v4759 = vpack.c.b16 %v2919, %v2911
    %v4760 = vpack.c.b16 %v2920, %v2912
    %v4761 = vpack.c.b16 %v2921, %v2913
    %v4762 = vpack.c.b16 %v2922, %v2914
    %v4763 = vpack.c.b16 %v2923, %v2915
    %v4764 = vpack.c.b16 %v2924, %v2916
    %v4765 = vpack.c.b16 %v2925, %v2917
    %v4766 = vpack.c.b16 %v2934, %v2926
    %v4767 = vpack.c.b16 %v2935, %v2927
    %v4768 = vpack.c.b16 %v2936, %v2928
    %v4769 = vpack.c.b16 %v2937, %v2929
    %v4770 = vpack.c.b16 %v2938, %v2930
    %v4771 = vpack.c.b16 %v2939, %v2931
    %v4772 = vpack.c.b16 %v2940, %v2932
    %v4773 = vpack.c.b16 %v2941, %v2933
    %v4774 = vpack.c.b16 %v2950, %v2942
    %v4775 = vpack.c.b16 %v2951, %v2943
    %v4776 = vpack.c.b16 %v2952, %v2944
    %v4777 = vpack.c.b16 %v2953, %v2945
    %v4778 = vpack.c.b16 %v2954, %v2946
    %v4779 = vpack.c.b16 %v2955, %v2947
    %v4780 = vpack.c.b16 %v2956, %v2948
    %v4781 = vpack.c.b16 %v2957, %v2949
    %v4782 = vpack.c.b16 %v2966, %v2958
    %v4783 = vpack.c.b16 %v2967, %v2959
    %v4784 = vpack.c.b16 %v2968, %v2960
    %v4785 = vpack.c.b16 %v2969, %v2961
    %v4786 = vpack.c.b16 %v2970, %v2962
    %v4787 = vpack.c.b16 %v2971, %v2963
    %v4788 = vpack.c.b16 %v2972, %v2964
    %v4789 = vpack.c.b16 %v2973, %v2965
    %v4790 = vpack.c.b16 %v2982, %v2974
    %v4791 = vpack.c.b16 %v2983, %v2975
    %v4792 = vpack.c.b16 %v2984, %v2976
    %v4793 = vpack.c.b16 %v2985, %v2977
    %v4794 = vpack.c.b16 %v2986, %v2978
    %v4795 = vpack.c.b16 %v2987, %v2979
    %v4796 = vpack.c.b16 %v2988, %v2980
    %v4797 = vpack.c.b16 %v2989, %v2981
    %v4798 = vpack.c.b16 %v2998, %v2990
    %v4799 = vpack.c.b16 %v2999, %v2991
    %v4800 = vpack.c.b16 %v3000, %v2992
    %v4801 = vpack.c.b16 %v3001, %v2993
    %v4802 = vpack.c.b16 %v3002, %v2994
    %v4803 = vpack.c.b16 %v3003, %v2995
    %v4804 = vpack.c.b16 %v3004, %v2996
    %v4805 = vpack.c.b16 %v3005, %v2997
    %v4806 = vpack.c.b16 %v3014, %v3006
    %v4807 = vpack.c.b16 %v3015, %v3007
    %v4808 = vpack.c.b16 %v3016, %v3008
    %v4809 = vpack.c.b16 %v3017, %v3009
    %v4810 = vpack.c.b16 %v3018, %v3010
    %v4811 = vpack.c.b16 %v3019, %v3011
    %v4812 = vpack.c.b16 %v3020, %v3012
    %v4813 = vpack.c.b16 %v3021, %v3013
    %v4814 = vpack.c.b16 %v3030, %v3022
    %v4815 = vpack.c.b16 %v3031, %v3023
    %v4816 = vpack.c.b16 %v3032, %v3024
    %v4817 = vpack.c.b16 %v3033, %v3025
    %v4818 = vpack.c.b16 %v3034, %v3026
    %v4819 = vpack.c.b16 %v3035, %v3027
    %v4820 = vpack.c.b16 %v3036, %v3028
    %v4821 = vpack.c.b16 %v3037, %v3029
    %v4822 = vpack.c.b16 %v3046, %v3038
    %v4823 = vpack.c.b16 %v3047, %v3039
    %v4824 = vpack.c.b16 %v3048, %v3040
    %v4825 = vpack.c.b16 %v3049, %v3041
    %v4826 = vpack.c.b16 %v3050, %v3042
    %v4827 = vpack.c.b16 %v3051, %v3043
    %v4828 = vpack.c.b16 %v3052, %v3044
    %v4829 = vpack.c.b16 %v3053, %v3045
    %v4830 = vpack.c.b16 %v3062, %v3054
    %v4831 = vpack.c.b16 %v3063, %v3055
    %v4832 = vpack.c.b16 %v3064, %v3056
    %v4833 = vpack.c.b16 %v3065, %v3057
    %v4834 = vpack.c.b16 %v3066, %v3058
    %v4835 = vpack.c.b16 %v3067, %v3059
    %v4836 = vpack.c.b16 %v3068, %v3060
    %v4837 = vpack.c.b16 %v3069, %v3061
    %v4838 = vpack.c.b16 %v3078, %v3070
    %v4839 = vpack.c.b16 %v3079, %v3071
    %v4840 = vpack.c.b16 %v3080, %v3072
    %v4841 = vpack.c.b16 %v3081, %v3073
    %v4842 = vpack.c.b16 %v3082, %v3074
    %v4843 = vpack.c.b16 %v3083, %v3075
    %v4844 = vpack.c.b16 %v3084, %v3076
    %v4845 = vpack.c.b16 %v3085, %v3077
    %v4846 = vpack.c.b16 %v3094, %v3086
    %v4847 = vpack.c.b16 %v3095, %v3087
    %v4848 = vpack.c.b16 %v3096, %v3088
    %v4849 = vpack.c.b16 %v3097, %v3089
    %v4850 = vpack.c.b16 %v3098, %v3090
    %v4851 = vpack.c.b16 %v3099, %v3091
    %v4852 = vpack.c.b16 %v3100, %v3092
    %v4853 = vpack.c.b16 %v3101, %v3093
    %v4854 = vpack.c.b16 %v3110, %v3102
    %v4855 = vpack.c.b16 %v3111, %v3103
    %v4856 = vpack.c.b16 %v3112, %v3104
    %v4857 = vpack.c.b16 %v3113, %v3105
    %v4858 = vpack.c.b16 %v3114, %v3106
    %v4859 = vpack.c.b16 %v3115, %v3107
    %v4860 = vpack.c.b16 %v3116, %v3108
    %v4861 = vpack.c.b16 %v3117, %v3109
    %v4862 = vpack.c.b16 %v3126, %v3118
    %v4863 = vpack.c.b16 %v3127, %v3119
    %v4864 = vpack.c.b16 %v3128, %v3120
    %v4865 = vpack.c.b16 %v3129, %v3121
    %v4866 = vpack.c.b16 %v3130, %v3122
    %v4867 = vpack.c.b16 %v3131, %v3123
    %v4868 = vpack.c.b16 %v3132, %v3124
    %v4869 = vpack.c.b16 %v3133, %v3125
    %v4870 = vpack.c.b16 %v3142, %v3134
    %v4871 = vpack.c.b16 %v3143, %v3135
    %v4872 = vpack.c.b16 %v3144, %v3136
    %v4873 = vpack.c.b16 %v3145, %v3137
    %v4874 = vpack.c.b16 %v3146, %v3138
    %v4875 = vpack.c.b16 %v3147, %v3139
    %v4876 = vpack.c.b16 %v3148, %v3140
    %v4877 = vpack.c.b16 %v3149, %v3141
    %v4878 = vpack.c.b16 %v3158, %v3150
    %v4879 = vpack.c.b16 %v3159, %v3151
    %v4880 = vpack.c.b16 %v3160, %v3152
    %v4881 = vpack.c.b16 %v3161, %v3153
    %v4882 = vpack.c.b16 %v3162, %v3154
    %v4883 = vpack.c.b16 %v3163, %v3155
    %v4884 = vpack.c.b16 %v3164, %v3156
    %v4885 = vpack.c.b16 %v3165, %v3157
    %v4886 = vpack.c.b16 %v3174, %v3166
    %v4887 = vpack.c.b16 %v3175, %v3167
    %v4888 = vpack.c.b16 %v3176, %v3168
    %v4889 = vpack.c.b16 %v3177, %v3169
    %v4890 = vpack.c.b16 %v3178, %v3170
    %v4891 = vpack.c.b16 %v3179, %v3171
    %v4892 = vpack.c.b16 %v3180, %v3172
    %v4893 = vpack.c.b16 %v3181, %v3173
    %v4894 = vpack.c.b16 %v3190, %v3182
    %v4895 = vpack.c.b16 %v3191, %v3183
    %v4896 = vpack.c.b16 %v3192, %v3184
    %v4897 = vpack.c.b16 %v3193, %v3185
    %v4898 = vpack.c.b16 %v3194, %v3186
    %v4899 = vpack.c.b16 %v3195, %v3187
    %v4900 = vpack.c.b16 %v3196, %v3188
    %v4901 = vpack.c.b16 %v3197, %v3189
    %v4902 = vpack.c.b16 %v3206, %v3198
    %v4903 = vpack.c.b16 %v3207, %v3199
    %v4904 = vpack.c.b16 %v3208, %v3200
    %v4905 = vpack.c.b16 %v3209, %v3201
    %v4906 = vpack.c.b16 %v3210, %v3202
    %v4907 = vpack.c.b16 %v3211, %v3203
    %v4908 = vpack.c.b16 %v3212, %v3204
    %v4909 = vpack.c.b16 %v3213, %v3205
    %v4910 = vpack.c.b16 %v3222, %v3214
    %v4911 = vpack.c.b16 %v3223, %v3215
    %v4912 = vpack.c.b16 %v3224, %v3216
    %v4913 = vpack.c.b16 %v3225, %v3217
    %v4914 = vpack.c.b16 %v3226, %v3218
    %v4915 = vpack.c.b16 %v3227, %v3219
    %v4916 = vpack.c.b16 %v3228, %v3220
    %v4917 = vpack.c.b16 %v3229, %v3221
    %v4918 = vpack.c.b16 %v3238, %v3230
    %v4919 = vpack.c.b16 %v3239, %v3231
    %v4920 = vpack.c.b16 %v3240, %v3232
    %v4921 = vpack.c.b16 %v3241, %v3233
    %v4922 = vpack.c.b16 %v3242, %v3234
    %v4923 = vpack.c.b16 %v3243, %v3235
    %v4924 = vpack.c.b16 %v3244, %v3236
    %v4925 = vpack.c.b16 %v3245, %v3237
    %v4926 = vpack.c.b16 %v3254, %v3246
    %v4927 = vpack.c.b16 %v3255, %v3247
    %v4928 = vpack.c.b16 %v3256, %v3248
    %v4929 = vpack.c.b16 %v3257, %v3249
    %v4930 = vpack.c.b16 %v3258, %v3250
    %v4931 = vpack.c.b16 %v3259, %v3251
    %v4932 = vpack.c.b16 %v3260, %v3252
    %v4933 = vpack.c.b16 %v3261, %v3253
    %v4934 = vpack.c.b16 %v3270, %v3262
    %v4935 = vpack.c.b16 %v3271, %v3263
    %v4936 = vpack.c.b16 %v3272, %v3264
    %v4937 = vpack.c.b16 %v3273, %v3265
    %v4938 = vpack.c.b16 %v3274, %v3266
    %v4939 = vpack.c.b16 %v3275, %v3267
    %v4940 = vpack.c.b16 %v3276, %v3268
    %v4941 = vpack.c.b16 %v3277, %v3269
    %v4942 = vpack.c.b16 %v3286, %v3278
    %v4943 = vpack.c.b16 %v3287, %v3279
    %v4944 = vpack.c.b16 %v3288, %v3280
    %v4945 = vpack.c.b16 %v3289, %v3281
    %v4946 = vpack.c.b16 %v3290, %v3282
    %v4947 = vpack.c.b16 %v3291, %v3283
    %v4948 = vpack.c.b16 %v3292, %v3284
    %v4949 = vpack.c.b16 %v3293, %v3285
    %v4950 = vpack.c.b16 %v3302, %v3294
    %v4951 = vpack.c.b16 %v3303, %v3295
    %v4952 = vpack.c.b16 %v3304, %v3296
    %v4953 = vpack.c.b16 %v3305, %v3297
    %v4954 = vpack.c.b16 %v3306, %v3298
    %v4955 = vpack.c.b16 %v3307, %v3299
    %v4956 = vpack.c.b16 %v3308, %v3300
    %v4957 = vpack.c.b16 %v3309, %v3301
    %v4958 = vpack.c.b16 %v3318, %v3310
    %v4959 = vpack.c.b16 %v3319, %v3311
    %v4960 = vpack.c.b16 %v3320, %v3312
    %v4961 = vpack.c.b16 %v3321, %v3313
    %v4962 = vpack.c.b16 %v3322, %v3314
    %v4963 = vpack.c.b16 %v3323, %v3315
    %v4964 = vpack.c.b16 %v3324, %v3316
    %v4965 = vpack.c.b16 %v3325, %v3317
    %v4966 = vpack.c.b16 %v3334, %v3326
    %v4967 = vpack.c.b16 %v3335, %v3327
    %v4968 = vpack.c.b16 %v3336, %v3328
    %v4969 = vpack.c.b16 %v3337, %v3329
    %v4970 = vpack.c.b16 %v3338, %v3330
    %v4971 = vpack.c.b16 %v3339, %v3331
    %v4972 = vpack.c.b16 %v3340, %v3332
    %v4973 = vpack.c.b16 %v3341, %v3333
    %v4974 = vpack.c.b16 %v3350, %v3342
    %v4975 = vpack.c.b16 %v3351, %v3343
    %v4976 = vpack.c.b16 %v3352, %v3344
    %v4977 = vpack.c.b16 %v3353, %v3345
    %v4978 = vpack.c.b16 %v3354, %v3346
    %v4979 = vpack.c.b16 %v3355, %v3347
    %v4980 = vpack.c.b16 %v3356, %v3348
    %v4981 = vpack.c.b16 %v3357, %v3349
    %v4982 = vpack.c.b16 %v3366, %v3358
    %v4983 = vpack.c.b16 %v3367, %v3359
    %v4984 = vpack.c.b16 %v3368, %v3360
    %v4985 = vpack.c.b16 %v3369, %v3361
    %v4986 = vpack.c.b16 %v3370, %v3362
    %v4987 = vpack.c.b16 %v3371, %v3363
    %v4988 = vpack.c.b16 %v3372, %v3364
    %v4989 = vpack.c.b16 %v3373, %v3365
    %v4990 = vpack.c.b16 %v3382, %v3374
    %v4991 = vpack.c.b16 %v3383, %v3375
    %v4992 = vpack.c.b16 %v3384, %v3376
    %v4993 = vpack.c.b16 %v3385, %v3377
    %v4994 = vpack.c.b16 %v3386, %v3378
    %v4995 = vpack.c.b16 %v3387, %v3379
    %v4996 = vpack.c.b16 %v3388, %v3380
    %v4997 = vpack.c.b16 %v3389, %v3381
    %v4998 = vpack.c.b16 %v3398, %v3390
    %v4999 = vpack.c.b16 %v3399, %v3391
    %v5000 = vpack.c.b16 %v3400, %v3392
    %v5001 = vpack.c.b16 %v3401, %v3393
    %v5002 = vpack.c.b16 %v3402, %v3394
    %v5003 = vpack.c.b16 %v3403, %v3395
    %v5004 = vpack.c.b16 %v3404, %v3396
    %v5005 = vpack.c.b16 %v3405, %v3397
    %v5006 = vpack.c.b16 %v3414, %v3406
    %v5007 = vpack.c.b16 %v3415, %v3407
    %v5008 = vpack.c.b16 %v3416, %v3408
    %v5009 = vpack.c.b16 %v3417, %v3409
    %v5010 = vpack.c.b16 %v3418, %v3410
    %v5011 = vpack.c.b16 %v3419, %v3411
    %v5012 = vpack.c.b16 %v3420, %v3412
    %v5013 = vpack.c.b16 %v3421, %v3413
    %v5014 = vpack.c.b16 %v3430, %v3422
    %v5015 = vpack.c.b16 %v3431, %v3423
    %v5016 = vpack.c.b16 %v3432, %v3424
    %v5017 = vpack.c.b16 %v3433, %v3425
    %v5018 = vpack.c.b16 %v3434, %v3426
    %v5019 = vpack.c.b16 %v3435, %v3427
    %v5020 = vpack.c.b16 %v3436, %v3428
    %v5021 = vpack.c.b16 %v3437, %v3429
    %v5022 = vpack.c.b16 %v3446, %v3438
    %v5023 = vpack.c.b16 %v3447, %v3439
    %v5024 = vpack.c.b16 %v3448, %v3440
    %v5025 = vpack.c.b16 %v3449, %v3441
    %v5026 = vpack.c.b16 %v3450, %v3442
    %v5027 = vpack.c.b16 %v3451, %v3443
    %v5028 = vpack.c.b16 %v3452, %v3444
    %v5029 = vpack.c.b16 %v3453, %v3445
    %v5030 = vpack.c.b16 %v3462, %v3454
    %v5031 = vpack.c.b16 %v3463, %v3455
    %v5032 = vpack.c.b16 %v3464, %v3456
    %v5033 = vpack.c.b16 %v3465, %v3457
    %v5034 = vpack.c.b16 %v3466, %v3458
    %v5035 = vpack.c.b16 %v3467, %v3459
    %v5036 = vpack.c.b16 %v3468, %v3460
    %v5037 = vpack.c.b16 %v3469, %v3461
    %v5038 = vpack.c.b16 %v3478, %v3470
    %v5039 = vpack.c.b16 %v3479, %v3471
    %v5040 = vpack.c.b16 %v3480, %v3472
    %v5041 = vpack.c.b16 %v3481, %v3473
    %v5042 = vpack.c.b16 %v3482, %v3474
    %v5043 = vpack.c.b16 %v3483, %v3475
    %v5044 = vpack.c.b16 %v3484, %v3476
    %v5045 = vpack.c.b16 %v3485, %v3477
    %v5046 = vpack.c.b16 %v3494, %v3486
    %v5047 = vpack.c.b16 %v3495, %v3487
    %v5048 = vpack.c.b16 %v3496, %v3488
    %v5049 = vpack.c.b16 %v3497, %v3489
    %v5050 = vpack.c.b16 %v3498, %v3490
    %v5051 = vpack.c.b16 %v3499, %v3491
    %v5052 = vpack.c.b16 %v3500, %v3492
    %v5053 = vpack.c.b16 %v3501, %v3493
    %v5054 = vpack.c.b16 %v3510, %v3502
    %v5055 = vpack.c.b16 %v3511, %v3503
    %v5056 = vpack.c.b16 %v3512, %v3504
    %v5057 = vpack.c.b16 %v3513, %v3505
    %v5058 = vpack.c.b16 %v3514, %v3506
    %v5059 = vpack.c.b16 %v3515, %v3507
    %v5060 = vpack.c.b16 %v3516, %v3508
    %v5061 = vpack.c.b16 %v3517, %v3509
    %v5062 = vpack.c.b16 %v3526, %v3518
    %v5063 = vpack.c.b16 %v3527, %v3519
    %v5064 = vpack.c.b16 %v3528, %v3520
    %v5065 = vpack.c.b16 %v3529, %v3521
    %v5066 = vpack.c.b16 %v3530, %v3522
    %v5067 = vpack.c.b16 %v3531, %v3523
    %v5068 = vpack.c.b16 %v3532, %v3524
    %v5069 = vpack.c.b16 %v3533, %v3525
    %v5070 = vpack.c.b16 %v3542, %v3534
    %v5071 = vpack.c.b16 %v3543, %v3535
    %v5072 = vpack.c.b16 %v3544, %v3536
    %v5073 = vpack.c.b16 %v3545, %v3537
    %v5074 = vpack.c.b16 %v3546, %v3538
    %v5075 = vpack.c.b16 %v3547, %v3539
    %v5076 = vpack.c.b16 %v3548, %v3540
    %v5077 = vpack.c.b16 %v3549, %v3541
    %v5078 = vpack.c.b16 %v3558, %v3550
    %v5079 = vpack.c.b16 %v3559, %v3551
    %v5080 = vpack.c.b16 %v3560, %v3552
    %v5081 = vpack.c.b16 %v3561, %v3553
    %v5082 = vpack.c.b16 %v3562, %v3554
    %v5083 = vpack.c.b16 %v3563, %v3555
    %v5084 = vpack.c.b16 %v3564, %v3556
    %v5085 = vpack.c.b16 %v3565, %v3557
    %v5086 = vpack.c.b16 %v3574, %v3566
    %v5087 = vpack.c.b16 %v3575, %v3567
    %v5088 = vpack.c.b16 %v3576, %v3568
    %v5089 = vpack.c.b16 %v3577, %v3569
    %v5090 = vpack.c.b16 %v3578, %v3570
    %v5091 = vpack.c.b16 %v3579, %v3571
    %v5092 = vpack.c.b16 %v3580, %v3572
    %v5093 = vpack.c.b16 %v3581, %v3573
    %v5094 = vpack.c.b16 %v3590, %v3582
    %v5095 = vpack.c.b16 %v3591, %v3583
    %v5096 = vpack.c.b16 %v3592, %v3584
    %v5097 = vpack.c.b16 %v3593, %v3585
    %v5098 = vpack.c.b16 %v3594, %v3586
    %v5099 = vpack.c.b16 %v3595, %v3587
    %v5100 = vpack.c.b16 %v3596, %v3588
    %v5101 = vpack.c.b16 %v3597, %v3589
    %v5102 = vpack.c.b16 %v3606, %v3598
    %v5103 = vpack.c.b16 %v3607, %v3599
    %v5104 = vpack.c.b16 %v3608, %v3600
    %v5105 = vpack.c.b16 %v3609, %v3601
    %v5106 = vpack.c.b16 %v3610, %v3602
    %v5107 = vpack.c.b16 %v3611, %v3603
    %v5108 = vpack.c.b16 %v3612, %v3604
    %v5109 = vpack.c.b16 %v3613, %v3605
    %v5110 = vpack.c.b16 %v3622, %v3614
    %v5111 = vpack.c.b16 %v3623, %v3615
    %v5112 = vpack.c.b16 %v3624, %v3616
    %v5113 = vpack.c.b16 %v3625, %v3617
    %v5114 = vpack.c.b16 %v3626, %v3618
    %v5115 = vpack.c.b16 %v3627, %v3619
    %v5116 = vpack.c.b16 %v3628, %v3620
    %v5117 = vpack.c.b16 %v3629, %v3621
    %v5118 = vpack.c.b16 %v3638, %v3630
    %v5119 = vpack.c.b16 %v3639, %v3631
    %v5120 = vpack.c.b16 %v3640, %v3632
    %v5121 = vpack.c.b16 %v3641, %v3633
    %v5122 = vpack.c.b16 %v3642, %v3634
    %v5123 = vpack.c.b16 %v3643, %v3635
    %v5124 = vpack.c.b16 %v3644, %v3636
    %v5125 = vpack.c.b16 %v3645, %v3637
    %v5126 = vpack.c.b16 %v3654, %v3646
    %v5127 = vpack.c.b16 %v3655, %v3647
    %v5128 = vpack.c.b16 %v3656, %v3648
    %v5129 = vpack.c.b16 %v3657, %v3649
    %v5130 = vpack.c.b16 %v3658, %v3650
    %v5131 = vpack.c.b16 %v3659, %v3651
    %v5132 = vpack.c.b16 %v3660, %v3652
    %v5133 = vpack.c.b16 %v3661, %v3653
    %v5134 = vpack.c.b16 %v3670, %v3662
    %v5135 = vpack.c.b16 %v3671, %v3663
    %v5136 = vpack.c.b16 %v3672, %v3664
    %v5137 = vpack.c.b16 %v3673, %v3665
    %v5138 = vpack.c.b16 %v3674, %v3666
    %v5139 = vpack.c.b16 %v3675, %v3667
    %v5140 = vpack.c.b16 %v3676, %v3668
    %v5141 = vpack.c.b16 %v3677, %v3669
    %v5142 = vpack.c.b16 %v3686, %v3678
    %v5143 = vpack.c.b16 %v3687, %v3679
    %v5144 = vpack.c.b16 %v3688, %v3680
    %v5145 = vpack.c.b16 %v3689, %v3681
    %v5146 = vpack.c.b16 %v3690, %v3682
    %v5147 = vpack.c.b16 %v3691, %v3683
    %v5148 = vpack.c.b16 %v3692, %v3684
    %v5149 = vpack.c.b16 %v3693, %v3685
    %v5150 = vpack.c.b16 %v3702, %v3694
    %v5151 = vpack.c.b16 %v3703, %v3695
    %v5152 = vpack.c.b16 %v3704, %v3696
    %v5153 = vpack.c.b16 %v3705, %v3697
    %v5154 = vpack.c.b16 %v3706, %v3698
    %v5155 = vpack.c.b16 %v3707, %v3699
    %v5156 = vpack.c.b16 %v3708, %v3700
    %v5157 = vpack.c.b16 %v3709, %v3701
    %v5158 = vpack.c.b16 %v3718, %v3710
    %v5159 = vpack.c.b16 %v3719, %v3711
    %v5160 = vpack.c.b16 %v3720, %v3712
    %v5161 = vpack.c.b16 %v3721, %v3713
    %v5162 = vpack.c.b16 %v3722, %v3714
    %v5163 = vpack.c.b16 %v3723, %v3715
    %v5164 = vpack.c.b16 %v3724, %v3716
    %v5165 = vpack.c.b16 %v3725, %v3717
    %v5166 = vpack.c.b16 %v3734, %v3726
    %v5167 = vpack.c.b16 %v3735, %v3727
    %v5168 = vpack.c.b16 %v3736, %v3728
    %v5169 = vpack.c.b16 %v3737, %v3729
    %v5170 = vpack.c.b16 %v3738, %v3730
    %v5171 = vpack.c.b16 %v3739, %v3731
    %v5172 = vpack.c.b16 %v3740, %v3732
    %v5173 = vpack.c.b16 %v3741, %v3733
    %v5174 = vpack.c.b16 %v3750, %v3742
    %v5175 = vpack.c.b16 %v3751, %v3743
    %v5176 = vpack.c.b16 %v3752, %v3744
    %v5177 = vpack.c.b16 %v3753, %v3745
    %v5178 = vpack.c.b16 %v3754, %v3746
    %v5179 = vpack.c.b16 %v3755, %v3747
    %v5180 = vpack.c.b16 %v3756, %v3748
    %v5181 = vpack.c.b16 %v3757, %v3749
    %v5182 = vpack.c.b16 %v3766, %v3758
    %v5183 = vpack.c.b16 %v3767, %v3759
    %v5184 = vpack.c.b16 %v3768, %v3760
    %v5185 = vpack.c.b16 %v3769, %v3761
    %v5186 = vpack.c.b16 %v3770, %v3762
    %v5187 = vpack.c.b16 %v3771, %v3763
    %v5188 = vpack.c.b16 %v3772, %v3764
    %v5189 = vpack.c.b16 %v3773, %v3765
    %v5190 = vpack.c.b16 %v3782, %v3774
    %v5191 = vpack.c.b16 %v3783, %v3775
    %v5192 = vpack.c.b16 %v3784, %v3776
    %v5193 = vpack.c.b16 %v3785, %v3777
    %v5194 = vpack.c.b16 %v3786, %v3778
    %v5195 = vpack.c.b16 %v3787, %v3779
    %v5196 = vpack.c.b16 %v3788, %v3780
    %v5197 = vpack.c.b16 %v3789, %v3781
    %v5198 = vpack.c.b16 %v3798, %v3790
    %v5199 = vpack.c.b16 %v3799, %v3791
    %v5200 = vpack.c.b16 %v3800, %v3792
    %v5201 = vpack.c.b16 %v3801, %v3793
    %v5202 = vpack.c.b16 %v3802, %v3794
    %v5203 = vpack.c.b16 %v3803, %v3795
    %v5204 = vpack.c.b16 %v3804, %v3796
    %v5205 = vpack.c.b16 %v3805, %v3797
    %v5206 = vpack.c.b16 %v3814, %v3806
    %v5207 = vpack.c.b16 %v3815, %v3807
    %v5208 = vpack.c.b16 %v3816, %v3808
    %v5209 = vpack.c.b16 %v3817, %v3809
    %v5210 = vpack.c.b16 %v3818, %v3810
    %v5211 = vpack.c.b16 %v3819, %v3811
    %v5212 = vpack.c.b16 %v3820, %v3812
    %v5213 = vpack.c.b16 %v3821, %v3813
    %v5214 = vpack.c.b16 %v3830, %v3822
    %v5215 = vpack.c.b16 %v3831, %v3823
    %v5216 = vpack.c.b16 %v3832, %v3824
    %v5217 = vpack.c.b16 %v3833, %v3825
    %v5218 = vpack.c.b16 %v3834, %v3826
    %v5219 = vpack.c.b16 %v3835, %v3827
    %v5220 = vpack.c.b16 %v3836, %v3828
    %v5221 = vpack.c.b16 %v3837, %v3829
    %v5222 = vpack.c.b16 %v3846, %v3838
    %v5223 = vpack.c.b16 %v3847, %v3839
    %v5224 = vpack.c.b16 %v3848, %v3840
    %v5225 = vpack.c.b16 %v3849, %v3841
    %v5226 = vpack.c.b16 %v3850, %v3842
    %v5227 = vpack.c.b16 %v3851, %v3843
    %v5228 = vpack.c.b16 %v3852, %v3844
    %v5229 = vpack.c.b16 %v3853, %v3845
    %v5230 = vpack.c.b16 %v3862, %v3854
    %v5231 = vpack.c.b16 %v3863, %v3855
    %v5232 = vpack.c.b16 %v3864, %v3856
    %v5233 = vpack.c.b16 %v3865, %v3857
    %v5234 = vpack.c.b16 %v3866, %v3858
    %v5235 = vpack.c.b16 %v3867, %v3859
    %v5236 = vpack.c.b16 %v3868, %v3860
    %v5237 = vpack.c.b16 %v3869, %v3861
    %v5238 = vpack.c.b16 %v3878, %v3870
    %v5239 = vpack.c.b16 %v3879, %v3871
    %v5240 = vpack.c.b16 %v3880, %v3872
    %v5241 = vpack.c.b16 %v3881, %v3873
    %v5242 = vpack.c.b16 %v3882, %v3874
    %v5243 = vpack.c.b16 %v3883, %v3875
    %v5244 = vpack.c.b16 %v3884, %v3876
    %v5245 = vpack.c.b16 %v3885, %v3877
    %v5246 = vpack.c.b16 %v3894, %v3886
    %v5247 = vpack.c.b16 %v3895, %v3887
    %v5248 = vpack.c.b16 %v3896, %v3888
    %v5249 = vpack.c.b16 %v3897, %v3889
    %v5250 = vpack.c.b16 %v3898, %v3890
    %v5251 = vpack.c.b16 %v3899, %v3891
    %v5252 = vpack.c.b16 %v3900, %v3892
    %v5253 = vpack.c.b16 %v3901, %v3893
    %v5254 = vpack.c.b16 %v3910, %v3902
    %v5255 = vpack.c.b16 %v3911, %v3903
    %v5256 = vpack.c.b16 %v3912, %v3904
    %v5257 = vpack.c.b16 %v3913, %v3905
    %v5258 = vpack.c.b16 %v3914, %v3906
    %v5259 = vpack.c.b16 %v3915, %v3907
    %v5260 = vpack.c.b16 %v3916, %v3908
    %v5261 = vpack.c.b16 %v3917, %v3909
    %v5262 = vpack.c.b16 %v3926, %v3918
    %v5263 = vpack.c.b16 %v3927, %v3919
    %v5264 = vpack.c.b16 %v3928, %v3920
    %v5265 = vpack.c.b16 %v3929, %v3921
    %v5266 = vpack.c.b16 %v3930, %v3922
    %v5267 = vpack.c.b16 %v3931, %v3923
    %v5268 = vpack.c.b16 %v3932, %v3924
    %v5269 = vpack.c.b16 %v3933, %v3925
    %v5270 = vpack.c.b16 %v3942, %v3934
    %v5271 = vpack.c.b16 %v3943, %v3935
    %v5272 = vpack.c.b16 %v3944, %v3936
    %v5273 = vpack.c.b16 %v3945, %v3937
    %v5274 = vpack.c.b16 %v3946, %v3938
    %v5275 = vpack.c.b16 %v3947, %v3939
    %v5276 = vpack.c.b16 %v3948, %v3940
    %v5277 = vpack.c.b16 %v3949, %v3941
    %v5278 = vpack.c.b16 %v3958, %v3950
    %v5279 = vpack.c.b16 %v3959, %v3951
    %v5280 = vpack.c.b16 %v3960, %v3952
    %v5281 = vpack.c.b16 %v3961, %v3953
    %v5282 = vpack.c.b16 %v3962, %v3954
    %v5283 = vpack.c.b16 %v3963, %v3955
    %v5284 = vpack.c.b16 %v3964, %v3956
    %v5285 = vpack.c.b16 %v3965, %v3957
    %v5286 = vpack.c.b16 %v3974, %v3966
    %v5287 = vpack.c.b16 %v3975, %v3967
    %v5288 = vpack.c.b16 %v3976, %v3968
    %v5289 = vpack.c.b16 %v3977, %v3969
    %v5290 = vpack.c.b16 %v3978, %v3970
    %v5291 = vpack.c.b16 %v3979, %v3971
    %v5292 = vpack.c.b16 %v3980, %v3972
    %v5293 = vpack.c.b16 %v3981, %v3973
    %v5294 = vpack.c.b16 %v3990, %v3982
    %v5295 = vpack.c.b16 %v3991, %v3983
    %v5296 = vpack.c.b16 %v3992, %v3984
    %v5297 = vpack.c.b16 %v3993, %v3985
    %v5298 = vpack.c.b16 %v3994, %v3986
    %v5299 = vpack.c.b16 %v3995, %v3987
    %v5300 = vpack.c.b16 %v3996, %v3988
    %v5301 = vpack.c.b16 %v3997, %v3989
    %v5302 = vpack.c.b16 %v4006, %v3998
    %v5303 = vpack.c.b16 %v4007, %v3999
    %v5304 = vpack.c.b16 %v4008, %v4000
    %v5305 = vpack.c.b16 %v4009, %v4001
    %v5306 = vpack.c.b16 %v4010, %v4002
    %v5307 = vpack.c.b16 %v4011, %v4003
    %v5308 = vpack.c.b16 %v4012, %v4004
    %v5309 = vpack.c.b16 %v4013, %v4005
    %v5310 = vpack.c.b16 %v4022, %v4014
    %v5311 = vpack.c.b16 %v4023, %v4015
    %v5312 = vpack.c.b16 %v4024, %v4016
    %v5313 = vpack.c.b16 %v4025, %v4017
    %v5314 = vpack.c.b16 %v4026, %v4018
    %v5315 = vpack.c.b16 %v4027, %v4019
    %v5316 = vpack.c.b16 %v4028, %v4020
    %v5317 = vpack.c.b16 %v4029, %v4021
    %v5318 = vpack.c.b16 %v4038, %v4030
    %v5319 = vpack.c.b16 %v4039, %v4031
    %v5320 = vpack.c.b16 %v4040, %v4032
    %v5321 = vpack.c.b16 %v4041, %v4033
    %v5322 = vpack.c.b16 %v4042, %v4034
    %v5323 = vpack.c.b16 %v4043, %v4035
    %v5324 = vpack.c.b16 %v4044, %v4036
    %v5325 = vpack.c.b16 %v4045, %v4037
    %v5326 = vpack.c.b16 %v4054, %v4046
    %v5327 = vpack.c.b16 %v4055, %v4047
    %v5328 = vpack.c.b16 %v4056, %v4048
    %v5329 = vpack.c.b16 %v4057, %v4049
    %v5330 = vpack.c.b16 %v4058, %v4050
    %v5331 = vpack.c.b16 %v4059, %v4051
    %v5332 = vpack.c.b16 %v4060, %v4052
    %v5333 = vpack.c.b16 %v4061, %v4053
    %v5334 = vpack.c.b16 %v4070, %v4062
    %v5335 = vpack.c.b16 %v4071, %v4063
    %v5336 = vpack.c.b16 %v4072, %v4064
    %v5337 = vpack.c.b16 %v4073, %v4065
    %v5338 = vpack.c.b16 %v4074, %v4066
    %v5339 = vpack.c.b16 %v4075, %v4067
    %v5340 = vpack.c.b16 %v4076, %v4068
    %v5341 = vpack.c.b16 %v4077, %v4069
    %v5342 = vpack.c.b16 %v4086, %v4078
    %v5343 = vpack.c.b16 %v4087, %v4079
    %v5344 = vpack.c.b16 %v4088, %v4080
    %v5345 = vpack.c.b16 %v4089, %v4081
    %v5346 = vpack.c.b16 %v4090, %v4082
    %v5347 = vpack.c.b16 %v4091, %v4083
    %v5348 = vpack.c.b16 %v4092, %v4084
    %v5349 = vpack.c.b16 %v4093, %v4085
    %v5350 = vpack.c.b16 %v4102, %v4094
    %v5351 = vpack.c.b16 %v4103, %v4095
    %v5352 = vpack.c.b16 %v4104, %v4096
    %v5353 = vpack.c.b16 %v4105, %v4097
    %v5354 = vpack.c.b16 %v4106, %v4098
    %v5355 = vpack.c.b16 %v4107, %v4099
    %v5356 = vpack.c.b16 %v4108, %v4100
    %v5357 = vpack.c.b16 %v4109, %v4101
    %v5358 = vpack.c.b16 %v4118, %v4110
    %v5359 = vpack.c.b16 %v4119, %v4111
    %v5360 = vpack.c.b16 %v4120, %v4112
    %v5361 = vpack.c.b16 %v4121, %v4113
    %v5362 = vpack.c.b16 %v4122, %v4114
    %v5363 = vpack.c.b16 %v4123, %v4115
    %v5364 = vpack.c.b16 %v4124, %v4116
    %v5365 = vpack.c.b16 %v4125, %v4117
    %v5366 = vpack.c.b16 %v4134, %v4126
    %v5367 = vpack.c.b16 %v4135, %v4127
    %v5368 = vpack.c.b16 %v4136, %v4128
    %v5369 = vpack.c.b16 %v4137, %v4129
    %v5370 = vpack.c.b16 %v4138, %v4130
    %v5371 = vpack.c.b16 %v4139, %v4131
    %v5372 = vpack.c.b16 %v4140, %v4132
    %v5373 = vpack.c.b16 %v4141, %v4133
    %v5374 = vpack.c.b16 %v4150, %v4142
    %v5375 = vpack.c.b16 %v4151, %v4143
    %v5376 = vpack.c.b16 %v4152, %v4144
    %v5377 = vpack.c.b16 %v4153, %v4145
    %v5378 = vpack.c.b16 %v4154, %v4146
    %v5379 = vpack.c.b16 %v4155, %v4147
    %v5380 = vpack.c.b16 %v4156, %v4148
    %v5381 = vpack.c.b16 %v4157, %v4149
    %v5382 = vpack.c.b16 %v4166, %v4158
    %v5383 = vpack.c.b16 %v4167, %v4159
    %v5384 = vpack.c.b16 %v4168, %v4160
    %v5385 = vpack.c.b16 %v4169, %v4161
    %v5386 = vpack.c.b16 %v4170, %v4162
    %v5387 = vpack.c.b16 %v4171, %v4163
    %v5388 = vpack.c.b16 %v4172, %v4164
    %v5389 = vpack.c.b16 %v4173, %v4165
    %v5390 = vpack.c.b16 %v4182, %v4174
    %v5391 = vpack.c.b16 %v4183, %v4175
    %v5392 = vpack.c.b16 %v4184, %v4176
    %v5393 = vpack.c.b16 %v4185, %v4177
    %v5394 = vpack.c.b16 %v4186, %v4178
    %v5395 = vpack.c.b16 %v4187, %v4179
    %v5396 = vpack.c.b16 %v4188, %v4180
    %v5397 = vpack.c.b16 %v4189, %v4181
    %v5398 = vpack.c.b16 %v4198, %v4190
    %v5399 = vpack.c.b16 %v4199, %v4191
    %v5400 = vpack.c.b16 %v4200, %v4192
    %v5401 = vpack.c.b16 %v4201, %v4193
    %v5402 = vpack.c.b16 %v4202, %v4194
    %v5403 = vpack.c.b16 %v4203, %v4195
    %v5404 = vpack.c.b16 %v4204, %v4196
    %v5405 = vpack.c.b16 %v4205, %v4197
    %v5406 = vpack.c.b16 %v4214, %v4206
    %v5407 = vpack.c.b16 %v4215, %v4207
    %v5408 = vpack.c.b16 %v4216, %v4208
    %v5409 = vpack.c.b16 %v4217, %v4209
    %v5410 = vpack.c.b16 %v4218, %v4210
    %v5411 = vpack.c.b16 %v4219, %v4211
    %v5412 = vpack.c.b16 %v4220, %v4212
    %v5413 = vpack.c.b16 %v4221, %v4213
    %v5414 = vpack.c.b16 %v4230, %v4222
    %v5415 = vpack.c.b16 %v4231, %v4223
    %v5416 = vpack.c.b16 %v4232, %v4224
    %v5417 = vpack.c.b16 %v4233, %v4225
    %v5418 = vpack.c.b16 %v4234, %v4226
    %v5419 = vpack.c.b16 %v4235, %v4227
    %v5420 = vpack.c.b16 %v4236, %v4228
    %v5421 = vpack.c.b16 %v4237, %v4229
    %v5422 = vpack.c.b16 %v4246, %v4238
    %v5423 = vpack.c.b16 %v4247, %v4239
    %v5424 = vpack.c.b16 %v4248, %v4240
    %v5425 = vpack.c.b16 %v4249, %v4241
    %v5426 = vpack.c.b16 %v4250, %v4242
    %v5427 = vpack.c.b16 %v4251, %v4243
    %v5428 = vpack.c.b16 %v4252, %v4244
    %v5429 = vpack.c.b16 %v4253, %v4245
    %v5430 = vpack.c.b16 %v4262, %v4254
    %v5431 = vpack.c.b16 %v4263, %v4255
    %v5432 = vpack.c.b16 %v4264, %v4256
    %v5433 = vpack.c.b16 %v4265, %v4257
    %v5434 = vpack.c.b16 %v4266, %v4258
    %v5435 = vpack.c.b16 %v4267, %v4259
    %v5436 = vpack.c.b16 %v4268, %v4260
    %v5437 = vpack.c.b16 %v4269, %v4261
    %v5438 = vpack.c.b16 %v4278, %v4270
    %v5439 = vpack.c.b16 %v4279, %v4271
    %v5440 = vpack.c.b16 %v4280, %v4272
    %v5441 = vpack.c.b16 %v4281, %v4273
    %v5442 = vpack.c.b16 %v4282, %v4274
    %v5443 = vpack.c.b16 %v4283, %v4275
    %v5444 = vpack.c.b16 %v4284, %v4276
    %v5445 = vpack.c.b16 %v4285, %v4277
    %v5446 = vpack.c.b16 %v4294, %v4286
    %v5447 = vpack.c.b16 %v4295, %v4287
    %v5448 = vpack.c.b16 %v4296, %v4288
    %v5449 = vpack.c.b16 %v4297, %v4289
    %v5450 = vpack.c.b16 %v4298, %v4290
    %v5451 = vpack.c.b16 %v4299, %v4291
    %v5452 = vpack.c.b16 %v4300, %v4292
    %v5453 = vpack.c.b16 %v4301, %v4293
    %v5454 = vpack.c.b16 %v4310, %v4302
    %v5455 = vpack.c.b16 %v4311, %v4303
    %v5456 = vpack.c.b16 %v4312, %v4304
    %v5457 = vpack.c.b16 %v4313, %v4305
    %v5458 = vpack.c.b16 %v4314, %v4306
    %v5459 = vpack.c.b16 %v4315, %v4307
    %v5460 = vpack.c.b16 %v4316, %v4308
    %v5461 = vpack.c.b16 %v4317, %v4309
    %v5462 = vpack.c.b16 %v4326, %v4318
    %v5463 = vpack.c.b16 %v4327, %v4319
    %v5464 = vpack.c.b16 %v4328, %v4320
    %v5465 = vpack.c.b16 %v4329, %v4321
    %v5466 = vpack.c.b16 %v4330, %v4322
    %v5467 = vpack.c.b16 %v4331, %v4323
    %v5468 = vpack.c.b16 %v4332, %v4324
    %v5469 = vpack.c.b16 %v4333, %v4325
    %v5470 = vpack.c.b16 %v4342, %v4334
    %v5471 = vpack.c.b16 %v4343, %v4335
    %v5472 = vpack.c.b16 %v4344, %v4336
    %v5473 = vpack.c.b16 %v4345, %v4337
    %v5474 = vpack.c.b16 %v4346, %v4338
    %v5475 = vpack.c.b16 %v4347, %v4339
    %v5476 = vpack.c.b16 %v4348, %v4340
    %v5477 = vpack.c.b16 %v4349, %v4341
    %v5478 = vpack.c.b16 %v4358, %v4350
    %v5479 = vpack.c.b16 %v4359, %v4351
    %v5480 = vpack.c.b16 %v4360, %v4352
    %v5481 = vpack.c.b16 %v4361, %v4353
    %v5482 = vpack.c.b16 %v4362, %v4354
    %v5483 = vpack.c.b16 %v4363, %v4355
    %v5484 = vpack.c.b16 %v4364, %v4356
    %v5485 = vpack.c.b16 %v4365, %v4357
    %v5486 = vpack.c.b16 %v4374, %v4366
    %v5487 = vpack.c.b16 %v4375, %v4367
    %v5488 = vpack.c.b16 %v4376, %v4368
    %v5489 = vpack.c.b16 %v4377, %v4369
    %v5490 = vpack.c.b16 %v4378, %v4370
    %v5491 = vpack.c.b16 %v4379, %v4371
    %v5492 = vpack.c.b16 %v4380, %v4372
    %v5493 = vpack.c.b16 %v4381, %v4373
    %v5494 = vpack.c.b16 %v4390, %v4382
    %v5495 = vpack.c.b16 %v4391, %v4383
    %v5496 = vpack.c.b16 %v4392, %v4384
    %v5497 = vpack.c.b16 %v4393, %v4385
    %v5498 = vpack.c.b16 %v4394, %v4386
    %v5499 = vpack.c.b16 %v4395, %v4387
    %v5500 = vpack.c.b16 %v4396, %v4388
    %v5501 = vpack.c.b16 %v4397, %v4389
    %v5502 = vpack.c.b16 %v4406, %v4398
    %v5503 = vpack.c.b16 %v4407, %v4399
    %v5504 = vpack.c.b16 %v4408, %v4400
    %v5505 = vpack.c.b16 %v4409, %v4401
    %v5506 = vpack.c.b16 %v4410, %v4402
    %v5507 = vpack.c.b16 %v4411, %v4403
    %v5508 = vpack.c.b16 %v4412, %v4404
    %v5509 = vpack.c.b16 %v4413, %v4405
    %v5510 = vpack.c.b16 %v4422, %v4414
    %v5511 = vpack.c.b16 %v4423, %v4415
    %v5512 = vpack.c.b16 %v4424, %v4416
    %v5513 = vpack.c.b16 %v4425, %v4417
    %v5514 = vpack.c.b16 %v4426, %v4418
    %v5515 = vpack.c.b16 %v4427, %v4419
    %v5516 = vpack.c.b16 %v4428, %v4420
    %v5517 = vpack.c.b16 %v4429, %v4421
    %v5518 = vpack.c.b16 %v4438, %v4430
    %v5519 = vpack.c.b16 %v4439, %v4431
    %v5520 = vpack.c.b16 %v4440, %v4432
    %v5521 = vpack.c.b16 %v4441, %v4433
    %v5522 = vpack.c.b16 %v4442, %v4434
    %v5523 = vpack.c.b16 %v4443, %v4435
    %v5524 = vpack.c.b16 %v4444, %v4436
    %v5525 = vpack.c.b16 %v4445, %v4437
    %v5526 = vpack.c.b16 %v4454, %v4446
    %v5527 = vpack.c.b16 %v4455, %v4447
    %v5528 = vpack.c.b16 %v4456, %v4448
    %v5529 = vpack.c.b16 %v4457, %v4449
    %v5530 = vpack.c.b16 %v4458, %v4450
    %v5531 = vpack.c.b16 %v4459, %v4451
    %v5532 = vpack.c.b16 %v4460, %v4452
    %v5533 = vpack.c.b16 %v4461, %v4453
    %v5534 = vpack.c.b16 %v4470, %v4462
    %v5535 = vpack.c.b16 %v4471, %v4463
    %v5536 = vpack.c.b16 %v4472, %v4464
    %v5537 = vpack.c.b16 %v4473, %v4465
    %v5538 = vpack.c.b16 %v4474, %v4466
    %v5539 = vpack.c.b16 %v4475, %v4467
    %v5540 = vpack.c.b16 %v4476, %v4468
    %v5541 = vpack.c.b16 %v4477, %v4469
    %v5542 = vpack.c.b16 %v4486, %v4478
    %v5543 = vpack.c.b16 %v4487, %v4479
    %v5544 = vpack.c.b16 %v4488, %v4480
    %v5545 = vpack.c.b16 %v4489, %v4481
    %v5546 = vpack.c.b16 %v4490, %v4482
    %v5547 = vpack.c.b16 %v4491, %v4483
    %v5548 = vpack.c.b16 %v4492, %v4484
    %v5549 = vpack.c.b16 %v4493, %v4485
    %v5550 = vpack.c.b16 %v4502, %v4494
    %v5551 = vpack.c.b16 %v4503, %v4495
    %v5552 = vpack.c.b16 %v4504, %v4496
    %v5553 = vpack.c.b16 %v4505, %v4497
    %v5554 = vpack.c.b16 %v4506, %v4498
    %v5555 = vpack.c.b16 %v4507, %v4499
    %v5556 = vpack.c.b16 %v4508, %v4500
    %v5557 = vpack.c.b16 %v4509, %v4501
    %v5558 = vpack.c.b16 %v4518, %v4510
    %v5559 = vpack.c.b16 %v4519, %v4511
    %v5560 = vpack.c.b16 %v4520, %v4512
    %v5561 = vpack.c.b16 %v4521, %v4513
    %v5562 = vpack.c.b16 %v4522, %v4514
    %v5563 = vpack.c.b16 %v4523, %v4515
    %v5564 = vpack.c.b16 %v4524, %v4516
    %v5565 = vpack.c.b16 %v4525, %v4517
    %v5566 = vpack.c.b16 %v4534, %v4526
    %v5567 = vpack.c.b16 %v4535, %v4527
    %v5568 = vpack.c.b16 %v4536, %v4528
    %v5569 = vpack.c.b16 %v4537, %v4529
    %v5570 = vpack.c.b16 %v4538, %v4530
    %v5571 = vpack.c.b16 %v4539, %v4531
    %v5572 = vpack.c.b16 %v4540, %v4532
    %v5573 = vpack.c.b16 %v4541, %v4533
    %v5574 = vpack.c.b16 %v4550, %v4542
    %v5575 = vpack.c.b16 %v4551, %v4543
    %v5576 = vpack.c.b16 %v4552, %v4544
    %v5577 = vpack.c.b16 %v4553, %v4545
    %v5578 = vpack.c.b16 %v4554, %v4546
    %v5579 = vpack.c.b16 %v4555, %v4547
    %v5580 = vpack.c.b16 %v4556, %v4548
    %v5581 = vpack.c.b16 %v4557, %v4549
    %6606 = vmatprep.subr.bf16.mxu0 %v4615
    %6607 = vmatpush1.bf16.msra.mxu0 %v4614
    %6608 = vmatprep.subr.bf16.mxu0 %v4607
    %6609 = vmatpush1.bf16.msra.mxu0 %v4606
    %6610 = vmatprep.subr.bf16.mxu0 %v4599
    %6611 = vmatpush1.bf16.msra.mxu0 %v4598
    %6612 = vmatprep.subr.bf16.mxu0 %v4591
    %6613 = vmatpush1.bf16.msra.mxu0 %v4590
    %6614 = vmatprep.subr.bf16.mxu0 %v4583
    %6615 = vmatpush1.bf16.msra.mxu0 %v4582
    %6616 = vmatprep.subr.bf16.mxu0 %v4575
    %6617 = vmatpush1.bf16.msra.mxu0 %v4574
    %6618 = vmatprep.subr.bf16.mxu0 %v4567
    %6619 = vmatpush1.bf16.msra.mxu0 %v4566
    %6620 = vmatprep.subr.bf16.mxu0 %v4559
    %6621 = vmatpush1.bf16.msra.mxu0 %v4558
    %6622 = vmatprep.subr.bf16.mxu0 %v4679
    %6623 = vmatpush2.bf16.msra.mxu0 %v4678
    %6624 = vmatprep.subr.bf16.mxu0 %v4671
    %6625 = vmatpush2.bf16.msra.mxu0 %v4670
    %6626 = vmatprep.subr.bf16.mxu0 %v4663
    %6627 = vmatpush2.bf16.msra.mxu0 %v4662
    %6628 = vmatprep.subr.bf16.mxu0 %v4655
    %6629 = vmatpush2.bf16.msra.mxu0 %v4654
    %6630 = vmatprep.subr.bf16.mxu0 %v4647
    %6631 = vmatpush2.bf16.msra.mxu0 %v4646
    %6632 = vmatprep.subr.bf16.mxu0 %v4639
    %6633 = vmatpush2.bf16.msra.mxu0 %v4638
    %6634 = vmatprep.subr.bf16.mxu0 %v4631
    %6635 = vmatpush2.bf16.msra.mxu0 %v4630
    %6636 = vmatprep.subr.bf16.mxu0 %v4623
    %6637 = vmatpush2.bf16.msra.mxu0 %v4622
    %6638 = vmatprep.mubr.bf16.mxu0 %v405
    %6639 = vmatmul.mubr.bf16.gmra.mxu0 %v404
    %v6640 = vpop.f32.mrf.mxu0
    %v6641 = vadd.f32 %v1449, %v6640
    %v6642 = vpop.f32.mrf.mxu0
    %v6643 = vadd.f32 %v1453, %v6642
    %v6644 = vpop.f32.mrf.mxu0
    %v6645 = vpop.f32.mrf.mxu0
    %6646 = vdwg.mxu0
    %6647 = vmatprep.subr.bf16.mxu0 %v4743
    %6648 = vmatpush1.bf16.msra.mxu0 %v4742
    %6649 = vmatprep.subr.bf16.mxu0 %v4735
    %6650 = vmatpush1.bf16.msra.mxu0 %v4734
    %6651 = vmatprep.subr.bf16.mxu0 %v4727
    %6652 = vmatpush1.bf16.msra.mxu0 %v4726
    %6653 = vmatprep.subr.bf16.mxu0 %v4719
    %6654 = vmatpush1.bf16.msra.mxu0 %v4718
    %6655 = vmatprep.subr.bf16.mxu0 %v4711
    %6656 = vmatpush1.bf16.msra.mxu0 %v4710
    %6657 = vmatprep.subr.bf16.mxu0 %v4703
    %6658 = vmatpush1.bf16.msra.mxu0 %v4702
    %6659 = vmatprep.subr.bf16.mxu0 %v4695
    %6660 = vmatpush1.bf16.msra.mxu0 %v4694
    %6661 = vmatprep.subr.bf16.mxu0 %v4687
    %6662 = vmatpush1.bf16.msra.mxu0 %v4686
    %6663 = vmatprep.subr.bf16.mxu0 %v4807
    %6664 = vmatpush2.bf16.msra.mxu0 %v4806
    %6665 = vmatprep.subr.bf16.mxu0 %v4799
    %6666 = vmatpush2.bf16.msra.mxu0 %v4798
    %6667 = vmatprep.subr.bf16.mxu0 %v4791
    %6668 = vmatpush2.bf16.msra.mxu0 %v4790
    %6669 = vmatprep.subr.bf16.mxu0 %v4783
    %6670 = vmatpush2.bf16.msra.mxu0 %v4782
    %6671 = vmatprep.subr.bf16.mxu0 %v4775
    %6672 = vmatpush2.bf16.msra.mxu0 %v4774
    %6673 = vmatprep.subr.bf16.mxu0 %v4767
    %6674 = vmatpush2.bf16.msra.mxu0 %v4766
    %6675 = vmatprep.subr.bf16.mxu0 %v4759
    %6676 = vmatpush2.bf16.msra.mxu0 %v4758
    %6677 = vmatprep.subr.bf16.mxu0 %v4751
    %6678 = vmatpush2.bf16.msra.mxu0 %v4750
    %6679 = vmatprep.mubr.bf16.mxu0 %v407
    %6680 = vmatmul.mubr.bf16.gmra.mxu0 %v406
    %v6681 = vpop.f32.mrf.mxu0
    %v6682 = vadd.f32 %v6641, %v6681
    %v6683 = vpop.f32.mrf.mxu0
    %v6684 = vadd.f32 %v6643, %v6683
    %v6685 = vpop.f32.mrf.mxu0
    %v6686 = vpop.f32.mrf.mxu0
    %6687 = vdwg.mxu0
    %6688 = vmatprep.subr.bf16.mxu0 %v4871
    %6689 = vmatpush1.bf16.msra.mxu0 %v4870
    %6690 = vmatprep.subr.bf16.mxu0 %v4863
    %6691 = vmatpush1.bf16.msra.mxu0 %v4862
    %6692 = vmatprep.subr.bf16.mxu0 %v4855
    %6693 = vmatpush1.bf16.msra.mxu0 %v4854
    %6694 = vmatprep.subr.bf16.mxu0 %v4847
    %6695 = vmatpush1.bf16.msra.mxu0 %v4846
    %6696 = vmatprep.subr.bf16.mxu0 %v4839
    %6697 = vmatpush1.bf16.msra.mxu0 %v4838
    %6698 = vmatprep.subr.bf16.mxu0 %v4831
    %6699 = vmatpush1.bf16.msra.mxu0 %v4830
    %6700 = vmatprep.subr.bf16.mxu0 %v4823
    %6701 = vmatpush1.bf16.msra.mxu0 %v4822
    %6702 = vmatprep.subr.bf16.mxu0 %v4815
    %6703 = vmatpush1.bf16.msra.mxu0 %v4814
    %6704 = vmatprep.subr.bf16.mxu0 %v4935
    %6705 = vmatpush2.bf16.msra.mxu0 %v4934
    %6706 = vmatprep.subr.bf16.mxu0 %v4927
    %6707 = vmatpush2.bf16.msra.mxu0 %v4926
    %6708 = vmatprep.subr.bf16.mxu0 %v4919
    %6709 = vmatpush2.bf16.msra.mxu0 %v4918
    %6710 = vmatprep.subr.bf16.mxu0 %v4911
    %6711 = vmatpush2.bf16.msra.mxu0 %v4910
    %6712 = vmatprep.subr.bf16.mxu0 %v4903
    %6713 = vmatpush2.bf16.msra.mxu0 %v4902
    %6714 = vmatprep.subr.bf16.mxu0 %v4895
    %6715 = vmatpush2.bf16.msra.mxu0 %v4894
    %6716 = vmatprep.subr.bf16.mxu0 %v4887
    %6717 = vmatpush2.bf16.msra.mxu0 %v4886
    %6718 = vmatprep.subr.bf16.mxu0 %v4879
    %6719 = vmatpush2.bf16.msra.mxu0 %v4878
    %6720 = vmatprep.mubr.bf16.mxu0 %v409
    %6721 = vmatmul.mubr.bf16.gmra.mxu0 %v408
    %v6722 = vpop.f32.mrf.mxu0
    %v6723 = vadd.f32 %v6682, %v6722
    %v6724 = vpop.f32.mrf.mxu0
    %v6725 = vadd.f32 %v6684, %v6724
    %v6726 = vpop.f32.mrf.mxu0
    %v6727 = vpop.f32.mrf.mxu0
    %6728 = vdwg.mxu0
    %6729 = vmatprep.subr.bf16.mxu0 %v4999
    %6730 = vmatpush1.bf16.msra.mxu0 %v4998
    %6731 = vmatprep.subr.bf16.mxu0 %v4991
    %6732 = vmatpush1.bf16.msra.mxu0 %v4990
    %6733 = vmatprep.subr.bf16.mxu0 %v4983
    %6734 = vmatpush1.bf16.msra.mxu0 %v4982
    %6735 = vmatprep.subr.bf16.mxu0 %v4975
    %6736 = vmatpush1.bf16.msra.mxu0 %v4974
    %6737 = vmatprep.subr.bf16.mxu0 %v4967
    %6738 = vmatpush1.bf16.msra.mxu0 %v4966
    %6739 = vmatprep.subr.bf16.mxu0 %v4959
    %6740 = vmatpush1.bf16.msra.mxu0 %v4958
    %6741 = vmatprep.subr.bf16.mxu0 %v4951
    %6742 = vmatpush1.bf16.msra.mxu0 %v4950
    %6743 = vmatprep.subr.bf16.mxu0 %v4943
    %6744 = vmatpush1.bf16.msra.mxu0 %v4942
    %6745 = vmatprep.subr.bf16.mxu0 %v5063
    %6746 = vmatpush2.bf16.msra.mxu0 %v5062
    %6747 = vmatprep.subr.bf16.mxu0 %v5055
    %6748 = vmatpush2.bf16.msra.mxu0 %v5054
    %6749 = vmatprep.subr.bf16.mxu0 %v5047
    %6750 = vmatpush2.bf16.msra.mxu0 %v5046
    %6751 = vmatprep.subr.bf16.mxu0 %v5039
    %6752 = vmatpush2.bf16.msra.mxu0 %v5038
    %6753 = vmatprep.subr.bf16.mxu0 %v5031
    %6754 = vmatpush2.bf16.msra.mxu0 %v5030
    %6755 = vmatprep.subr.bf16.mxu0 %v5023
    %6756 = vmatpush2.bf16.msra.mxu0 %v5022
    %6757 = vmatprep.subr.bf16.mxu0 %v5015
    %6758 = vmatpush2.bf16.msra.mxu0 %v5014
    %6759 = vmatprep.subr.bf16.mxu0 %v5007
    %6760 = vmatpush2.bf16.msra.mxu0 %v5006
    %6761 = vmatprep.mubr.bf16.mxu0 %v411
    %6762 = vmatmul.mubr.bf16.gmra.mxu0 %v410
    %v6763 = vpop.f32.mrf.mxu0
    %v6764 = vadd.f32 %v6723, %v6763
    %v6765 = vpop.f32.mrf.mxu0
    %v6766 = vadd.f32 %v6725, %v6765
    %v6767 = vpop.f32.mrf.mxu0
    %v6768 = vpop.f32.mrf.mxu0
    %6769 = vdwg.mxu0
    %6770 = vmatprep.subr.bf16.mxu0 %v5127
    %6771 = vmatpush1.bf16.msra.mxu0 %v5126
    %6772 = vmatprep.subr.bf16.mxu0 %v5119
    %6773 = vmatpush1.bf16.msra.mxu0 %v5118
    %6774 = vmatprep.subr.bf16.mxu0 %v5111
    %6775 = vmatpush1.bf16.msra.mxu0 %v5110
    %6776 = vmatprep.subr.bf16.mxu0 %v5103
    %6777 = vmatpush1.bf16.msra.mxu0 %v5102
    %6778 = vmatprep.subr.bf16.mxu0 %v5095
    %6779 = vmatpush1.bf16.msra.mxu0 %v5094
    %6780 = vmatprep.subr.bf16.mxu0 %v5087
    %6781 = vmatpush1.bf16.msra.mxu0 %v5086
    %6782 = vmatprep.subr.bf16.mxu0 %v5079
    %6783 = vmatpush1.bf16.msra.mxu0 %v5078
    %6784 = vmatprep.subr.bf16.mxu0 %v5071
    %6785 = vmatpush1.bf16.msra.mxu0 %v5070
    %6786 = vmatprep.subr.bf16.mxu0 %v5191
    %6787 = vmatpush2.bf16.msra.mxu0 %v5190
    %6788 = vmatprep.subr.bf16.mxu0 %v5183
    %6789 = vmatpush2.bf16.msra.mxu0 %v5182
    %6790 = vmatprep.subr.bf16.mxu0 %v5175
    %6791 = vmatpush2.bf16.msra.mxu0 %v5174
    %6792 = vmatprep.subr.bf16.mxu0 %v5167
    %6793 = vmatpush2.bf16.msra.mxu0 %v5166
    %6794 = vmatprep.subr.bf16.mxu0 %v5159
    %6795 = vmatpush2.bf16.msra.mxu0 %v5158
    %6796 = vmatprep.subr.bf16.mxu0 %v5151
    %6797 = vmatpush2.bf16.msra.mxu0 %v5150
    %6798 = vmatprep.subr.bf16.mxu0 %v5143
    %6799 = vmatpush2.bf16.msra.mxu0 %v5142
    %6800 = vmatprep.subr.bf16.mxu0 %v5135
    %6801 = vmatpush2.bf16.msra.mxu0 %v5134
    %6802 = vmatprep.mubr.bf16.mxu0 %v413
    %6803 = vmatmul.mubr.bf16.gmra.mxu0 %v412
    %v6804 = vpop.f32.mrf.mxu0
    %v6805 = vadd.f32 %v6764, %v6804
    %v6806 = vpop.f32.mrf.mxu0
    %v6807 = vadd.f32 %v6766, %v6806
    %v6808 = vpop.f32.mrf.mxu0
    %v6809 = vpop.f32.mrf.mxu0
    %6810 = vdwg.mxu0
    %6811 = vmatprep.subr.bf16.mxu0 %v5255
    %6812 = vmatpush1.bf16.msra.mxu0 %v5254
    %6813 = vmatprep.subr.bf16.mxu0 %v5247
    %6814 = vmatpush1.bf16.msra.mxu0 %v5246
    %6815 = vmatprep.subr.bf16.mxu0 %v5239
    %6816 = vmatpush1.bf16.msra.mxu0 %v5238
    %6817 = vmatprep.subr.bf16.mxu0 %v5231
    %6818 = vmatpush1.bf16.msra.mxu0 %v5230
    %6819 = vmatprep.subr.bf16.mxu0 %v5223
    %6820 = vmatpush1.bf16.msra.mxu0 %v5222
    %6821 = vmatprep.subr.bf16.mxu0 %v5215
    %6822 = vmatpush1.bf16.msra.mxu0 %v5214
    %6823 = vmatprep.subr.bf16.mxu0 %v5207
    %6824 = vmatpush1.bf16.msra.mxu0 %v5206
    %6825 = vmatprep.subr.bf16.mxu0 %v5199
    %6826 = vmatpush1.bf16.msra.mxu0 %v5198
    %6827 = vmatprep.subr.bf16.mxu0 %v5319
    %6828 = vmatpush2.bf16.msra.mxu0 %v5318
    %6829 = vmatprep.subr.bf16.mxu0 %v5311
    %6830 = vmatpush2.bf16.msra.mxu0 %v5310
    %6831 = vmatprep.subr.bf16.mxu0 %v5303
    %6832 = vmatpush2.bf16.msra.mxu0 %v5302
    %6833 = vmatprep.subr.bf16.mxu0 %v5295
    %6834 = vmatpush2.bf16.msra.mxu0 %v5294
    %6835 = vmatprep.subr.bf16.mxu0 %v5287
    %6836 = vmatpush2.bf16.msra.mxu0 %v5286
    %6837 = vmatprep.subr.bf16.mxu0 %v5279
    %6838 = vmatpush2.bf16.msra.mxu0 %v5278
    %6839 = vmatprep.subr.bf16.mxu0 %v5271
    %6840 = vmatpush2.bf16.msra.mxu0 %v5270
    %6841 = vmatprep.subr.bf16.mxu0 %v5263
    %6842 = vmatpush2.bf16.msra.mxu0 %v5262
    %6843 = vmatprep.mubr.bf16.mxu0 %v415
    %6844 = vmatmul.mubr.bf16.gmra.mxu0 %v414
    %v6845 = vpop.f32.mrf.mxu0
    %v6846 = vadd.f32 %v6805, %v6845
    %v6847 = vpop.f32.mrf.mxu0
    %v6848 = vadd.f32 %v6807, %v6847
    %v6849 = vpop.f32.mrf.mxu0
    %v6850 = vpop.f32.mrf.mxu0
    %6851 = vdwg.mxu0
    %6852 = vmatprep.subr.bf16.mxu0 %v5383
    %6853 = vmatpush1.bf16.msra.mxu0 %v5382
    %6854 = vmatprep.subr.bf16.mxu0 %v5375
    %6855 = vmatpush1.bf16.msra.mxu0 %v5374
    %6856 = vmatprep.subr.bf16.mxu0 %v5367
    %6857 = vmatpush1.bf16.msra.mxu0 %v5366
    %6858 = vmatprep.subr.bf16.mxu0 %v5359
    %6859 = vmatpush1.bf16.msra.mxu0 %v5358
    %6860 = vmatprep.subr.bf16.mxu0 %v5351
    %6861 = vmatpush1.bf16.msra.mxu0 %v5350
    %6862 = vmatprep.subr.bf16.mxu0 %v5343
    %6863 = vmatpush1.bf16.msra.mxu0 %v5342
    %6864 = vmatprep.subr.bf16.mxu0 %v5335
    %6865 = vmatpush1.bf16.msra.mxu0 %v5334
    %6866 = vmatprep.subr.bf16.mxu0 %v5327
    %6867 = vmatpush1.bf16.msra.mxu0 %v5326
    %6868 = vmatprep.subr.bf16.mxu0 %v5447
    %6869 = vmatpush2.bf16.msra.mxu0 %v5446
    %6870 = vmatprep.subr.bf16.mxu0 %v5439
    %6871 = vmatpush2.bf16.msra.mxu0 %v5438
    %6872 = vmatprep.subr.bf16.mxu0 %v5431
    %6873 = vmatpush2.bf16.msra.mxu0 %v5430
    %6874 = vmatprep.subr.bf16.mxu0 %v5423
    %6875 = vmatpush2.bf16.msra.mxu0 %v5422
    %6876 = vmatprep.subr.bf16.mxu0 %v5415
    %6877 = vmatpush2.bf16.msra.mxu0 %v5414
    %6878 = vmatprep.subr.bf16.mxu0 %v5407
    %6879 = vmatpush2.bf16.msra.mxu0 %v5406
    %6880 = vmatprep.subr.bf16.mxu0 %v5399
    %6881 = vmatpush2.bf16.msra.mxu0 %v5398
    %6882 = vmatprep.subr.bf16.mxu0 %v5391
    %6883 = vmatpush2.bf16.msra.mxu0 %v5390
    %6884 = vmatprep.mubr.bf16.mxu0 %v417
    %6885 = vmatmul.mubr.bf16.gmra.mxu0 %v416
    %v6886 = vpop.f32.mrf.mxu0
    %v6887 = vadd.f32 %v6846, %v6886
    %v6888 = vpop.f32.mrf.mxu0
    %v6889 = vadd.f32 %v6848, %v6888
    %v6890 = vpop.f32.mrf.mxu0
    %v6891 = vpop.f32.mrf.mxu0
    %6892 = vdwg.mxu0
    %6893 = vmatprep.subr.bf16.mxu0 %v5511
    %6894 = vmatpush1.bf16.msra.mxu0 %v5510
    %6895 = vmatprep.subr.bf16.mxu0 %v5503
    %6896 = vmatpush1.bf16.msra.mxu0 %v5502
    %6897 = vmatprep.subr.bf16.mxu0 %v5495
    %6898 = vmatpush1.bf16.msra.mxu0 %v5494
    %6899 = vmatprep.subr.bf16.mxu0 %v5487
    %6900 = vmatpush1.bf16.msra.mxu0 %v5486
    %6901 = vmatprep.subr.bf16.mxu0 %v5479
    %6902 = vmatpush1.bf16.msra.mxu0 %v5478
    %6903 = vmatprep.subr.bf16.mxu0 %v5471
    %6904 = vmatpush1.bf16.msra.mxu0 %v5470
    %6905 = vmatprep.subr.bf16.mxu0 %v5463
    %6906 = vmatpush1.bf16.msra.mxu0 %v5462
    %6907 = vmatprep.subr.bf16.mxu0 %v5455
    %6908 = vmatpush1.bf16.msra.mxu0 %v5454
    %6909 = vmatprep.subr.bf16.mxu0 %v5575
    %6910 = vmatpush2.bf16.msra.mxu0 %v5574
    %6911 = vmatprep.subr.bf16.mxu0 %v5567
    %6912 = vmatpush2.bf16.msra.mxu0 %v5566
    %6913 = vmatprep.subr.bf16.mxu0 %v5559
    %6914 = vmatpush2.bf16.msra.mxu0 %v5558
    %6915 = vmatprep.subr.bf16.mxu0 %v5551
    %6916 = vmatpush2.bf16.msra.mxu0 %v5550
    %6917 = vmatprep.subr.bf16.mxu0 %v5543
    %6918 = vmatpush2.bf16.msra.mxu0 %v5542
    %6919 = vmatprep.subr.bf16.mxu0 %v5535
    %6920 = vmatpush2.bf16.msra.mxu0 %v5534
    %6921 = vmatprep.subr.bf16.mxu0 %v5527
    %6922 = vmatpush2.bf16.msra.mxu0 %v5526
    %6923 = vmatprep.subr.bf16.mxu0 %v5519
    %6924 = vmatpush2.bf16.msra.mxu0 %v5518
    %6925 = vmatprep.mubr.bf16.mxu0 %v419
    %6926 = vmatmul.mubr.bf16.gmra.mxu0 %v418
    %v6927 = vpop.f32.mrf.mxu0
    %v6928 = vadd.f32 %v6887, %v6927
    %v6929 = vpop.f32.mrf.mxu0
    %v6930 = vadd.f32 %v6889, %v6929
    %v6931 = vpop.f32.mrf.mxu0
    %v6932 = vpop.f32.mrf.mxu0
    %6933 = vdwg.mxu0
    %6934 = vmatprep.subr.bf16.mxu0 %v4617
    %6935 = vmatpush1.bf16.msra.mxu0 %v4616
    %6936 = vmatprep.subr.bf16.mxu0 %v4609
    %6937 = vmatpush1.bf16.msra.mxu0 %v4608
    %6938 = vmatprep.subr.bf16.mxu0 %v4601
    %6939 = vmatpush1.bf16.msra.mxu0 %v4600
    %6940 = vmatprep.subr.bf16.mxu0 %v4593
    %6941 = vmatpush1.bf16.msra.mxu0 %v4592
    %6942 = vmatprep.subr.bf16.mxu0 %v4585
    %6943 = vmatpush1.bf16.msra.mxu0 %v4584
    %6944 = vmatprep.subr.bf16.mxu0 %v4577
    %6945 = vmatpush1.bf16.msra.mxu0 %v4576
    %6946 = vmatprep.subr.bf16.mxu0 %v4569
    %6947 = vmatpush1.bf16.msra.mxu0 %v4568
    %6948 = vmatprep.subr.bf16.mxu0 %v4561
    %6949 = vmatpush1.bf16.msra.mxu0 %v4560
    %6950 = vmatprep.subr.bf16.mxu0 %v4681
    %6951 = vmatpush2.bf16.msra.mxu0 %v4680
    %6952 = vmatprep.subr.bf16.mxu0 %v4673
    %6953 = vmatpush2.bf16.msra.mxu0 %v4672
    %6954 = vmatprep.subr.bf16.mxu0 %v4665
    %6955 = vmatpush2.bf16.msra.mxu0 %v4664
    %6956 = vmatprep.subr.bf16.mxu0 %v4657
    %6957 = vmatpush2.bf16.msra.mxu0 %v4656
    %6958 = vmatprep.subr.bf16.mxu0 %v4649
    %6959 = vmatpush2.bf16.msra.mxu0 %v4648
    %6960 = vmatprep.subr.bf16.mxu0 %v4641
    %6961 = vmatpush2.bf16.msra.mxu0 %v4640
    %6962 = vmatprep.subr.bf16.mxu0 %v4633
    %6963 = vmatpush2.bf16.msra.mxu0 %v4632
    %6964 = vmatprep.subr.bf16.mxu0 %v4625
    %6965 = vmatpush2.bf16.msra.mxu0 %v4624
    %6966 = vmatprep.mubr.bf16.mxu0 %v405
    %6967 = vmatmul.mubr.bf16.gmra.mxu0 %v404
    %v6968 = vpop.f32.mrf.mxu0
    %v6969 = vadd.f32 %v1457, %v6968
    %v6970 = vpop.f32.mrf.mxu0
    %v6971 = vadd.f32 %v1461, %v6970
    %v6972 = vpop.f32.mrf.mxu0
    %v6973 = vpop.f32.mrf.mxu0
    %6974 = vdwg.mxu0
    %6975 = vmatprep.subr.bf16.mxu0 %v4745
    %6976 = vmatpush1.bf16.msra.mxu0 %v4744
    %6977 = vmatprep.subr.bf16.mxu0 %v4737
    %6978 = vmatpush1.bf16.msra.mxu0 %v4736
    %6979 = vmatprep.subr.bf16.mxu0 %v4729
    %6980 = vmatpush1.bf16.msra.mxu0 %v4728
    %6981 = vmatprep.subr.bf16.mxu0 %v4721
    %6982 = vmatpush1.bf16.msra.mxu0 %v4720
    %6983 = vmatprep.subr.bf16.mxu0 %v4713
    %6984 = vmatpush1.bf16.msra.mxu0 %v4712
    %6985 = vmatprep.subr.bf16.mxu0 %v4705
    %6986 = vmatpush1.bf16.msra.mxu0 %v4704
    %6987 = vmatprep.subr.bf16.mxu0 %v4697
    %6988 = vmatpush1.bf16.msra.mxu0 %v4696
    %6989 = vmatprep.subr.bf16.mxu0 %v4689
    %6990 = vmatpush1.bf16.msra.mxu0 %v4688
    %6991 = vmatprep.subr.bf16.mxu0 %v4809
    %6992 = vmatpush2.bf16.msra.mxu0 %v4808
    %6993 = vmatprep.subr.bf16.mxu0 %v4801
    %6994 = vmatpush2.bf16.msra.mxu0 %v4800
    %6995 = vmatprep.subr.bf16.mxu0 %v4793
    %6996 = vmatpush2.bf16.msra.mxu0 %v4792
    %6997 = vmatprep.subr.bf16.mxu0 %v4785
    %6998 = vmatpush2.bf16.msra.mxu0 %v4784
    %6999 = vmatprep.subr.bf16.mxu0 %v4777
    %7000 = vmatpush2.bf16.msra.mxu0 %v4776
    %7001 = vmatprep.subr.bf16.mxu0 %v4769
    %7002 = vmatpush2.bf16.msra.mxu0 %v4768
    %7003 = vmatprep.subr.bf16.mxu0 %v4761
    %7004 = vmatpush2.bf16.msra.mxu0 %v4760
    %7005 = vmatprep.subr.bf16.mxu0 %v4753
    %7006 = vmatpush2.bf16.msra.mxu0 %v4752
    %7007 = vmatprep.mubr.bf16.mxu0 %v407
    %7008 = vmatmul.mubr.bf16.gmra.mxu0 %v406
    %v7009 = vpop.f32.mrf.mxu0
    %v7010 = vadd.f32 %v6969, %v7009
    %v7011 = vpop.f32.mrf.mxu0
    %v7012 = vadd.f32 %v6971, %v7011
    %v7013 = vpop.f32.mrf.mxu0
    %v7014 = vpop.f32.mrf.mxu0
    %7015 = vdwg.mxu0
    %7016 = vmatprep.subr.bf16.mxu0 %v4873
    %7017 = vmatpush1.bf16.msra.mxu0 %v4872
    %7018 = vmatprep.subr.bf16.mxu0 %v4865
    %7019 = vmatpush1.bf16.msra.mxu0 %v4864
    %7020 = vmatprep.subr.bf16.mxu0 %v4857
    %7021 = vmatpush1.bf16.msra.mxu0 %v4856
    %7022 = vmatprep.subr.bf16.mxu0 %v4849
    %7023 = vmatpush1.bf16.msra.mxu0 %v4848
    %7024 = vmatprep.subr.bf16.mxu0 %v4841
    %7025 = vmatpush1.bf16.msra.mxu0 %v4840
    %7026 = vmatprep.subr.bf16.mxu0 %v4833
    %7027 = vmatpush1.bf16.msra.mxu0 %v4832
    %7028 = vmatprep.subr.bf16.mxu0 %v4825
    %7029 = vmatpush1.bf16.msra.mxu0 %v4824
    %7030 = vmatprep.subr.bf16.mxu0 %v4817
    %7031 = vmatpush1.bf16.msra.mxu0 %v4816
    %7032 = vmatprep.subr.bf16.mxu0 %v4937
    %7033 = vmatpush2.bf16.msra.mxu0 %v4936
    %7034 = vmatprep.subr.bf16.mxu0 %v4929
    %7035 = vmatpush2.bf16.msra.mxu0 %v4928
    %7036 = vmatprep.subr.bf16.mxu0 %v4921
    %7037 = vmatpush2.bf16.msra.mxu0 %v4920
    %7038 = vmatprep.subr.bf16.mxu0 %v4913
    %7039 = vmatpush2.bf16.msra.mxu0 %v4912
    %7040 = vmatprep.subr.bf16.mxu0 %v4905
    %7041 = vmatpush2.bf16.msra.mxu0 %v4904
    %7042 = vmatprep.subr.bf16.mxu0 %v4897
    %7043 = vmatpush2.bf16.msra.mxu0 %v4896
    %7044 = vmatprep.subr.bf16.mxu0 %v4889
    %7045 = vmatpush2.bf16.msra.mxu0 %v4888
    %7046 = vmatprep.subr.bf16.mxu0 %v4881
    %7047 = vmatpush2.bf16.msra.mxu0 %v4880
    %7048 = vmatprep.mubr.bf16.mxu0 %v409
    %7049 = vmatmul.mubr.bf16.gmra.mxu0 %v408
    %v7050 = vpop.f32.mrf.mxu0
    %v7051 = vadd.f32 %v7010, %v7050
    %v7052 = vpop.f32.mrf.mxu0
    %v7053 = vadd.f32 %v7012, %v7052
    %v7054 = vpop.f32.mrf.mxu0
    %v7055 = vpop.f32.mrf.mxu0
    %7056 = vdwg.mxu0
    %7057 = vmatprep.subr.bf16.mxu0 %v5001
    %7058 = vmatpush1.bf16.msra.mxu0 %v5000
    %7059 = vmatprep.subr.bf16.mxu0 %v4993
    %7060 = vmatpush1.bf16.msra.mxu0 %v4992
    %7061 = vmatprep.subr.bf16.mxu0 %v4985
    %7062 = vmatpush1.bf16.msra.mxu0 %v4984
    %7063 = vmatprep.subr.bf16.mxu0 %v4977
    %7064 = vmatpush1.bf16.msra.mxu0 %v4976
    %7065 = vmatprep.subr.bf16.mxu0 %v4969
    %7066 = vmatpush1.bf16.msra.mxu0 %v4968
    %7067 = vmatprep.subr.bf16.mxu0 %v4961
    %7068 = vmatpush1.bf16.msra.mxu0 %v4960
    %7069 = vmatprep.subr.bf16.mxu0 %v4953
    %7070 = vmatpush1.bf16.msra.mxu0 %v4952
    %7071 = vmatprep.subr.bf16.mxu0 %v4945
    %7072 = vmatpush1.bf16.msra.mxu0 %v4944
    %7073 = vmatprep.subr.bf16.mxu0 %v5065
    %7074 = vmatpush2.bf16.msra.mxu0 %v5064
    %7075 = vmatprep.subr.bf16.mxu0 %v5057
    %7076 = vmatpush2.bf16.msra.mxu0 %v5056
    %7077 = vmatprep.subr.bf16.mxu0 %v5049
    %7078 = vmatpush2.bf16.msra.mxu0 %v5048
    %7079 = vmatprep.subr.bf16.mxu0 %v5041
    %7080 = vmatpush2.bf16.msra.mxu0 %v5040
    %7081 = vmatprep.subr.bf16.mxu0 %v5033
    %7082 = vmatpush2.bf16.msra.mxu0 %v5032
    %7083 = vmatprep.subr.bf16.mxu0 %v5025
    %7084 = vmatpush2.bf16.msra.mxu0 %v5024
    %7085 = vmatprep.subr.bf16.mxu0 %v5017
    %7086 = vmatpush2.bf16.msra.mxu0 %v5016
    %7087 = vmatprep.subr.bf16.mxu0 %v5009
    %7088 = vmatpush2.bf16.msra.mxu0 %v5008
    %7089 = vmatprep.mubr.bf16.mxu0 %v411
    %7090 = vmatmul.mubr.bf16.gmra.mxu0 %v410
    %v7091 = vpop.f32.mrf.mxu0
    %v7092 = vadd.f32 %v7051, %v7091
    %v7093 = vpop.f32.mrf.mxu0
    %v7094 = vadd.f32 %v7053, %v7093
    %v7095 = vpop.f32.mrf.mxu0
    %v7096 = vpop.f32.mrf.mxu0
    %7097 = vdwg.mxu0
    %7098 = vmatprep.subr.bf16.mxu0 %v5129
    %7099 = vmatpush1.bf16.msra.mxu0 %v5128
    %7100 = vmatprep.subr.bf16.mxu0 %v5121
    %7101 = vmatpush1.bf16.msra.mxu0 %v5120
    %7102 = vmatprep.subr.bf16.mxu0 %v5113
    %7103 = vmatpush1.bf16.msra.mxu0 %v5112
    %7104 = vmatprep.subr.bf16.mxu0 %v5105
    %7105 = vmatpush1.bf16.msra.mxu0 %v5104
    %7106 = vmatprep.subr.bf16.mxu0 %v5097
    %7107 = vmatpush1.bf16.msra.mxu0 %v5096
    %7108 = vmatprep.subr.bf16.mxu0 %v5089
    %7109 = vmatpush1.bf16.msra.mxu0 %v5088
    %7110 = vmatprep.subr.bf16.mxu0 %v5081
    %7111 = vmatpush1.bf16.msra.mxu0 %v5080
    %7112 = vmatprep.subr.bf16.mxu0 %v5073
    %7113 = vmatpush1.bf16.msra.mxu0 %v5072
    %7114 = vmatprep.subr.bf16.mxu0 %v5193
    %7115 = vmatpush2.bf16.msra.mxu0 %v5192
    %7116 = vmatprep.subr.bf16.mxu0 %v5185
    %7117 = vmatpush2.bf16.msra.mxu0 %v5184
    %7118 = vmatprep.subr.bf16.mxu0 %v5177
    %7119 = vmatpush2.bf16.msra.mxu0 %v5176
    %7120 = vmatprep.subr.bf16.mxu0 %v5169
    %7121 = vmatpush2.bf16.msra.mxu0 %v5168
    %7122 = vmatprep.subr.bf16.mxu0 %v5161
    %7123 = vmatpush2.bf16.msra.mxu0 %v5160
    %7124 = vmatprep.subr.bf16.mxu0 %v5153
    %7125 = vmatpush2.bf16.msra.mxu0 %v5152
    %7126 = vmatprep.subr.bf16.mxu0 %v5145
    %7127 = vmatpush2.bf16.msra.mxu0 %v5144
    %7128 = vmatprep.subr.bf16.mxu0 %v5137
    %7129 = vmatpush2.bf16.msra.mxu0 %v5136
    %7130 = vmatprep.mubr.bf16.mxu0 %v413
    %7131 = vmatmul.mubr.bf16.gmra.mxu0 %v412
    %v7132 = vpop.f32.mrf.mxu0
    %v7133 = vadd.f32 %v7092, %v7132
    %v7134 = vpop.f32.mrf.mxu0
    %v7135 = vadd.f32 %v7094, %v7134
    %v7136 = vpop.f32.mrf.mxu0
    %v7137 = vpop.f32.mrf.mxu0
    %7138 = vdwg.mxu0
    %7139 = vmatprep.subr.bf16.mxu0 %v5257
    %7140 = vmatpush1.bf16.msra.mxu0 %v5256
    %7141 = vmatprep.subr.bf16.mxu0 %v5249
    %7142 = vmatpush1.bf16.msra.mxu0 %v5248
    %7143 = vmatprep.subr.bf16.mxu0 %v5241
    %7144 = vmatpush1.bf16.msra.mxu0 %v5240
    %7145 = vmatprep.subr.bf16.mxu0 %v5233
    %7146 = vmatpush1.bf16.msra.mxu0 %v5232
    %7147 = vmatprep.subr.bf16.mxu0 %v5225
    %7148 = vmatpush1.bf16.msra.mxu0 %v5224
    %7149 = vmatprep.subr.bf16.mxu0 %v5217
    %7150 = vmatpush1.bf16.msra.mxu0 %v5216
    %7151 = vmatprep.subr.bf16.mxu0 %v5209
    %7152 = vmatpush1.bf16.msra.mxu0 %v5208
    %7153 = vmatprep.subr.bf16.mxu0 %v5201
    %7154 = vmatpush1.bf16.msra.mxu0 %v5200
    %7155 = vmatprep.subr.bf16.mxu0 %v5321
    %7156 = vmatpush2.bf16.msra.mxu0 %v5320
    %7157 = vmatprep.subr.bf16.mxu0 %v5313
    %7158 = vmatpush2.bf16.msra.mxu0 %v5312
    %7159 = vmatprep.subr.bf16.mxu0 %v5305
    %7160 = vmatpush2.bf16.msra.mxu0 %v5304
    %7161 = vmatprep.subr.bf16.mxu0 %v5297
    %7162 = vmatpush2.bf16.msra.mxu0 %v5296
    %7163 = vmatprep.subr.bf16.mxu0 %v5289
    %7164 = vmatpush2.bf16.msra.mxu0 %v5288
    %7165 = vmatprep.subr.bf16.mxu0 %v5281
    %7166 = vmatpush2.bf16.msra.mxu0 %v5280
    %7167 = vmatprep.subr.bf16.mxu0 %v5273
    %7168 = vmatpush2.bf16.msra.mxu0 %v5272
    %7169 = vmatprep.subr.bf16.mxu0 %v5265
    %7170 = vmatpush2.bf16.msra.mxu0 %v5264
    %7171 = vmatprep.mubr.bf16.mxu0 %v415
    %7172 = vmatmul.mubr.bf16.gmra.mxu0 %v414
    %v7173 = vpop.f32.mrf.mxu0
    %v7174 = vadd.f32 %v7133, %v7173
    %v7175 = vpop.f32.mrf.mxu0
    %v7176 = vadd.f32 %v7135, %v7175
    %v7177 = vpop.f32.mrf.mxu0
    %v7178 = vpop.f32.mrf.mxu0
    %7179 = vdwg.mxu0
    %7180 = vmatprep.subr.bf16.mxu0 %v5385
    %7181 = vmatpush1.bf16.msra.mxu0 %v5384
    %7182 = vmatprep.subr.bf16.mxu0 %v5377
    %7183 = vmatpush1.bf16.msra.mxu0 %v5376
    %7184 = vmatprep.subr.bf16.mxu0 %v5369
    %7185 = vmatpush1.bf16.msra.mxu0 %v5368
    %7186 = vmatprep.subr.bf16.mxu0 %v5361
    %7187 = vmatpush1.bf16.msra.mxu0 %v5360
    %7188 = vmatprep.subr.bf16.mxu0 %v5353
    %7189 = vmatpush1.bf16.msra.mxu0 %v5352
    %7190 = vmatprep.subr.bf16.mxu0 %v5345
    %7191 = vmatpush1.bf16.msra.mxu0 %v5344
    %7192 = vmatprep.subr.bf16.mxu0 %v5337
    %7193 = vmatpush1.bf16.msra.mxu0 %v5336
    %7194 = vmatprep.subr.bf16.mxu0 %v5329
    %7195 = vmatpush1.bf16.msra.mxu0 %v5328
    %7196 = vmatprep.subr.bf16.mxu0 %v5449
    %7197 = vmatpush2.bf16.msra.mxu0 %v5448
    %7198 = vmatprep.subr.bf16.mxu0 %v5441
    %7199 = vmatpush2.bf16.msra.mxu0 %v5440
    %7200 = vmatprep.subr.bf16.mxu0 %v5433
    %7201 = vmatpush2.bf16.msra.mxu0 %v5432
    %7202 = vmatprep.subr.bf16.mxu0 %v5425
    %7203 = vmatpush2.bf16.msra.mxu0 %v5424
    %7204 = vmatprep.subr.bf16.mxu0 %v5417
    %7205 = vmatpush2.bf16.msra.mxu0 %v5416
    %7206 = vmatprep.subr.bf16.mxu0 %v5409
    %7207 = vmatpush2.bf16.msra.mxu0 %v5408
    %7208 = vmatprep.subr.bf16.mxu0 %v5401
    %7209 = vmatpush2.bf16.msra.mxu0 %v5400
    %7210 = vmatprep.subr.bf16.mxu0 %v5393
    %7211 = vmatpush2.bf16.msra.mxu0 %v5392
    %7212 = vmatprep.mubr.bf16.mxu0 %v417
    %7213 = vmatmul.mubr.bf16.gmra.mxu0 %v416
    %v7214 = vpop.f32.mrf.mxu0
    %v7215 = vadd.f32 %v7174, %v7214
    %v7216 = vpop.f32.mrf.mxu0
    %v7217 = vadd.f32 %v7176, %v7216
    %v7218 = vpop.f32.mrf.mxu0
    %v7219 = vpop.f32.mrf.mxu0
    %7220 = vdwg.mxu0
    %7221 = vmatprep.subr.bf16.mxu0 %v5513
    %7222 = vmatpush1.bf16.msra.mxu0 %v5512
    %7223 = vmatprep.subr.bf16.mxu0 %v5505
    %7224 = vmatpush1.bf16.msra.mxu0 %v5504
    %7225 = vmatprep.subr.bf16.mxu0 %v5497
    %7226 = vmatpush1.bf16.msra.mxu0 %v5496
    %7227 = vmatprep.subr.bf16.mxu0 %v5489
    %7228 = vmatpush1.bf16.msra.mxu0 %v5488
    %7229 = vmatprep.subr.bf16.mxu0 %v5481
    %7230 = vmatpush1.bf16.msra.mxu0 %v5480
    %7231 = vmatprep.subr.bf16.mxu0 %v5473
    %7232 = vmatpush1.bf16.msra.mxu0 %v5472
    %7233 = vmatprep.subr.bf16.mxu0 %v5465
    %7234 = vmatpush1.bf16.msra.mxu0 %v5464
    %7235 = vmatprep.subr.bf16.mxu0 %v5457
    %7236 = vmatpush1.bf16.msra.mxu0 %v5456
    %7237 = vmatprep.subr.bf16.mxu0 %v5577
    %7238 = vmatpush2.bf16.msra.mxu0 %v5576
    %7239 = vmatprep.subr.bf16.mxu0 %v5569
    %7240 = vmatpush2.bf16.msra.mxu0 %v5568
    %7241 = vmatprep.subr.bf16.mxu0 %v5561
    %7242 = vmatpush2.bf16.msra.mxu0 %v5560
    %7243 = vmatprep.subr.bf16.mxu0 %v5553
    %7244 = vmatpush2.bf16.msra.mxu0 %v5552
    %7245 = vmatprep.subr.bf16.mxu0 %v5545
    %7246 = vmatpush2.bf16.msra.mxu0 %v5544
    %7247 = vmatprep.subr.bf16.mxu0 %v5537
    %7248 = vmatpush2.bf16.msra.mxu0 %v5536
    %7249 = vmatprep.subr.bf16.mxu0 %v5529
    %7250 = vmatpush2.bf16.msra.mxu0 %v5528
    %7251 = vmatprep.subr.bf16.mxu0 %v5521
    %7252 = vmatpush2.bf16.msra.mxu0 %v5520
    %7253 = vmatprep.mubr.bf16.mxu0 %v419
    %7254 = vmatmul.mubr.bf16.gmra.mxu0 %v418
    %v7255 = vpop.f32.mrf.mxu0
    %v7256 = vadd.f32 %v7215, %v7255
    %v7257 = vpop.f32.mrf.mxu0
    %v7258 = vadd.f32 %v7217, %v7257
    %v7259 = vpop.f32.mrf.mxu0
    %v7260 = vpop.f32.mrf.mxu0
    %7261 = vdwg.mxu0
    %7262 = vmatprep.subr.bf16.mxu0 %v4619
    %7263 = vmatpush1.bf16.msra.mxu0 %v4618
    %7264 = vmatprep.subr.bf16.mxu0 %v4611
    %7265 = vmatpush1.bf16.msra.mxu0 %v4610
    %7266 = vmatprep.subr.bf16.mxu0 %v4603
    %7267 = vmatpush1.bf16.msra.mxu0 %v4602
    %7268 = vmatprep.subr.bf16.mxu0 %v4595
    %7269 = vmatpush1.bf16.msra.mxu0 %v4594
    %7270 = vmatprep.subr.bf16.mxu0 %v4587
    %7271 = vmatpush1.bf16.msra.mxu0 %v4586
    %7272 = vmatprep.subr.bf16.mxu0 %v4579
    %7273 = vmatpush1.bf16.msra.mxu0 %v4578
    %7274 = vmatprep.subr.bf16.mxu0 %v4571
    %7275 = vmatpush1.bf16.msra.mxu0 %v4570
    %7276 = vmatprep.subr.bf16.mxu0 %v4563
    %7277 = vmatpush1.bf16.msra.mxu0 %v4562
    %7278 = vmatprep.subr.bf16.mxu0 %v4683
    %7279 = vmatpush2.bf16.msra.mxu0 %v4682
    %7280 = vmatprep.subr.bf16.mxu0 %v4675
    %7281 = vmatpush2.bf16.msra.mxu0 %v4674
    %7282 = vmatprep.subr.bf16.mxu0 %v4667
    %7283 = vmatpush2.bf16.msra.mxu0 %v4666
    %7284 = vmatprep.subr.bf16.mxu0 %v4659
    %7285 = vmatpush2.bf16.msra.mxu0 %v4658
    %7286 = vmatprep.subr.bf16.mxu0 %v4651
    %7287 = vmatpush2.bf16.msra.mxu0 %v4650
    %7288 = vmatprep.subr.bf16.mxu0 %v4643
    %7289 = vmatpush2.bf16.msra.mxu0 %v4642
    %7290 = vmatprep.subr.bf16.mxu0 %v4635
    %7291 = vmatpush2.bf16.msra.mxu0 %v4634
    %7292 = vmatprep.subr.bf16.mxu0 %v4627
    %7293 = vmatpush2.bf16.msra.mxu0 %v4626
    %7294 = vmatprep.mubr.bf16.mxu0 %v405
    %7295 = vmatmul.mubr.bf16.gmra.mxu0 %v404
    %v7296 = vpop.f32.mrf.mxu0
    %v7297 = vadd.f32 %v1465, %v7296
    %v7298 = vpop.f32.mrf.mxu0
    %v7299 = vadd.f32 %v1469, %v7298
    %v7300 = vpop.f32.mrf.mxu0
    %v7301 = vpop.f32.mrf.mxu0
    %7302 = vdwg.mxu0
    %7303 = vmatprep.subr.bf16.mxu0 %v4747
    %7304 = vmatpush1.bf16.msra.mxu0 %v4746
    %7305 = vmatprep.subr.bf16.mxu0 %v4739
    %7306 = vmatpush1.bf16.msra.mxu0 %v4738
    %7307 = vmatprep.subr.bf16.mxu0 %v4731
    %7308 = vmatpush1.bf16.msra.mxu0 %v4730
    %7309 = vmatprep.subr.bf16.mxu0 %v4723
    %7310 = vmatpush1.bf16.msra.mxu0 %v4722
    %7311 = vmatprep.subr.bf16.mxu0 %v4715
    %7312 = vmatpush1.bf16.msra.mxu0 %v4714
    %7313 = vmatprep.subr.bf16.mxu0 %v4707
    %7314 = vmatpush1.bf16.msra.mxu0 %v4706
    %7315 = vmatprep.subr.bf16.mxu0 %v4699
    %7316 = vmatpush1.bf16.msra.mxu0 %v4698
    %7317 = vmatprep.subr.bf16.mxu0 %v4691
    %7318 = vmatpush1.bf16.msra.mxu0 %v4690
    %7319 = vmatprep.subr.bf16.mxu0 %v4811
    %7320 = vmatpush2.bf16.msra.mxu0 %v4810
    %7321 = vmatprep.subr.bf16.mxu0 %v4803
    %7322 = vmatpush2.bf16.msra.mxu0 %v4802
    %7323 = vmatprep.subr.bf16.mxu0 %v4795
    %7324 = vmatpush2.bf16.msra.mxu0 %v4794
    %7325 = vmatprep.subr.bf16.mxu0 %v4787
    %7326 = vmatpush2.bf16.msra.mxu0 %v4786
    %7327 = vmatprep.subr.bf16.mxu0 %v4779
    %7328 = vmatpush2.bf16.msra.mxu0 %v4778
    %7329 = vmatprep.subr.bf16.mxu0 %v4771
    %7330 = vmatpush2.bf16.msra.mxu0 %v4770
    %7331 = vmatprep.subr.bf16.mxu0 %v4763
    %7332 = vmatpush2.bf16.msra.mxu0 %v4762
    %7333 = vmatprep.subr.bf16.mxu0 %v4755
    %7334 = vmatpush2.bf16.msra.mxu0 %v4754
    %7335 = vmatprep.mubr.bf16.mxu0 %v407
    %7336 = vmatmul.mubr.bf16.gmra.mxu0 %v406
    %v7337 = vpop.f32.mrf.mxu0
    %v7338 = vadd.f32 %v7297, %v7337
    %v7339 = vpop.f32.mrf.mxu0
    %v7340 = vadd.f32 %v7299, %v7339
    %v7341 = vpop.f32.mrf.mxu0
    %v7342 = vpop.f32.mrf.mxu0
    %7343 = vdwg.mxu0
    %7344 = vmatprep.subr.bf16.mxu0 %v4875
    %7345 = vmatpush1.bf16.msra.mxu0 %v4874
    %7346 = vmatprep.subr.bf16.mxu0 %v4867
    %7347 = vmatpush1.bf16.msra.mxu0 %v4866
    %7348 = vmatprep.subr.bf16.mxu0 %v4859
    %7349 = vmatpush1.bf16.msra.mxu0 %v4858
    %7350 = vmatprep.subr.bf16.mxu0 %v4851
    %7351 = vmatpush1.bf16.msra.mxu0 %v4850
    %7352 = vmatprep.subr.bf16.mxu0 %v4843
    %7353 = vmatpush1.bf16.msra.mxu0 %v4842
    %7354 = vmatprep.subr.bf16.mxu0 %v4835
    %7355 = vmatpush1.bf16.msra.mxu0 %v4834
    %7356 = vmatprep.subr.bf16.mxu0 %v4827
    %7357 = vmatpush1.bf16.msra.mxu0 %v4826
    %7358 = vmatprep.subr.bf16.mxu0 %v4819
    %7359 = vmatpush1.bf16.msra.mxu0 %v4818
    %7360 = vmatprep.subr.bf16.mxu0 %v4939
    %7361 = vmatpush2.bf16.msra.mxu0 %v4938
    %7362 = vmatprep.subr.bf16.mxu0 %v4931
    %7363 = vmatpush2.bf16.msra.mxu0 %v4930
    %7364 = vmatprep.subr.bf16.mxu0 %v4923
    %7365 = vmatpush2.bf16.msra.mxu0 %v4922
    %7366 = vmatprep.subr.bf16.mxu0 %v4915
    %7367 = vmatpush2.bf16.msra.mxu0 %v4914
    %7368 = vmatprep.subr.bf16.mxu0 %v4907
    %7369 = vmatpush2.bf16.msra.mxu0 %v4906
    %7370 = vmatprep.subr.bf16.mxu0 %v4899
    %7371 = vmatpush2.bf16.msra.mxu0 %v4898
    %7372 = vmatprep.subr.bf16.mxu0 %v4891
    %7373 = vmatpush2.bf16.msra.mxu0 %v4890
    %7374 = vmatprep.subr.bf16.mxu0 %v4883
    %7375 = vmatpush2.bf16.msra.mxu0 %v4882
    %7376 = vmatprep.mubr.bf16.mxu0 %v409
    %7377 = vmatmul.mubr.bf16.gmra.mxu0 %v408
    %v7378 = vpop.f32.mrf.mxu0
    %v7379 = vadd.f32 %v7338, %v7378
    %v7380 = vpop.f32.mrf.mxu0
    %v7381 = vadd.f32 %v7340, %v7380
    %v7382 = vpop.f32.mrf.mxu0
    %v7383 = vpop.f32.mrf.mxu0
    %7384 = vdwg.mxu0
    %7385 = vmatprep.subr.bf16.mxu0 %v5003
    %7386 = vmatpush1.bf16.msra.mxu0 %v5002
    %7387 = vmatprep.subr.bf16.mxu0 %v4995
    %7388 = vmatpush1.bf16.msra.mxu0 %v4994
    %7389 = vmatprep.subr.bf16.mxu0 %v4987
    %7390 = vmatpush1.bf16.msra.mxu0 %v4986
    %7391 = vmatprep.subr.bf16.mxu0 %v4979
    %7392 = vmatpush1.bf16.msra.mxu0 %v4978
    %7393 = vmatprep.subr.bf16.mxu0 %v4971
    %7394 = vmatpush1.bf16.msra.mxu0 %v4970
    %7395 = vmatprep.subr.bf16.mxu0 %v4963
    %7396 = vmatpush1.bf16.msra.mxu0 %v4962
    %7397 = vmatprep.subr.bf16.mxu0 %v4955
    %7398 = vmatpush1.bf16.msra.mxu0 %v4954
    %7399 = vmatprep.subr.bf16.mxu0 %v4947
    %7400 = vmatpush1.bf16.msra.mxu0 %v4946
    %7401 = vmatprep.subr.bf16.mxu0 %v5067
    %7402 = vmatpush2.bf16.msra.mxu0 %v5066
    %7403 = vmatprep.subr.bf16.mxu0 %v5059
    %7404 = vmatpush2.bf16.msra.mxu0 %v5058
    %7405 = vmatprep.subr.bf16.mxu0 %v5051
    %7406 = vmatpush2.bf16.msra.mxu0 %v5050
    %7407 = vmatprep.subr.bf16.mxu0 %v5043
    %7408 = vmatpush2.bf16.msra.mxu0 %v5042
    %7409 = vmatprep.subr.bf16.mxu0 %v5035
    %7410 = vmatpush2.bf16.msra.mxu0 %v5034
    %7411 = vmatprep.subr.bf16.mxu0 %v5027
    %7412 = vmatpush2.bf16.msra.mxu0 %v5026
    %7413 = vmatprep.subr.bf16.mxu0 %v5019
    %7414 = vmatpush2.bf16.msra.mxu0 %v5018
    %7415 = vmatprep.subr.bf16.mxu0 %v5011
    %7416 = vmatpush2.bf16.msra.mxu0 %v5010
    %7417 = vmatprep.mubr.bf16.mxu0 %v411
    %7418 = vmatmul.mubr.bf16.gmra.mxu0 %v410
    %v7419 = vpop.f32.mrf.mxu0
    %v7420 = vadd.f32 %v7379, %v7419
    %v7421 = vpop.f32.mrf.mxu0
    %v7422 = vadd.f32 %v7381, %v7421
    %v7423 = vpop.f32.mrf.mxu0
    %v7424 = vpop.f32.mrf.mxu0
    %7425 = vdwg.mxu0
    %7426 = vmatprep.subr.bf16.mxu0 %v5131
    %7427 = vmatpush1.bf16.msra.mxu0 %v5130
    %7428 = vmatprep.subr.bf16.mxu0 %v5123
    %7429 = vmatpush1.bf16.msra.mxu0 %v5122
    %7430 = vmatprep.subr.bf16.mxu0 %v5115
    %7431 = vmatpush1.bf16.msra.mxu0 %v5114
    %7432 = vmatprep.subr.bf16.mxu0 %v5107
    %7433 = vmatpush1.bf16.msra.mxu0 %v5106
    %7434 = vmatprep.subr.bf16.mxu0 %v5099
    %7435 = vmatpush1.bf16.msra.mxu0 %v5098
    %7436 = vmatprep.subr.bf16.mxu0 %v5091
    %7437 = vmatpush1.bf16.msra.mxu0 %v5090
    %7438 = vmatprep.subr.bf16.mxu0 %v5083
    %7439 = vmatpush1.bf16.msra.mxu0 %v5082
    %7440 = vmatprep.subr.bf16.mxu0 %v5075
    %7441 = vmatpush1.bf16.msra.mxu0 %v5074
    %7442 = vmatprep.subr.bf16.mxu0 %v5195
    %7443 = vmatpush2.bf16.msra.mxu0 %v5194
    %7444 = vmatprep.subr.bf16.mxu0 %v5187
    %7445 = vmatpush2.bf16.msra.mxu0 %v5186
    %7446 = vmatprep.subr.bf16.mxu0 %v5179
    %7447 = vmatpush2.bf16.msra.mxu0 %v5178
    %7448 = vmatprep.subr.bf16.mxu0 %v5171
    %7449 = vmatpush2.bf16.msra.mxu0 %v5170
    %7450 = vmatprep.subr.bf16.mxu0 %v5163
    %7451 = vmatpush2.bf16.msra.mxu0 %v5162
    %7452 = vmatprep.subr.bf16.mxu0 %v5155
    %7453 = vmatpush2.bf16.msra.mxu0 %v5154
    %7454 = vmatprep.subr.bf16.mxu0 %v5147
    %7455 = vmatpush2.bf16.msra.mxu0 %v5146
    %7456 = vmatprep.subr.bf16.mxu0 %v5139
    %7457 = vmatpush2.bf16.msra.mxu0 %v5138
    %7458 = vmatprep.mubr.bf16.mxu0 %v413
    %7459 = vmatmul.mubr.bf16.gmra.mxu0 %v412
    %v7460 = vpop.f32.mrf.mxu0
    %v7461 = vadd.f32 %v7420, %v7460
    %v7462 = vpop.f32.mrf.mxu0
    %v7463 = vadd.f32 %v7422, %v7462
    %v7464 = vpop.f32.mrf.mxu0
    %v7465 = vpop.f32.mrf.mxu0
    %7466 = vdwg.mxu0
    %7467 = vmatprep.subr.bf16.mxu0 %v5259
    %7468 = vmatpush1.bf16.msra.mxu0 %v5258
    %7469 = vmatprep.subr.bf16.mxu0 %v5251
    %7470 = vmatpush1.bf16.msra.mxu0 %v5250
    %7471 = vmatprep.subr.bf16.mxu0 %v5243
    %7472 = vmatpush1.bf16.msra.mxu0 %v5242
    %7473 = vmatprep.subr.bf16.mxu0 %v5235
    %7474 = vmatpush1.bf16.msra.mxu0 %v5234
    %7475 = vmatprep.subr.bf16.mxu0 %v5227
    %7476 = vmatpush1.bf16.msra.mxu0 %v5226
    %7477 = vmatprep.subr.bf16.mxu0 %v5219
    %7478 = vmatpush1.bf16.msra.mxu0 %v5218
    %7479 = vmatprep.subr.bf16.mxu0 %v5211
    %7480 = vmatpush1.bf16.msra.mxu0 %v5210
    %7481 = vmatprep.subr.bf16.mxu0 %v5203
    %7482 = vmatpush1.bf16.msra.mxu0 %v5202
    %7483 = vmatprep.subr.bf16.mxu0 %v5323
    %7484 = vmatpush2.bf16.msra.mxu0 %v5322
    %7485 = vmatprep.subr.bf16.mxu0 %v5315
    %7486 = vmatpush2.bf16.msra.mxu0 %v5314
    %7487 = vmatprep.subr.bf16.mxu0 %v5307
    %7488 = vmatpush2.bf16.msra.mxu0 %v5306
    %7489 = vmatprep.subr.bf16.mxu0 %v5299
    %7490 = vmatpush2.bf16.msra.mxu0 %v5298
    %7491 = vmatprep.subr.bf16.mxu0 %v5291
    %7492 = vmatpush2.bf16.msra.mxu0 %v5290
    %7493 = vmatprep.subr.bf16.mxu0 %v5283
    %7494 = vmatpush2.bf16.msra.mxu0 %v5282
    %7495 = vmatprep.subr.bf16.mxu0 %v5275
    %7496 = vmatpush2.bf16.msra.mxu0 %v5274
    %7497 = vmatprep.subr.bf16.mxu0 %v5267
    %7498 = vmatpush2.bf16.msra.mxu0 %v5266
    %7499 = vmatprep.mubr.bf16.mxu0 %v415
    %7500 = vmatmul.mubr.bf16.gmra.mxu0 %v414
    %v7501 = vpop.f32.mrf.mxu0
    %v7502 = vadd.f32 %v7461, %v7501
    %v7503 = vpop.f32.mrf.mxu0
    %v7504 = vadd.f32 %v7463, %v7503
    %v7505 = vpop.f32.mrf.mxu0
    %v7506 = vpop.f32.mrf.mxu0
    %7507 = vdwg.mxu0
    %7508 = vmatprep.subr.bf16.mxu0 %v5387
    %7509 = vmatpush1.bf16.msra.mxu0 %v5386
    %7510 = vmatprep.subr.bf16.mxu0 %v5379
    %7511 = vmatpush1.bf16.msra.mxu0 %v5378
    %7512 = vmatprep.subr.bf16.mxu0 %v5371
    %7513 = vmatpush1.bf16.msra.mxu0 %v5370
    %7514 = vmatprep.subr.bf16.mxu0 %v5363
    %7515 = vmatpush1.bf16.msra.mxu0 %v5362
    %7516 = vmatprep.subr.bf16.mxu0 %v5355
    %7517 = vmatpush1.bf16.msra.mxu0 %v5354
    %7518 = vmatprep.subr.bf16.mxu0 %v5347
    %7519 = vmatpush1.bf16.msra.mxu0 %v5346
    %7520 = vmatprep.subr.bf16.mxu0 %v5339
    %7521 = vmatpush1.bf16.msra.mxu0 %v5338
    %7522 = vmatprep.subr.bf16.mxu0 %v5331
    %7523 = vmatpush1.bf16.msra.mxu0 %v5330
    %7524 = vmatprep.subr.bf16.mxu0 %v5451
    %7525 = vmatpush2.bf16.msra.mxu0 %v5450
    %7526 = vmatprep.subr.bf16.mxu0 %v5443
    %7527 = vmatpush2.bf16.msra.mxu0 %v5442
    %7528 = vmatprep.subr.bf16.mxu0 %v5435
    %7529 = vmatpush2.bf16.msra.mxu0 %v5434
    %7530 = vmatprep.subr.bf16.mxu0 %v5427
    %7531 = vmatpush2.bf16.msra.mxu0 %v5426
    %7532 = vmatprep.subr.bf16.mxu0 %v5419
    %7533 = vmatpush2.bf16.msra.mxu0 %v5418
    %7534 = vmatprep.subr.bf16.mxu0 %v5411
    %7535 = vmatpush2.bf16.msra.mxu0 %v5410
    %7536 = vmatprep.subr.bf16.mxu0 %v5403
    %7537 = vmatpush2.bf16.msra.mxu0 %v5402
    %7538 = vmatprep.subr.bf16.mxu0 %v5395
    %7539 = vmatpush2.bf16.msra.mxu0 %v5394
    %7540 = vmatprep.mubr.bf16.mxu0 %v417
    %7541 = vmatmul.mubr.bf16.gmra.mxu0 %v416
    %v7542 = vpop.f32.mrf.mxu0
    %v7543 = vadd.f32 %v7502, %v7542
    %v7544 = vpop.f32.mrf.mxu0
    %v7545 = vadd.f32 %v7504, %v7544
    %v7546 = vpop.f32.mrf.mxu0
    %v7547 = vpop.f32.mrf.mxu0
    %7548 = vdwg.mxu0
    %7549 = vmatprep.subr.bf16.mxu0 %v5515
    %7550 = vmatpush1.bf16.msra.mxu0 %v5514
    %7551 = vmatprep.subr.bf16.mxu0 %v5507
    %7552 = vmatpush1.bf16.msra.mxu0 %v5506
    %7553 = vmatprep.subr.bf16.mxu0 %v5499
    %7554 = vmatpush1.bf16.msra.mxu0 %v5498
    %7555 = vmatprep.subr.bf16.mxu0 %v5491
    %7556 = vmatpush1.bf16.msra.mxu0 %v5490
    %7557 = vmatprep.subr.bf16.mxu0 %v5483
    %7558 = vmatpush1.bf16.msra.mxu0 %v5482
    %7559 = vmatprep.subr.bf16.mxu0 %v5475
    %7560 = vmatpush1.bf16.msra.mxu0 %v5474
    %7561 = vmatprep.subr.bf16.mxu0 %v5467
    %7562 = vmatpush1.bf16.msra.mxu0 %v5466
    %7563 = vmatprep.subr.bf16.mxu0 %v5459
    %7564 = vmatpush1.bf16.msra.mxu0 %v5458
    %7565 = vmatprep.subr.bf16.mxu0 %v5579
    %7566 = vmatpush2.bf16.msra.mxu0 %v5578
    %7567 = vmatprep.subr.bf16.mxu0 %v5571
    %7568 = vmatpush2.bf16.msra.mxu0 %v5570
    %7569 = vmatprep.subr.bf16.mxu0 %v5563
    %7570 = vmatpush2.bf16.msra.mxu0 %v5562
    %7571 = vmatprep.subr.bf16.mxu0 %v5555
    %7572 = vmatpush2.bf16.msra.mxu0 %v5554
    %7573 = vmatprep.subr.bf16.mxu0 %v5547
    %7574 = vmatpush2.bf16.msra.mxu0 %v5546
    %7575 = vmatprep.subr.bf16.mxu0 %v5539
    %7576 = vmatpush2.bf16.msra.mxu0 %v5538
    %7577 = vmatprep.subr.bf16.mxu0 %v5531
    %7578 = vmatpush2.bf16.msra.mxu0 %v5530
    %7579 = vmatprep.subr.bf16.mxu0 %v5523
    %7580 = vmatpush2.bf16.msra.mxu0 %v5522
    %7581 = vmatprep.mubr.bf16.mxu0 %v419
    %7582 = vmatmul.mubr.bf16.gmra.mxu0 %v418
    %v7583 = vpop.f32.mrf.mxu0
    %v7584 = vadd.f32 %v7543, %v7583
    %v7585 = vpop.f32.mrf.mxu0
    %v7586 = vadd.f32 %v7545, %v7585
    %v7587 = vpop.f32.mrf.mxu0
    %v7588 = vpop.f32.mrf.mxu0
    %7589 = vdwg.mxu0
    %7590 = vmatprep.subr.bf16.mxu0 %v4621
    %7591 = vmatpush1.bf16.msra.mxu0 %v4620
    %7592 = vmatprep.subr.bf16.mxu0 %v4613
    %7593 = vmatpush1.bf16.msra.mxu0 %v4612
    %7594 = vmatprep.subr.bf16.mxu0 %v4605
    %7595 = vmatpush1.bf16.msra.mxu0 %v4604
    %7596 = vmatprep.subr.bf16.mxu0 %v4597
    %7597 = vmatpush1.bf16.msra.mxu0 %v4596
    %7598 = vmatprep.subr.bf16.mxu0 %v4589
    %7599 = vmatpush1.bf16.msra.mxu0 %v4588
    %7600 = vmatprep.subr.bf16.mxu0 %v4581
    %7601 = vmatpush1.bf16.msra.mxu0 %v4580
    %7602 = vmatprep.subr.bf16.mxu0 %v4573
    %7603 = vmatpush1.bf16.msra.mxu0 %v4572
    %7604 = vmatprep.subr.bf16.mxu0 %v4565
    %7605 = vmatpush1.bf16.msra.mxu0 %v4564
    %7606 = vmatprep.subr.bf16.mxu0 %v4685
    %7607 = vmatpush2.bf16.msra.mxu0 %v4684
    %7608 = vmatprep.subr.bf16.mxu0 %v4677
    %7609 = vmatpush2.bf16.msra.mxu0 %v4676
    %7610 = vmatprep.subr.bf16.mxu0 %v4669
    %7611 = vmatpush2.bf16.msra.mxu0 %v4668
    %7612 = vmatprep.subr.bf16.mxu0 %v4661
    %7613 = vmatpush2.bf16.msra.mxu0 %v4660
    %7614 = vmatprep.subr.bf16.mxu0 %v4653
    %7615 = vmatpush2.bf16.msra.mxu0 %v4652
    %7616 = vmatprep.subr.bf16.mxu0 %v4645
    %7617 = vmatpush2.bf16.msra.mxu0 %v4644
    %7618 = vmatprep.subr.bf16.mxu0 %v4637
    %7619 = vmatpush2.bf16.msra.mxu0 %v4636
    %7620 = vmatprep.subr.bf16.mxu0 %v4629
    %7621 = vmatpush2.bf16.msra.mxu0 %v4628
    %7622 = vmatprep.mubr.bf16.mxu0 %v405
    %7623 = vmatmul.mubr.bf16.gmra.mxu0 %v404
    %v7624 = vpop.f32.mrf.mxu0
    %v7625 = vadd.f32 %v1473, %v7624
    %v7626 = vpop.f32.mrf.mxu0
    %v7627 = vadd.f32 %v1477, %v7626
    %v7628 = vpop.f32.mrf.mxu0
    %v7629 = vpop.f32.mrf.mxu0
    %7630 = vdwg.mxu0
    %7631 = vmatprep.subr.bf16.mxu0 %v4749
    %7632 = vmatpush1.bf16.msra.mxu0 %v4748
    %7633 = vmatprep.subr.bf16.mxu0 %v4741
    %7634 = vmatpush1.bf16.msra.mxu0 %v4740
    %7635 = vmatprep.subr.bf16.mxu0 %v4733
    %7636 = vmatpush1.bf16.msra.mxu0 %v4732
    %7637 = vmatprep.subr.bf16.mxu0 %v4725
    %7638 = vmatpush1.bf16.msra.mxu0 %v4724
    %7639 = vmatprep.subr.bf16.mxu0 %v4717
    %7640 = vmatpush1.bf16.msra.mxu0 %v4716
    %7641 = vmatprep.subr.bf16.mxu0 %v4709
    %7642 = vmatpush1.bf16.msra.mxu0 %v4708
    %7643 = vmatprep.subr.bf16.mxu0 %v4701
    %7644 = vmatpush1.bf16.msra.mxu0 %v4700
    %7645 = vmatprep.subr.bf16.mxu0 %v4693
    %7646 = vmatpush1.bf16.msra.mxu0 %v4692
    %7647 = vmatprep.subr.bf16.mxu0 %v4813
    %7648 = vmatpush2.bf16.msra.mxu0 %v4812
    %7649 = vmatprep.subr.bf16.mxu0 %v4805
    %7650 = vmatpush2.bf16.msra.mxu0 %v4804
    %7651 = vmatprep.subr.bf16.mxu0 %v4797
    %7652 = vmatpush2.bf16.msra.mxu0 %v4796
    %7653 = vmatprep.subr.bf16.mxu0 %v4789
    %7654 = vmatpush2.bf16.msra.mxu0 %v4788
    %7655 = vmatprep.subr.bf16.mxu0 %v4781
    %7656 = vmatpush2.bf16.msra.mxu0 %v4780
    %7657 = vmatprep.subr.bf16.mxu0 %v4773
    %7658 = vmatpush2.bf16.msra.mxu0 %v4772
    %7659 = vmatprep.subr.bf16.mxu0 %v4765
    %7660 = vmatpush2.bf16.msra.mxu0 %v4764
    %7661 = vmatprep.subr.bf16.mxu0 %v4757
    %7662 = vmatpush2.bf16.msra.mxu0 %v4756
    %7663 = vmatprep.mubr.bf16.mxu0 %v407
    %7664 = vmatmul.mubr.bf16.gmra.mxu0 %v406
    %v7665 = vpop.f32.mrf.mxu0
    %v7666 = vadd.f32 %v7625, %v7665
    %v7667 = vpop.f32.mrf.mxu0
    %v7668 = vadd.f32 %v7627, %v7667
    %v7669 = vpop.f32.mrf.mxu0
    %v7670 = vpop.f32.mrf.mxu0
    %7671 = vdwg.mxu0
    %7672 = vmatprep.subr.bf16.mxu0 %v4877
    %7673 = vmatpush1.bf16.msra.mxu0 %v4876
    %7674 = vmatprep.subr.bf16.mxu0 %v4869
    %7675 = vmatpush1.bf16.msra.mxu0 %v4868
    %7676 = vmatprep.subr.bf16.mxu0 %v4861
    %7677 = vmatpush1.bf16.msra.mxu0 %v4860
    %7678 = vmatprep.subr.bf16.mxu0 %v4853
    %7679 = vmatpush1.bf16.msra.mxu0 %v4852
    %7680 = vmatprep.subr.bf16.mxu0 %v4845
    %7681 = vmatpush1.bf16.msra.mxu0 %v4844
    %7682 = vmatprep.subr.bf16.mxu0 %v4837
    %7683 = vmatpush1.bf16.msra.mxu0 %v4836
    %7684 = vmatprep.subr.bf16.mxu0 %v4829
    %7685 = vmatpush1.bf16.msra.mxu0 %v4828
    %7686 = vmatprep.subr.bf16.mxu0 %v4821
    %7687 = vmatpush1.bf16.msra.mxu0 %v4820
    %7688 = vmatprep.subr.bf16.mxu0 %v4941
    %7689 = vmatpush2.bf16.msra.mxu0 %v4940
    %7690 = vmatprep.subr.bf16.mxu0 %v4933
    %7691 = vmatpush2.bf16.msra.mxu0 %v4932
    %7692 = vmatprep.subr.bf16.mxu0 %v4925
    %7693 = vmatpush2.bf16.msra.mxu0 %v4924
    %7694 = vmatprep.subr.bf16.mxu0 %v4917
    %7695 = vmatpush2.bf16.msra.mxu0 %v4916
    %7696 = vmatprep.subr.bf16.mxu0 %v4909
    %7697 = vmatpush2.bf16.msra.mxu0 %v4908
    %7698 = vmatprep.subr.bf16.mxu0 %v4901
    %7699 = vmatpush2.bf16.msra.mxu0 %v4900
    %7700 = vmatprep.subr.bf16.mxu0 %v4893
    %7701 = vmatpush2.bf16.msra.mxu0 %v4892
    %7702 = vmatprep.subr.bf16.mxu0 %v4885
    %7703 = vmatpush2.bf16.msra.mxu0 %v4884
    %7704 = vmatprep.mubr.bf16.mxu0 %v409
    %7705 = vmatmul.mubr.bf16.gmra.mxu0 %v408
    %v7706 = vpop.f32.mrf.mxu0
    %v7707 = vadd.f32 %v7666, %v7706
    %v7708 = vpop.f32.mrf.mxu0
    %v7709 = vadd.f32 %v7668, %v7708
    %v7710 = vpop.f32.mrf.mxu0
    %v7711 = vpop.f32.mrf.mxu0
    %7712 = vdwg.mxu0
    %7713 = vmatprep.subr.bf16.mxu0 %v5005
    %7714 = vmatpush1.bf16.msra.mxu0 %v5004
    %7715 = vmatprep.subr.bf16.mxu0 %v4997
    %7716 = vmatpush1.bf16.msra.mxu0 %v4996
    %7717 = vmatprep.subr.bf16.mxu0 %v4989
    %7718 = vmatpush1.bf16.msra.mxu0 %v4988
    %7719 = vmatprep.subr.bf16.mxu0 %v4981
    %7720 = vmatpush1.bf16.msra.mxu0 %v4980
    %7721 = vmatprep.subr.bf16.mxu0 %v4973
    %7722 = vmatpush1.bf16.msra.mxu0 %v4972
    %7723 = vmatprep.subr.bf16.mxu0 %v4965
    %7724 = vmatpush1.bf16.msra.mxu0 %v4964
    %7725 = vmatprep.subr.bf16.mxu0 %v4957
    %7726 = vmatpush1.bf16.msra.mxu0 %v4956
    %7727 = vmatprep.subr.bf16.mxu0 %v4949
    %7728 = vmatpush1.bf16.msra.mxu0 %v4948
    %7729 = vmatprep.subr.bf16.mxu0 %v5069
    %7730 = vmatpush2.bf16.msra.mxu0 %v5068
    %7731 = vmatprep.subr.bf16.mxu0 %v5061
    %7732 = vmatpush2.bf16.msra.mxu0 %v5060
    %7733 = vmatprep.subr.bf16.mxu0 %v5053
    %7734 = vmatpush2.bf16.msra.mxu0 %v5052
    %7735 = vmatprep.subr.bf16.mxu0 %v5045
    %7736 = vmatpush2.bf16.msra.mxu0 %v5044
    %7737 = vmatprep.subr.bf16.mxu0 %v5037
    %7738 = vmatpush2.bf16.msra.mxu0 %v5036
    %7739 = vmatprep.subr.bf16.mxu0 %v5029
    %7740 = vmatpush2.bf16.msra.mxu0 %v5028
    %7741 = vmatprep.subr.bf16.mxu0 %v5021
    %7742 = vmatpush2.bf16.msra.mxu0 %v5020
    %7743 = vmatprep.subr.bf16.mxu0 %v5013
    %7744 = vmatpush2.bf16.msra.mxu0 %v5012
    %7745 = vmatprep.mubr.bf16.mxu0 %v411
    %7746 = vmatmul.mubr.bf16.gmra.mxu0 %v410
    %v7747 = vpop.f32.mrf.mxu0
    %v7748 = vadd.f32 %v7707, %v7747
    %v7749 = vpop.f32.mrf.mxu0
    %v7750 = vadd.f32 %v7709, %v7749
    %v7751 = vpop.f32.mrf.mxu0
    %v7752 = vpop.f32.mrf.mxu0
    %7753 = vdwg.mxu0
    %7754 = vmatprep.subr.bf16.mxu0 %v5133
    %7755 = vmatpush1.bf16.msra.mxu0 %v5132
    %7756 = vmatprep.subr.bf16.mxu0 %v5125
    %7757 = vmatpush1.bf16.msra.mxu0 %v5124
    %7758 = vmatprep.subr.bf16.mxu0 %v5117
    %7759 = vmatpush1.bf16.msra.mxu0 %v5116
    %7760 = vmatprep.subr.bf16.mxu0 %v5109
    %7761 = vmatpush1.bf16.msra.mxu0 %v5108
    %7762 = vmatprep.subr.bf16.mxu0 %v5101
    %7763 = vmatpush1.bf16.msra.mxu0 %v5100
    %7764 = vmatprep.subr.bf16.mxu0 %v5093
    %7765 = vmatpush1.bf16.msra.mxu0 %v5092
    %7766 = vmatprep.subr.bf16.mxu0 %v5085
    %7767 = vmatpush1.bf16.msra.mxu0 %v5084
    %7768 = vmatprep.subr.bf16.mxu0 %v5077
    %7769 = vmatpush1.bf16.msra.mxu0 %v5076
    %7770 = vmatprep.subr.bf16.mxu0 %v5197
    %7771 = vmatpush2.bf16.msra.mxu0 %v5196
    %7772 = vmatprep.subr.bf16.mxu0 %v5189
    %7773 = vmatpush2.bf16.msra.mxu0 %v5188
    %7774 = vmatprep.subr.bf16.mxu0 %v5181
    %7775 = vmatpush2.bf16.msra.mxu0 %v5180
    %7776 = vmatprep.subr.bf16.mxu0 %v5173
    %7777 = vmatpush2.bf16.msra.mxu0 %v5172
    %7778 = vmatprep.subr.bf16.mxu0 %v5165
    %7779 = vmatpush2.bf16.msra.mxu0 %v5164
    %7780 = vmatprep.subr.bf16.mxu0 %v5157
    %7781 = vmatpush2.bf16.msra.mxu0 %v5156
    %7782 = vmatprep.subr.bf16.mxu0 %v5149
    %7783 = vmatpush2.bf16.msra.mxu0 %v5148
    %7784 = vmatprep.subr.bf16.mxu0 %v5141
    %7785 = vmatpush2.bf16.msra.mxu0 %v5140
    %7786 = vmatprep.mubr.bf16.mxu0 %v413
    %7787 = vmatmul.mubr.bf16.gmra.mxu0 %v412
    %v7788 = vpop.f32.mrf.mxu0
    %v7789 = vadd.f32 %v7748, %v7788
    %v7790 = vpop.f32.mrf.mxu0
    %v7791 = vadd.f32 %v7750, %v7790
    %v7792 = vpop.f32.mrf.mxu0
    %v7793 = vpop.f32.mrf.mxu0
    %7794 = vdwg.mxu0
    %7795 = vmatprep.subr.bf16.mxu0 %v5261
    %7796 = vmatpush1.bf16.msra.mxu0 %v5260
    %7797 = vmatprep.subr.bf16.mxu0 %v5253
    %7798 = vmatpush1.bf16.msra.mxu0 %v5252
    %7799 = vmatprep.subr.bf16.mxu0 %v5245
    %7800 = vmatpush1.bf16.msra.mxu0 %v5244
    %7801 = vmatprep.subr.bf16.mxu0 %v5237
    %7802 = vmatpush1.bf16.msra.mxu0 %v5236
    %7803 = vmatprep.subr.bf16.mxu0 %v5229
    %7804 = vmatpush1.bf16.msra.mxu0 %v5228
    %7805 = vmatprep.subr.bf16.mxu0 %v5221
    %7806 = vmatpush1.bf16.msra.mxu0 %v5220
    %7807 = vmatprep.subr.bf16.mxu0 %v5213
    %7808 = vmatpush1.bf16.msra.mxu0 %v5212
    %7809 = vmatprep.subr.bf16.mxu0 %v5205
    %7810 = vmatpush1.bf16.msra.mxu0 %v5204
    %7811 = vmatprep.subr.bf16.mxu0 %v5325
    %7812 = vmatpush2.bf16.msra.mxu0 %v5324
    %7813 = vmatprep.subr.bf16.mxu0 %v5317
    %7814 = vmatpush2.bf16.msra.mxu0 %v5316
    %7815 = vmatprep.subr.bf16.mxu0 %v5309
    %7816 = vmatpush2.bf16.msra.mxu0 %v5308
    %7817 = vmatprep.subr.bf16.mxu0 %v5301
    %7818 = vmatpush2.bf16.msra.mxu0 %v5300
    %7819 = vmatprep.subr.bf16.mxu0 %v5293
    %7820 = vmatpush2.bf16.msra.mxu0 %v5292
    %7821 = vmatprep.subr.bf16.mxu0 %v5285
    %7822 = vmatpush2.bf16.msra.mxu0 %v5284
    %7823 = vmatprep.subr.bf16.mxu0 %v5277
    %7824 = vmatpush2.bf16.msra.mxu0 %v5276
    %7825 = vmatprep.subr.bf16.mxu0 %v5269
    %7826 = vmatpush2.bf16.msra.mxu0 %v5268
    %7827 = vmatprep.mubr.bf16.mxu0 %v415
    %7828 = vmatmul.mubr.bf16.gmra.mxu0 %v414
    %v7829 = vpop.f32.mrf.mxu0
    %v7830 = vadd.f32 %v7789, %v7829
    %v7831 = vpop.f32.mrf.mxu0
    %v7832 = vadd.f32 %v7791, %v7831
    %v7833 = vpop.f32.mrf.mxu0
    %v7834 = vpop.f32.mrf.mxu0
    %7835 = vdwg.mxu0
    %7836 = vmatprep.subr.bf16.mxu0 %v5389
    %7837 = vmatpush1.bf16.msra.mxu0 %v5388
    %7838 = vmatprep.subr.bf16.mxu0 %v5381
    %7839 = vmatpush1.bf16.msra.mxu0 %v5380
    %7840 = vmatprep.subr.bf16.mxu0 %v5373
    %7841 = vmatpush1.bf16.msra.mxu0 %v5372
    %7842 = vmatprep.subr.bf16.mxu0 %v5365
    %7843 = vmatpush1.bf16.msra.mxu0 %v5364
    %7844 = vmatprep.subr.bf16.mxu0 %v5357
    %7845 = vmatpush1.bf16.msra.mxu0 %v5356
    %7846 = vmatprep.subr.bf16.mxu0 %v5349
    %7847 = vmatpush1.bf16.msra.mxu0 %v5348
    %7848 = vmatprep.subr.bf16.mxu0 %v5341
    %7849 = vmatpush1.bf16.msra.mxu0 %v5340
    %7850 = vmatprep.subr.bf16.mxu0 %v5333
    %7851 = vmatpush1.bf16.msra.mxu0 %v5332
    %7852 = vmatprep.subr.bf16.mxu0 %v5453
    %7853 = vmatpush2.bf16.msra.mxu0 %v5452
    %7854 = vmatprep.subr.bf16.mxu0 %v5445
    %7855 = vmatpush2.bf16.msra.mxu0 %v5444
    %7856 = vmatprep.subr.bf16.mxu0 %v5437
    %7857 = vmatpush2.bf16.msra.mxu0 %v5436
    %7858 = vmatprep.subr.bf16.mxu0 %v5429
    %7859 = vmatpush2.bf16.msra.mxu0 %v5428
    %7860 = vmatprep.subr.bf16.mxu0 %v5421
    %7861 = vmatpush2.bf16.msra.mxu0 %v5420
    %7862 = vmatprep.subr.bf16.mxu0 %v5413
    %7863 = vmatpush2.bf16.msra.mxu0 %v5412
    %7864 = vmatprep.subr.bf16.mxu0 %v5405
    %7865 = vmatpush2.bf16.msra.mxu0 %v5404
    %7866 = vmatprep.subr.bf16.mxu0 %v5397
    %7867 = vmatpush2.bf16.msra.mxu0 %v5396
    %7868 = vmatprep.mubr.bf16.mxu0 %v417
    %7869 = vmatmul.mubr.bf16.gmra.mxu0 %v416
    %v7870 = vpop.f32.mrf.mxu0
    %v7871 = vadd.f32 %v7830, %v7870
    %v7872 = vpop.f32.mrf.mxu0
    %v7873 = vadd.f32 %v7832, %v7872
    %v7874 = vpop.f32.mrf.mxu0
    %v7875 = vpop.f32.mrf.mxu0
    %7876 = vdwg.mxu0
    %7877 = vmatprep.subr.bf16.mxu0 %v5517
    %7878 = vmatpush1.bf16.msra.mxu0 %v5516
    %7879 = vmatprep.subr.bf16.mxu0 %v5509
    %7880 = vmatpush1.bf16.msra.mxu0 %v5508
    %7881 = vmatprep.subr.bf16.mxu0 %v5501
    %7882 = vmatpush1.bf16.msra.mxu0 %v5500
    %7883 = vmatprep.subr.bf16.mxu0 %v5493
    %7884 = vmatpush1.bf16.msra.mxu0 %v5492
    %7885 = vmatprep.subr.bf16.mxu0 %v5485
    %7886 = vmatpush1.bf16.msra.mxu0 %v5484
    %7887 = vmatprep.subr.bf16.mxu0 %v5477
    %7888 = vmatpush1.bf16.msra.mxu0 %v5476
    %7889 = vmatprep.subr.bf16.mxu0 %v5469
    %7890 = vmatpush1.bf16.msra.mxu0 %v5468
    %7891 = vmatprep.subr.bf16.mxu0 %v5461
    %7892 = vmatpush1.bf16.msra.mxu0 %v5460
    %7893 = vmatprep.subr.bf16.mxu0 %v5581
    %7894 = vmatpush2.bf16.msra.mxu0 %v5580
    %7895 = vmatprep.subr.bf16.mxu0 %v5573
    %7896 = vmatpush2.bf16.msra.mxu0 %v5572
    %7897 = vmatprep.subr.bf16.mxu0 %v5565
    %7898 = vmatpush2.bf16.msra.mxu0 %v5564
    %7899 = vmatprep.subr.bf16.mxu0 %v5557
    %7900 = vmatpush2.bf16.msra.mxu0 %v5556
    %7901 = vmatprep.subr.bf16.mxu0 %v5549
    %7902 = vmatpush2.bf16.msra.mxu0 %v5548
    %7903 = vmatprep.subr.bf16.mxu0 %v5541
    %7904 = vmatpush2.bf16.msra.mxu0 %v5540
    %7905 = vmatprep.subr.bf16.mxu0 %v5533
    %7906 = vmatpush2.bf16.msra.mxu0 %v5532
    %7907 = vmatprep.subr.bf16.mxu0 %v5525
    %7908 = vmatpush2.bf16.msra.mxu0 %v5524
    %7909 = vmatprep.mubr.bf16.mxu0 %v419
    %7910 = vmatmul.mubr.bf16.gmra.mxu0 %v418
    %v7911 = vpop.f32.mrf.mxu0
    %v7912 = vadd.f32 %v7871, %v7911
    %v7913 = vpop.f32.mrf.mxu0
    %v7914 = vadd.f32 %v7873, %v7913
    %v7915 = vpop.f32.mrf.mxu0
    %v7916 = vpop.f32.mrf.mxu0
    %7917 = vdwg.mxu0
    %v7918 = vmax.f32 %v6928, 0.0
    %v7919 = vmax.f32 %v6930, 0.0
    %v7920 = vmax.f32 %v7256, 0.0
    %v7921 = vmax.f32 %v7258, 0.0
    %v7922 = vmax.f32 %v7584, 0.0
    %v7923 = vmax.f32 %v7586, 0.0
    %v7924 = vmax.f32 %v7912, 0.0
    %v7925 = vmax.f32 %v7914, 0.0
    %v7926 = vpack.c.bf16 %v7918, %v7918
    %v7927 = vpack.c.bf16 %v7919, %v7919
    %v7928 = vpack.c.bf16 %v7920, %v7920
    %v7929 = vpack.c.bf16 %v7921, %v7921
    %v7930 = vpack.c.bf16 %v7922, %v7922
    %v7931 = vpack.c.bf16 %v7923, %v7923
    %v7932 = vpack.c.bf16 %v7924, %v7924
    %v7933 = vpack.c.bf16 %v7925, %v7925
    %v7934 = vld [vmem:[#allocation10] sm:$0xff]
    %v7935 = vld [vmem:[#allocation10 + $0x8] sm:$0xff]
    %v7936 = vld [vmem:[#allocation10 + $0x10] sm:$0xff]
    %v7937 = vld [vmem:[#allocation10 + $0x18] sm:$0xff]
    %v7938 = vld [vmem:[#allocation10 + $0x20] sm:$0xff]
    %v7939 = vld [vmem:[#allocation10 + $0x28] sm:$0xff]
    %v7940 = vld [vmem:[#allocation10 + $0x30] sm:$0xff]
    %v7941 = vld [vmem:[#allocation10 + $0x38] sm:$0xff]
    %v7942 = vld [vmem:[#allocation10 + $0x40] sm:$0xff]
    %v7943 = vld [vmem:[#allocation10 + $0x48] sm:$0xff]
    %v7944 = vld [vmem:[#allocation10 + $0x50] sm:$0xff]
    %v7945 = vld [vmem:[#allocation10 + $0x58] sm:$0xff]
    %v7946 = vld [vmem:[#allocation10 + $0x60] sm:$0xff]
    %v7947 = vld [vmem:[#allocation10 + $0x68] sm:$0xff]
    %v7948 = vld [vmem:[#allocation10 + $0x70] sm:$0xff]
    %v7949 = vld [vmem:[#allocation10 + $0x78] sm:$0xff]
    %v7950 = vld [vmem:[#allocation10 + $0x80] sm:$0xff]
    %v7951 = vld [vmem:[#allocation10 + $0x88] sm:$0xff]
    %v7952 = vld [vmem:[#allocation10 + $0x90] sm:$0xff]
    %v7953 = vld [vmem:[#allocation10 + $0x98] sm:$0xff]
    %v7954 = vld [vmem:[#allocation10 + $0xa0] sm:$0xff]
    %v7955 = vld [vmem:[#allocation10 + $0xa8] sm:$0xff]
    %v7956 = vld [vmem:[#allocation10 + $0xb0] sm:$0xff]
    %v7957 = vld [vmem:[#allocation10 + $0xb8] sm:$0xff]
    %v7958 = vld [vmem:[#allocation10 + $0xc0] sm:$0xff]
    %v7959 = vld [vmem:[#allocation10 + $0xc8] sm:$0xff]
    %v7960 = vld [vmem:[#allocation10 + $0xd0] sm:$0xff]
    %v7961 = vld [vmem:[#allocation10 + $0xd8] sm:$0xff]
    %v7962 = vld [vmem:[#allocation10 + $0xe0] sm:$0xff]
    %v7963 = vld [vmem:[#allocation10 + $0xe8] sm:$0xff]
    %v7964 = vld [vmem:[#allocation10 + $0xf0] sm:$0xff]
    %v7965 = vld [vmem:[#allocation10 + $0xf8] sm:$0xff]
    %v7966 = vld [vmem:[#allocation10 + $0x100] sm:$0xff]
    %v7967 = vld [vmem:[#allocation10 + $0x108] sm:$0xff]
    %v7968 = vld [vmem:[#allocation10 + $0x110] sm:$0xff]
    %v7969 = vld [vmem:[#allocation10 + $0x118] sm:$0xff]
    %v7970 = vld [vmem:[#allocation10 + $0x120] sm:$0xff]
    %v7971 = vld [vmem:[#allocation10 + $0x128] sm:$0xff]
    %v7972 = vld [vmem:[#allocation10 + $0x130] sm:$0xff]
    %v7973 = vld [vmem:[#allocation10 + $0x138] sm:$0xff]
    %v7974 = vld [vmem:[#allocation10 + $0x140] sm:$0xff]
    %v7975 = vld [vmem:[#allocation10 + $0x148] sm:$0xff]
    %v7976 = vld [vmem:[#allocation10 + $0x150] sm:$0xff]
    %v7977 = vld [vmem:[#allocation10 + $0x158] sm:$0xff]
    %v7978 = vld [vmem:[#allocation10 + $0x160] sm:$0xff]
    %v7979 = vld [vmem:[#allocation10 + $0x168] sm:$0xff]
    %v7980 = vld [vmem:[#allocation10 + $0x170] sm:$0xff]
    %v7981 = vld [vmem:[#allocation10 + $0x178] sm:$0xff]
    %v7982 = vld [vmem:[#allocation10 + $0x180] sm:$0xff]
    %v7983 = vld [vmem:[#allocation10 + $0x188] sm:$0xff]
    %v7984 = vld [vmem:[#allocation10 + $0x190] sm:$0xff]
    %v7985 = vld [vmem:[#allocation10 + $0x198] sm:$0xff]
    %v7986 = vld [vmem:[#allocation10 + $0x1a0] sm:$0xff]
    %v7987 = vld [vmem:[#allocation10 + $0x1a8] sm:$0xff]
    %v7988 = vld [vmem:[#allocation10 + $0x1b0] sm:$0xff]
    %v7989 = vld [vmem:[#allocation10 + $0x1b8] sm:$0xff]
    %v7990 = vld [vmem:[#allocation10 + $0x1c0] sm:$0xff]
    %v7991 = vld [vmem:[#allocation10 + $0x1c8] sm:$0xff]
    %v7992 = vld [vmem:[#allocation10 + $0x1d0] sm:$0xff]
    %v7993 = vld [vmem:[#allocation10 + $0x1d8] sm:$0xff]
    %v7994 = vld [vmem:[#allocation10 + $0x1e0] sm:$0xff]
    %v7995 = vld [vmem:[#allocation10 + $0x1e8] sm:$0xff]
    %v7996 = vld [vmem:[#allocation10 + $0x1f0] sm:$0xff]
    %v7997 = vld [vmem:[#allocation10 + $0x1f8] sm:$0xff]
    %v7998 = vld [vmem:[#allocation10 + $0x200] sm:$0xff]
    %v7999 = vld [vmem:[#allocation10 + $0x208] sm:$0xff]
    %v8000 = vld [vmem:[#allocation10 + $0x210] sm:$0xff]
    %v8001 = vld [vmem:[#allocation10 + $0x218] sm:$0xff]
    %v8002 = vld [vmem:[#allocation10 + $0x220] sm:$0xff]
    %v8003 = vld [vmem:[#allocation10 + $0x228] sm:$0xff]
    %v8004 = vld [vmem:[#allocation10 + $0x230] sm:$0xff]
    %v8005 = vld [vmem:[#allocation10 + $0x238] sm:$0xff]
    %v8006 = vld [vmem:[#allocation10 + $0x240] sm:$0xff]
    %v8007 = vld [vmem:[#allocation10 + $0x248] sm:$0xff]
    %v8008 = vld [vmem:[#allocation10 + $0x250] sm:$0xff]
    %v8009 = vld [vmem:[#allocation10 + $0x258] sm:$0xff]
    %v8010 = vld [vmem:[#allocation10 + $0x260] sm:$0xff]
    %v8011 = vld [vmem:[#allocation10 + $0x268] sm:$0xff]
    %v8012 = vld [vmem:[#allocation10 + $0x270] sm:$0xff]
    %v8013 = vld [vmem:[#allocation10 + $0x278] sm:$0xff]
    %v8014 = vld [vmem:[#allocation10 + $0x280] sm:$0xff]
    %v8015 = vld [vmem:[#allocation10 + $0x288] sm:$0xff]
    %v8016 = vld [vmem:[#allocation10 + $0x290] sm:$0xff]
    %v8017 = vld [vmem:[#allocation10 + $0x298] sm:$0xff]
    %v8018 = vld [vmem:[#allocation10 + $0x2a0] sm:$0xff]
    %v8019 = vld [vmem:[#allocation10 + $0x2a8] sm:$0xff]
    %v8020 = vld [vmem:[#allocation10 + $0x2b0] sm:$0xff]
    %v8021 = vld [vmem:[#allocation10 + $0x2b8] sm:$0xff]
    %v8022 = vld [vmem:[#allocation10 + $0x2c0] sm:$0xff]
    %v8023 = vld [vmem:[#allocation10 + $0x2c8] sm:$0xff]
    %v8024 = vld [vmem:[#allocation10 + $0x2d0] sm:$0xff]
    %v8025 = vld [vmem:[#allocation10 + $0x2d8] sm:$0xff]
    %v8026 = vld [vmem:[#allocation10 + $0x2e0] sm:$0xff]
    %v8027 = vld [vmem:[#allocation10 + $0x2e8] sm:$0xff]
    %v8028 = vld [vmem:[#allocation10 + $0x2f0] sm:$0xff]
    %v8029 = vld [vmem:[#allocation10 + $0x2f8] sm:$0xff]
    %v8030 = vld [vmem:[#allocation10 + $0x300] sm:$0xff]
    %v8031 = vld [vmem:[#allocation10 + $0x308] sm:$0xff]
    %v8032 = vld [vmem:[#allocation10 + $0x310] sm:$0xff]
    %v8033 = vld [vmem:[#allocation10 + $0x318] sm:$0xff]
    %v8034 = vld [vmem:[#allocation10 + $0x320] sm:$0xff]
    %v8035 = vld [vmem:[#allocation10 + $0x328] sm:$0xff]
    %v8036 = vld [vmem:[#allocation10 + $0x330] sm:$0xff]
    %v8037 = vld [vmem:[#allocation10 + $0x338] sm:$0xff]
    %v8038 = vld [vmem:[#allocation10 + $0x340] sm:$0xff]
    %v8039 = vld [vmem:[#allocation10 + $0x348] sm:$0xff]
    %v8040 = vld [vmem:[#allocation10 + $0x350] sm:$0xff]
    %v8041 = vld [vmem:[#allocation10 + $0x358] sm:$0xff]
    %v8042 = vld [vmem:[#allocation10 + $0x360] sm:$0xff]
    %v8043 = vld [vmem:[#allocation10 + $0x368] sm:$0xff]
    %v8044 = vld [vmem:[#allocation10 + $0x370] sm:$0xff]
    %v8045 = vld [vmem:[#allocation10 + $0x378] sm:$0xff]
    %v8046 = vld [vmem:[#allocation10 + $0x380] sm:$0xff]
    %v8047 = vld [vmem:[#allocation10 + $0x388] sm:$0xff]
    %v8048 = vld [vmem:[#allocation10 + $0x390] sm:$0xff]
    %v8049 = vld [vmem:[#allocation10 + $0x398] sm:$0xff]
    %v8050 = vld [vmem:[#allocation10 + $0x3a0] sm:$0xff]
    %v8051 = vld [vmem:[#allocation10 + $0x3a8] sm:$0xff]
    %v8052 = vld [vmem:[#allocation10 + $0x3b0] sm:$0xff]
    %v8053 = vld [vmem:[#allocation10 + $0x3b8] sm:$0xff]
    %v8054 = vld [vmem:[#allocation10 + $0x3c0] sm:$0xff]
    %v8055 = vld [vmem:[#allocation10 + $0x3c8] sm:$0xff]
    %v8056 = vld [vmem:[#allocation10 + $0x3d0] sm:$0xff]
    %v8057 = vld [vmem:[#allocation10 + $0x3d8] sm:$0xff]
    %v8058 = vld [vmem:[#allocation10 + $0x3e0] sm:$0xff]
    %v8059 = vld [vmem:[#allocation10 + $0x3e8] sm:$0xff]
    %v8060 = vld [vmem:[#allocation10 + $0x3f0] sm:$0xff]
    %v8061 = vld [vmem:[#allocation10 + $0x3f8] sm:$0xff]
    %v8062 = vld [vmem:[#allocation10 + $0x400] sm:$0xff]
    %v8063 = vld [vmem:[#allocation10 + $0x408] sm:$0xff]
    %v8064 = vld [vmem:[#allocation10 + $0x410] sm:$0xff]
    %v8065 = vld [vmem:[#allocation10 + $0x418] sm:$0xff]
    %v8066 = vld [vmem:[#allocation10 + $0x420] sm:$0xff]
    %v8067 = vld [vmem:[#allocation10 + $0x428] sm:$0xff]
    %v8068 = vld [vmem:[#allocation10 + $0x430] sm:$0xff]
    %v8069 = vld [vmem:[#allocation10 + $0x438] sm:$0xff]
    %v8070 = vld [vmem:[#allocation10 + $0x440] sm:$0xff]
    %v8071 = vld [vmem:[#allocation10 + $0x448] sm:$0xff]
    %v8072 = vld [vmem:[#allocation10 + $0x450] sm:$0xff]
    %v8073 = vld [vmem:[#allocation10 + $0x458] sm:$0xff]
    %v8074 = vld [vmem:[#allocation10 + $0x460] sm:$0xff]
    %v8075 = vld [vmem:[#allocation10 + $0x468] sm:$0xff]
    %v8076 = vld [vmem:[#allocation10 + $0x470] sm:$0xff]
    %v8077 = vld [vmem:[#allocation10 + $0x478] sm:$0xff]
    %v8078 = vld [vmem:[#allocation10 + $0x480] sm:$0xff]
    %v8079 = vld [vmem:[#allocation10 + $0x488] sm:$0xff]
    %v8080 = vld [vmem:[#allocation10 + $0x490] sm:$0xff]
    %v8081 = vld [vmem:[#allocation10 + $0x498] sm:$0xff]
    %v8082 = vld [vmem:[#allocation10 + $0x4a0] sm:$0xff]
    %v8083 = vld [vmem:[#allocation10 + $0x4a8] sm:$0xff]
    %v8084 = vld [vmem:[#allocation10 + $0x4b0] sm:$0xff]
    %v8085 = vld [vmem:[#allocation10 + $0x4b8] sm:$0xff]
    %v8086 = vld [vmem:[#allocation10 + $0x4c0] sm:$0xff]
    %v8087 = vld [vmem:[#allocation10 + $0x4c8] sm:$0xff]
    %v8088 = vld [vmem:[#allocation10 + $0x4d0] sm:$0xff]
    %v8089 = vld [vmem:[#allocation10 + $0x4d8] sm:$0xff]
    %v8090 = vld [vmem:[#allocation10 + $0x4e0] sm:$0xff]
    %v8091 = vld [vmem:[#allocation10 + $0x4e8] sm:$0xff]
    %v8092 = vld [vmem:[#allocation10 + $0x4f0] sm:$0xff]
    %v8093 = vld [vmem:[#allocation10 + $0x4f8] sm:$0xff]
    %v8094 = vld [vmem:[#allocation10 + $0x500] sm:$0xff]
    %v8095 = vld [vmem:[#allocation10 + $0x508] sm:$0xff]
    %v8096 = vld [vmem:[#allocation10 + $0x510] sm:$0xff]
    %v8097 = vld [vmem:[#allocation10 + $0x518] sm:$0xff]
    %v8098 = vld [vmem:[#allocation10 + $0x520] sm:$0xff]
    %v8099 = vld [vmem:[#allocation10 + $0x528] sm:$0xff]
    %v8100 = vld [vmem:[#allocation10 + $0x530] sm:$0xff]
    %v8101 = vld [vmem:[#allocation10 + $0x538] sm:$0xff]
    %v8102 = vld [vmem:[#allocation10 + $0x540] sm:$0xff]
    %v8103 = vld [vmem:[#allocation10 + $0x548] sm:$0xff]
    %v8104 = vld [vmem:[#allocation10 + $0x550] sm:$0xff]
    %v8105 = vld [vmem:[#allocation10 + $0x558] sm:$0xff]
    %v8106 = vld [vmem:[#allocation10 + $0x560] sm:$0xff]
    %v8107 = vld [vmem:[#allocation10 + $0x568] sm:$0xff]
    %v8108 = vld [vmem:[#allocation10 + $0x570] sm:$0xff]
    %v8109 = vld [vmem:[#allocation10 + $0x578] sm:$0xff]
    %v8110 = vld [vmem:[#allocation10 + $0x580] sm:$0xff]
    %v8111 = vld [vmem:[#allocation10 + $0x588] sm:$0xff]
    %v8112 = vld [vmem:[#allocation10 + $0x590] sm:$0xff]
    %v8113 = vld [vmem:[#allocation10 + $0x598] sm:$0xff]
    %v8114 = vld [vmem:[#allocation10 + $0x5a0] sm:$0xff]
    %v8115 = vld [vmem:[#allocation10 + $0x5a8] sm:$0xff]
    %v8116 = vld [vmem:[#allocation10 + $0x5b0] sm:$0xff]
    %v8117 = vld [vmem:[#allocation10 + $0x5b8] sm:$0xff]
    %v8118 = vld [vmem:[#allocation10 + $0x5c0] sm:$0xff]
    %v8119 = vld [vmem:[#allocation10 + $0x5c8] sm:$0xff]
    %v8120 = vld [vmem:[#allocation10 + $0x5d0] sm:$0xff]
    %v8121 = vld [vmem:[#allocation10 + $0x5d8] sm:$0xff]
    %v8122 = vld [vmem:[#allocation10 + $0x5e0] sm:$0xff]
    %v8123 = vld [vmem:[#allocation10 + $0x5e8] sm:$0xff]
    %v8124 = vld [vmem:[#allocation10 + $0x5f0] sm:$0xff]
    %v8125 = vld [vmem:[#allocation10 + $0x5f8] sm:$0xff]
    %v8126 = vld [vmem:[#allocation10 + $0x600] sm:$0xff]
    %v8127 = vld [vmem:[#allocation10 + $0x608] sm:$0xff]
    %v8128 = vld [vmem:[#allocation10 + $0x610] sm:$0xff]
    %v8129 = vld [vmem:[#allocation10 + $0x618] sm:$0xff]
    %v8130 = vld [vmem:[#allocation10 + $0x620] sm:$0xff]
    %v8131 = vld [vmem:[#allocation10 + $0x628] sm:$0xff]
    %v8132 = vld [vmem:[#allocation10 + $0x630] sm:$0xff]
    %v8133 = vld [vmem:[#allocation10 + $0x638] sm:$0xff]
    %v8134 = vld [vmem:[#allocation10 + $0x640] sm:$0xff]
    %v8135 = vld [vmem:[#allocation10 + $0x648] sm:$0xff]
    %v8136 = vld [vmem:[#allocation10 + $0x650] sm:$0xff]
    %v8137 = vld [vmem:[#allocation10 + $0x658] sm:$0xff]
    %v8138 = vld [vmem:[#allocation10 + $0x660] sm:$0xff]
    %v8139 = vld [vmem:[#allocation10 + $0x668] sm:$0xff]
    %v8140 = vld [vmem:[#allocation10 + $0x670] sm:$0xff]
    %v8141 = vld [vmem:[#allocation10 + $0x678] sm:$0xff]
    %v8142 = vld [vmem:[#allocation10 + $0x680] sm:$0xff]
    %v8143 = vld [vmem:[#allocation10 + $0x688] sm:$0xff]
    %v8144 = vld [vmem:[#allocation10 + $0x690] sm:$0xff]
    %v8145 = vld [vmem:[#allocation10 + $0x698] sm:$0xff]
    %v8146 = vld [vmem:[#allocation10 + $0x6a0] sm:$0xff]
    %v8147 = vld [vmem:[#allocation10 + $0x6a8] sm:$0xff]
    %v8148 = vld [vmem:[#allocation10 + $0x6b0] sm:$0xff]
    %v8149 = vld [vmem:[#allocation10 + $0x6b8] sm:$0xff]
    %v8150 = vld [vmem:[#allocation10 + $0x6c0] sm:$0xff]
    %v8151 = vld [vmem:[#allocation10 + $0x6c8] sm:$0xff]
    %v8152 = vld [vmem:[#allocation10 + $0x6d0] sm:$0xff]
    %v8153 = vld [vmem:[#allocation10 + $0x6d8] sm:$0xff]
    %v8154 = vld [vmem:[#allocation10 + $0x6e0] sm:$0xff]
    %v8155 = vld [vmem:[#allocation10 + $0x6e8] sm:$0xff]
    %v8156 = vld [vmem:[#allocation10 + $0x6f0] sm:$0xff]
    %v8157 = vld [vmem:[#allocation10 + $0x6f8] sm:$0xff]
    %v8158 = vld [vmem:[#allocation10 + $0x700] sm:$0xff]
    %v8159 = vld [vmem:[#allocation10 + $0x708] sm:$0xff]
    %v8160 = vld [vmem:[#allocation10 + $0x710] sm:$0xff]
    %v8161 = vld [vmem:[#allocation10 + $0x718] sm:$0xff]
    %v8162 = vld [vmem:[#allocation10 + $0x720] sm:$0xff]
    %v8163 = vld [vmem:[#allocation10 + $0x728] sm:$0xff]
    %v8164 = vld [vmem:[#allocation10 + $0x730] sm:$0xff]
    %v8165 = vld [vmem:[#allocation10 + $0x738] sm:$0xff]
    %v8166 = vld [vmem:[#allocation10 + $0x740] sm:$0xff]
    %v8167 = vld [vmem:[#allocation10 + $0x748] sm:$0xff]
    %v8168 = vld [vmem:[#allocation10 + $0x750] sm:$0xff]
    %v8169 = vld [vmem:[#allocation10 + $0x758] sm:$0xff]
    %v8170 = vld [vmem:[#allocation10 + $0x760] sm:$0xff]
    %v8171 = vld [vmem:[#allocation10 + $0x768] sm:$0xff]
    %v8172 = vld [vmem:[#allocation10 + $0x770] sm:$0xff]
    %v8173 = vld [vmem:[#allocation10 + $0x778] sm:$0xff]
    %v8174 = vld [vmem:[#allocation10 + $0x780] sm:$0xff]
    %v8175 = vld [vmem:[#allocation10 + $0x788] sm:$0xff]
    %v8176 = vld [vmem:[#allocation10 + $0x790] sm:$0xff]
    %v8177 = vld [vmem:[#allocation10 + $0x798] sm:$0xff]
    %v8178 = vld [vmem:[#allocation10 + $0x7a0] sm:$0xff]
    %v8179 = vld [vmem:[#allocation10 + $0x7a8] sm:$0xff]
    %v8180 = vld [vmem:[#allocation10 + $0x7b0] sm:$0xff]
    %v8181 = vld [vmem:[#allocation10 + $0x7b8] sm:$0xff]
    %v8182 = vld [vmem:[#allocation10 + $0x7c0] sm:$0xff]
    %v8183 = vld [vmem:[#allocation10 + $0x7c8] sm:$0xff]
    %v8184 = vld [vmem:[#allocation10 + $0x7d0] sm:$0xff]
    %v8185 = vld [vmem:[#allocation10 + $0x7d8] sm:$0xff]
    %v8186 = vld [vmem:[#allocation10 + $0x7e0] sm:$0xff]
    %v8187 = vld [vmem:[#allocation10 + $0x7e8] sm:$0xff]
    %v8188 = vld [vmem:[#allocation10 + $0x7f0] sm:$0xff]
    %v8189 = vld [vmem:[#allocation10 + $0x7f8] sm:$0xff]
    %v8190 = vld [vmem:[#allocation11] sm:$0xf]
    %v8192 = vlaneseq
    %v8193 = vshrl.u32 %v8192, 7
    %v8194 = vsub.s32 0, %v8193
    %v8195 = vrot.slane %v8190, %v8194
    %v8196 = vlaneseq
    %v8197 = vshrl.u32 %v8196, 7
    %v8198 = vsub.s32 1, %v8197
    %v8199 = vrot.slane %v8190, %v8198
    %v8200 = vlaneseq
    %v8201 = vshrl.u32 %v8200, 7
    %v8202 = vsub.s32 2, %v8201
    %v8203 = vrot.slane %v8190, %v8202
    %v8204 = vlaneseq
    %v8205 = vshrl.u32 %v8204, 7
    %v8206 = vsub.s32 3, %v8205
    %v8207 = vrot.slane %v8190, %v8206
    %v8468 = vunpack.c.l.b16 %v7934
    %v8469 = vunpack.c.h.b16 %v7934
    %v8470 = vunpack.c.l.b16 %v7935
    %v8471 = vunpack.c.h.b16 %v7935
    %v8472 = vunpack.c.l.b16 %v7936
    %v8473 = vunpack.c.h.b16 %v7936
    %v8474 = vunpack.c.l.b16 %v7937
    %v8475 = vunpack.c.h.b16 %v7937
    %v8476 = vunpack.c.l.b16 %v7938
    %v8477 = vunpack.c.h.b16 %v7938
    %v8478 = vunpack.c.l.b16 %v7939
    %v8479 = vunpack.c.h.b16 %v7939
    %v8480 = vunpack.c.l.b16 %v7940
    %v8481 = vunpack.c.h.b16 %v7940
    %v8482 = vunpack.c.l.b16 %v7941
    %v8483 = vunpack.c.h.b16 %v7941
    %v8484 = vunpack.c.l.b16 %v7942
    %v8485 = vunpack.c.h.b16 %v7942
    %v8486 = vunpack.c.l.b16 %v7943
    %v8487 = vunpack.c.h.b16 %v7943
    %v8488 = vunpack.c.l.b16 %v7944
    %v8489 = vunpack.c.h.b16 %v7944
    %v8490 = vunpack.c.l.b16 %v7945
    %v8491 = vunpack.c.h.b16 %v7945
    %v8492 = vunpack.c.l.b16 %v7946
    %v8493 = vunpack.c.h.b16 %v7946
    %v8494 = vunpack.c.l.b16 %v7947
    %v8495 = vunpack.c.h.b16 %v7947
    %v8496 = vunpack.c.l.b16 %v7948
    %v8497 = vunpack.c.h.b16 %v7948
    %v8498 = vunpack.c.l.b16 %v7949
    %v8499 = vunpack.c.h.b16 %v7949
    %v8500 = vunpack.c.l.b16 %v7950
    %v8501 = vunpack.c.h.b16 %v7950
    %v8502 = vunpack.c.l.b16 %v7951
    %v8503 = vunpack.c.h.b16 %v7951
    %v8504 = vunpack.c.l.b16 %v7952
    %v8505 = vunpack.c.h.b16 %v7952
    %v8506 = vunpack.c.l.b16 %v7953
    %v8507 = vunpack.c.h.b16 %v7953
    %v8508 = vunpack.c.l.b16 %v7954
    %v8509 = vunpack.c.h.b16 %v7954
    %v8510 = vunpack.c.l.b16 %v7955
    %v8511 = vunpack.c.h.b16 %v7955
    %v8512 = vunpack.c.l.b16 %v7956
    %v8513 = vunpack.c.h.b16 %v7956
    %v8514 = vunpack.c.l.b16 %v7957
    %v8515 = vunpack.c.h.b16 %v7957
    %v8516 = vunpack.c.l.b16 %v7958
    %v8517 = vunpack.c.h.b16 %v7958
    %v8518 = vunpack.c.l.b16 %v7959
    %v8519 = vunpack.c.h.b16 %v7959
    %v8520 = vunpack.c.l.b16 %v7960
    %v8521 = vunpack.c.h.b16 %v7960
    %v8522 = vunpack.c.l.b16 %v7961
    %v8523 = vunpack.c.h.b16 %v7961
    %v8524 = vunpack.c.l.b16 %v7962
    %v8525 = vunpack.c.h.b16 %v7962
    %v8526 = vunpack.c.l.b16 %v7963
    %v8527 = vunpack.c.h.b16 %v7963
    %v8528 = vunpack.c.l.b16 %v7964
    %v8529 = vunpack.c.h.b16 %v7964
    %v8530 = vunpack.c.l.b16 %v7965
    %v8531 = vunpack.c.h.b16 %v7965
    %v8532 = vunpack.c.l.b16 %v7966
    %v8533 = vunpack.c.h.b16 %v7966
    %v8534 = vunpack.c.l.b16 %v7967
    %v8535 = vunpack.c.h.b16 %v7967
    %v8536 = vunpack.c.l.b16 %v7968
    %v8537 = vunpack.c.h.b16 %v7968
    %v8538 = vunpack.c.l.b16 %v7969
    %v8539 = vunpack.c.h.b16 %v7969
    %v8540 = vunpack.c.l.b16 %v7970
    %v8541 = vunpack.c.h.b16 %v7970
    %v8542 = vunpack.c.l.b16 %v7971
    %v8543 = vunpack.c.h.b16 %v7971
    %v8544 = vunpack.c.l.b16 %v7972
    %v8545 = vunpack.c.h.b16 %v7972
    %v8546 = vunpack.c.l.b16 %v7973
    %v8547 = vunpack.c.h.b16 %v7973
    %v8548 = vunpack.c.l.b16 %v7974
    %v8549 = vunpack.c.h.b16 %v7974
    %v8550 = vunpack.c.l.b16 %v7975
    %v8551 = vunpack.c.h.b16 %v7975
    %v8552 = vunpack.c.l.b16 %v7976
    %v8553 = vunpack.c.h.b16 %v7976
    %v8554 = vunpack.c.l.b16 %v7977
    %v8555 = vunpack.c.h.b16 %v7977
    %v8556 = vunpack.c.l.b16 %v7978
    %v8557 = vunpack.c.h.b16 %v7978
    %v8558 = vunpack.c.l.b16 %v7979
    %v8559 = vunpack.c.h.b16 %v7979
    %v8560 = vunpack.c.l.b16 %v7980
    %v8561 = vunpack.c.h.b16 %v7980
    %v8562 = vunpack.c.l.b16 %v7981
    %v8563 = vunpack.c.h.b16 %v7981
    %v8564 = vunpack.c.l.b16 %v7982
    %v8565 = vunpack.c.h.b16 %v7982
    %v8566 = vunpack.c.l.b16 %v7983
    %v8567 = vunpack.c.h.b16 %v7983
    %v8568 = vunpack.c.l.b16 %v7984
    %v8569 = vunpack.c.h.b16 %v7984
    %v8570 = vunpack.c.l.b16 %v7985
    %v8571 = vunpack.c.h.b16 %v7985
    %v8572 = vunpack.c.l.b16 %v7986
    %v8573 = vunpack.c.h.b16 %v7986
    %v8574 = vunpack.c.l.b16 %v7987
    %v8575 = vunpack.c.h.b16 %v7987
    %v8576 = vunpack.c.l.b16 %v7988
    %v8577 = vunpack.c.h.b16 %v7988
    %v8578 = vunpack.c.l.b16 %v7989
    %v8579 = vunpack.c.h.b16 %v7989
    %v8580 = vunpack.c.l.b16 %v7990
    %v8581 = vunpack.c.h.b16 %v7990
    %v8582 = vunpack.c.l.b16 %v7991
    %v8583 = vunpack.c.h.b16 %v7991
    %v8584 = vunpack.c.l.b16 %v7992
    %v8585 = vunpack.c.h.b16 %v7992
    %v8586 = vunpack.c.l.b16 %v7993
    %v8587 = vunpack.c.h.b16 %v7993
    %v8588 = vunpack.c.l.b16 %v7994
    %v8589 = vunpack.c.h.b16 %v7994
    %v8590 = vunpack.c.l.b16 %v7995
    %v8591 = vunpack.c.h.b16 %v7995
    %v8592 = vunpack.c.l.b16 %v7996
    %v8593 = vunpack.c.h.b16 %v7996
    %v8594 = vunpack.c.l.b16 %v7997
    %v8595 = vunpack.c.h.b16 %v7997
    %v8596 = vunpack.c.l.b16 %v7998
    %v8597 = vunpack.c.h.b16 %v7998
    %v8598 = vunpack.c.l.b16 %v7999
    %v8599 = vunpack.c.h.b16 %v7999
    %v8600 = vunpack.c.l.b16 %v8000
    %v8601 = vunpack.c.h.b16 %v8000
    %v8602 = vunpack.c.l.b16 %v8001
    %v8603 = vunpack.c.h.b16 %v8001
    %v8604 = vunpack.c.l.b16 %v8002
    %v8605 = vunpack.c.h.b16 %v8002
    %v8606 = vunpack.c.l.b16 %v8003
    %v8607 = vunpack.c.h.b16 %v8003
    %v8608 = vunpack.c.l.b16 %v8004
    %v8609 = vunpack.c.h.b16 %v8004
    %v8610 = vunpack.c.l.b16 %v8005
    %v8611 = vunpack.c.h.b16 %v8005
    %v8612 = vunpack.c.l.b16 %v8006
    %v8613 = vunpack.c.h.b16 %v8006
    %v8614 = vunpack.c.l.b16 %v8007
    %v8615 = vunpack.c.h.b16 %v8007
    %v8616 = vunpack.c.l.b16 %v8008
    %v8617 = vunpack.c.h.b16 %v8008
    %v8618 = vunpack.c.l.b16 %v8009
    %v8619 = vunpack.c.h.b16 %v8009
    %v8620 = vunpack.c.l.b16 %v8010
    %v8621 = vunpack.c.h.b16 %v8010
    %v8622 = vunpack.c.l.b16 %v8011
    %v8623 = vunpack.c.h.b16 %v8011
    %v8624 = vunpack.c.l.b16 %v8012
    %v8625 = vunpack.c.h.b16 %v8012
    %v8626 = vunpack.c.l.b16 %v8013
    %v8627 = vunpack.c.h.b16 %v8013
    %v8628 = vunpack.c.l.b16 %v8014
    %v8629 = vunpack.c.h.b16 %v8014
    %v8630 = vunpack.c.l.b16 %v8015
    %v8631 = vunpack.c.h.b16 %v8015
    %v8632 = vunpack.c.l.b16 %v8016
    %v8633 = vunpack.c.h.b16 %v8016
    %v8634 = vunpack.c.l.b16 %v8017
    %v8635 = vunpack.c.h.b16 %v8017
    %v8636 = vunpack.c.l.b16 %v8018
    %v8637 = vunpack.c.h.b16 %v8018
    %v8638 = vunpack.c.l.b16 %v8019
    %v8639 = vunpack.c.h.b16 %v8019
    %v8640 = vunpack.c.l.b16 %v8020
    %v8641 = vunpack.c.h.b16 %v8020
    %v8642 = vunpack.c.l.b16 %v8021
    %v8643 = vunpack.c.h.b16 %v8021
    %v8644 = vunpack.c.l.b16 %v8022
    %v8645 = vunpack.c.h.b16 %v8022
    %v8646 = vunpack.c.l.b16 %v8023
    %v8647 = vunpack.c.h.b16 %v8023
    %v8648 = vunpack.c.l.b16 %v8024
    %v8649 = vunpack.c.h.b16 %v8024
    %v8650 = vunpack.c.l.b16 %v8025
    %v8651 = vunpack.c.h.b16 %v8025
    %v8652 = vunpack.c.l.b16 %v8026
    %v8653 = vunpack.c.h.b16 %v8026
    %v8654 = vunpack.c.l.b16 %v8027
    %v8655 = vunpack.c.h.b16 %v8027
    %v8656 = vunpack.c.l.b16 %v8028
    %v8657 = vunpack.c.h.b16 %v8028
    %v8658 = vunpack.c.l.b16 %v8029
    %v8659 = vunpack.c.h.b16 %v8029
    %v8660 = vunpack.c.l.b16 %v8030
    %v8661 = vunpack.c.h.b16 %v8030
    %v8662 = vunpack.c.l.b16 %v8031
    %v8663 = vunpack.c.h.b16 %v8031
    %v8664 = vunpack.c.l.b16 %v8032
    %v8665 = vunpack.c.h.b16 %v8032
    %v8666 = vunpack.c.l.b16 %v8033
    %v8667 = vunpack.c.h.b16 %v8033
    %v8668 = vunpack.c.l.b16 %v8034
    %v8669 = vunpack.c.h.b16 %v8034
    %v8670 = vunpack.c.l.b16 %v8035
    %v8671 = vunpack.c.h.b16 %v8035
    %v8672 = vunpack.c.l.b16 %v8036
    %v8673 = vunpack.c.h.b16 %v8036
    %v8674 = vunpack.c.l.b16 %v8037
    %v8675 = vunpack.c.h.b16 %v8037
    %v8676 = vunpack.c.l.b16 %v8038
    %v8677 = vunpack.c.h.b16 %v8038
    %v8678 = vunpack.c.l.b16 %v8039
    %v8679 = vunpack.c.h.b16 %v8039
    %v8680 = vunpack.c.l.b16 %v8040
    %v8681 = vunpack.c.h.b16 %v8040
    %v8682 = vunpack.c.l.b16 %v8041
    %v8683 = vunpack.c.h.b16 %v8041
    %v8684 = vunpack.c.l.b16 %v8042
    %v8685 = vunpack.c.h.b16 %v8042
    %v8686 = vunpack.c.l.b16 %v8043
    %v8687 = vunpack.c.h.b16 %v8043
    %v8688 = vunpack.c.l.b16 %v8044
    %v8689 = vunpack.c.h.b16 %v8044
    %v8690 = vunpack.c.l.b16 %v8045
    %v8691 = vunpack.c.h.b16 %v8045
    %v8692 = vunpack.c.l.b16 %v8046
    %v8693 = vunpack.c.h.b16 %v8046
    %v8694 = vunpack.c.l.b16 %v8047
    %v8695 = vunpack.c.h.b16 %v8047
    %v8696 = vunpack.c.l.b16 %v8048
    %v8697 = vunpack.c.h.b16 %v8048
    %v8698 = vunpack.c.l.b16 %v8049
    %v8699 = vunpack.c.h.b16 %v8049
    %v8700 = vunpack.c.l.b16 %v8050
    %v8701 = vunpack.c.h.b16 %v8050
    %v8702 = vunpack.c.l.b16 %v8051
    %v8703 = vunpack.c.h.b16 %v8051
    %v8704 = vunpack.c.l.b16 %v8052
    %v8705 = vunpack.c.h.b16 %v8052
    %v8706 = vunpack.c.l.b16 %v8053
    %v8707 = vunpack.c.h.b16 %v8053
    %v8708 = vunpack.c.l.b16 %v8054
    %v8709 = vunpack.c.h.b16 %v8054
    %v8710 = vunpack.c.l.b16 %v8055
    %v8711 = vunpack.c.h.b16 %v8055
    %v8712 = vunpack.c.l.b16 %v8056
    %v8713 = vunpack.c.h.b16 %v8056
    %v8714 = vunpack.c.l.b16 %v8057
    %v8715 = vunpack.c.h.b16 %v8057
    %v8716 = vunpack.c.l.b16 %v8058
    %v8717 = vunpack.c.h.b16 %v8058
    %v8718 = vunpack.c.l.b16 %v8059
    %v8719 = vunpack.c.h.b16 %v8059
    %v8720 = vunpack.c.l.b16 %v8060
    %v8721 = vunpack.c.h.b16 %v8060
    %v8722 = vunpack.c.l.b16 %v8061
    %v8723 = vunpack.c.h.b16 %v8061
    %v8724 = vunpack.c.l.b16 %v8062
    %v8725 = vunpack.c.h.b16 %v8062
    %v8726 = vunpack.c.l.b16 %v8063
    %v8727 = vunpack.c.h.b16 %v8063
    %v8728 = vunpack.c.l.b16 %v8064
    %v8729 = vunpack.c.h.b16 %v8064
    %v8730 = vunpack.c.l.b16 %v8065
    %v8731 = vunpack.c.h.b16 %v8065
    %v8732 = vunpack.c.l.b16 %v8066
    %v8733 = vunpack.c.h.b16 %v8066
    %v8734 = vunpack.c.l.b16 %v8067
    %v8735 = vunpack.c.h.b16 %v8067
    %v8736 = vunpack.c.l.b16 %v8068
    %v8737 = vunpack.c.h.b16 %v8068
    %v8738 = vunpack.c.l.b16 %v8069
    %v8739 = vunpack.c.h.b16 %v8069
    %v8740 = vunpack.c.l.b16 %v8070
    %v8741 = vunpack.c.h.b16 %v8070
    %v8742 = vunpack.c.l.b16 %v8071
    %v8743 = vunpack.c.h.b16 %v8071
    %v8744 = vunpack.c.l.b16 %v8072
    %v8745 = vunpack.c.h.b16 %v8072
    %v8746 = vunpack.c.l.b16 %v8073
    %v8747 = vunpack.c.h.b16 %v8073
    %v8748 = vunpack.c.l.b16 %v8074
    %v8749 = vunpack.c.h.b16 %v8074
    %v8750 = vunpack.c.l.b16 %v8075
    %v8751 = vunpack.c.h.b16 %v8075
    %v8752 = vunpack.c.l.b16 %v8076
    %v8753 = vunpack.c.h.b16 %v8076
    %v8754 = vunpack.c.l.b16 %v8077
    %v8755 = vunpack.c.h.b16 %v8077
    %v8756 = vunpack.c.l.b16 %v8078
    %v8757 = vunpack.c.h.b16 %v8078
    %v8758 = vunpack.c.l.b16 %v8079
    %v8759 = vunpack.c.h.b16 %v8079
    %v8760 = vunpack.c.l.b16 %v8080
    %v8761 = vunpack.c.h.b16 %v8080
    %v8762 = vunpack.c.l.b16 %v8081
    %v8763 = vunpack.c.h.b16 %v8081
    %v8764 = vunpack.c.l.b16 %v8082
    %v8765 = vunpack.c.h.b16 %v8082
    %v8766 = vunpack.c.l.b16 %v8083
    %v8767 = vunpack.c.h.b16 %v8083
    %v8768 = vunpack.c.l.b16 %v8084
    %v8769 = vunpack.c.h.b16 %v8084
    %v8770 = vunpack.c.l.b16 %v8085
    %v8771 = vunpack.c.h.b16 %v8085
    %v8772 = vunpack.c.l.b16 %v8086
    %v8773 = vunpack.c.h.b16 %v8086
    %v8774 = vunpack.c.l.b16 %v8087
    %v8775 = vunpack.c.h.b16 %v8087
    %v8776 = vunpack.c.l.b16 %v8088
    %v8777 = vunpack.c.h.b16 %v8088
    %v8778 = vunpack.c.l.b16 %v8089
    %v8779 = vunpack.c.h.b16 %v8089
    %v8780 = vunpack.c.l.b16 %v8090
    %v8781 = vunpack.c.h.b16 %v8090
    %v8782 = vunpack.c.l.b16 %v8091
    %v8783 = vunpack.c.h.b16 %v8091
    %v8784 = vunpack.c.l.b16 %v8092
    %v8785 = vunpack.c.h.b16 %v8092
    %v8786 = vunpack.c.l.b16 %v8093
    %v8787 = vunpack.c.h.b16 %v8093
    %v8788 = vunpack.c.l.b16 %v8094
    %v8789 = vunpack.c.h.b16 %v8094
    %v8790 = vunpack.c.l.b16 %v8095
    %v8791 = vunpack.c.h.b16 %v8095
    %v8792 = vunpack.c.l.b16 %v8096
    %v8793 = vunpack.c.h.b16 %v8096
    %v8794 = vunpack.c.l.b16 %v8097
    %v8795 = vunpack.c.h.b16 %v8097
    %v8796 = vunpack.c.l.b16 %v8098
    %v8797 = vunpack.c.h.b16 %v8098
    %v8798 = vunpack.c.l.b16 %v8099
    %v8799 = vunpack.c.h.b16 %v8099
    %v8800 = vunpack.c.l.b16 %v8100
    %v8801 = vunpack.c.h.b16 %v8100
    %v8802 = vunpack.c.l.b16 %v8101
    %v8803 = vunpack.c.h.b16 %v8101
    %v8804 = vunpack.c.l.b16 %v8102
    %v8805 = vunpack.c.h.b16 %v8102
    %v8806 = vunpack.c.l.b16 %v8103
    %v8807 = vunpack.c.h.b16 %v8103
    %v8808 = vunpack.c.l.b16 %v8104
    %v8809 = vunpack.c.h.b16 %v8104
    %v8810 = vunpack.c.l.b16 %v8105
    %v8811 = vunpack.c.h.b16 %v8105
    %v8812 = vunpack.c.l.b16 %v8106
    %v8813 = vunpack.c.h.b16 %v8106
    %v8814 = vunpack.c.l.b16 %v8107
    %v8815 = vunpack.c.h.b16 %v8107
    %v8816 = vunpack.c.l.b16 %v8108
    %v8817 = vunpack.c.h.b16 %v8108
    %v8818 = vunpack.c.l.b16 %v8109
    %v8819 = vunpack.c.h.b16 %v8109
    %v8820 = vunpack.c.l.b16 %v8110
    %v8821 = vunpack.c.h.b16 %v8110
    %v8822 = vunpack.c.l.b16 %v8111
    %v8823 = vunpack.c.h.b16 %v8111
    %v8824 = vunpack.c.l.b16 %v8112
    %v8825 = vunpack.c.h.b16 %v8112
    %v8826 = vunpack.c.l.b16 %v8113
    %v8827 = vunpack.c.h.b16 %v8113
    %v8828 = vunpack.c.l.b16 %v8114
    %v8829 = vunpack.c.h.b16 %v8114
    %v8830 = vunpack.c.l.b16 %v8115
    %v8831 = vunpack.c.h.b16 %v8115
    %v8832 = vunpack.c.l.b16 %v8116
    %v8833 = vunpack.c.h.b16 %v8116
    %v8834 = vunpack.c.l.b16 %v8117
    %v8835 = vunpack.c.h.b16 %v8117
    %v8836 = vunpack.c.l.b16 %v8118
    %v8837 = vunpack.c.h.b16 %v8118
    %v8838 = vunpack.c.l.b16 %v8119
    %v8839 = vunpack.c.h.b16 %v8119
    %v8840 = vunpack.c.l.b16 %v8120
    %v8841 = vunpack.c.h.b16 %v8120
    %v8842 = vunpack.c.l.b16 %v8121
    %v8843 = vunpack.c.h.b16 %v8121
    %v8844 = vunpack.c.l.b16 %v8122
    %v8845 = vunpack.c.h.b16 %v8122
    %v8846 = vunpack.c.l.b16 %v8123
    %v8847 = vunpack.c.h.b16 %v8123
    %v8848 = vunpack.c.l.b16 %v8124
    %v8849 = vunpack.c.h.b16 %v8124
    %v8850 = vunpack.c.l.b16 %v8125
    %v8851 = vunpack.c.h.b16 %v8125
    %v8852 = vunpack.c.l.b16 %v8126
    %v8853 = vunpack.c.h.b16 %v8126
    %v8854 = vunpack.c.l.b16 %v8127
    %v8855 = vunpack.c.h.b16 %v8127
    %v8856 = vunpack.c.l.b16 %v8128
    %v8857 = vunpack.c.h.b16 %v8128
    %v8858 = vunpack.c.l.b16 %v8129
    %v8859 = vunpack.c.h.b16 %v8129
    %v8860 = vunpack.c.l.b16 %v8130
    %v8861 = vunpack.c.h.b16 %v8130
    %v8862 = vunpack.c.l.b16 %v8131
    %v8863 = vunpack.c.h.b16 %v8131
    %v8864 = vunpack.c.l.b16 %v8132
    %v8865 = vunpack.c.h.b16 %v8132
    %v8866 = vunpack.c.l.b16 %v8133
    %v8867 = vunpack.c.h.b16 %v8133
    %v8868 = vunpack.c.l.b16 %v8134
    %v8869 = vunpack.c.h.b16 %v8134
    %v8870 = vunpack.c.l.b16 %v8135
    %v8871 = vunpack.c.h.b16 %v8135
    %v8872 = vunpack.c.l.b16 %v8136
    %v8873 = vunpack.c.h.b16 %v8136
    %v8874 = vunpack.c.l.b16 %v8137
    %v8875 = vunpack.c.h.b16 %v8137
    %v8876 = vunpack.c.l.b16 %v8138
    %v8877 = vunpack.c.h.b16 %v8138
    %v8878 = vunpack.c.l.b16 %v8139
    %v8879 = vunpack.c.h.b16 %v8139
    %v8880 = vunpack.c.l.b16 %v8140
    %v8881 = vunpack.c.h.b16 %v8140
    %v8882 = vunpack.c.l.b16 %v8141
    %v8883 = vunpack.c.h.b16 %v8141
    %v8884 = vunpack.c.l.b16 %v8142
    %v8885 = vunpack.c.h.b16 %v8142
    %v8886 = vunpack.c.l.b16 %v8143
    %v8887 = vunpack.c.h.b16 %v8143
    %v8888 = vunpack.c.l.b16 %v8144
    %v8889 = vunpack.c.h.b16 %v8144
    %v8890 = vunpack.c.l.b16 %v8145
    %v8891 = vunpack.c.h.b16 %v8145
    %v8892 = vunpack.c.l.b16 %v8146
    %v8893 = vunpack.c.h.b16 %v8146
    %v8894 = vunpack.c.l.b16 %v8147
    %v8895 = vunpack.c.h.b16 %v8147
    %v8896 = vunpack.c.l.b16 %v8148
    %v8897 = vunpack.c.h.b16 %v8148
    %v8898 = vunpack.c.l.b16 %v8149
    %v8899 = vunpack.c.h.b16 %v8149
    %v8900 = vunpack.c.l.b16 %v8150
    %v8901 = vunpack.c.h.b16 %v8150
    %v8902 = vunpack.c.l.b16 %v8151
    %v8903 = vunpack.c.h.b16 %v8151
    %v8904 = vunpack.c.l.b16 %v8152
    %v8905 = vunpack.c.h.b16 %v8152
    %v8906 = vunpack.c.l.b16 %v8153
    %v8907 = vunpack.c.h.b16 %v8153
    %v8908 = vunpack.c.l.b16 %v8154
    %v8909 = vunpack.c.h.b16 %v8154
    %v8910 = vunpack.c.l.b16 %v8155
    %v8911 = vunpack.c.h.b16 %v8155
    %v8912 = vunpack.c.l.b16 %v8156
    %v8913 = vunpack.c.h.b16 %v8156
    %v8914 = vunpack.c.l.b16 %v8157
    %v8915 = vunpack.c.h.b16 %v8157
    %v8916 = vunpack.c.l.b16 %v8158
    %v8917 = vunpack.c.h.b16 %v8158
    %v8918 = vunpack.c.l.b16 %v8159
    %v8919 = vunpack.c.h.b16 %v8159
    %v8920 = vunpack.c.l.b16 %v8160
    %v8921 = vunpack.c.h.b16 %v8160
    %v8922 = vunpack.c.l.b16 %v8161
    %v8923 = vunpack.c.h.b16 %v8161
    %v8924 = vunpack.c.l.b16 %v8162
    %v8925 = vunpack.c.h.b16 %v8162
    %v8926 = vunpack.c.l.b16 %v8163
    %v8927 = vunpack.c.h.b16 %v8163
    %v8928 = vunpack.c.l.b16 %v8164
    %v8929 = vunpack.c.h.b16 %v8164
    %v8930 = vunpack.c.l.b16 %v8165
    %v8931 = vunpack.c.h.b16 %v8165
    %v8932 = vunpack.c.l.b16 %v8166
    %v8933 = vunpack.c.h.b16 %v8166
    %v8934 = vunpack.c.l.b16 %v8167
    %v8935 = vunpack.c.h.b16 %v8167
    %v8936 = vunpack.c.l.b16 %v8168
    %v8937 = vunpack.c.h.b16 %v8168
    %v8938 = vunpack.c.l.b16 %v8169
    %v8939 = vunpack.c.h.b16 %v8169
    %v8940 = vunpack.c.l.b16 %v8170
    %v8941 = vunpack.c.h.b16 %v8170
    %v8942 = vunpack.c.l.b16 %v8171
    %v8943 = vunpack.c.h.b16 %v8171
    %v8944 = vunpack.c.l.b16 %v8172
    %v8945 = vunpack.c.h.b16 %v8172
    %v8946 = vunpack.c.l.b16 %v8173
    %v8947 = vunpack.c.h.b16 %v8173
    %v8948 = vunpack.c.l.b16 %v8174
    %v8949 = vunpack.c.h.b16 %v8174
    %v8950 = vunpack.c.l.b16 %v8175
    %v8951 = vunpack.c.h.b16 %v8175
    %v8952 = vunpack.c.l.b16 %v8176
    %v8953 = vunpack.c.h.b16 %v8176
    %v8954 = vunpack.c.l.b16 %v8177
    %v8955 = vunpack.c.h.b16 %v8177
    %v8956 = vunpack.c.l.b16 %v8178
    %v8957 = vunpack.c.h.b16 %v8178
    %v8958 = vunpack.c.l.b16 %v8179
    %v8959 = vunpack.c.h.b16 %v8179
    %v8960 = vunpack.c.l.b16 %v8180
    %v8961 = vunpack.c.h.b16 %v8180
    %v8962 = vunpack.c.l.b16 %v8181
    %v8963 = vunpack.c.h.b16 %v8181
    %v8964 = vunpack.c.l.b16 %v8182
    %v8965 = vunpack.c.h.b16 %v8182
    %v8966 = vunpack.c.l.b16 %v8183
    %v8967 = vunpack.c.h.b16 %v8183
    %v8968 = vunpack.c.l.b16 %v8184
    %v8969 = vunpack.c.h.b16 %v8184
    %v8970 = vunpack.c.l.b16 %v8185
    %v8971 = vunpack.c.h.b16 %v8185
    %v8972 = vunpack.c.l.b16 %v8186
    %v8973 = vunpack.c.h.b16 %v8186
    %v8974 = vunpack.c.l.b16 %v8187
    %v8975 = vunpack.c.h.b16 %v8187
    %v8976 = vunpack.c.l.b16 %v8188
    %v8977 = vunpack.c.h.b16 %v8188
    %v8978 = vunpack.c.l.b16 %v8189
    %v8979 = vunpack.c.h.b16 %v8189
    %v8980 = vpack.c.b16 %v8472, %v8468
    %v8981 = vpack.c.b16 %v8473, %v8469
    %v8982 = vpack.c.b16 %v8474, %v8470
    %v8983 = vpack.c.b16 %v8475, %v8471
    %v8984 = vpack.c.b16 %v8480, %v8476
    %v8985 = vpack.c.b16 %v8481, %v8477
    %v8986 = vpack.c.b16 %v8482, %v8478
    %v8987 = vpack.c.b16 %v8483, %v8479
    %v8988 = vpack.c.b16 %v8488, %v8484
    %v8989 = vpack.c.b16 %v8489, %v8485
    %v8990 = vpack.c.b16 %v8490, %v8486
    %v8991 = vpack.c.b16 %v8491, %v8487
    %v8992 = vpack.c.b16 %v8496, %v8492
    %v8993 = vpack.c.b16 %v8497, %v8493
    %v8994 = vpack.c.b16 %v8498, %v8494
    %v8995 = vpack.c.b16 %v8499, %v8495
    %v8996 = vpack.c.b16 %v8504, %v8500
    %v8997 = vpack.c.b16 %v8505, %v8501
    %v8998 = vpack.c.b16 %v8506, %v8502
    %v8999 = vpack.c.b16 %v8507, %v8503
    %v9000 = vpack.c.b16 %v8512, %v8508
    %v9001 = vpack.c.b16 %v8513, %v8509
    %v9002 = vpack.c.b16 %v8514, %v8510
    %v9003 = vpack.c.b16 %v8515, %v8511
    %v9004 = vpack.c.b16 %v8520, %v8516
    %v9005 = vpack.c.b16 %v8521, %v8517
    %v9006 = vpack.c.b16 %v8522, %v8518
    %v9007 = vpack.c.b16 %v8523, %v8519
    %v9008 = vpack.c.b16 %v8528, %v8524
    %v9009 = vpack.c.b16 %v8529, %v8525
    %v9010 = vpack.c.b16 %v8530, %v8526
    %v9011 = vpack.c.b16 %v8531, %v8527
    %v9012 = vpack.c.b16 %v8536, %v8532
    %v9013 = vpack.c.b16 %v8537, %v8533
    %v9014 = vpack.c.b16 %v8538, %v8534
    %v9015 = vpack.c.b16 %v8539, %v8535
    %v9016 = vpack.c.b16 %v8544, %v8540
    %v9017 = vpack.c.b16 %v8545, %v8541
    %v9018 = vpack.c.b16 %v8546, %v8542
    %v9019 = vpack.c.b16 %v8547, %v8543
    %v9020 = vpack.c.b16 %v8552, %v8548
    %v9021 = vpack.c.b16 %v8553, %v8549
    %v9022 = vpack.c.b16 %v8554, %v8550
    %v9023 = vpack.c.b16 %v8555, %v8551
    %v9024 = vpack.c.b16 %v8560, %v8556
    %v9025 = vpack.c.b16 %v8561, %v8557
    %v9026 = vpack.c.b16 %v8562, %v8558
    %v9027 = vpack.c.b16 %v8563, %v8559
    %v9028 = vpack.c.b16 %v8568, %v8564
    %v9029 = vpack.c.b16 %v8569, %v8565
    %v9030 = vpack.c.b16 %v8570, %v8566
    %v9031 = vpack.c.b16 %v8571, %v8567
    %v9032 = vpack.c.b16 %v8576, %v8572
    %v9033 = vpack.c.b16 %v8577, %v8573
    %v9034 = vpack.c.b16 %v8578, %v8574
    %v9035 = vpack.c.b16 %v8579, %v8575
    %v9036 = vpack.c.b16 %v8584, %v8580
    %v9037 = vpack.c.b16 %v8585, %v8581
    %v9038 = vpack.c.b16 %v8586, %v8582
    %v9039 = vpack.c.b16 %v8587, %v8583
    %v9040 = vpack.c.b16 %v8592, %v8588
    %v9041 = vpack.c.b16 %v8593, %v8589
    %v9042 = vpack.c.b16 %v8594, %v8590
    %v9043 = vpack.c.b16 %v8595, %v8591
    %v9044 = vpack.c.b16 %v8600, %v8596
    %v9045 = vpack.c.b16 %v8601, %v8597
    %v9046 = vpack.c.b16 %v8602, %v8598
    %v9047 = vpack.c.b16 %v8603, %v8599
    %v9048 = vpack.c.b16 %v8608, %v8604
    %v9049 = vpack.c.b16 %v8609, %v8605
    %v9050 = vpack.c.b16 %v8610, %v8606
    %v9051 = vpack.c.b16 %v8611, %v8607
    %v9052 = vpack.c.b16 %v8616, %v8612
    %v9053 = vpack.c.b16 %v8617, %v8613
    %v9054 = vpack.c.b16 %v8618, %v8614
    %v9055 = vpack.c.b16 %v8619, %v8615
    %v9056 = vpack.c.b16 %v8624, %v8620
    %v9057 = vpack.c.b16 %v8625, %v8621
    %v9058 = vpack.c.b16 %v8626, %v8622
    %v9059 = vpack.c.b16 %v8627, %v8623
    %v9060 = vpack.c.b16 %v8632, %v8628
    %v9061 = vpack.c.b16 %v8633, %v8629
    %v9062 = vpack.c.b16 %v8634, %v8630
    %v9063 = vpack.c.b16 %v8635, %v8631
    %v9064 = vpack.c.b16 %v8640, %v8636
    %v9065 = vpack.c.b16 %v8641, %v8637
    %v9066 = vpack.c.b16 %v8642, %v8638
    %v9067 = vpack.c.b16 %v8643, %v8639
    %v9068 = vpack.c.b16 %v8648, %v8644
    %v9069 = vpack.c.b16 %v8649, %v8645
    %v9070 = vpack.c.b16 %v8650, %v8646
    %v9071 = vpack.c.b16 %v8651, %v8647
    %v9072 = vpack.c.b16 %v8656, %v8652
    %v9073 = vpack.c.b16 %v8657, %v8653
    %v9074 = vpack.c.b16 %v8658, %v8654
    %v9075 = vpack.c.b16 %v8659, %v8655
    %v9076 = vpack.c.b16 %v8664, %v8660
    %v9077 = vpack.c.b16 %v8665, %v8661
    %v9078 = vpack.c.b16 %v8666, %v8662
    %v9079 = vpack.c.b16 %v8667, %v8663
    %v9080 = vpack.c.b16 %v8672, %v8668
    %v9081 = vpack.c.b16 %v8673, %v8669
    %v9082 = vpack.c.b16 %v8674, %v8670
    %v9083 = vpack.c.b16 %v8675, %v8671
    %v9084 = vpack.c.b16 %v8680, %v8676
    %v9085 = vpack.c.b16 %v8681, %v8677
    %v9086 = vpack.c.b16 %v8682, %v8678
    %v9087 = vpack.c.b16 %v8683, %v8679
    %v9088 = vpack.c.b16 %v8688, %v8684
    %v9089 = vpack.c.b16 %v8689, %v8685
    %v9090 = vpack.c.b16 %v8690, %v8686
    %v9091 = vpack.c.b16 %v8691, %v8687
    %v9092 = vpack.c.b16 %v8696, %v8692
    %v9093 = vpack.c.b16 %v8697, %v8693
    %v9094 = vpack.c.b16 %v8698, %v8694
    %v9095 = vpack.c.b16 %v8699, %v8695
    %v9096 = vpack.c.b16 %v8704, %v8700
    %v9097 = vpack.c.b16 %v8705, %v8701
    %v9098 = vpack.c.b16 %v8706, %v8702
    %v9099 = vpack.c.b16 %v8707, %v8703
    %v9100 = vpack.c.b16 %v8712, %v8708
    %v9101 = vpack.c.b16 %v8713, %v8709
    %v9102 = vpack.c.b16 %v8714, %v8710
    %v9103 = vpack.c.b16 %v8715, %v8711
    %v9104 = vpack.c.b16 %v8720, %v8716
    %v9105 = vpack.c.b16 %v8721, %v8717
    %v9106 = vpack.c.b16 %v8722, %v8718
    %v9107 = vpack.c.b16 %v8723, %v8719
    %v9108 = vpack.c.b16 %v8728, %v8724
    %v9109 = vpack.c.b16 %v8729, %v8725
    %v9110 = vpack.c.b16 %v8730, %v8726
    %v9111 = vpack.c.b16 %v8731, %v8727
    %v9112 = vpack.c.b16 %v8736, %v8732
    %v9113 = vpack.c.b16 %v8737, %v8733
    %v9114 = vpack.c.b16 %v8738, %v8734
    %v9115 = vpack.c.b16 %v8739, %v8735
    %v9116 = vpack.c.b16 %v8744, %v8740
    %v9117 = vpack.c.b16 %v8745, %v8741
    %v9118 = vpack.c.b16 %v8746, %v8742
    %v9119 = vpack.c.b16 %v8747, %v8743
    %v9120 = vpack.c.b16 %v8752, %v8748
    %v9121 = vpack.c.b16 %v8753, %v8749
    %v9122 = vpack.c.b16 %v8754, %v8750
    %v9123 = vpack.c.b16 %v8755, %v8751
    %v9124 = vpack.c.b16 %v8760, %v8756
    %v9125 = vpack.c.b16 %v8761, %v8757
    %v9126 = vpack.c.b16 %v8762, %v8758
    %v9127 = vpack.c.b16 %v8763, %v8759
    %v9128 = vpack.c.b16 %v8768, %v8764
    %v9129 = vpack.c.b16 %v8769, %v8765
    %v9130 = vpack.c.b16 %v8770, %v8766
    %v9131 = vpack.c.b16 %v8771, %v8767
    %v9132 = vpack.c.b16 %v8776, %v8772
    %v9133 = vpack.c.b16 %v8777, %v8773
    %v9134 = vpack.c.b16 %v8778, %v8774
    %v9135 = vpack.c.b16 %v8779, %v8775
    %v9136 = vpack.c.b16 %v8784, %v8780
    %v9137 = vpack.c.b16 %v8785, %v8781
    %v9138 = vpack.c.b16 %v8786, %v8782
    %v9139 = vpack.c.b16 %v8787, %v8783
    %v9140 = vpack.c.b16 %v8792, %v8788
    %v9141 = vpack.c.b16 %v8793, %v8789
    %v9142 = vpack.c.b16 %v8794, %v8790
    %v9143 = vpack.c.b16 %v8795, %v8791
    %v9144 = vpack.c.b16 %v8800, %v8796
    %v9145 = vpack.c.b16 %v8801, %v8797
    %v9146 = vpack.c.b16 %v8802, %v8798
    %v9147 = vpack.c.b16 %v8803, %v8799
    %v9148 = vpack.c.b16 %v8808, %v8804
    %v9149 = vpack.c.b16 %v8809, %v8805
    %v9150 = vpack.c.b16 %v8810, %v8806
    %v9151 = vpack.c.b16 %v8811, %v8807
    %v9152 = vpack.c.b16 %v8816, %v8812
    %v9153 = vpack.c.b16 %v8817, %v8813
    %v9154 = vpack.c.b16 %v8818, %v8814
    %v9155 = vpack.c.b16 %v8819, %v8815
    %v9156 = vpack.c.b16 %v8824, %v8820
    %v9157 = vpack.c.b16 %v8825, %v8821
    %v9158 = vpack.c.b16 %v8826, %v8822
    %v9159 = vpack.c.b16 %v8827, %v8823
    %v9160 = vpack.c.b16 %v8832, %v8828
    %v9161 = vpack.c.b16 %v8833, %v8829
    %v9162 = vpack.c.b16 %v8834, %v8830
    %v9163 = vpack.c.b16 %v8835, %v8831
    %v9164 = vpack.c.b16 %v8840, %v8836
    %v9165 = vpack.c.b16 %v8841, %v8837
    %v9166 = vpack.c.b16 %v8842, %v8838
    %v9167 = vpack.c.b16 %v8843, %v8839
    %v9168 = vpack.c.b16 %v8848, %v8844
    %v9169 = vpack.c.b16 %v8849, %v8845
    %v9170 = vpack.c.b16 %v8850, %v8846
    %v9171 = vpack.c.b16 %v8851, %v8847
    %v9172 = vpack.c.b16 %v8856, %v8852
    %v9173 = vpack.c.b16 %v8857, %v8853
    %v9174 = vpack.c.b16 %v8858, %v8854
    %v9175 = vpack.c.b16 %v8859, %v8855
    %v9176 = vpack.c.b16 %v8864, %v8860
    %v9177 = vpack.c.b16 %v8865, %v8861
    %v9178 = vpack.c.b16 %v8866, %v8862
    %v9179 = vpack.c.b16 %v8867, %v8863
    %v9180 = vpack.c.b16 %v8872, %v8868
    %v9181 = vpack.c.b16 %v8873, %v8869
    %v9182 = vpack.c.b16 %v8874, %v8870
    %v9183 = vpack.c.b16 %v8875, %v8871
    %v9184 = vpack.c.b16 %v8880, %v8876
    %v9185 = vpack.c.b16 %v8881, %v8877
    %v9186 = vpack.c.b16 %v8882, %v8878
    %v9187 = vpack.c.b16 %v8883, %v8879
    %v9188 = vpack.c.b16 %v8888, %v8884
    %v9189 = vpack.c.b16 %v8889, %v8885
    %v9190 = vpack.c.b16 %v8890, %v8886
    %v9191 = vpack.c.b16 %v8891, %v8887
    %v9192 = vpack.c.b16 %v8896, %v8892
    %v9193 = vpack.c.b16 %v8897, %v8893
    %v9194 = vpack.c.b16 %v8898, %v8894
    %v9195 = vpack.c.b16 %v8899, %v8895
    %v9196 = vpack.c.b16 %v8904, %v8900
    %v9197 = vpack.c.b16 %v8905, %v8901
    %v9198 = vpack.c.b16 %v8906, %v8902
    %v9199 = vpack.c.b16 %v8907, %v8903
    %v9200 = vpack.c.b16 %v8912, %v8908
    %v9201 = vpack.c.b16 %v8913, %v8909
    %v9202 = vpack.c.b16 %v8914, %v8910
    %v9203 = vpack.c.b16 %v8915, %v8911
    %v9204 = vpack.c.b16 %v8920, %v8916
    %v9205 = vpack.c.b16 %v8921, %v8917
    %v9206 = vpack.c.b16 %v8922, %v8918
    %v9207 = vpack.c.b16 %v8923, %v8919
    %v9208 = vpack.c.b16 %v8928, %v8924
    %v9209 = vpack.c.b16 %v8929, %v8925
    %v9210 = vpack.c.b16 %v8930, %v8926
    %v9211 = vpack.c.b16 %v8931, %v8927
    %v9212 = vpack.c.b16 %v8936, %v8932
    %v9213 = vpack.c.b16 %v8937, %v8933
    %v9214 = vpack.c.b16 %v8938, %v8934
    %v9215 = vpack.c.b16 %v8939, %v8935
    %v9216 = vpack.c.b16 %v8944, %v8940
    %v9217 = vpack.c.b16 %v8945, %v8941
    %v9218 = vpack.c.b16 %v8946, %v8942
    %v9219 = vpack.c.b16 %v8947, %v8943
    %v9220 = vpack.c.b16 %v8952, %v8948
    %v9221 = vpack.c.b16 %v8953, %v8949
    %v9222 = vpack.c.b16 %v8954, %v8950
    %v9223 = vpack.c.b16 %v8955, %v8951
    %v9224 = vpack.c.b16 %v8960, %v8956
    %v9225 = vpack.c.b16 %v8961, %v8957
    %v9226 = vpack.c.b16 %v8962, %v8958
    %v9227 = vpack.c.b16 %v8963, %v8959
    %v9228 = vpack.c.b16 %v8968, %v8964
    %v9229 = vpack.c.b16 %v8969, %v8965
    %v9230 = vpack.c.b16 %v8970, %v8966
    %v9231 = vpack.c.b16 %v8971, %v8967
    %v9232 = vpack.c.b16 %v8976, %v8972
    %v9233 = vpack.c.b16 %v8977, %v8973
    %v9234 = vpack.c.b16 %v8978, %v8974
    %v9235 = vpack.c.b16 %v8979, %v8975
    %9492 = vmatprep.subr.bf16.mxu0 %v9009
    %9493 = vmatpush1.bf16.msra.mxu0 %v9008
    %9494 = vmatprep.subr.bf16.mxu0 %v9005
    %9495 = vmatpush1.bf16.msra.mxu0 %v9004
    %9496 = vmatprep.subr.bf16.mxu0 %v9001
    %9497 = vmatpush1.bf16.msra.mxu0 %v9000
    %9498 = vmatprep.subr.bf16.mxu0 %v8997
    %9499 = vmatpush1.bf16.msra.mxu0 %v8996
    %9500 = vmatprep.subr.bf16.mxu0 %v8993
    %9501 = vmatpush1.bf16.msra.mxu0 %v8992
    %9502 = vmatprep.subr.bf16.mxu0 %v8989
    %9503 = vmatpush1.bf16.msra.mxu0 %v8988
    %9504 = vmatprep.subr.bf16.mxu0 %v8985
    %9505 = vmatpush1.bf16.msra.mxu0 %v8984
    %9506 = vmatprep.subr.bf16.mxu0 %v8981
    %9507 = vmatpush1.bf16.msra.mxu0 %v8980
    %9508 = vmatprep.subr.bf16.mxu0 %v9041
    %9509 = vmatpush2.bf16.msra.mxu0 %v9040
    %9510 = vmatprep.subr.bf16.mxu0 %v9037
    %9511 = vmatpush2.bf16.msra.mxu0 %v9036
    %9512 = vmatprep.subr.bf16.mxu0 %v9033
    %9513 = vmatpush2.bf16.msra.mxu0 %v9032
    %9514 = vmatprep.subr.bf16.mxu0 %v9029
    %9515 = vmatpush2.bf16.msra.mxu0 %v9028
    %9516 = vmatprep.subr.bf16.mxu0 %v9025
    %9517 = vmatpush2.bf16.msra.mxu0 %v9024
    %9518 = vmatprep.subr.bf16.mxu0 %v9021
    %9519 = vmatpush2.bf16.msra.mxu0 %v9020
    %9520 = vmatprep.subr.bf16.mxu0 %v9017
    %9521 = vmatpush2.bf16.msra.mxu0 %v9016
    %9522 = vmatprep.subr.bf16.mxu0 %v9013
    %9523 = vmatpush2.bf16.msra.mxu0 %v9012
    %9524 = vmatprep.mubr.bf16.mxu0 %v7927
    %9525 = vmatmul.mubr.bf16.gmra.mxu0 %v7926
    %v9526 = vpop.f32.mrf.mxu0
    %v9527 = vadd.f32 %v8195, %v9526
    %v9528 = vpop.f32.mrf.mxu0
    %v9529 = vadd.f32 %v8199, %v9528
    %v9530 = vpop.f32.mrf.mxu0
    %v9531 = vpop.f32.mrf.mxu0
    %9532 = vdwg.mxu0
    %9533 = vmatprep.subr.bf16.mxu0 %v9073
    %9534 = vmatpush1.bf16.msra.mxu0 %v9072
    %9535 = vmatprep.subr.bf16.mxu0 %v9069
    %9536 = vmatpush1.bf16.msra.mxu0 %v9068
    %9537 = vmatprep.subr.bf16.mxu0 %v9065
    %9538 = vmatpush1.bf16.msra.mxu0 %v9064
    %9539 = vmatprep.subr.bf16.mxu0 %v9061
    %9540 = vmatpush1.bf16.msra.mxu0 %v9060
    %9541 = vmatprep.subr.bf16.mxu0 %v9057
    %9542 = vmatpush1.bf16.msra.mxu0 %v9056
    %9543 = vmatprep.subr.bf16.mxu0 %v9053
    %9544 = vmatpush1.bf16.msra.mxu0 %v9052
    %9545 = vmatprep.subr.bf16.mxu0 %v9049
    %9546 = vmatpush1.bf16.msra.mxu0 %v9048
    %9547 = vmatprep.subr.bf16.mxu0 %v9045
    %9548 = vmatpush1.bf16.msra.mxu0 %v9044
    %9549 = vmatprep.subr.bf16.mxu0 %v9105
    %9550 = vmatpush2.bf16.msra.mxu0 %v9104
    %9551 = vmatprep.subr.bf16.mxu0 %v9101
    %9552 = vmatpush2.bf16.msra.mxu0 %v9100
    %9553 = vmatprep.subr.bf16.mxu0 %v9097
    %9554 = vmatpush2.bf16.msra.mxu0 %v9096
    %9555 = vmatprep.subr.bf16.mxu0 %v9093
    %9556 = vmatpush2.bf16.msra.mxu0 %v9092
    %9557 = vmatprep.subr.bf16.mxu0 %v9089
    %9558 = vmatpush2.bf16.msra.mxu0 %v9088
    %9559 = vmatprep.subr.bf16.mxu0 %v9085
    %9560 = vmatpush2.bf16.msra.mxu0 %v9084
    %9561 = vmatprep.subr.bf16.mxu0 %v9081
    %9562 = vmatpush2.bf16.msra.mxu0 %v9080
    %9563 = vmatprep.subr.bf16.mxu0 %v9077
    %9564 = vmatpush2.bf16.msra.mxu0 %v9076
    %9565 = vmatprep.mubr.bf16.mxu0 %v7929
    %9566 = vmatmul.mubr.bf16.gmra.mxu0 %v7928
    %v9567 = vpop.f32.mrf.mxu0
    %v9568 = vadd.f32 %v9527, %v9567
    %v9569 = vpop.f32.mrf.mxu0
    %v9570 = vadd.f32 %v9529, %v9569
    %v9571 = vpop.f32.mrf.mxu0
    %v9572 = vpop.f32.mrf.mxu0
    %9573 = vdwg.mxu0
    %9574 = vmatprep.subr.bf16.mxu0 %v9137
    %9575 = vmatpush1.bf16.msra.mxu0 %v9136
    %9576 = vmatprep.subr.bf16.mxu0 %v9133
    %9577 = vmatpush1.bf16.msra.mxu0 %v9132
    %9578 = vmatprep.subr.bf16.mxu0 %v9129
    %9579 = vmatpush1.bf16.msra.mxu0 %v9128
    %9580 = vmatprep.subr.bf16.mxu0 %v9125
    %9581 = vmatpush1.bf16.msra.mxu0 %v9124
    %9582 = vmatprep.subr.bf16.mxu0 %v9121
    %9583 = vmatpush1.bf16.msra.mxu0 %v9120
    %9584 = vmatprep.subr.bf16.mxu0 %v9117
    %9585 = vmatpush1.bf16.msra.mxu0 %v9116
    %9586 = vmatprep.subr.bf16.mxu0 %v9113
    %9587 = vmatpush1.bf16.msra.mxu0 %v9112
    %9588 = vmatprep.subr.bf16.mxu0 %v9109
    %9589 = vmatpush1.bf16.msra.mxu0 %v9108
    %9590 = vmatprep.subr.bf16.mxu0 %v9169
    %9591 = vmatpush2.bf16.msra.mxu0 %v9168
    %9592 = vmatprep.subr.bf16.mxu0 %v9165
    %9593 = vmatpush2.bf16.msra.mxu0 %v9164
    %9594 = vmatprep.subr.bf16.mxu0 %v9161
    %9595 = vmatpush2.bf16.msra.mxu0 %v9160
    %9596 = vmatprep.subr.bf16.mxu0 %v9157
    %9597 = vmatpush2.bf16.msra.mxu0 %v9156
    %9598 = vmatprep.subr.bf16.mxu0 %v9153
    %9599 = vmatpush2.bf16.msra.mxu0 %v9152
    %9600 = vmatprep.subr.bf16.mxu0 %v9149
    %9601 = vmatpush2.bf16.msra.mxu0 %v9148
    %9602 = vmatprep.subr.bf16.mxu0 %v9145
    %9603 = vmatpush2.bf16.msra.mxu0 %v9144
    %9604 = vmatprep.subr.bf16.mxu0 %v9141
    %9605 = vmatpush2.bf16.msra.mxu0 %v9140
    %9606 = vmatprep.mubr.bf16.mxu0 %v7931
    %9607 = vmatmul.mubr.bf16.gmra.mxu0 %v7930
    %v9608 = vpop.f32.mrf.mxu0
    %v9609 = vadd.f32 %v9568, %v9608
    %v9610 = vpop.f32.mrf.mxu0
    %v9611 = vadd.f32 %v9570, %v9610
    %v9612 = vpop.f32.mrf.mxu0
    %v9613 = vpop.f32.mrf.mxu0
    %9614 = vdwg.mxu0
    %9615 = vmatprep.subr.bf16.mxu0 %v9201
    %9616 = vmatpush1.bf16.msra.mxu0 %v9200
    %9617 = vmatprep.subr.bf16.mxu0 %v9197
    %9618 = vmatpush1.bf16.msra.mxu0 %v9196
    %9619 = vmatprep.subr.bf16.mxu0 %v9193
    %9620 = vmatpush1.bf16.msra.mxu0 %v9192
    %9621 = vmatprep.subr.bf16.mxu0 %v9189
    %9622 = vmatpush1.bf16.msra.mxu0 %v9188
    %9623 = vmatprep.subr.bf16.mxu0 %v9185
    %9624 = vmatpush1.bf16.msra.mxu0 %v9184
    %9625 = vmatprep.subr.bf16.mxu0 %v9181
    %9626 = vmatpush1.bf16.msra.mxu0 %v9180
    %9627 = vmatprep.subr.bf16.mxu0 %v9177
    %9628 = vmatpush1.bf16.msra.mxu0 %v9176
    %9629 = vmatprep.subr.bf16.mxu0 %v9173
    %9630 = vmatpush1.bf16.msra.mxu0 %v9172
    %9631 = vmatprep.subr.bf16.mxu0 %v9233
    %9632 = vmatpush2.bf16.msra.mxu0 %v9232
    %9633 = vmatprep.subr.bf16.mxu0 %v9229
    %9634 = vmatpush2.bf16.msra.mxu0 %v9228
    %9635 = vmatprep.subr.bf16.mxu0 %v9225
    %9636 = vmatpush2.bf16.msra.mxu0 %v9224
    %9637 = vmatprep.subr.bf16.mxu0 %v9221
    %9638 = vmatpush2.bf16.msra.mxu0 %v9220
    %9639 = vmatprep.subr.bf16.mxu0 %v9217
    %9640 = vmatpush2.bf16.msra.mxu0 %v9216
    %9641 = vmatprep.subr.bf16.mxu0 %v9213
    %9642 = vmatpush2.bf16.msra.mxu0 %v9212
    %9643 = vmatprep.subr.bf16.mxu0 %v9209
    %9644 = vmatpush2.bf16.msra.mxu0 %v9208
    %9645 = vmatprep.subr.bf16.mxu0 %v9205
    %9646 = vmatpush2.bf16.msra.mxu0 %v9204
    %9647 = vmatprep.mubr.bf16.mxu0 %v7933
    %9648 = vmatmul.mubr.bf16.gmra.mxu0 %v7932
    %v9649 = vpop.f32.mrf.mxu0
    %v9650 = vadd.f32 %v9609, %v9649
    %v9651 = vpop.f32.mrf.mxu0
    %v9652 = vadd.f32 %v9611, %v9651
    %v9653 = vpop.f32.mrf.mxu0
    %v9654 = vpop.f32.mrf.mxu0
    %9655 = vdwg.mxu0
    %9656 = vmatprep.subr.bf16.mxu0 %v9011
    %9657 = vmatpush1.bf16.msra.mxu0 %v9010
    %9658 = vmatprep.subr.bf16.mxu0 %v9007
    %9659 = vmatpush1.bf16.msra.mxu0 %v9006
    %9660 = vmatprep.subr.bf16.mxu0 %v9003
    %9661 = vmatpush1.bf16.msra.mxu0 %v9002
    %9662 = vmatprep.subr.bf16.mxu0 %v8999
    %9663 = vmatpush1.bf16.msra.mxu0 %v8998
    %9664 = vmatprep.subr.bf16.mxu0 %v8995
    %9665 = vmatpush1.bf16.msra.mxu0 %v8994
    %9666 = vmatprep.subr.bf16.mxu0 %v8991
    %9667 = vmatpush1.bf16.msra.mxu0 %v8990
    %9668 = vmatprep.subr.bf16.mxu0 %v8987
    %9669 = vmatpush1.bf16.msra.mxu0 %v8986
    %9670 = vmatprep.subr.bf16.mxu0 %v8983
    %9671 = vmatpush1.bf16.msra.mxu0 %v8982
    %9672 = vmatprep.subr.bf16.mxu0 %v9043
    %9673 = vmatpush2.bf16.msra.mxu0 %v9042
    %9674 = vmatprep.subr.bf16.mxu0 %v9039
    %9675 = vmatpush2.bf16.msra.mxu0 %v9038
    %9676 = vmatprep.subr.bf16.mxu0 %v9035
    %9677 = vmatpush2.bf16.msra.mxu0 %v9034
    %9678 = vmatprep.subr.bf16.mxu0 %v9031
    %9679 = vmatpush2.bf16.msra.mxu0 %v9030
    %9680 = vmatprep.subr.bf16.mxu0 %v9027
    %9681 = vmatpush2.bf16.msra.mxu0 %v9026
    %9682 = vmatprep.subr.bf16.mxu0 %v9023
    %9683 = vmatpush2.bf16.msra.mxu0 %v9022
    %9684 = vmatprep.subr.bf16.mxu0 %v9019
    %9685 = vmatpush2.bf16.msra.mxu0 %v9018
    %9686 = vmatprep.subr.bf16.mxu0 %v9015
    %9687 = vmatpush2.bf16.msra.mxu0 %v9014
    %9688 = vmatprep.mubr.bf16.mxu0 %v7927
    %9689 = vmatmul.mubr.bf16.gmra.mxu0 %v7926
    %v9690 = vpop.f32.mrf.mxu0
    %v9691 = vadd.f32 %v8203, %v9690
    %v9692 = vpop.f32.mrf.mxu0
    %v9693 = vadd.f32 %v8207, %v9692
    %v9694 = vpop.f32.mrf.mxu0
    %v9695 = vpop.f32.mrf.mxu0
    %9696 = vdwg.mxu0
    %9697 = vmatprep.subr.bf16.mxu0 %v9075
    %9698 = vmatpush1.bf16.msra.mxu0 %v9074
    %9699 = vmatprep.subr.bf16.mxu0 %v9071
    %9700 = vmatpush1.bf16.msra.mxu0 %v9070
    %9701 = vmatprep.subr.bf16.mxu0 %v9067
    %9702 = vmatpush1.bf16.msra.mxu0 %v9066
    %9703 = vmatprep.subr.bf16.mxu0 %v9063
    %9704 = vmatpush1.bf16.msra.mxu0 %v9062
    %9705 = vmatprep.subr.bf16.mxu0 %v9059
    %9706 = vmatpush1.bf16.msra.mxu0 %v9058
    %9707 = vmatprep.subr.bf16.mxu0 %v9055
    %9708 = vmatpush1.bf16.msra.mxu0 %v9054
    %9709 = vmatprep.subr.bf16.mxu0 %v9051
    %9710 = vmatpush1.bf16.msra.mxu0 %v9050
    %9711 = vmatprep.subr.bf16.mxu0 %v9047
    %9712 = vmatpush1.bf16.msra.mxu0 %v9046
    %9713 = vmatprep.subr.bf16.mxu0 %v9107
    %9714 = vmatpush2.bf16.msra.mxu0 %v9106
    %9715 = vmatprep.subr.bf16.mxu0 %v9103
    %9716 = vmatpush2.bf16.msra.mxu0 %v9102
    %9717 = vmatprep.subr.bf16.mxu0 %v9099
    %9718 = vmatpush2.bf16.msra.mxu0 %v9098
    %9719 = vmatprep.subr.bf16.mxu0 %v9095
    %9720 = vmatpush2.bf16.msra.mxu0 %v9094
    %9721 = vmatprep.subr.bf16.mxu0 %v9091
    %9722 = vmatpush2.bf16.msra.mxu0 %v9090
    %9723 = vmatprep.subr.bf16.mxu0 %v9087
    %9724 = vmatpush2.bf16.msra.mxu0 %v9086
    %9725 = vmatprep.subr.bf16.mxu0 %v9083
    %9726 = vmatpush2.bf16.msra.mxu0 %v9082
    %9727 = vmatprep.subr.bf16.mxu0 %v9079
    %9728 = vmatpush2.bf16.msra.mxu0 %v9078
    %9729 = vmatprep.mubr.bf16.mxu0 %v7929
    %9730 = vmatmul.mubr.bf16.gmra.mxu0 %v7928
    %v9731 = vpop.f32.mrf.mxu0
    %v9732 = vadd.f32 %v9691, %v9731
    %v9733 = vpop.f32.mrf.mxu0
    %v9734 = vadd.f32 %v9693, %v9733
    %v9735 = vpop.f32.mrf.mxu0
    %v9736 = vpop.f32.mrf.mxu0
    %9737 = vdwg.mxu0
    %9738 = vmatprep.subr.bf16.mxu0 %v9139
    %9739 = vmatpush1.bf16.msra.mxu0 %v9138
    %9740 = vmatprep.subr.bf16.mxu0 %v9135
    %9741 = vmatpush1.bf16.msra.mxu0 %v9134
    %9742 = vmatprep.subr.bf16.mxu0 %v9131
    %9743 = vmatpush1.bf16.msra.mxu0 %v9130
    %9744 = vmatprep.subr.bf16.mxu0 %v9127
    %9745 = vmatpush1.bf16.msra.mxu0 %v9126
    %9746 = vmatprep.subr.bf16.mxu0 %v9123
    %9747 = vmatpush1.bf16.msra.mxu0 %v9122
    %9748 = vmatprep.subr.bf16.mxu0 %v9119
    %9749 = vmatpush1.bf16.msra.mxu0 %v9118
    %9750 = vmatprep.subr.bf16.mxu0 %v9115
    %9751 = vmatpush1.bf16.msra.mxu0 %v9114
    %9752 = vmatprep.subr.bf16.mxu0 %v9111
    %9753 = vmatpush1.bf16.msra.mxu0 %v9110
    %9754 = vmatprep.subr.bf16.mxu0 %v9171
    %9755 = vmatpush2.bf16.msra.mxu0 %v9170
    %9756 = vmatprep.subr.bf16.mxu0 %v9167
    %9757 = vmatpush2.bf16.msra.mxu0 %v9166
    %9758 = vmatprep.subr.bf16.mxu0 %v9163
    %9759 = vmatpush2.bf16.msra.mxu0 %v9162
    %9760 = vmatprep.subr.bf16.mxu0 %v9159
    %9761 = vmatpush2.bf16.msra.mxu0 %v9158
    %9762 = vmatprep.subr.bf16.mxu0 %v9155
    %9763 = vmatpush2.bf16.msra.mxu0 %v9154
    %9764 = vmatprep.subr.bf16.mxu0 %v9151
    %9765 = vmatpush2.bf16.msra.mxu0 %v9150
    %9766 = vmatprep.subr.bf16.mxu0 %v9147
    %9767 = vmatpush2.bf16.msra.mxu0 %v9146
    %9768 = vmatprep.subr.bf16.mxu0 %v9143
    %9769 = vmatpush2.bf16.msra.mxu0 %v9142
    %9770 = vmatprep.mubr.bf16.mxu0 %v7931
    %9771 = vmatmul.mubr.bf16.gmra.mxu0 %v7930
    %v9772 = vpop.f32.mrf.mxu0
    %v9773 = vadd.f32 %v9732, %v9772
    %v9774 = vpop.f32.mrf.mxu0
    %v9775 = vadd.f32 %v9734, %v9774
    %v9776 = vpop.f32.mrf.mxu0
    %v9777 = vpop.f32.mrf.mxu0
    %9778 = vdwg.mxu0
    %9779 = vmatprep.subr.bf16.mxu0 %v9203
    %9780 = vmatpush1.bf16.msra.mxu0 %v9202
    %9781 = vmatprep.subr.bf16.mxu0 %v9199
    %9782 = vmatpush1.bf16.msra.mxu0 %v9198
    %9783 = vmatprep.subr.bf16.mxu0 %v9195
    %9784 = vmatpush1.bf16.msra.mxu0 %v9194
    %9785 = vmatprep.subr.bf16.mxu0 %v9191
    %9786 = vmatpush1.bf16.msra.mxu0 %v9190
    %9787 = vmatprep.subr.bf16.mxu0 %v9187
    %9788 = vmatpush1.bf16.msra.mxu0 %v9186
    %9789 = vmatprep.subr.bf16.mxu0 %v9183
    %9790 = vmatpush1.bf16.msra.mxu0 %v9182
    %9791 = vmatprep.subr.bf16.mxu0 %v9179
    %9792 = vmatpush1.bf16.msra.mxu0 %v9178
    %9793 = vmatprep.subr.bf16.mxu0 %v9175
    %9794 = vmatpush1.bf16.msra.mxu0 %v9174
    %9795 = vmatprep.subr.bf16.mxu0 %v9235
    %9796 = vmatpush2.bf16.msra.mxu0 %v9234
    %9797 = vmatprep.subr.bf16.mxu0 %v9231
    %9798 = vmatpush2.bf16.msra.mxu0 %v9230
    %9799 = vmatprep.subr.bf16.mxu0 %v9227
    %9800 = vmatpush2.bf16.msra.mxu0 %v9226
    %9801 = vmatprep.subr.bf16.mxu0 %v9223
    %9802 = vmatpush2.bf16.msra.mxu0 %v9222
    %9803 = vmatprep.subr.bf16.mxu0 %v9219
    %9804 = vmatpush2.bf16.msra.mxu0 %v9218
    %9805 = vmatprep.subr.bf16.mxu0 %v9215
    %9806 = vmatpush2.bf16.msra.mxu0 %v9214
    %9807 = vmatprep.subr.bf16.mxu0 %v9211
    %9808 = vmatpush2.bf16.msra.mxu0 %v9210
    %9809 = vmatprep.subr.bf16.mxu0 %v9207
    %9810 = vmatpush2.bf16.msra.mxu0 %v9206
    %9811 = vmatprep.mubr.bf16.mxu0 %v7933
    %9812 = vmatmul.mubr.bf16.gmra.mxu0 %v7932
    %v9813 = vpop.f32.mrf.mxu0
    %v9814 = vadd.f32 %v9773, %v9813
    %v9815 = vpop.f32.mrf.mxu0
    %v9816 = vadd.f32 %v9775, %v9815
    %v9817 = vpop.f32.mrf.mxu0
    %v9818 = vpop.f32.mrf.mxu0
    %9819 = vdwg.mxu0
    %v9820 = vmax.f32 %v9650, 0.0
    %v9821 = vmax.f32 %v9652, 0.0
    %v9822 = vmax.f32 %v9814, 0.0
    %v9823 = vmax.f32 %v9816, 0.0
    %v9824 = vpack.c.bf16 %v9820, %v9820
    %v9825 = vpack.c.bf16 %v9821, %v9821
    %v9826 = vpack.c.bf16 %v9822, %v9822
    %v9827 = vpack.c.bf16 %v9823, %v9823
    %v9828 = vld [vmem:[#allocation13] sm:$0xff]
    %v9829 = vld [vmem:[#allocation13 + $0x8] sm:$0xff]
    %v9830 = vld [vmem:[#allocation13 + $0x10] sm:$0xff]
    %v9831 = vld [vmem:[#allocation13 + $0x18] sm:$0xff]
    %v9832 = vld [vmem:[#allocation13 + $0x20] sm:$0xff]
    %v9833 = vld [vmem:[#allocation13 + $0x28] sm:$0xff]
    %v9834 = vld [vmem:[#allocation13 + $0x30] sm:$0xff]
    %v9835 = vld [vmem:[#allocation13 + $0x38] sm:$0xff]
    %v9836 = vld [vmem:[#allocation13 + $0x40] sm:$0xff]
    %v9837 = vld [vmem:[#allocation13 + $0x48] sm:$0xff]
    %v9838 = vld [vmem:[#allocation13 + $0x50] sm:$0xff]
    %v9839 = vld [vmem:[#allocation13 + $0x58] sm:$0xff]
    %v9840 = vld [vmem:[#allocation13 + $0x60] sm:$0xff]
    %v9841 = vld [vmem:[#allocation13 + $0x68] sm:$0xff]
    %v9842 = vld [vmem:[#allocation13 + $0x70] sm:$0xff]
    %v9843 = vld [vmem:[#allocation13 + $0x78] sm:$0xff]
    %v9844 = vld [vmem:[#allocation13 + $0x80] sm:$0xff]
    %v9845 = vld [vmem:[#allocation13 + $0x88] sm:$0xff]
    %v9846 = vld [vmem:[#allocation13 + $0x90] sm:$0xff]
    %v9847 = vld [vmem:[#allocation13 + $0x98] sm:$0xff]
    %v9848 = vld [vmem:[#allocation13 + $0xa0] sm:$0xff]
    %v9849 = vld [vmem:[#allocation13 + $0xa8] sm:$0xff]
    %v9850 = vld [vmem:[#allocation13 + $0xb0] sm:$0xff]
    %v9851 = vld [vmem:[#allocation13 + $0xb8] sm:$0xff]
    %v9852 = vld [vmem:[#allocation13 + $0xc0] sm:$0xff]
    %v9853 = vld [vmem:[#allocation13 + $0xc8] sm:$0xff]
    %v9854 = vld [vmem:[#allocation13 + $0xd0] sm:$0xff]
    %v9855 = vld [vmem:[#allocation13 + $0xd8] sm:$0xff]
    %v9856 = vld [vmem:[#allocation13 + $0xe0] sm:$0xff]
    %v9857 = vld [vmem:[#allocation13 + $0xe8] sm:$0xff]
    %v9858 = vld [vmem:[#allocation13 + $0xf0] sm:$0xff]
    %v9859 = vld [vmem:[#allocation13 + $0xf8] sm:$0xff]
    %v9860 = vld [vmem:[#allocation13 + $0x100] sm:$0xff]
    %v9861 = vld [vmem:[#allocation13 + $0x108] sm:$0xff]
    %v9862 = vld [vmem:[#allocation13 + $0x110] sm:$0xff]
    %v9863 = vld [vmem:[#allocation13 + $0x118] sm:$0xff]
    %v9864 = vld [vmem:[#allocation13 + $0x120] sm:$0xff]
    %v9865 = vld [vmem:[#allocation13 + $0x128] sm:$0xff]
    %v9866 = vld [vmem:[#allocation13 + $0x130] sm:$0xff]
    %v9867 = vld [vmem:[#allocation13 + $0x138] sm:$0xff]
    %v9868 = vld [vmem:[#allocation13 + $0x140] sm:$0xff]
    %v9869 = vld [vmem:[#allocation13 + $0x148] sm:$0xff]
    %v9870 = vld [vmem:[#allocation13 + $0x150] sm:$0xff]
    %v9871 = vld [vmem:[#allocation13 + $0x158] sm:$0xff]
    %v9872 = vld [vmem:[#allocation13 + $0x160] sm:$0xff]
    %v9873 = vld [vmem:[#allocation13 + $0x168] sm:$0xff]
    %v9874 = vld [vmem:[#allocation13 + $0x170] sm:$0xff]
    %v9875 = vld [vmem:[#allocation13 + $0x178] sm:$0xff]
    %v9876 = vld [vmem:[#allocation13 + $0x180] sm:$0xff]
    %v9877 = vld [vmem:[#allocation13 + $0x188] sm:$0xff]
    %v9878 = vld [vmem:[#allocation13 + $0x190] sm:$0xff]
    %v9879 = vld [vmem:[#allocation13 + $0x198] sm:$0xff]
    %v9880 = vld [vmem:[#allocation13 + $0x1a0] sm:$0xff]
    %v9881 = vld [vmem:[#allocation13 + $0x1a8] sm:$0xff]
    %v9882 = vld [vmem:[#allocation13 + $0x1b0] sm:$0xff]
    %v9883 = vld [vmem:[#allocation13 + $0x1b8] sm:$0xff]
    %v9884 = vld [vmem:[#allocation13 + $0x1c0] sm:$0xff]
    %v9885 = vld [vmem:[#allocation13 + $0x1c8] sm:$0xff]
    %v9886 = vld [vmem:[#allocation13 + $0x1d0] sm:$0xff]
    %v9887 = vld [vmem:[#allocation13 + $0x1d8] sm:$0xff]
    %v9888 = vld [vmem:[#allocation13 + $0x1e0] sm:$0xff]
    %v9889 = vld [vmem:[#allocation13 + $0x1e8] sm:$0xff]
    %v9890 = vld [vmem:[#allocation13 + $0x1f0] sm:$0xff]
    %v9891 = vld [vmem:[#allocation13 + $0x1f8] sm:$0xff]
    %v9892 = vld [vmem:[#allocation14] sm:$0x3]
    %v9894 = vlaneseq
    %v9895 = vshrl.u32 %v9894, 7
    %v9896 = vsub.s32 0, %v9895
    %v9897 = vrot.slane %v9892, %v9896
    %v9898 = vlaneseq
    %v9899 = vshrl.u32 %v9898, 7
    %v9900 = vsub.s32 1, %v9899
    %v9901 = vrot.slane %v9892, %v9900
    %v9968 = vunpack.c.l.b16 %v9828
    %v9969 = vunpack.c.h.b16 %v9828
    %v9970 = vunpack.c.l.b16 %v9829
    %v9971 = vunpack.c.h.b16 %v9829
    %v9972 = vunpack.c.l.b16 %v9830
    %v9973 = vunpack.c.h.b16 %v9830
    %v9974 = vunpack.c.l.b16 %v9831
    %v9975 = vunpack.c.h.b16 %v9831
    %v9976 = vunpack.c.l.b16 %v9832
    %v9977 = vunpack.c.h.b16 %v9832
    %v9978 = vunpack.c.l.b16 %v9833
    %v9979 = vunpack.c.h.b16 %v9833
    %v9980 = vunpack.c.l.b16 %v9834
    %v9981 = vunpack.c.h.b16 %v9834
    %v9982 = vunpack.c.l.b16 %v9835
    %v9983 = vunpack.c.h.b16 %v9835
    %v9984 = vunpack.c.l.b16 %v9836
    %v9985 = vunpack.c.h.b16 %v9836
    %v9986 = vunpack.c.l.b16 %v9837
    %v9987 = vunpack.c.h.b16 %v9837
    %v9988 = vunpack.c.l.b16 %v9838
    %v9989 = vunpack.c.h.b16 %v9838
    %v9990 = vunpack.c.l.b16 %v9839
    %v9991 = vunpack.c.h.b16 %v9839
    %v9992 = vunpack.c.l.b16 %v9840
    %v9993 = vunpack.c.h.b16 %v9840
    %v9994 = vunpack.c.l.b16 %v9841
    %v9995 = vunpack.c.h.b16 %v9841
    %v9996 = vunpack.c.l.b16 %v9842
    %v9997 = vunpack.c.h.b16 %v9842
    %v9998 = vunpack.c.l.b16 %v9843
    %v9999 = vunpack.c.h.b16 %v9843
    %v10000 = vunpack.c.l.b16 %v9844
    %v10001 = vunpack.c.h.b16 %v9844
    %v10002 = vunpack.c.l.b16 %v9845
    %v10003 = vunpack.c.h.b16 %v9845
    %v10004 = vunpack.c.l.b16 %v9846
    %v10005 = vunpack.c.h.b16 %v9846
    %v10006 = vunpack.c.l.b16 %v9847
    %v10007 = vunpack.c.h.b16 %v9847
    %v10008 = vunpack.c.l.b16 %v9848
    %v10009 = vunpack.c.h.b16 %v9848
    %v10010 = vunpack.c.l.b16 %v9849
    %v10011 = vunpack.c.h.b16 %v9849
    %v10012 = vunpack.c.l.b16 %v9850
    %v10013 = vunpack.c.h.b16 %v9850
    %v10014 = vunpack.c.l.b16 %v9851
    %v10015 = vunpack.c.h.b16 %v9851
    %v10016 = vunpack.c.l.b16 %v9852
    %v10017 = vunpack.c.h.b16 %v9852
    %v10018 = vunpack.c.l.b16 %v9853
    %v10019 = vunpack.c.h.b16 %v9853
    %v10020 = vunpack.c.l.b16 %v9854
    %v10021 = vunpack.c.h.b16 %v9854
    %v10022 = vunpack.c.l.b16 %v9855
    %v10023 = vunpack.c.h.b16 %v9855
    %v10024 = vunpack.c.l.b16 %v9856
    %v10025 = vunpack.c.h.b16 %v9856
    %v10026 = vunpack.c.l.b16 %v9857
    %v10027 = vunpack.c.h.b16 %v9857
    %v10028 = vunpack.c.l.b16 %v9858
    %v10029 = vunpack.c.h.b16 %v9858
    %v10030 = vunpack.c.l.b16 %v9859
    %v10031 = vunpack.c.h.b16 %v9859
    %v10032 = vunpack.c.l.b16 %v9860
    %v10033 = vunpack.c.h.b16 %v9860
    %v10034 = vunpack.c.l.b16 %v9861
    %v10035 = vunpack.c.h.b16 %v9861
    %v10036 = vunpack.c.l.b16 %v9862
    %v10037 = vunpack.c.h.b16 %v9862
    %v10038 = vunpack.c.l.b16 %v9863
    %v10039 = vunpack.c.h.b16 %v9863
    %v10040 = vunpack.c.l.b16 %v9864
    %v10041 = vunpack.c.h.b16 %v9864
    %v10042 = vunpack.c.l.b16 %v9865
    %v10043 = vunpack.c.h.b16 %v9865
    %v10044 = vunpack.c.l.b16 %v9866
    %v10045 = vunpack.c.h.b16 %v9866
    %v10046 = vunpack.c.l.b16 %v9867
    %v10047 = vunpack.c.h.b16 %v9867
    %v10048 = vunpack.c.l.b16 %v9868
    %v10049 = vunpack.c.h.b16 %v9868
    %v10050 = vunpack.c.l.b16 %v9869
    %v10051 = vunpack.c.h.b16 %v9869
    %v10052 = vunpack.c.l.b16 %v9870
    %v10053 = vunpack.c.h.b16 %v9870
    %v10054 = vunpack.c.l.b16 %v9871
    %v10055 = vunpack.c.h.b16 %v9871
    %v10056 = vunpack.c.l.b16 %v9872
    %v10057 = vunpack.c.h.b16 %v9872
    %v10058 = vunpack.c.l.b16 %v9873
    %v10059 = vunpack.c.h.b16 %v9873
    %v10060 = vunpack.c.l.b16 %v9874
    %v10061 = vunpack.c.h.b16 %v9874
    %v10062 = vunpack.c.l.b16 %v9875
    %v10063 = vunpack.c.h.b16 %v9875
    %v10064 = vunpack.c.l.b16 %v9876
    %v10065 = vunpack.c.h.b16 %v9876
    %v10066 = vunpack.c.l.b16 %v9877
    %v10067 = vunpack.c.h.b16 %v9877
    %v10068 = vunpack.c.l.b16 %v9878
    %v10069 = vunpack.c.h.b16 %v9878
    %v10070 = vunpack.c.l.b16 %v9879
    %v10071 = vunpack.c.h.b16 %v9879
    %v10072 = vunpack.c.l.b16 %v9880
    %v10073 = vunpack.c.h.b16 %v9880
    %v10074 = vunpack.c.l.b16 %v9881
    %v10075 = vunpack.c.h.b16 %v9881
    %v10076 = vunpack.c.l.b16 %v9882
    %v10077 = vunpack.c.h.b16 %v9882
    %v10078 = vunpack.c.l.b16 %v9883
    %v10079 = vunpack.c.h.b16 %v9883
    %v10080 = vunpack.c.l.b16 %v9884
    %v10081 = vunpack.c.h.b16 %v9884
    %v10082 = vunpack.c.l.b16 %v9885
    %v10083 = vunpack.c.h.b16 %v9885
    %v10084 = vunpack.c.l.b16 %v9886
    %v10085 = vunpack.c.h.b16 %v9886
    %v10086 = vunpack.c.l.b16 %v9887
    %v10087 = vunpack.c.h.b16 %v9887
    %v10088 = vunpack.c.l.b16 %v9888
    %v10089 = vunpack.c.h.b16 %v9888
    %v10090 = vunpack.c.l.b16 %v9889
    %v10091 = vunpack.c.h.b16 %v9889
    %v10092 = vunpack.c.l.b16 %v9890
    %v10093 = vunpack.c.h.b16 %v9890
    %v10094 = vunpack.c.l.b16 %v9891
    %v10095 = vunpack.c.h.b16 %v9891
    %v10096 = vpack.c.b16 %v9970, %v9968
    %v10097 = vpack.c.b16 %v9971, %v9969
    %v10098 = vpack.c.b16 %v9974, %v9972
    %v10099 = vpack.c.b16 %v9975, %v9973
    %v10100 = vpack.c.b16 %v9978, %v9976
    %v10101 = vpack.c.b16 %v9979, %v9977
    %v10102 = vpack.c.b16 %v9982, %v9980
    %v10103 = vpack.c.b16 %v9983, %v9981
    %v10104 = vpack.c.b16 %v9986, %v9984
    %v10105 = vpack.c.b16 %v9987, %v9985
    %v10106 = vpack.c.b16 %v9990, %v9988
    %v10107 = vpack.c.b16 %v9991, %v9989
    %v10108 = vpack.c.b16 %v9994, %v9992
    %v10109 = vpack.c.b16 %v9995, %v9993
    %v10110 = vpack.c.b16 %v9998, %v9996
    %v10111 = vpack.c.b16 %v9999, %v9997
    %v10112 = vpack.c.b16 %v10002, %v10000
    %v10113 = vpack.c.b16 %v10003, %v10001
    %v10114 = vpack.c.b16 %v10006, %v10004
    %v10115 = vpack.c.b16 %v10007, %v10005
    %v10116 = vpack.c.b16 %v10010, %v10008
    %v10117 = vpack.c.b16 %v10011, %v10009
    %v10118 = vpack.c.b16 %v10014, %v10012
    %v10119 = vpack.c.b16 %v10015, %v10013
    %v10120 = vpack.c.b16 %v10018, %v10016
    %v10121 = vpack.c.b16 %v10019, %v10017
    %v10122 = vpack.c.b16 %v10022, %v10020
    %v10123 = vpack.c.b16 %v10023, %v10021
    %v10124 = vpack.c.b16 %v10026, %v10024
    %v10125 = vpack.c.b16 %v10027, %v10025
    %v10126 = vpack.c.b16 %v10030, %v10028
    %v10127 = vpack.c.b16 %v10031, %v10029
    %v10128 = vpack.c.b16 %v10034, %v10032
    %v10129 = vpack.c.b16 %v10035, %v10033
    %v10130 = vpack.c.b16 %v10038, %v10036
    %v10131 = vpack.c.b16 %v10039, %v10037
    %v10132 = vpack.c.b16 %v10042, %v10040
    %v10133 = vpack.c.b16 %v10043, %v10041
    %v10134 = vpack.c.b16 %v10046, %v10044
    %v10135 = vpack.c.b16 %v10047, %v10045
    %v10136 = vpack.c.b16 %v10050, %v10048
    %v10137 = vpack.c.b16 %v10051, %v10049
    %v10138 = vpack.c.b16 %v10054, %v10052
    %v10139 = vpack.c.b16 %v10055, %v10053
    %v10140 = vpack.c.b16 %v10058, %v10056
    %v10141 = vpack.c.b16 %v10059, %v10057
    %v10142 = vpack.c.b16 %v10062, %v10060
    %v10143 = vpack.c.b16 %v10063, %v10061
    %v10144 = vpack.c.b16 %v10066, %v10064
    %v10145 = vpack.c.b16 %v10067, %v10065
    %v10146 = vpack.c.b16 %v10070, %v10068
    %v10147 = vpack.c.b16 %v10071, %v10069
    %v10148 = vpack.c.b16 %v10074, %v10072
    %v10149 = vpack.c.b16 %v10075, %v10073
    %v10150 = vpack.c.b16 %v10078, %v10076
    %v10151 = vpack.c.b16 %v10079, %v10077
    %v10152 = vpack.c.b16 %v10082, %v10080
    %v10153 = vpack.c.b16 %v10083, %v10081
    %v10154 = vpack.c.b16 %v10086, %v10084
    %v10155 = vpack.c.b16 %v10087, %v10085
    %v10156 = vpack.c.b16 %v10090, %v10088
    %v10157 = vpack.c.b16 %v10091, %v10089
    %v10158 = vpack.c.b16 %v10094, %v10092
    %v10159 = vpack.c.b16 %v10095, %v10093
    %10224 = vmatprep.subr.bf16.mxu0 %v10111
    %10225 = vmatpush1.bf16.msra.mxu0 %v10110
    %10226 = vmatprep.subr.bf16.mxu0 %v10109
    %10227 = vmatpush1.bf16.msra.mxu0 %v10108
    %10228 = vmatprep.subr.bf16.mxu0 %v10107
    %10229 = vmatpush1.bf16.msra.mxu0 %v10106
    %10230 = vmatprep.subr.bf16.mxu0 %v10105
    %10231 = vmatpush1.bf16.msra.mxu0 %v10104
    %10232 = vmatprep.subr.bf16.mxu0 %v10103
    %10233 = vmatpush1.bf16.msra.mxu0 %v10102
    %10234 = vmatprep.subr.bf16.mxu0 %v10101
    %10235 = vmatpush1.bf16.msra.mxu0 %v10100
    %10236 = vmatprep.subr.bf16.mxu0 %v10099
    %10237 = vmatpush1.bf16.msra.mxu0 %v10098
    %10238 = vmatprep.subr.bf16.mxu0 %v10097
    %10239 = vmatpush1.bf16.msra.mxu0 %v10096
    %10240 = vmatprep.subr.bf16.mxu0 %v10127
    %10241 = vmatpush2.bf16.msra.mxu0 %v10126
    %10242 = vmatprep.subr.bf16.mxu0 %v10125
    %10243 = vmatpush2.bf16.msra.mxu0 %v10124
    %10244 = vmatprep.subr.bf16.mxu0 %v10123
    %10245 = vmatpush2.bf16.msra.mxu0 %v10122
    %10246 = vmatprep.subr.bf16.mxu0 %v10121
    %10247 = vmatpush2.bf16.msra.mxu0 %v10120
    %10248 = vmatprep.subr.bf16.mxu0 %v10119
    %10249 = vmatpush2.bf16.msra.mxu0 %v10118
    %10250 = vmatprep.subr.bf16.mxu0 %v10117
    %10251 = vmatpush2.bf16.msra.mxu0 %v10116
    %10252 = vmatprep.subr.bf16.mxu0 %v10115
    %10253 = vmatpush2.bf16.msra.mxu0 %v10114
    %10254 = vmatprep.subr.bf16.mxu0 %v10113
    %10255 = vmatpush2.bf16.msra.mxu0 %v10112
    %10256 = vmatprep.mubr.bf16.mxu0 %v9825
    %10257 = vmatmul.mubr.bf16.gmra.mxu0 %v9824
    %v10258 = vpop.f32.mrf.mxu0
    %v10259 = vadd.f32 %v9897, %v10258
    %v10260 = vpop.f32.mrf.mxu0
    %v10261 = vadd.f32 %v9901, %v10260
    %v10262 = vpop.f32.mrf.mxu0
    %v10263 = vpop.f32.mrf.mxu0
    %10264 = vdwg.mxu0
    %10265 = vmatprep.subr.bf16.mxu0 %v10143
    %10266 = vmatpush1.bf16.msra.mxu0 %v10142
    %10267 = vmatprep.subr.bf16.mxu0 %v10141
    %10268 = vmatpush1.bf16.msra.mxu0 %v10140
    %10269 = vmatprep.subr.bf16.mxu0 %v10139
    %10270 = vmatpush1.bf16.msra.mxu0 %v10138
    %10271 = vmatprep.subr.bf16.mxu0 %v10137
    %10272 = vmatpush1.bf16.msra.mxu0 %v10136
    %10273 = vmatprep.subr.bf16.mxu0 %v10135
    %10274 = vmatpush1.bf16.msra.mxu0 %v10134
    %10275 = vmatprep.subr.bf16.mxu0 %v10133
    %10276 = vmatpush1.bf16.msra.mxu0 %v10132
    %10277 = vmatprep.subr.bf16.mxu0 %v10131
    %10278 = vmatpush1.bf16.msra.mxu0 %v10130
    %10279 = vmatprep.subr.bf16.mxu0 %v10129
    %10280 = vmatpush1.bf16.msra.mxu0 %v10128
    %10281 = vmatprep.subr.bf16.mxu0 %v10159
    %10282 = vmatpush2.bf16.msra.mxu0 %v10158
    %10283 = vmatprep.subr.bf16.mxu0 %v10157
    %10284 = vmatpush2.bf16.msra.mxu0 %v10156
    %10285 = vmatprep.subr.bf16.mxu0 %v10155
    %10286 = vmatpush2.bf16.msra.mxu0 %v10154
    %10287 = vmatprep.subr.bf16.mxu0 %v10153
    %10288 = vmatpush2.bf16.msra.mxu0 %v10152
    %10289 = vmatprep.subr.bf16.mxu0 %v10151
    %10290 = vmatpush2.bf16.msra.mxu0 %v10150
    %10291 = vmatprep.subr.bf16.mxu0 %v10149
    %10292 = vmatpush2.bf16.msra.mxu0 %v10148
    %10293 = vmatprep.subr.bf16.mxu0 %v10147
    %10294 = vmatpush2.bf16.msra.mxu0 %v10146
    %10295 = vmatprep.subr.bf16.mxu0 %v10145
    %10296 = vmatpush2.bf16.msra.mxu0 %v10144
    %10297 = vmatprep.mubr.bf16.mxu0 %v9827
    %10298 = vmatmul.mubr.bf16.gmra.mxu0 %v9826
    %v10299 = vpop.f32.mrf.mxu0
    %v10300 = vadd.f32 %v10259, %v10299
    %v10301 = vpop.f32.mrf.mxu0
    %v10302 = vadd.f32 %v10261, %v10301
    %v10303 = vpop.f32.mrf.mxu0
    %v10304 = vpop.f32.mrf.mxu0
    %10305 = vdwg.mxu0
    %v10306 = vmax.f32 %v10300, 0.0
    %v10307 = vmax.f32 %v10302, 0.0
    %v10308 = vpack.c.bf16 %v10306, %v10306
    %v10309 = vpack.c.bf16 %v10307, %v10307
    %v10310 = vld [vmem:[#allocation16] sm:$0xf]
    %v10311 = vld [vmem:[#allocation16 + $0x4] sm:$0xf]
    %v10312 = vld [vmem:[#allocation16 + $0x8] sm:$0xf]
    %v10313 = vld [vmem:[#allocation16 + $0xc] sm:$0xf]
    %v10314 = vld [vmem:[#allocation16 + $0x10] sm:$0xf]
    %v10315 = vld [vmem:[#allocation16 + $0x14] sm:$0xf]
    %v10316 = vld [vmem:[#allocation16 + $0x18] sm:$0xf]
    %v10317 = vld [vmem:[#allocation16 + $0x1c] sm:$0xf]
    %v10318 = vld [vmem:[#allocation16 + $0x20] sm:$0xf]
    %v10319 = vld [vmem:[#allocation16 + $0x24] sm:$0xf]
    %v10320 = vld [vmem:[#allocation16 + $0x28] sm:$0xf]
    %v10321 = vld [vmem:[#allocation16 + $0x2c] sm:$0xf]
    %v10322 = vld [vmem:[#allocation16 + $0x30] sm:$0xf]
    %v10323 = vld [vmem:[#allocation16 + $0x34] sm:$0xf]
    %v10324 = vld [vmem:[#allocation16 + $0x38] sm:$0xf]
    %v10325 = vld [vmem:[#allocation16 + $0x3c] sm:$0xf]
    %v10326 = vld [vmem:[#allocation16 + $0x40] sm:$0xf]
    %v10327 = vld [vmem:[#allocation16 + $0x44] sm:$0xf]
    %v10328 = vld [vmem:[#allocation16 + $0x48] sm:$0xf]
    %v10329 = vld [vmem:[#allocation16 + $0x4c] sm:$0xf]
    %v10330 = vld [vmem:[#allocation16 + $0x50] sm:$0xf]
    %v10331 = vld [vmem:[#allocation16 + $0x54] sm:$0xf]
    %v10332 = vld [vmem:[#allocation16 + $0x58] sm:$0xf]
    %v10333 = vld [vmem:[#allocation16 + $0x5c] sm:$0xf]
    %v10334 = vld [vmem:[#allocation16 + $0x60] sm:$0xf]
    %v10335 = vld [vmem:[#allocation16 + $0x64] sm:$0xf]
    %v10336 = vld [vmem:[#allocation16 + $0x68] sm:$0xf]
    %v10337 = vld [vmem:[#allocation16 + $0x6c] sm:$0xf]
    %v10338 = vld [vmem:[#allocation16 + $0x70] sm:$0xf]
    %v10339 = vld [vmem:[#allocation16 + $0x74] sm:$0xf]
    %v10340 = vld [vmem:[#allocation16 + $0x78] sm:$0xf]
    %v10341 = vld [vmem:[#allocation16 + $0x7c] sm:$0xf]
    %v10342 = vld [vmem:[#allocation17] sm:$0x1]
    %v10344 = vlaneseq
    %v10345 = vshrl.u32 %v10344, 7
    %v10346 = vsub.s32 0, %v10345
    %v10347 = vrot.slane %v10342, %v10346
    %v10381 = vunpack.c.l.b16 %v10310
    %v10382 = vunpack.c.l.b16 %v10311
    %v10383 = vunpack.c.l.b16 %v10312
    %v10384 = vunpack.c.l.b16 %v10313
    %v10385 = vunpack.c.l.b16 %v10314
    %v10386 = vunpack.c.l.b16 %v10315
    %v10387 = vunpack.c.l.b16 %v10316
    %v10388 = vunpack.c.l.b16 %v10317
    %v10389 = vunpack.c.l.b16 %v10318
    %v10390 = vunpack.c.l.b16 %v10319
    %v10391 = vunpack.c.l.b16 %v10320
    %v10392 = vunpack.c.l.b16 %v10321
    %v10393 = vunpack.c.l.b16 %v10322
    %v10394 = vunpack.c.l.b16 %v10323
    %v10395 = vunpack.c.l.b16 %v10324
    %v10396 = vunpack.c.l.b16 %v10325
    %v10397 = vunpack.c.l.b16 %v10326
    %v10398 = vunpack.c.l.b16 %v10327
    %v10399 = vunpack.c.l.b16 %v10328
    %v10400 = vunpack.c.l.b16 %v10329
    %v10401 = vunpack.c.l.b16 %v10330
    %v10402 = vunpack.c.l.b16 %v10331
    %v10403 = vunpack.c.l.b16 %v10332
    %v10404 = vunpack.c.l.b16 %v10333
    %v10405 = vunpack.c.l.b16 %v10334
    %v10406 = vunpack.c.l.b16 %v10335
    %v10407 = vunpack.c.l.b16 %v10336
    %v10408 = vunpack.c.l.b16 %v10337
    %v10409 = vunpack.c.l.b16 %v10338
    %v10410 = vunpack.c.l.b16 %v10339
    %v10411 = vunpack.c.l.b16 %v10340
    %v10412 = vunpack.c.l.b16 %v10341
    %v10413 = vpack.c.b16 %v10382, %v10381
    %v10414 = vpack.c.b16 %v10384, %v10383
    %v10415 = vpack.c.b16 %v10386, %v10385
    %v10416 = vpack.c.b16 %v10388, %v10387
    %v10417 = vpack.c.b16 %v10390, %v10389
    %v10418 = vpack.c.b16 %v10392, %v10391
    %v10419 = vpack.c.b16 %v10394, %v10393
    %v10420 = vpack.c.b16 %v10396, %v10395
    %v10421 = vpack.c.b16 %v10398, %v10397
    %v10422 = vpack.c.b16 %v10400, %v10399
    %v10423 = vpack.c.b16 %v10402, %v10401
    %v10424 = vpack.c.b16 %v10404, %v10403
    %v10425 = vpack.c.b16 %v10406, %v10405
    %v10426 = vpack.c.b16 %v10408, %v10407
    %v10427 = vpack.c.b16 %v10410, %v10409
    %v10428 = vpack.c.b16 %v10412, %v10411
    %10445 = vmatprep.subr.bf16.mxu0 0
    %10446 = vmatpush1.bf16.msra.mxu0 %v10420
    %10447 = vmatprep.subr.bf16.mxu0 0
    %10448 = vmatpush1.bf16.msra.mxu0 %v10419
    %10449 = vmatprep.subr.bf16.mxu0 0
    %10450 = vmatpush1.bf16.msra.mxu0 %v10418
    %10451 = vmatprep.subr.bf16.mxu0 0
    %10452 = vmatpush1.bf16.msra.mxu0 %v10417
    %10453 = vmatprep.subr.bf16.mxu0 0
    %10454 = vmatpush1.bf16.msra.mxu0 %v10416
    %10455 = vmatprep.subr.bf16.mxu0 0
    %10456 = vmatpush1.bf16.msra.mxu0 %v10415
    %10457 = vmatprep.subr.bf16.mxu0 0
    %10458 = vmatpush1.bf16.msra.mxu0 %v10414
    %10459 = vmatprep.subr.bf16.mxu0 0
    %10460 = vmatpush1.bf16.msra.mxu0 %v10413
    %10461 = vmatprep.subr.bf16.mxu0 0
    %10462 = vmatpush2.bf16.msra.mxu0 %v10428
    %10463 = vmatprep.subr.bf16.mxu0 0
    %10464 = vmatpush2.bf16.msra.mxu0 %v10427
    %10465 = vmatprep.subr.bf16.mxu0 0
    %10466 = vmatpush2.bf16.msra.mxu0 %v10426
    %10467 = vmatprep.subr.bf16.mxu0 0
    %10468 = vmatpush2.bf16.msra.mxu0 %v10425
    %10469 = vmatprep.subr.bf16.mxu0 0
    %10470 = vmatpush2.bf16.msra.mxu0 %v10424
    %10471 = vmatprep.subr.bf16.mxu0 0
    %10472 = vmatpush2.bf16.msra.mxu0 %v10423
    %10473 = vmatprep.subr.bf16.mxu0 0
    %10474 = vmatpush2.bf16.msra.mxu0 %v10422
    %10475 = vmatprep.subr.bf16.mxu0 0
    %10476 = vmatpush2.bf16.msra.mxu0 %v10421
    %10477 = vmatprep.mubr.bf16.mxu0 %v10309
    %10478 = vmatmul.mubr.bf16.gmra.mxu0 %v10308
    %v10479 = vpop.f32.mrf.mxu0
    %v10480 = vadd.f32 %v10347, %v10479
    %v10481 = vpop.f32.mrf.mxu0
    %v10482 = vpop.f32.mrf.mxu0
    %v10483 = vpop.f32.mrf.mxu0
    %10484 = vdwg.mxu0
    %v10485 = vmax.f32 %v10480, 0.0
    %v10486 = vld [vmem:[#allocation19] sm:$0x1]
    %v10488 = vlaneseq
    %v10489 = vshrl.u32 %v10488, 7
    %v10490 = vsub.s32 0, %v10489
    %v10491 = vrot.slane %v10486, %v10490
    %v10493 = vmul.f32 %v10485, %v10491
    %10494 = vadd.xlane.f32.xlu0 %v10493
    %v10495 = vpop.xlane.xlu0 %10494
    %v10496 = vld [vmem:[#allocation2] sm:$0x1]
    %v10498 = vlaneseq
    %v10499 = vshrl.u32 %v10498, 7
    %v10500 = vsub.s32 0, %v10499
    %v10501 = vrot.slane %v10496, %v10500
    %v10503 = vadd.f32 %v10495, %v10501
    %v10504 = vxor.u32 %v10503, 2147483648
    %v10505 = vmul.f32 %v10504, 1.442695
    %v10506 = vpow.pop %v10505
    %v10507 = vadd.f32 %v10506, 1.0
    %v10508 = vrcp.pop %v10507
    %v10509 = vmul.f32 1.0, %v10508
    %vm10510 = vcmask 7168
    %10511 = vst.msk [vmem:[%s13] sm:$0xff] %vm10510, %v10509
    // Predicated region
    $region98: #{distmult_forward.3} parent=1 // pred_check
      _
    $region99: #{distmult_forward.3} parent=1 // pred_check_branch
      %10513 = sbr.rel (0) target = $region101
    $region100: #{distmult_forward.3} parent=1 // pred_region
      _
    $region101: #{distmult_forward.3} parent=1 // pred_fallthru
      _
    // Predicated region
    $region102: #{distmult_forward.3} parent=1 // pred_check
      _
    $region103: #{distmult_forward.3} parent=1 // pred_check_branch
      %10515 = sbr.rel (0) target = $region105
    $region104: #{distmult_forward.3} parent=1 // pred_region
      _
    $region105: #{distmult_forward.3} parent=1 // pred_fallthru
      _
    %10516 = vsyncpa [#allocation4], 1
    %10517 = vsyncpa [#allocation6], 1
    %10518 = vsyncpa [#allocation9], 1
    %10519 = vsyncpa [#allocation12], 1
    %10520 = vsyncpa [#allocation15], 1
    %10521 = vsyncpa [#allocation18], 1

</llo_original>
